<compile_context>
chip_gen: v6e
topology: v6e:2x2x1
jax: 0.10.0
libtpu: 0.0.40
codegen_flags: <defaults>
</compile_context>

<pallas_src>
import functools

import jax
import jax.numpy as jnp
from jax.experimental import pallas as pl
from jax.experimental.pallas import tpu as pltpu


# ------------------------- fused block kernel -------------------------

def _block_kernel(x_ref, wcat_ref, bcat_ref, whh_ref, out_ref,
                  pre_scr, res_scr, h_scr, c_scr, *,
                  batch, time_chunk, hidden):
    """One LSTMResidualBlock over a chunk of `time_chunk` timesteps.

    x_ref:    (Tc*B, D)   time-major flattened input rows (f32)
    wcat_ref: (D, 5H)     [W_ih^T | W_lin^T], bf16, resident across grid
    bcat_ref: (1, 5H)     [b_ih + b_hh | b_lin], f32
    whh_ref:  (H, 4H)     W_hh^T, bf16, resident
    out_ref:  (Tc*B, H)   output rows (f32)
    pre_scr:  (Tc*B, 4H)  f32 scratch: x @ W_ih^T + b
    res_scr:  (Tc*B, H)   f32 scratch: x @ W_lin^T + b_lin
    h_scr/c_scr: (B, H)   recurrent state carried across chunks
    """
    H = hidden
    B = batch
    chunk = pl.program_id(0)

    # --- non-recurrent projection for the whole chunk: one bf16 GEMM ---
    x = x_ref[...].astype(jnp.bfloat16)
    proj = jnp.dot(x, wcat_ref[...],
                   preferred_element_type=jnp.float32) + bcat_ref[...]
    pre_scr[...] = proj[:, :4 * H]
    res_scr[...] = proj[:, 4 * H:]

    # --- recurrent state: scratch touched once per chunk, not per step ---
    @pl.when(chunk == 0)
    def _():
        h_scr[...] = jnp.zeros_like(h_scr)
        c_scr[...] = jnp.zeros_like(c_scr)

    def step(t, carry):
        h, c = carry
        r0 = pl.multiple_of(t * B, B)          # B is a multiple of 8 -> aligned
        pre = pre_scr[pl.ds(r0, B), :]
        gates = pre + jnp.dot(h.astype(jnp.bfloat16), whh_ref[...],
                              preferred_element_type=jnp.float32)
        i_g = jax.nn.sigmoid(gates[:, 0 * H:1 * H])
        f_g = jax.nn.sigmoid(gates[:, 1 * H:2 * H])
        g_g = jnp.tanh(gates[:, 2 * H:3 * H])
        o_g = jax.nn.sigmoid(gates[:, 3 * H:4 * H])
        c_new = f_g * c + i_g * g_g
        h_new = o_g * jnp.tanh(c_new)
        out_ref[pl.ds(r0, B), :] = (
            h_new + res_scr[pl.ds(r0, B), :]).astype(out_ref.dtype)
        return h_new, c_new

    h0 = h_scr[...]
    c0 = c_scr[...]
    hT, cT = jax.lax.fori_loop(0, time_chunk, step, (h0, c0),
                               unroll=min(time_chunk, 8))
    h_scr[...] = hT
    c_scr[...] = cT


# ------------------------- wrappers -------------------------

def _round_up(x, m):
    return (x + m - 1) // m * m


def _choose_time_chunk(T, b_pad, hidden, max_feat, vmem_budget_bytes=8 << 20):
    """Timesteps per chunk, sized from a VMEM byte budget (never exceeds it)."""
    # f32 bytes per timestep of chunk-resident data:
    #   pre (4H) + res (H) scratch + double-buffered x (2*D) and out (2*H).
    per_t = b_pad * 4 * (5 * hidden + 2 * max_feat + 2 * hidden)
    return int(max(1, min(T, vmem_budget_bytes // per_t)))


def _lstm_residual_block(x_rows, params, *, T_pad, B_pad, Tc):
    """x_rows: (T_pad*B_pad, D) time-major flattened -> (T_pad*B_pad, H)."""
    D = x_rows.shape[-1]
    H = params["w_hh"].shape[0]
    n_chunks = T_pad // Tc
    rows = Tc * B_pad

    return pl.pallas_call(
        functools.partial(_block_kernel, batch=B_pad, time_chunk=Tc, hidden=H),
        out_shape=jax.ShapeDtypeStruct((T_pad * B_pad, H), jnp.float32),
        grid_spec=pltpu.PrefetchScalarGridSpec(
            num_scalar_prefetch=0,
            grid=(n_chunks,),
            in_specs=[
                pl.BlockSpec((rows, D), lambda c: (c, 0)),        # x chunk
                pl.BlockSpec((D, 5 * H), lambda c: (0, 0)),       # [W_ih^T|W_lin^T]
                pl.BlockSpec((1, 5 * H), lambda c: (0, 0)),       # biases
                pl.BlockSpec((H, 4 * H), lambda c: (0, 0)),       # W_hh^T
            ],
            out_specs=pl.BlockSpec((rows, H), lambda c: (c, 0)),
            scratch_shapes=[
                pltpu.VMEM((rows, 4 * H), jnp.float32),           # pre-gates
                pltpu.VMEM((rows, H), jnp.float32),               # residual
                pltpu.VMEM((B_pad, H), jnp.float32),              # h state
                pltpu.VMEM((B_pad, H), jnp.float32),              # c state
            ],
        ),
        compiler_params=pltpu.CompilerParams(
            dimension_semantics=("arbitrary",),   # serial recurrence
            vmem_limit_bytes=32 * 1024 * 1024,
        ),
    )(x_rows, params["w_cat"], params["b_cat"], params["w_hh"])


def lstm_encoder(x, blocks):
    """x: (B, T, D_in) f32 -> (B, T, H) f32."""
    B, T, D = x.shape
    H = blocks[0]["w_hh"].shape[0]
    B_pad = _round_up(B, 8)
    max_feat = max([H] + [int(p["w_cat"].shape[0]) for p in blocks])
    Tc = _choose_time_chunk(T, B_pad, H, max_feat)
    T_pad = _round_up(T, Tc)

    # (B,T,D) -> padded time-major flattened rows, once for all layers.
    xt = jnp.transpose(x, (1, 0, 2))
    xt = jnp.pad(xt, ((0, T_pad - T), (0, B_pad - B), (0, 0)))
    rows = xt.reshape(T_pad * B_pad, D)

    for p in blocks:
        rows = _lstm_residual_block(rows, p, T_pad=T_pad, B_pad=B_pad, Tc=Tc)

    H_out = rows.shape[-1]
    out = rows.reshape(T_pad, B_pad, H_out)[:T, :B]
    return jnp.transpose(out, (1, 0, 2))


# ------------------------- parameter construction -------------------------

def init_block_params(key, input_size, hidden_size):
    """PyTorch-shaped params (uniform +-1/sqrt(H)); bf16 kernel copies + f32 refs."""
    k = 1.0 / jnp.sqrt(jnp.float32(hidden_size))
    keys = jax.random.split(key, 6)
    w_ih = jax.random.uniform(keys[0], (4 * hidden_size, input_size), jnp.float32, -k, k)
    w_hh = jax.random.uniform(keys[1], (4 * hidden_size, hidden_size), jnp.float32, -k, k)
    b_ih = jax.random.uniform(keys[2], (4 * hidden_size,), jnp.float32, -k, k)
    b_hh = jax.random.uniform(keys[3], (4 * hidden_size,), jnp.float32, -k, k)
    w_lin = jax.random.uniform(keys[4], (hidden_size, input_size), jnp.float32, -k, k)
    b_lin = jax.random.uniform(keys[5], (hidden_size,), jnp.float32, -k, k)

    w_ih_t = jnp.transpose(w_ih)            # (D, 4H)
    w_hh_t = jnp.transpose(w_hh)            # (H, 4H)
    w_lin_t = jnp.transpose(w_lin)          # (D, H)
    b = (b_ih + b_hh).reshape(1, -1)        # (1, 4H)
    b_lin2 = b_lin.reshape(1, -1)           # (1, H)

    return {
        # kernel-facing (bf16 weights, concatenated input projection)
        "w_cat": jnp.concatenate([w_ih_t, w_lin_t], axis=1).astype(jnp.bfloat16),
        "b_cat": jnp.concatenate([b, b_lin2], axis=1),           # (1, 5H) f32
        "w_hh": w_hh_t.astype(jnp.bfloat16),                     # (H, 4H)
        # f32 originals for the pure-JAX reference
        "w_ih_t": w_ih_t, "w_hh_t": w_hh_t, "b": b,
        "w_lin_t": w_lin_t, "b_lin": b_lin2,
    }


# ------------------------- pure-JAX reference (f32) -------------------------

def _block_ref(x, p):
    B, T, D = x.shape
    H = p["w_hh_t"].shape[0]

    def step(carry, x_t):
        h, c = carry
        gates = x_t @ p["w_ih_t"] + h @ p["w_hh_t"] + p["b"]
        i = jax.nn.sigmoid(gates[:, 0 * H:1 * H])
        f = jax.nn.sigmoid(gates[:, 1 * H:2 * H])
        g = jnp.tanh(gates[:, 2 * H:3 * H])
        o = jax.nn.sigmoid(gates[:, 3 * H:4 * H])
        c = f * c + i * g
        h = o * jnp.tanh(c)
        return (h, c), h

    h0 = jnp.zeros((B, H), jnp.float32)
    c0 = jnp.zeros((B, H), jnp.float32)
    _, hs = jax.lax.scan(step, (h0, c0), jnp.transpose(x, (1, 0, 2)))
    out = jnp.transpose(hs, (1, 0, 2))
    residual = x @ p["w_lin_t"] + p["b_lin"]
    return out + residual


def encoder_ref(x, blocks):
    for p in blocks:
        x = _block_ref(x, p)
    return x


# ------------------------- main -------------------------

if __name__ == "__main__":
    # Small shapes consistent with the module: (batch, seq, input_size).
    B, T = 2, 8
    input_size, hidden_size, num_layers = 16, 128, 2

    key = jax.random.PRNGKey(0)
    k_x, k_p = jax.random.split(key)
    x = jax.random.normal(k_x, (B, T, input_size), jnp.float32)

    blocks = []
    for i, kp in enumerate(jax.random.split(k_p, num_layers)):
        d_in = input_size if i == 0 else hidden_size
        blocks.append(init_block_params(kp, d_in, hidden_size))

    run = jax.jit(functools.partial(lstm_encoder, blocks=blocks))
    out = run(x)
    jax.block_until_ready(out)

    ref = encoder_ref(x, blocks)
    assert out.shape == (B, T, hidden_size)
    max_err = float(jnp.max(jnp.abs(out - ref)))
    # bf16 weights on the MXU (f32 accumulation) -> loosened tolerance vs f32 ref.
    assert jnp.allclose(out, ref, atol=2e-2, rtol=2e-2), (
        f"mismatch vs reference, max abs err {max_err}")

    print("KERNEL_OK")
</pallas_src>

<mosaic_0001>
module attributes {stable_mosaic.version = 11 : i64} {
  func.func @_block_kernel(%arg0: i32, %arg1: memref<64x128xf32, #tpu.memory_space<vmem>>, %arg2: memref<128x640xbf16, #tpu.memory_space<vmem>>, %arg3: memref<1x640xf32, #tpu.memory_space<vmem>>, %arg4: memref<128x512xbf16, #tpu.memory_space<vmem>>, %arg5: memref<64x128xf32, #tpu.memory_space<vmem>>, %arg6: memref<64x512xf32, #tpu.memory_space<vmem>>, %arg7: memref<64x128xf32, #tpu.memory_space<vmem>>, %arg8: memref<8x128xf32, #tpu.memory_space<vmem>>, %arg9: memref<8x128xf32, #tpu.memory_space<vmem>>) attributes {dimension_semantics = [#tpu.dimension_semantics<arbitrary>], iteration_bounds = array<i64: 1>, scalar_prefetch = 0 : i64, scratch_operands = 4 : i64, tpu.core_type = #tpu.core_type<tc>, window_params = [{transform_indices = @transform_0, window_bounds = array<i64: 64, 128>}, {pipeline_mode = #tpu.pipeline_mode<synchronous>, transform_indices = @transform_1, window_bounds = array<i64: 128, 640>}, {pipeline_mode = #tpu.pipeline_mode<synchronous>, transform_indices = @transform_2, window_bounds = array<i64: 1, 640>}, {pipeline_mode = #tpu.pipeline_mode<synchronous>, transform_indices = @transform_3, window_bounds = array<i64: 128, 512>}, {transform_indices = @transform_4, window_bounds = array<i64: 64, 128>}]} {
    %c0 = arith.constant 0 : index
    %c0_0 = arith.constant 0 : index
    %0 = vector.load %arg1[%c0, %c0_0] : memref<64x128xf32, #tpu.memory_space<vmem>>, vector<64x128xf32>
    %1 = arith.truncf %0 : vector<64x128xf32> to vector<64x128xbf16>
    %c0_1 = arith.constant 0 : index
    %c0_2 = arith.constant 0 : index
    %2 = vector.load %arg2[%c0_1, %c0_2] : memref<128x640xbf16, #tpu.memory_space<vmem>>, vector<128x640xbf16>
    %cst = arith.constant dense<0.000000e+00> : vector<64x640xf32>
    %3 = tpu.matmul %1, %2, %cst {dimension_numbers = #tpu.dot_dimension_numbers<[1], [0], [0], [1], [0, 0, 1, 1], [], []>} : vector<64x128xbf16>, vector<128x640xbf16>, vector<64x640xf32> -> vector<64x640xf32>
    %c0_3 = arith.constant 0 : index
    %c0_4 = arith.constant 0 : index
    %4 = vector.load %arg3[%c0_3, %c0_4] : memref<1x640xf32, #tpu.memory_space<vmem>>, vector<1x640xf32>
    %5 = vector.broadcast %4 : vector<1x640xf32> to vector<64x640xf32>
    %6 = arith.addf %3, %5 : vector<64x640xf32>
    %7 = vector.extract_strided_slice %6 {offsets = [0, 0], sizes = [64, 512], strides = [1, 1]} : vector<64x640xf32> to vector<64x512xf32>
    %c0_5 = arith.constant 0 : index
    %c0_6 = arith.constant 0 : index
    %8 = vector.load %arg6[%c0_5, %c0_6] : memref<64x512xf32, #tpu.memory_space<vmem>>, vector<64x512xf32>
    tpu.vector_store %arg6[%c0_5, %c0_6], %7 {strides = array<i32>} : memref<64x512xf32, #tpu.memory_space<vmem>>, vector<64x512xf32>,
    %9 = vector.extract_strided_slice %6 {offsets = [0, 512], sizes = [64, 128], strides = [1, 1]} : vector<64x640xf32> to vector<64x128xf32>
    %c0_7 = arith.constant 0 : index
    %c0_8 = arith.constant 0 : index
    %10 = vector.load %arg7[%c0_7, %c0_8] : memref<64x128xf32, #tpu.memory_space<vmem>>, vector<64x128xf32>
    tpu.vector_store %arg7[%c0_7, %c0_8], %9 {strides = array<i32>} : memref<64x128xf32, #tpu.memory_space<vmem>>, vector<64x128xf32>,
    %c0_i32 = arith.constant 0 : i32
    %11 = arith.cmpi eq, %arg0, %c0_i32 : i32
    %12 = arith.extui %11 : i1 to i32
    %c0_i32_9 = arith.constant 0 : i32
    %13 = arith.cmpi ne, %12, %c0_i32_9 : i32
    scf.if %13 {
      %cst_99 = arith.constant 0.000000e+00 : f32
      %322 = vector.broadcast %cst_99 : f32 to vector<8x128xf32>
      %c0_100 = arith.constant 0 : index
      %c0_101 = arith.constant 0 : index
      %323 = vector.load %arg8[%c0_100, %c0_101] : memref<8x128xf32, #tpu.memory_space<vmem>>, vector<8x128xf32>
      tpu.vector_store %arg8[%c0_100, %c0_101], %322 {strides = array<i32>} : memref<8x128xf32, #tpu.memory_space<vmem>>, vector<8x128xf32>,
      %cst_102 = arith.constant 0.000000e+00 : f32
      %324 = vector.broadcast %cst_102 : f32 to vector<8x128xf32>
      %c0_103 = arith.constant 0 : index
      %c0_104 = arith.constant 0 : index
      %325 = vector.load %arg9[%c0_103, %c0_104] : memref<8x128xf32, #tpu.memory_space<vmem>>, vector<8x128xf32>
      tpu.vector_store %arg9[%c0_103, %c0_104], %324 {strides = array<i32>} : memref<8x128xf32, #tpu.memory_space<vmem>>, vector<8x128xf32>,
    } else {
    }
    %c0_10 = arith.constant 0 : index
    %c0_11 = arith.constant 0 : index
    %14 = vector.load %arg8[%c0_10, %c0_11] : memref<8x128xf32, #tpu.memory_space<vmem>>, vector<8x128xf32>
    %c0_12 = arith.constant 0 : index
    %c0_13 = arith.constant 0 : index
    %15 = vector.load %arg9[%c0_12, %c0_13] : memref<8x128xf32, #tpu.memory_space<vmem>>, vector<8x128xf32>
    %c0_i32_14 = arith.constant 0 : i32
    %c8_i32 = arith.constant 8 : i32
    %16 = arith.muli %c0_i32_14, %c8_i32 : i32
    %17 = tpu.assume_multiple %16, 8 : i32
    %18 = arith.index_cast %17 : i32 to index
    %c0_15 = arith.constant 0 : index
    %19 = vector.load %arg6[%18, %c0_15] : memref<64x512xf32, #tpu.memory_space<vmem>>, vector<8x512xf32>
    %20 = arith.truncf %14 : vector<8x128xf32> to vector<8x128xbf16>
    %c0_16 = arith.constant 0 : index
    %c0_17 = arith.constant 0 : index
    %21 = vector.load %arg4[%c0_16, %c0_17] : memref<128x512xbf16, #tpu.memory_space<vmem>>, vector<128x512xbf16>
    %cst_18 = arith.constant dense<0.000000e+00> : vector<8x512xf32>
    %22 = tpu.matmul %20, %21, %cst_18 {dimension_numbers = #tpu.dot_dimension_numbers<[1], [0], [0], [1], [0, 0, 1, 1], [], []>} : vector<8x128xbf16>, vector<128x512xbf16>, vector<8x512xf32> -> vector<8x512xf32>
    %23 = arith.addf %19, %22 : vector<8x512xf32>
    %24 = vector.extract_strided_slice %23 {offsets = [0, 0], sizes = [8, 128], strides = [1, 1]} : vector<8x512xf32> to vector<8x128xf32>
    %25 = arith.negf %24 : vector<8x128xf32>
    %26 = math.exp %25 : vector<8x128xf32>
    %cst_19 = arith.constant 1.000000e+00 : f32
    %27 = vector.broadcast %cst_19 : f32 to vector<8x128xf32>
    %28 = arith.addf %27, %26 : vector<8x128xf32>
    %29 = arith.divf %27, %28 : vector<8x128xf32>
    %30 = vector.extract_strided_slice %23 {offsets = [0, 128], sizes = [8, 128], strides = [1, 1]} : vector<8x512xf32> to vector<8x128xf32>
    %31 = arith.negf %30 : vector<8x128xf32>
    %32 = math.exp %31 : vector<8x128xf32>
    %cst_20 = arith.constant 1.000000e+00 : f32
    %33 = vector.broadcast %cst_20 : f32 to vector<8x128xf32>
    %34 = arith.addf %33, %32 : vector<8x128xf32>
    %35 = arith.divf %33, %34 : vector<8x128xf32>
    %36 = vector.extract_strided_slice %23 {offsets = [0, 256], sizes = [8, 128], strides = [1, 1]} : vector<8x512xf32> to vector<8x128xf32>
    %37 = math.tanh %36 : vector<8x128xf32>
    %38 = vector.extract_strided_slice %23 {offsets = [0, 384], sizes = [8, 128], strides = [1, 1]} : vector<8x512xf32> to vector<8x128xf32>
    %39 = arith.negf %38 : vector<8x128xf32>
    %40 = math.exp %39 : vector<8x128xf32>
    %cst_21 = arith.constant 1.000000e+00 : f32
    %41 = vector.broadcast %cst_21 : f32 to vector<8x128xf32>
    %42 = arith.addf %41, %40 : vector<8x128xf32>
    %43 = arith.divf %41, %42 : vector<8x128xf32>
    %44 = arith.mulf %35, %15 : vector<8x128xf32>
    %45 = arith.mulf %29, %37 : vector<8x128xf32>
    %46 = arith.addf %44, %45 : vector<8x128xf32>
    %47 = math.tanh %46 : vector<8x128xf32>
    %48 = arith.mulf %43, %47 : vector<8x128xf32>
    %49 = arith.index_cast %17 : i32 to index
    %c0_22 = arith.constant 0 : index
    %50 = vector.load %arg7[%49, %c0_22] : memref<64x128xf32, #tpu.memory_space<vmem>>, vector<8x128xf32>
    %51 = arith.addf %48, %50 : vector<8x128xf32>
    %52 = arith.index_cast %17 : i32 to index
    %c0_23 = arith.constant 0 : index
    %53 = vector.load %arg5[%52, %c0_23] : memref<64x128xf32, #tpu.memory_space<vmem>>, vector<8x128xf32>
    tpu.vector_store %arg5[%52, %c0_23], %51 {strides = array<i32>} : memref<64x128xf32, #tpu.memory_space<vmem>>, vector<8x128xf32>,
    %c1_i32 = arith.constant 1 : i32
    %c8_i32_24 = arith.constant 8 : i32
    %54 = arith.muli %c1_i32, %c8_i32_24 : i32
    %55 = tpu.assume_multiple %54, 8 : i32
    %56 = arith.index_cast %55 : i32 to index
    %c0_25 = arith.constant 0 : index
    %57 = vector.load %arg6[%56, %c0_25] : memref<64x512xf32, #tpu.memory_space<vmem>>, vector<8x512xf32>
    %58 = arith.truncf %48 : vector<8x128xf32> to vector<8x128xbf16>
    %c0_26 = arith.constant 0 : index
    %c0_27 = arith.constant 0 : index
    %59 = vector.load %arg4[%c0_26, %c0_27] : memref<128x512xbf16, #tpu.memory_space<vmem>>, vector<128x512xbf16>
    %cst_28 = arith.constant dense<0.000000e+00> : vector<8x512xf32>
    %60 = tpu.matmul %58, %59, %cst_28 {dimension_numbers = #tpu.dot_dimension_numbers<[1], [0], [0], [1], [0, 0, 1, 1], [], []>} : vector<8x128xbf16>, vector<128x512xbf16>, vector<8x512xf32> -> vector<8x512xf32>
    %61 = arith.addf %57, %60 : vector<8x512xf32>
    %62 = vector.extract_strided_slice %61 {offsets = [0, 0], sizes = [8, 128], strides = [1, 1]} : vector<8x512xf32> to vector<8x128xf32>
    %63 = arith.negf %62 : vector<8x128xf32>
    %64 = math.exp %63 : vector<8x128xf32>
    %cst_29 = arith.constant 1.000000e+00 : f32
    %65 = vector.broadcast %cst_29 : f32 to vector<8x128xf32>
    %66 = arith.addf %65, %64 : vector<8x128xf32>
    %67 = arith.divf %65, %66 : vector<8x128xf32>
    %68 = vector.extract_strided_slice %61 {offsets = [0, 128], sizes = [8, 128], strides = [1, 1]} : vector<8x512xf32> to vector<8x128xf32>
    %69 = arith.negf %68 : vector<8x128xf32>
    %70 = math.exp %69 : vector<8x128xf32>
    %cst_30 = arith.constant 1.000000e+00 : f32
    %71 = vector.broadcast %cst_30 : f32 to vector<8x128xf32>
    %72 = arith.addf %71, %70 : vector<8x128xf32>
    %73 = arith.divf %71, %72 : vector<8x128xf32>
    %74 = vector.extract_strided_slice %61 {offsets = [0, 256], sizes = [8, 128], strides = [1, 1]} : vector<8x512xf32> to vector<8x128xf32>
    %75 = math.tanh %74 : vector<8x128xf32>
    %76 = vector.extract_strided_slice %61 {offsets = [0, 384], sizes = [8, 128], strides = [1, 1]} : vector<8x512xf32> to vector<8x128xf32>
    %77 = arith.negf %76 : vector<8x128xf32>
    %78 = math.exp %77 : vector<8x128xf32>
    %cst_31 = arith.constant 1.000000e+00 : f32
    %79 = vector.broadcast %cst_31 : f32 to vector<8x128xf32>
    %80 = arith.addf %79, %78 : vector<8x128xf32>
    %81 = arith.divf %79, %80 : vector<8x128xf32>
    %82 = arith.mulf %73, %46 : vector<8x128xf32>
    %83 = arith.mulf %67, %75 : vector<8x128xf32>
    %84 = arith.addf %82, %83 : vector<8x128xf32>
    %85 = math.tanh %84 : vector<8x128xf32>
    %86 = arith.mulf %81, %85 : vector<8x128xf32>
    %87 = arith.index_cast %55 : i32 to index
    %c0_32 = arith.constant 0 : index
    %88 = vector.load %arg7[%87, %c0_32] : memref<64x128xf32, #tpu.memory_space<vmem>>, vector<8x128xf32>
    %89 = arith.addf %86, %88 : vector<8x128xf32>
    %90 = arith.index_cast %55 : i32 to index
    %c0_33 = arith.constant 0 : index
    %91 = vector.load %arg5[%90, %c0_33] : memref<64x128xf32, #tpu.memory_space<vmem>>, vector<8x128xf32>
    tpu.vector_store %arg5[%90, %c0_33], %89 {strides = array<i32>} : memref<64x128xf32, #tpu.memory_space<vmem>>, vector<8x128xf32>,
    %c2_i32 = arith.constant 2 : i32
    %c8_i32_34 = arith.constant 8 : i32
    %92 = arith.muli %c2_i32, %c8_i32_34 : i32
    %93 = tpu.assume_multiple %92, 8 : i32
    %94 = arith.index_cast %93 : i32 to index
    %c0_35 = arith.constant 0 : index
    %95 = vector.load %arg6[%94, %c0_35] : memref<64x512xf32, #tpu.memory_space<vmem>>, vector<8x512xf32>
    %96 = arith.truncf %86 : vector<8x128xf32> to vector<8x128xbf16>
    %c0_36 = arith.constant 0 : index
    %c0_37 = arith.constant 0 : index
    %97 = vector.load %arg4[%c0_36, %c0_37] : memref<128x512xbf16, #tpu.memory_space<vmem>>, vector<128x512xbf16>
    %cst_38 = arith.constant dense<0.000000e+00> : vector<8x512xf32>
    %98 = tpu.matmul %96, %97, %cst_38 {dimension_numbers = #tpu.dot_dimension_numbers<[1], [0], [0], [1], [0, 0, 1, 1], [], []>} : vector<8x128xbf16>, vector<128x512xbf16>, vector<8x512xf32> -> vector<8x512xf32>
    %99 = arith.addf %95, %98 : vector<8x512xf32>
    %100 = vector.extract_strided_slice %99 {offsets = [0, 0], sizes = [8, 128], strides = [1, 1]} : vector<8x512xf32> to vector<8x128xf32>
    %101 = arith.negf %100 : vector<8x128xf32>
    %102 = math.exp %101 : vector<8x128xf32>
    %cst_39 = arith.constant 1.000000e+00 : f32
    %103 = vector.broadcast %cst_39 : f32 to vector<8x128xf32>
    %104 = arith.addf %103, %102 : vector<8x128xf32>
    %105 = arith.divf %103, %104 : vector<8x128xf32>
    %106 = vector.extract_strided_slice %99 {offsets = [0, 128], sizes = [8, 128], strides = [1, 1]} : vector<8x512xf32> to vector<8x128xf32>
    %107 = arith.negf %106 : vector<8x128xf32>
    %108 = math.exp %107 : vector<8x128xf32>
    %cst_40 = arith.constant 1.000000e+00 : f32
    %109 = vector.broadcast %cst_40 : f32 to vector<8x128xf32>
    %110 = arith.addf %109, %108 : vector<8x128xf32>
    %111 = arith.divf %109, %110 : vector<8x128xf32>
    %112 = vector.extract_strided_slice %99 {offsets = [0, 256], sizes = [8, 128], strides = [1, 1]} : vector<8x512xf32> to vector<8x128xf32>
    %113 = math.tanh %112 : vector<8x128xf32>
    %114 = vector.extract_strided_slice %99 {offsets = [0, 384], sizes = [8, 128], strides = [1, 1]} : vector<8x512xf32> to vector<8x128xf32>
    %115 = arith.negf %114 : vector<8x128xf32>
    %116 = math.exp %115 : vector<8x128xf32>
    %cst_41 = arith.constant 1.000000e+00 : f32
    %117 = vector.broadcast %cst_41 : f32 to vector<8x128xf32>
    %118 = arith.addf %117, %116 : vector<8x128xf32>
    %119 = arith.divf %117, %118 : vector<8x128xf32>
    %120 = arith.mulf %111, %84 : vector<8x128xf32>
    %121 = arith.mulf %105, %113 : vector<8x128xf32>
    %122 = arith.addf %120, %121 : vector<8x128xf32>
    %123 = math.tanh %122 : vector<8x128xf32>
    %124 = arith.mulf %119, %123 : vector<8x128xf32>
    %125 = arith.index_cast %93 : i32 to index
    %c0_42 = arith.constant 0 : index
    %126 = vector.load %arg7[%125, %c0_42] : memref<64x128xf32, #tpu.memory_space<vmem>>, vector<8x128xf32>
    %127 = arith.addf %124, %126 : vector<8x128xf32>
    %128 = arith.index_cast %93 : i32 to index
    %c0_43 = arith.constant 0 : index
    %129 = vector.load %arg5[%128, %c0_43] : memref<64x128xf32, #tpu.memory_space<vmem>>, vector<8x128xf32>
    tpu.vector_store %arg5[%128, %c0_43], %127 {strides = array<i32>} : memref<64x128xf32, #tpu.memory_space<vmem>>, vector<8x128xf32>,
    %c3_i32 = arith.constant 3 : i32
    %c8_i32_44 = arith.constant 8 : i32
    %130 = arith.muli %c3_i32, %c8_i32_44 : i32
    %131 = tpu.assume_multiple %130, 8 : i32
    %132 = arith.index_cast %131 : i32 to index
    %c0_45 = arith.constant 0 : index
    %133 = vector.load %arg6[%132, %c0_45] : memref<64x512xf32, #tpu.memory_space<vmem>>, vector<8x512xf32>
    %134 = arith.truncf %124 : vector<8x128xf32> to vector<8x128xbf16>
    %c0_46 = arith.constant 0 : index
    %c0_47 = arith.constant 0 : index
    %135 = vector.load %arg4[%c0_46, %c0_47] : memref<128x512xbf16, #tpu.memory_space<vmem>>, vector<128x512xbf16>
    %cst_48 = arith.constant dense<0.000000e+00> : vector<8x512xf32>
    %136 = tpu.matmul %134, %135, %cst_48 {dimension_numbers = #tpu.dot_dimension_numbers<[1], [0], [0], [1], [0, 0, 1, 1], [], []>} : vector<8x128xbf16>, vector<128x512xbf16>, vector<8x512xf32> -> vector<8x512xf32>
    %137 = arith.addf %133, %136 : vector<8x512xf32>
    %138 = vector.extract_strided_slice %137 {offsets = [0, 0], sizes = [8, 128], strides = [1, 1]} : vector<8x512xf32> to vector<8x128xf32>
    %139 = arith.negf %138 : vector<8x128xf32>
    %140 = math.exp %139 : vector<8x128xf32>
    %cst_49 = arith.constant 1.000000e+00 : f32
    %141 = vector.broadcast %cst_49 : f32 to vector<8x128xf32>
    %142 = arith.addf %141, %140 : vector<8x128xf32>
    %143 = arith.divf %141, %142 : vector<8x128xf32>
    %144 = vector.extract_strided_slice %137 {offsets = [0, 128], sizes = [8, 128], strides = [1, 1]} : vector<8x512xf32> to vector<8x128xf32>
    %145 = arith.negf %144 : vector<8x128xf32>
    %146 = math.exp %145 : vector<8x128xf32>
    %cst_50 = arith.constant 1.000000e+00 : f32
    %147 = vector.broadcast %cst_50 : f32 to vector<8x128xf32>
    %148 = arith.addf %147, %146 : vector<8x128xf32>
    %149 = arith.divf %147, %148 : vector<8x128xf32>
    %150 = vector.extract_strided_slice %137 {offsets = [0, 256], sizes = [8, 128], strides = [1, 1]} : vector<8x512xf32> to vector<8x128xf32>
    %151 = math.tanh %150 : vector<8x128xf32>
    %152 = vector.extract_strided_slice %137 {offsets = [0, 384], sizes = [8, 128], strides = [1, 1]} : vector<8x512xf32> to vector<8x128xf32>
    %153 = arith.negf %152 : vector<8x128xf32>
    %154 = math.exp %153 : vector<8x128xf32>
    %cst_51 = arith.constant 1.000000e+00 : f32
    %155 = vector.broadcast %cst_51 : f32 to vector<8x128xf32>
    %156 = arith.addf %155, %154 : vector<8x128xf32>
    %157 = arith.divf %155, %156 : vector<8x128xf32>
    %158 = arith.mulf %149, %122 : vector<8x128xf32>
    %159 = arith.mulf %143, %151 : vector<8x128xf32>
    %160 = arith.addf %158, %159 : vector<8x128xf32>
    %161 = math.tanh %160 : vector<8x128xf32>
    %162 = arith.mulf %157, %161 : vector<8x128xf32>
    %163 = arith.index_cast %131 : i32 to index
    %c0_52 = arith.constant 0 : index
    %164 = vector.load %arg7[%163, %c0_52] : memref<64x128xf32, #tpu.memory_space<vmem>>, vector<8x128xf32>
    %165 = arith.addf %162, %164 : vector<8x128xf32>
    %166 = arith.index_cast %131 : i32 to index
    %c0_53 = arith.constant 0 : index
    %167 = vector.load %arg5[%166, %c0_53] : memref<64x128xf32, #tpu.memory_space<vmem>>, vector<8x128xf32>
    tpu.vector_store %arg5[%166, %c0_53], %165 {strides = array<i32>} : memref<64x128xf32, #tpu.memory_space<vmem>>, vector<8x128xf32>,
    %c4_i32 = arith.constant 4 : i32
    %c8_i32_54 = arith.constant 8 : i32
    %168 = arith.muli %c4_i32, %c8_i32_54 : i32
    %169 = tpu.assume_multiple %168, 8 : i32
    %170 = arith.index_cast %169 : i32 to index
    %c0_55 = arith.constant 0 : index
    %171 = vector.load %arg6[%170, %c0_55] : memref<64x512xf32, #tpu.memory_space<vmem>>, vector<8x512xf32>
    %172 = arith.truncf %162 : vector<8x128xf32> to vector<8x128xbf16>
    %c0_56 = arith.constant 0 : index
    %c0_57 = arith.constant 0 : index
    %173 = vector.load %arg4[%c0_56, %c0_57] : memref<128x512xbf16, #tpu.memory_space<vmem>>, vector<128x512xbf16>
    %cst_58 = arith.constant dense<0.000000e+00> : vector<8x512xf32>
    %174 = tpu.matmul %172, %173, %cst_58 {dimension_numbers = #tpu.dot_dimension_numbers<[1], [0], [0], [1], [0, 0, 1, 1], [], []>} : vector<8x128xbf16>, vector<128x512xbf16>, vector<8x512xf32> -> vector<8x512xf32>
    %175 = arith.addf %171, %174 : vector<8x512xf32>
    %176 = vector.extract_strided_slice %175 {offsets = [0, 0], sizes = [8, 128], strides = [1, 1]} : vector<8x512xf32> to vector<8x128xf32>
    %177 = arith.negf %176 : vector<8x128xf32>
    %178 = math.exp %177 : vector<8x128xf32>
    %cst_59 = arith.constant 1.000000e+00 : f32
    %179 = vector.broadcast %cst_59 : f32 to vector<8x128xf32>
    %180 = arith.addf %179, %178 : vector<8x128xf32>
    %181 = arith.divf %179, %180 : vector<8x128xf32>
    %182 = vector.extract_strided_slice %175 {offsets = [0, 128], sizes = [8, 128], strides = [1, 1]} : vector<8x512xf32> to vector<8x128xf32>
    %183 = arith.negf %182 : vector<8x128xf32>
    %184 = math.exp %183 : vector<8x128xf32>
    %cst_60 = arith.constant 1.000000e+00 : f32
    %185 = vector.broadcast %cst_60 : f32 to vector<8x128xf32>
    %186 = arith.addf %185, %184 : vector<8x128xf32>
    %187 = arith.divf %185, %186 : vector<8x128xf32>
    %188 = vector.extract_strided_slice %175 {offsets = [0, 256], sizes = [8, 128], strides = [1, 1]} : vector<8x512xf32> to vector<8x128xf32>
    %189 = math.tanh %188 : vector<8x128xf32>
    %190 = vector.extract_strided_slice %175 {offsets = [0, 384], sizes = [8, 128], strides = [1, 1]} : vector<8x512xf32> to vector<8x128xf32>
    %191 = arith.negf %190 : vector<8x128xf32>
    %192 = math.exp %191 : vector<8x128xf32>
    %cst_61 = arith.constant 1.000000e+00 : f32
    %193 = vector.broadcast %cst_61 : f32 to vector<8x128xf32>
    %194 = arith.addf %193, %192 : vector<8x128xf32>
    %195 = arith.divf %193, %194 : vector<8x128xf32>
    %196 = arith.mulf %187, %160 : vector<8x128xf32>
    %197 = arith.mulf %181, %189 : vector<8x128xf32>
    %198 = arith.addf %196, %197 : vector<8x128xf32>
    %199 = math.tanh %198 : vector<8x128xf32>
    %200 = arith.mulf %195, %199 : vector<8x128xf32>
    %201 = arith.index_cast %169 : i32 to index
    %c0_62 = arith.constant 0 : index
    %202 = vector.load %arg7[%201, %c0_62] : memref<64x128xf32, #tpu.memory_space<vmem>>, vector<8x128xf32>
    %203 = arith.addf %200, %202 : vector<8x128xf32>
    %204 = arith.index_cast %169 : i32 to index
    %c0_63 = arith.constant 0 : index
    %205 = vector.load %arg5[%204, %c0_63] : memref<64x128xf32, #tpu.memory_space<vmem>>, vector<8x128xf32>
    tpu.vector_store %arg5[%204, %c0_63], %203 {strides = array<i32>} : memref<64x128xf32, #tpu.memory_space<vmem>>, vector<8x128xf32>,
    %c5_i32 = arith.constant 5 : i32
    %c8_i32_64 = arith.constant 8 : i32
    %206 = arith.muli %c5_i32, %c8_i32_64 : i32
    %207 = tpu.assume_multiple %206, 8 : i32
    %208 = arith.index_cast %207 : i32 to index
    %c0_65 = arith.constant 0 : index
    %209 = vector.load %arg6[%208, %c0_65] : memref<64x512xf32, #tpu.memory_space<vmem>>, vector<8x512xf32>
    %210 = arith.truncf %200 : vector<8x128xf32> to vector<8x128xbf16>
    %c0_66 = arith.constant 0 : index
    %c0_67 = arith.constant 0 : index
    %211 = vector.load %arg4[%c0_66, %c0_67] : memref<128x512xbf16, #tpu.memory_space<vmem>>, vector<128x512xbf16>
    %cst_68 = arith.constant dense<0.000000e+00> : vector<8x512xf32>
    %212 = tpu.matmul %210, %211, %cst_68 {dimension_numbers = #tpu.dot_dimension_numbers<[1], [0], [0], [1], [0, 0, 1, 1], [], []>} : vector<8x128xbf16>, vector<128x512xbf16>, vector<8x512xf32> -> vector<8x512xf32>
    %213 = arith.addf %209, %212 : vector<8x512xf32>
    %214 = vector.extract_strided_slice %213 {offsets = [0, 0], sizes = [8, 128], strides = [1, 1]} : vector<8x512xf32> to vector<8x128xf32>
    %215 = arith.negf %214 : vector<8x128xf32>
    %216 = math.exp %215 : vector<8x128xf32>
    %cst_69 = arith.constant 1.000000e+00 : f32
    %217 = vector.broadcast %cst_69 : f32 to vector<8x128xf32>
    %218 = arith.addf %217, %216 : vector<8x128xf32>
    %219 = arith.divf %217, %218 : vector<8x128xf32>
    %220 = vector.extract_strided_slice %213 {offsets = [0, 128], sizes = [8, 128], strides = [1, 1]} : vector<8x512xf32> to vector<8x128xf32>
    %221 = arith.negf %220 : vector<8x128xf32>
    %222 = math.exp %221 : vector<8x128xf32>
    %cst_70 = arith.constant 1.000000e+00 : f32
    %223 = vector.broadcast %cst_70 : f32 to vector<8x128xf32>
    %224 = arith.addf %223, %222 : vector<8x128xf32>
    %225 = arith.divf %223, %224 : vector<8x128xf32>
    %226 = vector.extract_strided_slice %213 {offsets = [0, 256], sizes = [8, 128], strides = [1, 1]} : vector<8x512xf32> to vector<8x128xf32>
    %227 = math.tanh %226 : vector<8x128xf32>
    %228 = vector.extract_strided_slice %213 {offsets = [0, 384], sizes = [8, 128], strides = [1, 1]} : vector<8x512xf32> to vector<8x128xf32>
    %229 = arith.negf %228 : vector<8x128xf32>
    %230 = math.exp %229 : vector<8x128xf32>
    %cst_71 = arith.constant 1.000000e+00 : f32
    %231 = vector.broadcast %cst_71 : f32 to vector<8x128xf32>
    %232 = arith.addf %231, %230 : vector<8x128xf32>
    %233 = arith.divf %231, %232 : vector<8x128xf32>
    %234 = arith.mulf %225, %198 : vector<8x128xf32>
    %235 = arith.mulf %219, %227 : vector<8x128xf32>
    %236 = arith.addf %234, %235 : vector<8x128xf32>
    %237 = math.tanh %236 : vector<8x128xf32>
    %238 = arith.mulf %233, %237 : vector<8x128xf32>
    %239 = arith.index_cast %207 : i32 to index
    %c0_72 = arith.constant 0 : index
    %240 = vector.load %arg7[%239, %c0_72] : memref<64x128xf32, #tpu.memory_space<vmem>>, vector<8x128xf32>
    %241 = arith.addf %238, %240 : vector<8x128xf32>
    %242 = arith.index_cast %207 : i32 to index
    %c0_73 = arith.constant 0 : index
    %243 = vector.load %arg5[%242, %c0_73] : memref<64x128xf32, #tpu.memory_space<vmem>>, vector<8x128xf32>
    tpu.vector_store %arg5[%242, %c0_73], %241 {strides = array<i32>} : memref<64x128xf32, #tpu.memory_space<vmem>>, vector<8x128xf32>,
    %c6_i32 = arith.constant 6 : i32
    %c8_i32_74 = arith.constant 8 : i32
    %244 = arith.muli %c6_i32, %c8_i32_74 : i32
    %245 = tpu.assume_multiple %244, 8 : i32
    %246 = arith.index_cast %245 : i32 to index
    %c0_75 = arith.constant 0 : index
    %247 = vector.load %arg6[%246, %c0_75] : memref<64x512xf32, #tpu.memory_space<vmem>>, vector<8x512xf32>
    %248 = arith.truncf %238 : vector<8x128xf32> to vector<8x128xbf16>
    %c0_76 = arith.constant 0 : index
    %c0_77 = arith.constant 0 : index
    %249 = vector.load %arg4[%c0_76, %c0_77] : memref<128x512xbf16, #tpu.memory_space<vmem>>, vector<128x512xbf16>
    %cst_78 = arith.constant dense<0.000000e+00> : vector<8x512xf32>
    %250 = tpu.matmul %248, %249, %cst_78 {dimension_numbers = #tpu.dot_dimension_numbers<[1], [0], [0], [1], [0, 0, 1, 1], [], []>} : vector<8x128xbf16>, vector<128x512xbf16>, vector<8x512xf32> -> vector<8x512xf32>
    %251 = arith.addf %247, %250 : vector<8x512xf32>
    %252 = vector.extract_strided_slice %251 {offsets = [0, 0], sizes = [8, 128], strides = [1, 1]} : vector<8x512xf32> to vector<8x128xf32>
    %253 = arith.negf %252 : vector<8x128xf32>
    %254 = math.exp %253 : vector<8x128xf32>
    %cst_79 = arith.constant 1.000000e+00 : f32
    %255 = vector.broadcast %cst_79 : f32 to vector<8x128xf32>
    %256 = arith.addf %255, %254 : vector<8x128xf32>
    %257 = arith.divf %255, %256 : vector<8x128xf32>
    %258 = vector.extract_strided_slice %251 {offsets = [0, 128], sizes = [8, 128], strides = [1, 1]} : vector<8x512xf32> to vector<8x128xf32>
    %259 = arith.negf %258 : vector<8x128xf32>
    %260 = math.exp %259 : vector<8x128xf32>
    %cst_80 = arith.constant 1.000000e+00 : f32
    %261 = vector.broadcast %cst_80 : f32 to vector<8x128xf32>
    %262 = arith.addf %261, %260 : vector<8x128xf32>
    %263 = arith.divf %261, %262 : vector<8x128xf32>
    %264 = vector.extract_strided_slice %251 {offsets = [0, 256], sizes = [8, 128], strides = [1, 1]} : vector<8x512xf32> to vector<8x128xf32>
    %265 = math.tanh %264 : vector<8x128xf32>
    %266 = vector.extract_strided_slice %251 {offsets = [0, 384], sizes = [8, 128], strides = [1, 1]} : vector<8x512xf32> to vector<8x128xf32>
    %267 = arith.negf %266 : vector<8x128xf32>
    %268 = math.exp %267 : vector<8x128xf32>
    %cst_81 = arith.constant 1.000000e+00 : f32
    %269 = vector.broadcast %cst_81 : f32 to vector<8x128xf32>
    %270 = arith.addf %269, %268 : vector<8x128xf32>
    %271 = arith.divf %269, %270 : vector<8x128xf32>
    %272 = arith.mulf %263, %236 : vector<8x128xf32>
    %273 = arith.mulf %257, %265 : vector<8x128xf32>
    %274 = arith.addf %272, %273 : vector<8x128xf32>
    %275 = math.tanh %274 : vector<8x128xf32>
    %276 = arith.mulf %271, %275 : vector<8x128xf32>
    %277 = arith.index_cast %245 : i32 to index
    %c0_82 = arith.constant 0 : index
    %278 = vector.load %arg7[%277, %c0_82] : memref<64x128xf32, #tpu.memory_space<vmem>>, vector<8x128xf32>
    %279 = arith.addf %276, %278 : vector<8x128xf32>
    %280 = arith.index_cast %245 : i32 to index
    %c0_83 = arith.constant 0 : index
    %281 = vector.load %arg5[%280, %c0_83] : memref<64x128xf32, #tpu.memory_space<vmem>>, vector<8x128xf32>
    tpu.vector_store %arg5[%280, %c0_83], %279 {strides = array<i32>} : memref<64x128xf32, #tpu.memory_space<vmem>>, vector<8x128xf32>,
    %c7_i32 = arith.constant 7 : i32
    %c8_i32_84 = arith.constant 8 : i32
    %282 = arith.muli %c7_i32, %c8_i32_84 : i32
    %283 = tpu.assume_multiple %282, 8 : i32
    %284 = arith.index_cast %283 : i32 to index
    %c0_85 = arith.constant 0 : index
    %285 = vector.load %arg6[%284, %c0_85] : memref<64x512xf32, #tpu.memory_space<vmem>>, vector<8x512xf32>
    %286 = arith.truncf %276 : vector<8x128xf32> to vector<8x128xbf16>
    %c0_86 = arith.constant 0 : index
    %c0_87 = arith.constant 0 : index
    %287 = vector.load %arg4[%c0_86, %c0_87] : memref<128x512xbf16, #tpu.memory_space<vmem>>, vector<128x512xbf16>
    %cst_88 = arith.constant dense<0.000000e+00> : vector<8x512xf32>
    %288 = tpu.matmul %286, %287, %cst_88 {dimension_numbers = #tpu.dot_dimension_numbers<[1], [0], [0], [1], [0, 0, 1, 1], [], []>} : vector<8x128xbf16>, vector<128x512xbf16>, vector<8x512xf32> -> vector<8x512xf32>
    %289 = arith.addf %285, %288 : vector<8x512xf32>
    %290 = vector.extract_strided_slice %289 {offsets = [0, 0], sizes = [8, 128], strides = [1, 1]} : vector<8x512xf32> to vector<8x128xf32>
    %291 = arith.negf %290 : vector<8x128xf32>
    %292 = math.exp %291 : vector<8x128xf32>
    %cst_89 = arith.constant 1.000000e+00 : f32
    %293 = vector.broadcast %cst_89 : f32 to vector<8x128xf32>
    %294 = arith.addf %293, %292 : vector<8x128xf32>
    %295 = arith.divf %293, %294 : vector<8x128xf32>
    %296 = vector.extract_strided_slice %289 {offsets = [0, 128], sizes = [8, 128], strides = [1, 1]} : vector<8x512xf32> to vector<8x128xf32>
    %297 = arith.negf %296 : vector<8x128xf32>
    %298 = math.exp %297 : vector<8x128xf32>
    %cst_90 = arith.constant 1.000000e+00 : f32
    %299 = vector.broadcast %cst_90 : f32 to vector<8x128xf32>
    %300 = arith.addf %299, %298 : vector<8x128xf32>
    %301 = arith.divf %299, %300 : vector<8x128xf32>
    %302 = vector.extract_strided_slice %289 {offsets = [0, 256], sizes = [8, 128], strides = [1, 1]} : vector<8x512xf32> to vector<8x128xf32>
    %303 = math.tanh %302 : vector<8x128xf32>
    %304 = vector.extract_strided_slice %289 {offsets = [0, 384], sizes = [8, 128], strides = [1, 1]} : vector<8x512xf32> to vector<8x128xf32>
    %305 = arith.negf %304 : vector<8x128xf32>
    %306 = math.exp %305 : vector<8x128xf32>
    %cst_91 = arith.constant 1.000000e+00 : f32
    %307 = vector.broadcast %cst_91 : f32 to vector<8x128xf32>
    %308 = arith.addf %307, %306 : vector<8x128xf32>
    %309 = arith.divf %307, %308 : vector<8x128xf32>
    %310 = arith.mulf %301, %274 : vector<8x128xf32>
    %311 = arith.mulf %295, %303 : vector<8x128xf32>
    %312 = arith.addf %310, %311 : vector<8x128xf32>
    %313 = math.tanh %312 : vector<8x128xf32>
    %314 = arith.mulf %309, %313 : vector<8x128xf32>
    %315 = arith.index_cast %283 : i32 to index
    %c0_92 = arith.constant 0 : index
    %316 = vector.load %arg7[%315, %c0_92] : memref<64x128xf32, #tpu.memory_space<vmem>>, vector<8x128xf32>
    %317 = arith.addf %314, %316 : vector<8x128xf32>
    %318 = arith.index_cast %283 : i32 to index
    %c0_93 = arith.constant 0 : index
    %319 = vector.load %arg5[%318, %c0_93] : memref<64x128xf32, #tpu.memory_space<vmem>>, vector<8x128xf32>
    tpu.vector_store %arg5[%318, %c0_93], %317 {strides = array<i32>} : memref<64x128xf32, #tpu.memory_space<vmem>>, vector<8x128xf32>,
    %c8_i32_94 = arith.constant 8 : i32
    %c0_95 = arith.constant 0 : index
    %c0_96 = arith.constant 0 : index
    %320 = vector.load %arg8[%c0_95, %c0_96] : memref<8x128xf32, #tpu.memory_space<vmem>>, vector<8x128xf32>
    tpu.vector_store %arg8[%c0_95, %c0_96], %314 {strides = array<i32>} : memref<8x128xf32, #tpu.memory_space<vmem>>, vector<8x128xf32>,
    %c0_97 = arith.constant 0 : index
    %c0_98 = arith.constant 0 : index
    %321 = vector.load %arg9[%c0_97, %c0_98] : memref<8x128xf32, #tpu.memory_space<vmem>>, vector<8x128xf32>
    tpu.vector_store %arg9[%c0_97, %c0_98], %312 {strides = array<i32>} : memref<8x128xf32, #tpu.memory_space<vmem>>, vector<8x128xf32>,
    return
  }
  func.func @transform_0(%arg0: i32) -> (i32, i32) {
    %c0_i32 = arith.constant 0 : i32
    %c0_i32_0 = arith.constant 0 : i32
    return %arg0, %c0_i32 : i32, i32
  }
  func.func @transform_1(%arg0: i32) -> (i32, i32) {
    %c0_i32 = arith.constant 0 : i32
    %c0_i32_0 = arith.constant 0 : i32
    %c0_i32_1 = arith.constant 0 : i32
    return %c0_i32, %c0_i32_0 : i32, i32
  }
  func.func @transform_2(%arg0: i32) -> (i32, i32) {
    %c0_i32 = arith.constant 0 : i32
    %c0_i32_0 = arith.constant 0 : i32
    %c0_i32_1 = arith.constant 0 : i32
    return %c0_i32, %c0_i32_0 : i32, i32
  }
  func.func @transform_3(%arg0: i32) -> (i32, i32) {
    %c0_i32 = arith.constant 0 : i32
    %c0_i32_0 = arith.constant 0 : i32
    %c0_i32_1 = arith.constant 0 : i32
    return %c0_i32, %c0_i32_0 : i32, i32
  }
  func.func @transform_4(%arg0: i32) -> (i32, i32) {
    %c0_i32 = arith.constant 0 : i32
    %c0_i32_0 = arith.constant 0 : i32
    return %arg0, %c0_i32 : i32, i32
  }
}

module attributes {stable_mosaic.version = 11 : i64} {
  func.func @_block_kernel(%arg0: i32, %arg1: memref<64x16xf32, #tpu.memory_space<vmem>>, %arg2: memref<16x640xbf16, #tpu.memory_space<vmem>>, %arg3: memref<1x640xf32, #tpu.memory_space<vmem>>, %arg4: memref<128x512xbf16, #tpu.memory_space<vmem>>, %arg5: memref<64x128xf32, #tpu.memory_space<vmem>>, %arg6: memref<64x512xf32, #tpu.memory_space<vmem>>, %arg7: memref<64x128xf32, #tpu.memory_space<vmem>>, %arg8: memref<8x128xf32, #tpu.memory_space<vmem>>, %arg9: memref<8x128xf32, #tpu.memory_space<vmem>>) attributes {dimension_semantics = [#tpu.dimension_semantics<arbitrary>], iteration_bounds = array<i64: 1>, scalar_prefetch = 0 : i64, scratch_operands = 4 : i64, tpu.core_type = #tpu.core_type<tc>, window_params = [{transform_indices = @transform_0, window_bounds = array<i64: 64, 16>}, {pipeline_mode = #tpu.pipeline_mode<synchronous>, transform_indices = @transform_1, window_bounds = array<i64: 16, 640>}, {pipeline_mode = #tpu.pipeline_mode<synchronous>, transform_indices = @transform_2, window_bounds = array<i64: 1, 640>}, {pipeline_mode = #tpu.pipeline_mode<synchronous>, transform_indices = @transform_3, window_bounds = array<i64: 128, 512>}, {transform_indices = @transform_4, window_bounds = array<i64: 64, 128>}]} {
    %c0 = arith.constant 0 : index
    %c0_0 = arith.constant 0 : index
    %0 = vector.load %arg1[%c0, %c0_0] : memref<64x16xf32, #tpu.memory_space<vmem>>, vector<64x16xf32>
    %1 = arith.truncf %0 : vector<64x16xf32> to vector<64x16xbf16>
    %c0_1 = arith.constant 0 : index
    %c0_2 = arith.constant 0 : index
    %2 = vector.load %arg2[%c0_1, %c0_2] : memref<16x640xbf16, #tpu.memory_space<vmem>>, vector<16x640xbf16>
    %cst = arith.constant dense<0.000000e+00> : vector<64x640xf32>
    %3 = tpu.matmul %1, %2, %cst {dimension_numbers = #tpu.dot_dimension_numbers<[1], [0], [0], [1], [0, 0, 1, 1], [], []>} : vector<64x16xbf16>, vector<16x640xbf16>, vector<64x640xf32> -> vector<64x640xf32>
    %c0_3 = arith.constant 0 : index
    %c0_4 = arith.constant 0 : index
    %4 = vector.load %arg3[%c0_3, %c0_4] : memref<1x640xf32, #tpu.memory_space<vmem>>, vector<1x640xf32>
    %5 = vector.broadcast %4 : vector<1x640xf32> to vector<64x640xf32>
    %6 = arith.addf %3, %5 : vector<64x640xf32>
    %7 = vector.extract_strided_slice %6 {offsets = [0, 0], sizes = [64, 512], strides = [1, 1]} : vector<64x640xf32> to vector<64x512xf32>
    %c0_5 = arith.constant 0 : index
    %c0_6 = arith.constant 0 : index
    %8 = vector.load %arg6[%c0_5, %c0_6] : memref<64x512xf32, #tpu.memory_space<vmem>>, vector<64x512xf32>
    tpu.vector_store %arg6[%c0_5, %c0_6], %7 {strides = array<i32>} : memref<64x512xf32, #tpu.memory_space<vmem>>, vector<64x512xf32>,
    %9 = vector.extract_strided_slice %6 {offsets = [0, 512], sizes = [64, 128], strides = [1, 1]} : vector<64x640xf32> to vector<64x128xf32>
    %c0_7 = arith.constant 0 : index
    %c0_8 = arith.constant 0 : index
    %10 = vector.load %arg7[%c0_7, %c0_8] : memref<64x128xf32, #tpu.memory_space<vmem>>, vector<64x128xf32>
    tpu.vector_store %arg7[%c0_7, %c0_8], %9 {strides = array<i32>} : memref<64x128xf32, #tpu.memory_space<vmem>>, vector<64x128xf32>,
    %c0_i32 = arith.constant 0 : i32
    %11 = arith.cmpi eq, %arg0, %c0_i32 : i32
    %12 = arith.extui %11 : i1 to i32
    %c0_i32_9 = arith.constant 0 : i32
    %13 = arith.cmpi ne, %12, %c0_i32_9 : i32
    scf.if %13 {
      %cst_99 = arith.constant 0.000000e+00 : f32
      %322 = vector.broadcast %cst_99 : f32 to vector<8x128xf32>
      %c0_100 = arith.constant 0 : index
      %c0_101 = arith.constant 0 : index
      %323 = vector.load %arg8[%c0_100, %c0_101] : memref<8x128xf32, #tpu.memory_space<vmem>>, vector<8x128xf32>
      tpu.vector_store %arg8[%c0_100, %c0_101], %322 {strides = array<i32>} : memref<8x128xf32, #tpu.memory_space<vmem>>, vector<8x128xf32>,
      %cst_102 = arith.constant 0.000000e+00 : f32
      %324 = vector.broadcast %cst_102 : f32 to vector<8x128xf32>
      %c0_103 = arith.constant 0 : index
      %c0_104 = arith.constant 0 : index
      %325 = vector.load %arg9[%c0_103, %c0_104] : memref<8x128xf32, #tpu.memory_space<vmem>>, vector<8x128xf32>
      tpu.vector_store %arg9[%c0_103, %c0_104], %324 {strides = array<i32>} : memref<8x128xf32, #tpu.memory_space<vmem>>, vector<8x128xf32>,
    } else {
    }
    %c0_10 = arith.constant 0 : index
    %c0_11 = arith.constant 0 : index
    %14 = vector.load %arg8[%c0_10, %c0_11] : memref<8x128xf32, #tpu.memory_space<vmem>>, vector<8x128xf32>
    %c0_12 = arith.constant 0 : index
    %c0_13 = arith.constant 0 : index
    %15 = vector.load %arg9[%c0_12, %c0_13] : memref<8x128xf32, #tpu.memory_space<vmem>>, vector<8x128xf32>
    %c0_i32_14 = arith.constant 0 : i32
    %c8_i32 = arith.constant 8 : i32
    %16 = arith.muli %c0_i32_14, %c8_i32 : i32
    %17 = tpu.assume_multiple %16, 8 : i32
    %18 = arith.index_cast %17 : i32 to index
    %c0_15 = arith.constant 0 : index
    %19 = vector.load %arg6[%18, %c0_15] : memref<64x512xf32, #tpu.memory_space<vmem>>, vector<8x512xf32>
    %20 = arith.truncf %14 : vector<8x128xf32> to vector<8x128xbf16>
    %c0_16 = arith.constant 0 : index
    %c0_17 = arith.constant 0 : index
    %21 = vector.load %arg4[%c0_16, %c0_17] : memref<128x512xbf16, #tpu.memory_space<vmem>>, vector<128x512xbf16>
    %cst_18 = arith.constant dense<0.000000e+00> : vector<8x512xf32>
    %22 = tpu.matmul %20, %21, %cst_18 {dimension_numbers = #tpu.dot_dimension_numbers<[1], [0], [0], [1], [0, 0, 1, 1], [], []>} : vector<8x128xbf16>, vector<128x512xbf16>, vector<8x512xf32> -> vector<8x512xf32>
    %23 = arith.addf %19, %22 : vector<8x512xf32>
    %24 = vector.extract_strided_slice %23 {offsets = [0, 0], sizes = [8, 128], strides = [1, 1]} : vector<8x512xf32> to vector<8x128xf32>
    %25 = arith.negf %24 : vector<8x128xf32>
    %26 = math.exp %25 : vector<8x128xf32>
    %cst_19 = arith.constant 1.000000e+00 : f32
    %27 = vector.broadcast %cst_19 : f32 to vector<8x128xf32>
    %28 = arith.addf %27, %26 : vector<8x128xf32>
    %29 = arith.divf %27, %28 : vector<8x128xf32>
    %30 = vector.extract_strided_slice %23 {offsets = [0, 128], sizes = [8, 128], strides = [1, 1]} : vector<8x512xf32> to vector<8x128xf32>
    %31 = arith.negf %30 : vector<8x128xf32>
    %32 = math.exp %31 : vector<8x128xf32>
    %cst_20 = arith.constant 1.000000e+00 : f32
    %33 = vector.broadcast %cst_20 : f32 to vector<8x128xf32>
    %34 = arith.addf %33, %32 : vector<8x128xf32>
    %35 = arith.divf %33, %34 : vector<8x128xf32>
    %36 = vector.extract_strided_slice %23 {offsets = [0, 256], sizes = [8, 128], strides = [1, 1]} : vector<8x512xf32> to vector<8x128xf32>
    %37 = math.tanh %36 : vector<8x128xf32>
    %38 = vector.extract_strided_slice %23 {offsets = [0, 384], sizes = [8, 128], strides = [1, 1]} : vector<8x512xf32> to vector<8x128xf32>
    %39 = arith.negf %38 : vector<8x128xf32>
    %40 = math.exp %39 : vector<8x128xf32>
    %cst_21 = arith.constant 1.000000e+00 : f32
    %41 = vector.broadcast %cst_21 : f32 to vector<8x128xf32>
    %42 = arith.addf %41, %40 : vector<8x128xf32>
    %43 = arith.divf %41, %42 : vector<8x128xf32>
    %44 = arith.mulf %35, %15 : vector<8x128xf32>
    %45 = arith.mulf %29, %37 : vector<8x128xf32>
    %46 = arith.addf %44, %45 : vector<8x128xf32>
    %47 = math.tanh %46 : vector<8x128xf32>
    %48 = arith.mulf %43, %47 : vector<8x128xf32>
    %49 = arith.index_cast %17 : i32 to index
    %c0_22 = arith.constant 0 : index
    %50 = vector.load %arg7[%49, %c0_22] : memref<64x128xf32, #tpu.memory_space<vmem>>, vector<8x128xf32>
    %51 = arith.addf %48, %50 : vector<8x128xf32>
    %52 = arith.index_cast %17 : i32 to index
    %c0_23 = arith.constant 0 : index
    %53 = vector.load %arg5[%52, %c0_23] : memref<64x128xf32, #tpu.memory_space<vmem>>, vector<8x128xf32>
    tpu.vector_store %arg5[%52, %c0_23], %51 {strides = array<i32>} : memref<64x128xf32, #tpu.memory_space<vmem>>, vector<8x128xf32>,
    %c1_i32 = arith.constant 1 : i32
    %c8_i32_24 = arith.constant 8 : i32
    %54 = arith.muli %c1_i32, %c8_i32_24 : i32
    %55 = tpu.assume_multiple %54, 8 : i32
    %56 = arith.index_cast %55 : i32 to index
    %c0_25 = arith.constant 0 : index
    %57 = vector.load %arg6[%56, %c0_25] : memref<64x512xf32, #tpu.memory_space<vmem>>, vector<8x512xf32>
    %58 = arith.truncf %48 : vector<8x128xf32> to vector<8x128xbf16>
    %c0_26 = arith.constant 0 : index
    %c0_27 = arith.constant 0 : index
    %59 = vector.load %arg4[%c0_26, %c0_27] : memref<128x512xbf16, #tpu.memory_space<vmem>>, vector<128x512xbf16>
    %cst_28 = arith.constant dense<0.000000e+00> : vector<8x512xf32>
    %60 = tpu.matmul %58, %59, %cst_28 {dimension_numbers = #tpu.dot_dimension_numbers<[1], [0], [0], [1], [0, 0, 1, 1], [], []>} : vector<8x128xbf16>, vector<128x512xbf16>, vector<8x512xf32> -> vector<8x512xf32>
    %61 = arith.addf %57, %60 : vector<8x512xf32>
    %62 = vector.extract_strided_slice %61 {offsets = [0, 0], sizes = [8, 128], strides = [1, 1]} : vector<8x512xf32> to vector<8x128xf32>
    %63 = arith.negf %62 : vector<8x128xf32>
    %64 = math.exp %63 : vector<8x128xf32>
    %cst_29 = arith.constant 1.000000e+00 : f32
    %65 = vector.broadcast %cst_29 : f32 to vector<8x128xf32>
    %66 = arith.addf %65, %64 : vector<8x128xf32>
    %67 = arith.divf %65, %66 : vector<8x128xf32>
    %68 = vector.extract_strided_slice %61 {offsets = [0, 128], sizes = [8, 128], strides = [1, 1]} : vector<8x512xf32> to vector<8x128xf32>
    %69 = arith.negf %68 : vector<8x128xf32>
    %70 = math.exp %69 : vector<8x128xf32>
    %cst_30 = arith.constant 1.000000e+00 : f32
    %71 = vector.broadcast %cst_30 : f32 to vector<8x128xf32>
    %72 = arith.addf %71, %70 : vector<8x128xf32>
    %73 = arith.divf %71, %72 : vector<8x128xf32>
    %74 = vector.extract_strided_slice %61 {offsets = [0, 256], sizes = [8, 128], strides = [1, 1]} : vector<8x512xf32> to vector<8x128xf32>
    %75 = math.tanh %74 : vector<8x128xf32>
    %76 = vector.extract_strided_slice %61 {offsets = [0, 384], sizes = [8, 128], strides = [1, 1]} : vector<8x512xf32> to vector<8x128xf32>
    %77 = arith.negf %76 : vector<8x128xf32>
    %78 = math.exp %77 : vector<8x128xf32>
    %cst_31 = arith.constant 1.000000e+00 : f32
    %79 = vector.broadcast %cst_31 : f32 to vector<8x128xf32>
    %80 = arith.addf %79, %78 : vector<8x128xf32>
    %81 = arith.divf %79, %80 : vector<8x128xf32>
    %82 = arith.mulf %73, %46 : vector<8x128xf32>
    %83 = arith.mulf %67, %75 : vector<8x128xf32>
    %84 = arith.addf %82, %83 : vector<8x128xf32>
    %85 = math.tanh %84 : vector<8x128xf32>
    %86 = arith.mulf %81, %85 : vector<8x128xf32>
    %87 = arith.index_cast %55 : i32 to index
    %c0_32 = arith.constant 0 : index
    %88 = vector.load %arg7[%87, %c0_32] : memref<64x128xf32, #tpu.memory_space<vmem>>, vector<8x128xf32>
    %89 = arith.addf %86, %88 : vector<8x128xf32>
    %90 = arith.index_cast %55 : i32 to index
    %c0_33 = arith.constant 0 : index
    %91 = vector.load %arg5[%90, %c0_33] : memref<64x128xf32, #tpu.memory_space<vmem>>, vector<8x128xf32>
    tpu.vector_store %arg5[%90, %c0_33], %89 {strides = array<i32>} : memref<64x128xf32, #tpu.memory_space<vmem>>, vector<8x128xf32>,
    %c2_i32 = arith.constant 2 : i32
    %c8_i32_34 = arith.constant 8 : i32
    %92 = arith.muli %c2_i32, %c8_i32_34 : i32
    %93 = tpu.assume_multiple %92, 8 : i32
    %94 = arith.index_cast %93 : i32 to index
    %c0_35 = arith.constant 0 : index
    %95 = vector.load %arg6[%94, %c0_35] : memref<64x512xf32, #tpu.memory_space<vmem>>, vector<8x512xf32>
    %96 = arith.truncf %86 : vector<8x128xf32> to vector<8x128xbf16>
    %c0_36 = arith.constant 0 : index
    %c0_37 = arith.constant 0 : index
    %97 = vector.load %arg4[%c0_36, %c0_37] : memref<128x512xbf16, #tpu.memory_space<vmem>>, vector<128x512xbf16>
    %cst_38 = arith.constant dense<0.000000e+00> : vector<8x512xf32>
    %98 = tpu.matmul %96, %97, %cst_38 {dimension_numbers = #tpu.dot_dimension_numbers<[1], [0], [0], [1], [0, 0, 1, 1], [], []>} : vector<8x128xbf16>, vector<128x512xbf16>, vector<8x512xf32> -> vector<8x512xf32>
    %99 = arith.addf %95, %98 : vector<8x512xf32>
    %100 = vector.extract_strided_slice %99 {offsets = [0, 0], sizes = [8, 128], strides = [1, 1]} : vector<8x512xf32> to vector<8x128xf32>
    %101 = arith.negf %100 : vector<8x128xf32>
    %102 = math.exp %101 : vector<8x128xf32>
    %cst_39 = arith.constant 1.000000e+00 : f32
    %103 = vector.broadcast %cst_39 : f32 to vector<8x128xf32>
    %104 = arith.addf %103, %102 : vector<8x128xf32>
    %105 = arith.divf %103, %104 : vector<8x128xf32>
    %106 = vector.extract_strided_slice %99 {offsets = [0, 128], sizes = [8, 128], strides = [1, 1]} : vector<8x512xf32> to vector<8x128xf32>
    %107 = arith.negf %106 : vector<8x128xf32>
    %108 = math.exp %107 : vector<8x128xf32>
    %cst_40 = arith.constant 1.000000e+00 : f32
    %109 = vector.broadcast %cst_40 : f32 to vector<8x128xf32>
    %110 = arith.addf %109, %108 : vector<8x128xf32>
    %111 = arith.divf %109, %110 : vector<8x128xf32>
    %112 = vector.extract_strided_slice %99 {offsets = [0, 256], sizes = [8, 128], strides = [1, 1]} : vector<8x512xf32> to vector<8x128xf32>
    %113 = math.tanh %112 : vector<8x128xf32>
    %114 = vector.extract_strided_slice %99 {offsets = [0, 384], sizes = [8, 128], strides = [1, 1]} : vector<8x512xf32> to vector<8x128xf32>
    %115 = arith.negf %114 : vector<8x128xf32>
    %116 = math.exp %115 : vector<8x128xf32>
    %cst_41 = arith.constant 1.000000e+00 : f32
    %117 = vector.broadcast %cst_41 : f32 to vector<8x128xf32>
    %118 = arith.addf %117, %116 : vector<8x128xf32>
    %119 = arith.divf %117, %118 : vector<8x128xf32>
    %120 = arith.mulf %111, %84 : vector<8x128xf32>
    %121 = arith.mulf %105, %113 : vector<8x128xf32>
    %122 = arith.addf %120, %121 : vector<8x128xf32>
    %123 = math.tanh %122 : vector<8x128xf32>
    %124 = arith.mulf %119, %123 : vector<8x128xf32>
    %125 = arith.index_cast %93 : i32 to index
    %c0_42 = arith.constant 0 : index
    %126 = vector.load %arg7[%125, %c0_42] : memref<64x128xf32, #tpu.memory_space<vmem>>, vector<8x128xf32>
    %127 = arith.addf %124, %126 : vector<8x128xf32>
    %128 = arith.index_cast %93 : i32 to index
    %c0_43 = arith.constant 0 : index
    %129 = vector.load %arg5[%128, %c0_43] : memref<64x128xf32, #tpu.memory_space<vmem>>, vector<8x128xf32>
    tpu.vector_store %arg5[%128, %c0_43], %127 {strides = array<i32>} : memref<64x128xf32, #tpu.memory_space<vmem>>, vector<8x128xf32>,
    %c3_i32 = arith.constant 3 : i32
    %c8_i32_44 = arith.constant 8 : i32
    %130 = arith.muli %c3_i32, %c8_i32_44 : i32
    %131 = tpu.assume_multiple %130, 8 : i32
    %132 = arith.index_cast %131 : i32 to index
    %c0_45 = arith.constant 0 : index
    %133 = vector.load %arg6[%132, %c0_45] : memref<64x512xf32, #tpu.memory_space<vmem>>, vector<8x512xf32>
    %134 = arith.truncf %124 : vector<8x128xf32> to vector<8x128xbf16>
    %c0_46 = arith.constant 0 : index
    %c0_47 = arith.constant 0 : index
    %135 = vector.load %arg4[%c0_46, %c0_47] : memref<128x512xbf16, #tpu.memory_space<vmem>>, vector<128x512xbf16>
    %cst_48 = arith.constant dense<0.000000e+00> : vector<8x512xf32>
    %136 = tpu.matmul %134, %135, %cst_48 {dimension_numbers = #tpu.dot_dimension_numbers<[1], [0], [0], [1], [0, 0, 1, 1], [], []>} : vector<8x128xbf16>, vector<128x512xbf16>, vector<8x512xf32> -> vector<8x512xf32>
    %137 = arith.addf %133, %136 : vector<8x512xf32>
    %138 = vector.extract_strided_slice %137 {offsets = [0, 0], sizes = [8, 128], strides = [1, 1]} : vector<8x512xf32> to vector<8x128xf32>
    %139 = arith.negf %138 : vector<8x128xf32>
    %140 = math.exp %139 : vector<8x128xf32>
    %cst_49 = arith.constant 1.000000e+00 : f32
    %141 = vector.broadcast %cst_49 : f32 to vector<8x128xf32>
    %142 = arith.addf %141, %140 : vector<8x128xf32>
    %143 = arith.divf %141, %142 : vector<8x128xf32>
    %144 = vector.extract_strided_slice %137 {offsets = [0, 128], sizes = [8, 128], strides = [1, 1]} : vector<8x512xf32> to vector<8x128xf32>
    %145 = arith.negf %144 : vector<8x128xf32>
    %146 = math.exp %145 : vector<8x128xf32>
    %cst_50 = arith.constant 1.000000e+00 : f32
    %147 = vector.broadcast %cst_50 : f32 to vector<8x128xf32>
    %148 = arith.addf %147, %146 : vector<8x128xf32>
    %149 = arith.divf %147, %148 : vector<8x128xf32>
    %150 = vector.extract_strided_slice %137 {offsets = [0, 256], sizes = [8, 128], strides = [1, 1]} : vector<8x512xf32> to vector<8x128xf32>
    %151 = math.tanh %150 : vector<8x128xf32>
    %152 = vector.extract_strided_slice %137 {offsets = [0, 384], sizes = [8, 128], strides = [1, 1]} : vector<8x512xf32> to vector<8x128xf32>
    %153 = arith.negf %152 : vector<8x128xf32>
    %154 = math.exp %153 : vector<8x128xf32>
    %cst_51 = arith.constant 1.000000e+00 : f32
    %155 = vector.broadcast %cst_51 : f32 to vector<8x128xf32>
    %156 = arith.addf %155, %154 : vector<8x128xf32>
    %157 = arith.divf %155, %156 : vector<8x128xf32>
    %158 = arith.mulf %149, %122 : vector<8x128xf32>
    %159 = arith.mulf %143, %151 : vector<8x128xf32>
    %160 = arith.addf %158, %159 : vector<8x128xf32>
    %161 = math.tanh %160 : vector<8x128xf32>
    %162 = arith.mulf %157, %161 : vector<8x128xf32>
    %163 = arith.index_cast %131 : i32 to index
    %c0_52 = arith.constant 0 : index
    %164 = vector.load %arg7[%163, %c0_52] : memref<64x128xf32, #tpu.memory_space<vmem>>, vector<8x128xf32>
    %165 = arith.addf %162, %164 : vector<8x128xf32>
    %166 = arith.index_cast %131 : i32 to index
    %c0_53 = arith.constant 0 : index
    %167 = vector.load %arg5[%166, %c0_53] : memref<64x128xf32, #tpu.memory_space<vmem>>, vector<8x128xf32>
    tpu.vector_store %arg5[%166, %c0_53], %165 {strides = array<i32>} : memref<64x128xf32, #tpu.memory_space<vmem>>, vector<8x128xf32>,
    %c4_i32 = arith.constant 4 : i32
    %c8_i32_54 = arith.constant 8 : i32
    %168 = arith.muli %c4_i32, %c8_i32_54 : i32
    %169 = tpu.assume_multiple %168, 8 : i32
    %170 = arith.index_cast %169 : i32 to index
    %c0_55 = arith.constant 0 : index
    %171 = vector.load %arg6[%170, %c0_55] : memref<64x512xf32, #tpu.memory_space<vmem>>, vector<8x512xf32>
    %172 = arith.truncf %162 : vector<8x128xf32> to vector<8x128xbf16>
    %c0_56 = arith.constant 0 : index
    %c0_57 = arith.constant 0 : index
    %173 = vector.load %arg4[%c0_56, %c0_57] : memref<128x512xbf16, #tpu.memory_space<vmem>>, vector<128x512xbf16>
    %cst_58 = arith.constant dense<0.000000e+00> : vector<8x512xf32>
    %174 = tpu.matmul %172, %173, %cst_58 {dimension_numbers = #tpu.dot_dimension_numbers<[1], [0], [0], [1], [0, 0, 1, 1], [], []>} : vector<8x128xbf16>, vector<128x512xbf16>, vector<8x512xf32> -> vector<8x512xf32>
    %175 = arith.addf %171, %174 : vector<8x512xf32>
    %176 = vector.extract_strided_slice %175 {offsets = [0, 0], sizes = [8, 128], strides = [1, 1]} : vector<8x512xf32> to vector<8x128xf32>
    %177 = arith.negf %176 : vector<8x128xf32>
    %178 = math.exp %177 : vector<8x128xf32>
    %cst_59 = arith.constant 1.000000e+00 : f32
    %179 = vector.broadcast %cst_59 : f32 to vector<8x128xf32>
    %180 = arith.addf %179, %178 : vector<8x128xf32>
    %181 = arith.divf %179, %180 : vector<8x128xf32>
    %182 = vector.extract_strided_slice %175 {offsets = [0, 128], sizes = [8, 128], strides = [1, 1]} : vector<8x512xf32> to vector<8x128xf32>
    %183 = arith.negf %182 : vector<8x128xf32>
    %184 = math.exp %183 : vector<8x128xf32>
    %cst_60 = arith.constant 1.000000e+00 : f32
    %185 = vector.broadcast %cst_60 : f32 to vector<8x128xf32>
    %186 = arith.addf %185, %184 : vector<8x128xf32>
    %187 = arith.divf %185, %186 : vector<8x128xf32>
    %188 = vector.extract_strided_slice %175 {offsets = [0, 256], sizes = [8, 128], strides = [1, 1]} : vector<8x512xf32> to vector<8x128xf32>
    %189 = math.tanh %188 : vector<8x128xf32>
    %190 = vector.extract_strided_slice %175 {offsets = [0, 384], sizes = [8, 128], strides = [1, 1]} : vector<8x512xf32> to vector<8x128xf32>
    %191 = arith.negf %190 : vector<8x128xf32>
    %192 = math.exp %191 : vector<8x128xf32>
    %cst_61 = arith.constant 1.000000e+00 : f32
    %193 = vector.broadcast %cst_61 : f32 to vector<8x128xf32>
    %194 = arith.addf %193, %192 : vector<8x128xf32>
    %195 = arith.divf %193, %194 : vector<8x128xf32>
    %196 = arith.mulf %187, %160 : vector<8x128xf32>
    %197 = arith.mulf %181, %189 : vector<8x128xf32>
    %198 = arith.addf %196, %197 : vector<8x128xf32>
    %199 = math.tanh %198 : vector<8x128xf32>
    %200 = arith.mulf %195, %199 : vector<8x128xf32>
    %201 = arith.index_cast %169 : i32 to index
    %c0_62 = arith.constant 0 : index
    %202 = vector.load %arg7[%201, %c0_62] : memref<64x128xf32, #tpu.memory_space<vmem>>, vector<8x128xf32>
    %203 = arith.addf %200, %202 : vector<8x128xf32>
    %204 = arith.index_cast %169 : i32 to index
    %c0_63 = arith.constant 0 : index
    %205 = vector.load %arg5[%204, %c0_63] : memref<64x128xf32, #tpu.memory_space<vmem>>, vector<8x128xf32>
    tpu.vector_store %arg5[%204, %c0_63], %203 {strides = array<i32>} : memref<64x128xf32, #tpu.memory_space<vmem>>, vector<8x128xf32>,
    %c5_i32 = arith.constant 5 : i32
    %c8_i32_64 = arith.constant 8 : i32
    %206 = arith.muli %c5_i32, %c8_i32_64 : i32
    %207 = tpu.assume_multiple %206, 8 : i32
    %208 = arith.index_cast %207 : i32 to index
    %c0_65 = arith.constant 0 : index
    %209 = vector.load %arg6[%208, %c0_65] : memref<64x512xf32, #tpu.memory_space<vmem>>, vector<8x512xf32>
    %210 = arith.truncf %200 : vector<8x128xf32> to vector<8x128xbf16>
    %c0_66 = arith.constant 0 : index
    %c0_67 = arith.constant 0 : index
    %211 = vector.load %arg4[%c0_66, %c0_67] : memref<128x512xbf16, #tpu.memory_space<vmem>>, vector<128x512xbf16>
    %cst_68 = arith.constant dense<0.000000e+00> : vector<8x512xf32>
    %212 = tpu.matmul %210, %211, %cst_68 {dimension_numbers = #tpu.dot_dimension_numbers<[1], [0], [0], [1], [0, 0, 1, 1], [], []>} : vector<8x128xbf16>, vector<128x512xbf16>, vector<8x512xf32> -> vector<8x512xf32>
    %213 = arith.addf %209, %212 : vector<8x512xf32>
    %214 = vector.extract_strided_slice %213 {offsets = [0, 0], sizes = [8, 128], strides = [1, 1]} : vector<8x512xf32> to vector<8x128xf32>
    %215 = arith.negf %214 : vector<8x128xf32>
    %216 = math.exp %215 : vector<8x128xf32>
    %cst_69 = arith.constant 1.000000e+00 : f32
    %217 = vector.broadcast %cst_69 : f32 to vector<8x128xf32>
    %218 = arith.addf %217, %216 : vector<8x128xf32>
    %219 = arith.divf %217, %218 : vector<8x128xf32>
    %220 = vector.extract_strided_slice %213 {offsets = [0, 128], sizes = [8, 128], strides = [1, 1]} : vector<8x512xf32> to vector<8x128xf32>
    %221 = arith.negf %220 : vector<8x128xf32>
    %222 = math.exp %221 : vector<8x128xf32>
    %cst_70 = arith.constant 1.000000e+00 : f32
    %223 = vector.broadcast %cst_70 : f32 to vector<8x128xf32>
    %224 = arith.addf %223, %222 : vector<8x128xf32>
    %225 = arith.divf %223, %224 : vector<8x128xf32>
    %226 = vector.extract_strided_slice %213 {offsets = [0, 256], sizes = [8, 128], strides = [1, 1]} : vector<8x512xf32> to vector<8x128xf32>
    %227 = math.tanh %226 : vector<8x128xf32>
    %228 = vector.extract_strided_slice %213 {offsets = [0, 384], sizes = [8, 128], strides = [1, 1]} : vector<8x512xf32> to vector<8x128xf32>
    %229 = arith.negf %228 : vector<8x128xf32>
    %230 = math.exp %229 : vector<8x128xf32>
    %cst_71 = arith.constant 1.000000e+00 : f32
    %231 = vector.broadcast %cst_71 : f32 to vector<8x128xf32>
    %232 = arith.addf %231, %230 : vector<8x128xf32>
    %233 = arith.divf %231, %232 : vector<8x128xf32>
    %234 = arith.mulf %225, %198 : vector<8x128xf32>
    %235 = arith.mulf %219, %227 : vector<8x128xf32>
    %236 = arith.addf %234, %235 : vector<8x128xf32>
    %237 = math.tanh %236 : vector<8x128xf32>
    %238 = arith.mulf %233, %237 : vector<8x128xf32>
    %239 = arith.index_cast %207 : i32 to index
    %c0_72 = arith.constant 0 : index
    %240 = vector.load %arg7[%239, %c0_72] : memref<64x128xf32, #tpu.memory_space<vmem>>, vector<8x128xf32>
    %241 = arith.addf %238, %240 : vector<8x128xf32>
    %242 = arith.index_cast %207 : i32 to index
    %c0_73 = arith.constant 0 : index
    %243 = vector.load %arg5[%242, %c0_73] : memref<64x128xf32, #tpu.memory_space<vmem>>, vector<8x128xf32>
    tpu.vector_store %arg5[%242, %c0_73], %241 {strides = array<i32>} : memref<64x128xf32, #tpu.memory_space<vmem>>, vector<8x128xf32>,
    %c6_i32 = arith.constant 6 : i32
    %c8_i32_74 = arith.constant 8 : i32
    %244 = arith.muli %c6_i32, %c8_i32_74 : i32
    %245 = tpu.assume_multiple %244, 8 : i32
    %246 = arith.index_cast %245 : i32 to index
    %c0_75 = arith.constant 0 : index
    %247 = vector.load %arg6[%246, %c0_75] : memref<64x512xf32, #tpu.memory_space<vmem>>, vector<8x512xf32>
    %248 = arith.truncf %238 : vector<8x128xf32> to vector<8x128xbf16>
    %c0_76 = arith.constant 0 : index
    %c0_77 = arith.constant 0 : index
    %249 = vector.load %arg4[%c0_76, %c0_77] : memref<128x512xbf16, #tpu.memory_space<vmem>>, vector<128x512xbf16>
    %cst_78 = arith.constant dense<0.000000e+00> : vector<8x512xf32>
    %250 = tpu.matmul %248, %249, %cst_78 {dimension_numbers = #tpu.dot_dimension_numbers<[1], [0], [0], [1], [0, 0, 1, 1], [], []>} : vector<8x128xbf16>, vector<128x512xbf16>, vector<8x512xf32> -> vector<8x512xf32>
    %251 = arith.addf %247, %250 : vector<8x512xf32>
    %252 = vector.extract_strided_slice %251 {offsets = [0, 0], sizes = [8, 128], strides = [1, 1]} : vector<8x512xf32> to vector<8x128xf32>
    %253 = arith.negf %252 : vector<8x128xf32>
    %254 = math.exp %253 : vector<8x128xf32>
    %cst_79 = arith.constant 1.000000e+00 : f32
    %255 = vector.broadcast %cst_79 : f32 to vector<8x128xf32>
    %256 = arith.addf %255, %254 : vector<8x128xf32>
    %257 = arith.divf %255, %256 : vector<8x128xf32>
    %258 = vector.extract_strided_slice %251 {offsets = [0, 128], sizes = [8, 128], strides = [1, 1]} : vector<8x512xf32> to vector<8x128xf32>
    %259 = arith.negf %258 : vector<8x128xf32>
    %260 = math.exp %259 : vector<8x128xf32>
    %cst_80 = arith.constant 1.000000e+00 : f32
    %261 = vector.broadcast %cst_80 : f32 to vector<8x128xf32>
    %262 = arith.addf %261, %260 : vector<8x128xf32>
    %263 = arith.divf %261, %262 : vector<8x128xf32>
    %264 = vector.extract_strided_slice %251 {offsets = [0, 256], sizes = [8, 128], strides = [1, 1]} : vector<8x512xf32> to vector<8x128xf32>
    %265 = math.tanh %264 : vector<8x128xf32>
    %266 = vector.extract_strided_slice %251 {offsets = [0, 384], sizes = [8, 128], strides = [1, 1]} : vector<8x512xf32> to vector<8x128xf32>
    %267 = arith.negf %266 : vector<8x128xf32>
    %268 = math.exp %267 : vector<8x128xf32>
    %cst_81 = arith.constant 1.000000e+00 : f32
    %269 = vector.broadcast %cst_81 : f32 to vector<8x128xf32>
    %270 = arith.addf %269, %268 : vector<8x128xf32>
    %271 = arith.divf %269, %270 : vector<8x128xf32>
    %272 = arith.mulf %263, %236 : vector<8x128xf32>
    %273 = arith.mulf %257, %265 : vector<8x128xf32>
    %274 = arith.addf %272, %273 : vector<8x128xf32>
    %275 = math.tanh %274 : vector<8x128xf32>
    %276 = arith.mulf %271, %275 : vector<8x128xf32>
    %277 = arith.index_cast %245 : i32 to index
    %c0_82 = arith.constant 0 : index
    %278 = vector.load %arg7[%277, %c0_82] : memref<64x128xf32, #tpu.memory_space<vmem>>, vector<8x128xf32>
    %279 = arith.addf %276, %278 : vector<8x128xf32>
    %280 = arith.index_cast %245 : i32 to index
    %c0_83 = arith.constant 0 : index
    %281 = vector.load %arg5[%280, %c0_83] : memref<64x128xf32, #tpu.memory_space<vmem>>, vector<8x128xf32>
    tpu.vector_store %arg5[%280, %c0_83], %279 {strides = array<i32>} : memref<64x128xf32, #tpu.memory_space<vmem>>, vector<8x128xf32>,
    %c7_i32 = arith.constant 7 : i32
    %c8_i32_84 = arith.constant 8 : i32
    %282 = arith.muli %c7_i32, %c8_i32_84 : i32
    %283 = tpu.assume_multiple %282, 8 : i32
    %284 = arith.index_cast %283 : i32 to index
    %c0_85 = arith.constant 0 : index
    %285 = vector.load %arg6[%284, %c0_85] : memref<64x512xf32, #tpu.memory_space<vmem>>, vector<8x512xf32>
    %286 = arith.truncf %276 : vector<8x128xf32> to vector<8x128xbf16>
    %c0_86 = arith.constant 0 : index
    %c0_87 = arith.constant 0 : index
    %287 = vector.load %arg4[%c0_86, %c0_87] : memref<128x512xbf16, #tpu.memory_space<vmem>>, vector<128x512xbf16>
    %cst_88 = arith.constant dense<0.000000e+00> : vector<8x512xf32>
    %288 = tpu.matmul %286, %287, %cst_88 {dimension_numbers = #tpu.dot_dimension_numbers<[1], [0], [0], [1], [0, 0, 1, 1], [], []>} : vector<8x128xbf16>, vector<128x512xbf16>, vector<8x512xf32> -> vector<8x512xf32>
    %289 = arith.addf %285, %288 : vector<8x512xf32>
    %290 = vector.extract_strided_slice %289 {offsets = [0, 0], sizes = [8, 128], strides = [1, 1]} : vector<8x512xf32> to vector<8x128xf32>
    %291 = arith.negf %290 : vector<8x128xf32>
    %292 = math.exp %291 : vector<8x128xf32>
    %cst_89 = arith.constant 1.000000e+00 : f32
    %293 = vector.broadcast %cst_89 : f32 to vector<8x128xf32>
    %294 = arith.addf %293, %292 : vector<8x128xf32>
    %295 = arith.divf %293, %294 : vector<8x128xf32>
    %296 = vector.extract_strided_slice %289 {offsets = [0, 128], sizes = [8, 128], strides = [1, 1]} : vector<8x512xf32> to vector<8x128xf32>
    %297 = arith.negf %296 : vector<8x128xf32>
    %298 = math.exp %297 : vector<8x128xf32>
    %cst_90 = arith.constant 1.000000e+00 : f32
    %299 = vector.broadcast %cst_90 : f32 to vector<8x128xf32>
    %300 = arith.addf %299, %298 : vector<8x128xf32>
    %301 = arith.divf %299, %300 : vector<8x128xf32>
    %302 = vector.extract_strided_slice %289 {offsets = [0, 256], sizes = [8, 128], strides = [1, 1]} : vector<8x512xf32> to vector<8x128xf32>
    %303 = math.tanh %302 : vector<8x128xf32>
    %304 = vector.extract_strided_slice %289 {offsets = [0, 384], sizes = [8, 128], strides = [1, 1]} : vector<8x512xf32> to vector<8x128xf32>
    %305 = arith.negf %304 : vector<8x128xf32>
    %306 = math.exp %305 : vector<8x128xf32>
    %cst_91 = arith.constant 1.000000e+00 : f32
    %307 = vector.broadcast %cst_91 : f32 to vector<8x128xf32>
    %308 = arith.addf %307, %306 : vector<8x128xf32>
    %309 = arith.divf %307, %308 : vector<8x128xf32>
    %310 = arith.mulf %301, %274 : vector<8x128xf32>
    %311 = arith.mulf %295, %303 : vector<8x128xf32>
    %312 = arith.addf %310, %311 : vector<8x128xf32>
    %313 = math.tanh %312 : vector<8x128xf32>
    %314 = arith.mulf %309, %313 : vector<8x128xf32>
    %315 = arith.index_cast %283 : i32 to index
    %c0_92 = arith.constant 0 : index
    %316 = vector.load %arg7[%315, %c0_92] : memref<64x128xf32, #tpu.memory_space<vmem>>, vector<8x128xf32>
    %317 = arith.addf %314, %316 : vector<8x128xf32>
    %318 = arith.index_cast %283 : i32 to index
    %c0_93 = arith.constant 0 : index
    %319 = vector.load %arg5[%318, %c0_93] : memref<64x128xf32, #tpu.memory_space<vmem>>, vector<8x128xf32>
    tpu.vector_store %arg5[%318, %c0_93], %317 {strides = array<i32>} : memref<64x128xf32, #tpu.memory_space<vmem>>, vector<8x128xf32>,
    %c8_i32_94 = arith.constant 8 : i32
    %c0_95 = arith.constant 0 : index
    %c0_96 = arith.constant 0 : index
    %320 = vector.load %arg8[%c0_95, %c0_96] : memref<8x128xf32, #tpu.memory_space<vmem>>, vector<8x128xf32>
    tpu.vector_store %arg8[%c0_95, %c0_96], %314 {strides = array<i32>} : memref<8x128xf32, #tpu.memory_space<vmem>>, vector<8x128xf32>,
    %c0_97 = arith.constant 0 : index
    %c0_98 = arith.constant 0 : index
    %321 = vector.load %arg9[%c0_97, %c0_98] : memref<8x128xf32, #tpu.memory_space<vmem>>, vector<8x128xf32>
    tpu.vector_store %arg9[%c0_97, %c0_98], %312 {strides = array<i32>} : memref<8x128xf32, #tpu.memory_space<vmem>>, vector<8x128xf32>,
    return
  }
  func.func @transform_0(%arg0: i32) -> (i32, i32) {
    %c0_i32 = arith.constant 0 : i32
    %c0_i32_0 = arith.constant 0 : i32
    return %arg0, %c0_i32 : i32, i32
  }
  func.func @transform_1(%arg0: i32) -> (i32, i32) {
    %c0_i32 = arith.constant 0 : i32
    %c0_i32_0 = arith.constant 0 : i32
    %c0_i32_1 = arith.constant 0 : i32
    return %c0_i32, %c0_i32_0 : i32, i32
  }
  func.func @transform_2(%arg0: i32) -> (i32, i32) {
    %c0_i32 = arith.constant 0 : i32
    %c0_i32_0 = arith.constant 0 : i32
    %c0_i32_1 = arith.constant 0 : i32
    return %c0_i32, %c0_i32_0 : i32, i32
  }
  func.func @transform_3(%arg0: i32) -> (i32, i32) {
    %c0_i32 = arith.constant 0 : i32
    %c0_i32_0 = arith.constant 0 : i32
    %c0_i32_1 = arith.constant 0 : i32
    return %c0_i32, %c0_i32_0 : i32, i32
  }
  func.func @transform_4(%arg0: i32) -> (i32, i32) {
    %c0_i32 = arith.constant 0 : i32
    %c0_i32_0 = arith.constant 0 : i32
    return %arg0, %c0_i32 : i32, i32
  }
}

</mosaic_0001>

<llo_original>
// kernel: lstm_encoder.2
$region0: #{lstm_encoder.2}
  #allocation0 [shape = 'u32[]', space=smem, size = 0x4, offset = 0x4, fixed_abs, tag = 'smem constant byte address 0x4 - core index']
  #allocation1 [shape = 'u32[144,128]{1,0:T(1,128)}', space=vmem, size = 0x12000, scoped, tag = 'internal scratch']
  #allocation2 [shape = 'f32[64,512]{1,0:T(8,128)}', space=vmem, size = 0x20000, scoped, tag = 'scratch operand']
  #allocation3 [shape = 'f32[64,128]{1,0:T(8,128)}', space=vmem, size = 0x8000, scoped, tag = 'scratch operand']
  #allocation4 [shape = 'f32[8,128]{1,0:T(8,128)}', space=vmem, size = 0x1000, scoped, tag = 'scratch operand']
  #allocation5 [shape = 'f32[8,128]{1,0:T(8,128)}', space=vmem, size = 0x1000, scoped, tag = 'scratch operand']
  %s0 = inlined_call_operand.vmem [shape: f32[64,16], index: 0, kind: input, shape index: {}]
  %s1 = inlined_call_operand.vmem [shape: bf16[16,640], index: 1, kind: input, shape index: {}]
  %s2 = inlined_call_operand.vmem [shape: f32[1,640], index: 2, kind: input, shape index: {}]
  %s3 = inlined_call_operand.hbm [shape: bf16[128,512], index: 3, kind: input, shape index: {}]
  %s4 = inlined_call_operand.vmem [shape: f32[64,128], index: 4, kind: output, shape index: {}]
  %s5 = sld [smem:[#allocation0]]
  $region34: #{lstm_encoder.2} parent=0
    _
  %s7 = ssub.s32 1, %s5
  %s8 = scalar_select 0, %s7, %s5
  $region1: #{lstm_encoder.2} parent=0
    #allocation6 [shape = 'u8[131072]{0}', space=vmem, size = 0x20000, scoped, tag = 'input window, operand 3, single buffered']
    #allocation7 [shape = 's32[1]{0}', space=sflag, size = 0x4, scoped, tag = 'scoped memory for lstm_encoder.2']
    %9 = vsyncpa [#allocation7], 0
    // Predicated region
    $region2: #{lstm_encoder.2} parent=1 // pred_check
      _
    $region3: #{lstm_encoder.2} parent=1 // pred_check_branch
      %11 = sbr.rel (0) target = $region5
    $region4: #{lstm_encoder.2} parent=1 // pred_region
      _
    $region5: #{lstm_encoder.2} parent=1 // pred_fallthru
      _
    // Predicated region
    $region6: #{lstm_encoder.2} parent=1 // pred_check
      _
    $region7: #{lstm_encoder.2} parent=1 // pred_check_branch
      %13 = sbr.rel (0) target = $region9
    $region8: #{lstm_encoder.2} parent=1 // pred_region
      _
    $region9: #{lstm_encoder.2} parent=1 // pred_fallthru
      _
    // Predicated region
    $region10: #{lstm_encoder.2} parent=1 // pred_check
      _
    $region11: #{lstm_encoder.2} parent=1 // pred_check_branch
      %15 = sbr.rel (0) target = $region13
    $region12: #{lstm_encoder.2} parent=1 // pred_region
      _
    $region13: #{lstm_encoder.2} parent=1 // pred_fallthru
      _
    // Predicated region
    $region14: #{lstm_encoder.2} parent=1 // pred_check
      _
    $region15: #{lstm_encoder.2} parent=1 // pred_check_branch
      %17 = sbr.rel (0) target = $region17
    $region16: #{lstm_encoder.2} parent=1 // pred_region
      %s19 = ssub.s32 4096, 4096
      %20 = vsyncadd [#allocation7], %s19
      %s21 = sshll.u32 [#allocation6], 4
      %s22 = int_to_ptr.vmem [resolvable:$true] %s21
      %27 = dma.hbm_to_vmem [thread:$0]  %s3, 4096, %s22, [#allocation7], 256, 256, 16
    $region17: #{lstm_encoder.2} parent=1 // pred_fallthru
      _
    // Predicated region
    $region18: #{lstm_encoder.2} parent=1 // pred_check
      _
    $region19: #{lstm_encoder.2} parent=1 // pred_check_branch
      %29 = sbr.rel (0) target = $region21
    $region20: #{lstm_encoder.2} parent=1 // pred_region
      %30 = dma.done [#allocation7], 4096
    $region21: #{lstm_encoder.2} parent=1 // pred_fallthru
      _
    %v32 = vld [vmem:[%s0] sm:$0xff]
    %v33 = vld [vmem:[%s0 + $0x8] sm:$0xff]
    %v34 = vld [vmem:[%s0 + $0x10] sm:$0xff]
    %v35 = vld [vmem:[%s0 + $0x18] sm:$0xff]
    %v36 = vld [vmem:[%s0 + $0x20] sm:$0xff]
    %v37 = vld [vmem:[%s0 + $0x28] sm:$0xff]
    %v38 = vld [vmem:[%s0 + $0x30] sm:$0xff]
    %v39 = vld [vmem:[%s0 + $0x38] sm:$0xff]
    %v40 = vpack.c.bf16 %v33, %v32
    %v41 = vpack.c.bf16 %v35, %v34
    %v42 = vpack.c.bf16 %v37, %v36
    %v43 = vpack.c.bf16 %v39, %v38
    %v44 = vld [vmem:[%s1] sm:$0xff]
    %v45 = vld [vmem:[%s1 + $0x8] sm:$0xff]
    %v46 = vld [vmem:[%s1 + $0x10] sm:$0xf]
    %v47 = vld [vmem:[%s1 + $0x14] sm:$0xff]
    %v48 = vld [vmem:[%s1 + $0x1c] sm:$0xff]
    %v49 = vld [vmem:[%s1 + $0x24] sm:$0xf]
    %v50 = vld [vmem:[%s2] sm:$0x1f]
    %v52 = vlaneseq
    %v53 = vshrl.u32 %v52, 7
    %v54 = vsub.s32 0, %v53
    %v55 = vrot.slane %v50, %v54
    %v56 = vlaneseq
    %v57 = vshrl.u32 %v56, 7
    %v58 = vsub.s32 1, %v57
    %v59 = vrot.slane %v50, %v58
    %v60 = vlaneseq
    %v61 = vshrl.u32 %v60, 7
    %v62 = vsub.s32 2, %v61
    %v63 = vrot.slane %v50, %v62
    %v64 = vlaneseq
    %v65 = vshrl.u32 %v64, 7
    %v66 = vsub.s32 3, %v65
    %v67 = vrot.slane %v50, %v66
    %v68 = vlaneseq
    %v69 = vshrl.u32 %v68, 7
    %v70 = vsub.s32 4, %v69
    %v71 = vrot.slane %v50, %v70
    %v83 = vunpack.c.l.b16 %v44
    %v84 = vunpack.c.h.b16 %v44
    %v85 = vunpack.c.l.b16 %v45
    %v86 = vunpack.c.h.b16 %v45
    %v87 = vunpack.c.l.b16 %v46
    %v88 = vunpack.c.l.b16 %v47
    %v89 = vunpack.c.h.b16 %v47
    %v90 = vunpack.c.l.b16 %v48
    %v91 = vunpack.c.h.b16 %v48
    %v92 = vunpack.c.l.b16 %v49
    %v93 = vpack.c.b16 %v88, %v83
    %v94 = vpack.c.b16 %v89, %v84
    %v95 = vpack.c.b16 %v90, %v85
    %v96 = vpack.c.b16 %v91, %v86
    %v97 = vpack.c.b16 %v92, %v87
    %vm103 = vcmask 130048
    %v105 = vsel %vm103, %v40, 0
    %v108 = vsel %vm103, %v41, 0
    %v111 = vsel %vm103, %v42, 0
    %v114 = vsel %vm103, %v43, 0
    %116 = vmatprep.subr.bf16.mxu0 0
    %117 = vmatpush1.bf16.msra.mxu0 0
    %118 = vmatprep.subr.bf16.mxu0 0
    %119 = vmatpush1.bf16.msra.mxu0 0
    %120 = vmatprep.subr.bf16.mxu0 0
    %121 = vmatpush1.bf16.msra.mxu0 0
    %122 = vmatprep.subr.bf16.mxu0 0
    %123 = vmatpush1.bf16.msra.mxu0 0
    %124 = vmatprep.subr.bf16.mxu0 0
    %125 = vmatpush1.bf16.msra.mxu0 0
    %126 = vmatprep.subr.bf16.mxu0 0
    %127 = vmatpush1.bf16.msra.mxu0 0
    %128 = vmatprep.subr.bf16.mxu0 0
    %129 = vmatpush1.bf16.msra.mxu0 0
    %130 = vmatprep.subr.bf16.mxu0 %v94
    %131 = vmatpush1.bf16.msra.mxu0 %v93
    %132 = vmatprep.subr.bf16.mxu0 0
    %133 = vmatpush2.bf16.msra.mxu0 0
    %134 = vmatprep.subr.bf16.mxu0 0
    %135 = vmatpush2.bf16.msra.mxu0 0
    %136 = vmatprep.subr.bf16.mxu0 0
    %137 = vmatpush2.bf16.msra.mxu0 0
    %138 = vmatprep.subr.bf16.mxu0 0
    %139 = vmatpush2.bf16.msra.mxu0 0
    %140 = vmatprep.subr.bf16.mxu0 0
    %141 = vmatpush2.bf16.msra.mxu0 0
    %142 = vmatprep.subr.bf16.mxu0 0
    %143 = vmatpush2.bf16.msra.mxu0 0
    %144 = vmatprep.subr.bf16.mxu0 0
    %145 = vmatpush2.bf16.msra.mxu0 0
    %146 = vmatprep.subr.bf16.mxu0 0
    %147 = vmatpush2.bf16.msra.mxu0 0
    %148 = vmatprep.mubr.bf16.mxu0 0
    %149 = vmatmul.mubr.bf16.gmra.mxu0 %v105
    %v150 = vpop.f32.mrf.mxu0
    %v151 = vadd.f32 %v55, %v150
    %v152 = vpop.f32.mrf.mxu0
    %v153 = vadd.f32 %v59, %v152
    %v154 = vpop.f32.mrf.mxu0
    %v155 = vadd.f32 %v55, %v154
    %v156 = vpop.f32.mrf.mxu0
    %v157 = vadd.f32 %v59, %v156
    %158 = vmatprep.mubr.bf16.mxu0 0
    %159 = vmatmul.mubr.bf16.gmra.mxu0 %v108
    %v160 = vpop.f32.mrf.mxu0
    %v161 = vadd.f32 %v55, %v160
    %v162 = vpop.f32.mrf.mxu0
    %v163 = vadd.f32 %v59, %v162
    %v164 = vpop.f32.mrf.mxu0
    %v165 = vadd.f32 %v55, %v164
    %v166 = vpop.f32.mrf.mxu0
    %v167 = vadd.f32 %v59, %v166
    %168 = vmatprep.mubr.bf16.mxu0 0
    %169 = vmatmul.mubr.bf16.gmra.mxu0 %v111
    %v170 = vpop.f32.mrf.mxu0
    %v171 = vadd.f32 %v55, %v170
    %v172 = vpop.f32.mrf.mxu0
    %v173 = vadd.f32 %v59, %v172
    %v174 = vpop.f32.mrf.mxu0
    %v175 = vadd.f32 %v55, %v174
    %v176 = vpop.f32.mrf.mxu0
    %v177 = vadd.f32 %v59, %v176
    %178 = vmatprep.mubr.bf16.mxu0 0
    %179 = vmatmul.mubr.bf16.gmra.mxu0 %v114
    %v180 = vpop.f32.mrf.mxu0
    %v181 = vadd.f32 %v55, %v180
    %v182 = vpop.f32.mrf.mxu0
    %v183 = vadd.f32 %v59, %v182
    %v184 = vpop.f32.mrf.mxu0
    %v185 = vadd.f32 %v55, %v184
    %v186 = vpop.f32.mrf.mxu0
    %v187 = vadd.f32 %v59, %v186
    %188 = vdwg.mxu0
    %189 = vmatprep.subr.bf16.mxu0 0
    %190 = vmatpush1.bf16.msra.mxu0 0
    %191 = vmatprep.subr.bf16.mxu0 0
    %192 = vmatpush1.bf16.msra.mxu0 0
    %193 = vmatprep.subr.bf16.mxu0 0
    %194 = vmatpush1.bf16.msra.mxu0 0
    %195 = vmatprep.subr.bf16.mxu0 0
    %196 = vmatpush1.bf16.msra.mxu0 0
    %197 = vmatprep.subr.bf16.mxu0 0
    %198 = vmatpush1.bf16.msra.mxu0 0
    %199 = vmatprep.subr.bf16.mxu0 0
    %200 = vmatpush1.bf16.msra.mxu0 0
    %201 = vmatprep.subr.bf16.mxu0 0
    %202 = vmatpush1.bf16.msra.mxu0 0
    %203 = vmatprep.subr.bf16.mxu0 %v96
    %204 = vmatpush1.bf16.msra.mxu0 %v95
    %205 = vmatprep.subr.bf16.mxu0 0
    %206 = vmatpush2.bf16.msra.mxu0 0
    %207 = vmatprep.subr.bf16.mxu0 0
    %208 = vmatpush2.bf16.msra.mxu0 0
    %209 = vmatprep.subr.bf16.mxu0 0
    %210 = vmatpush2.bf16.msra.mxu0 0
    %211 = vmatprep.subr.bf16.mxu0 0
    %212 = vmatpush2.bf16.msra.mxu0 0
    %213 = vmatprep.subr.bf16.mxu0 0
    %214 = vmatpush2.bf16.msra.mxu0 0
    %215 = vmatprep.subr.bf16.mxu0 0
    %216 = vmatpush2.bf16.msra.mxu0 0
    %217 = vmatprep.subr.bf16.mxu0 0
    %218 = vmatpush2.bf16.msra.mxu0 0
    %219 = vmatprep.subr.bf16.mxu0 0
    %220 = vmatpush2.bf16.msra.mxu0 0
    %221 = vmatprep.mubr.bf16.mxu0 0
    %222 = vmatmul.mubr.bf16.gmra.mxu0 %v105
    %v223 = vpop.f32.mrf.mxu0
    %v224 = vadd.f32 %v63, %v223
    %v225 = vpop.f32.mrf.mxu0
    %v226 = vadd.f32 %v67, %v225
    %v227 = vpop.f32.mrf.mxu0
    %v228 = vadd.f32 %v63, %v227
    %v229 = vpop.f32.mrf.mxu0
    %v230 = vadd.f32 %v67, %v229
    %231 = vmatprep.mubr.bf16.mxu0 0
    %232 = vmatmul.mubr.bf16.gmra.mxu0 %v108
    %v233 = vpop.f32.mrf.mxu0
    %v234 = vadd.f32 %v63, %v233
    %v235 = vpop.f32.mrf.mxu0
    %v236 = vadd.f32 %v67, %v235
    %v237 = vpop.f32.mrf.mxu0
    %v238 = vadd.f32 %v63, %v237
    %v239 = vpop.f32.mrf.mxu0
    %v240 = vadd.f32 %v67, %v239
    %241 = vmatprep.mubr.bf16.mxu0 0
    %242 = vmatmul.mubr.bf16.gmra.mxu0 %v111
    %v243 = vpop.f32.mrf.mxu0
    %v244 = vadd.f32 %v63, %v243
    %v245 = vpop.f32.mrf.mxu0
    %v246 = vadd.f32 %v67, %v245
    %v247 = vpop.f32.mrf.mxu0
    %v248 = vadd.f32 %v63, %v247
    %v249 = vpop.f32.mrf.mxu0
    %v250 = vadd.f32 %v67, %v249
    %251 = vmatprep.mubr.bf16.mxu0 0
    %252 = vmatmul.mubr.bf16.gmra.mxu0 %v114
    %v253 = vpop.f32.mrf.mxu0
    %v254 = vadd.f32 %v63, %v253
    %v255 = vpop.f32.mrf.mxu0
    %v256 = vadd.f32 %v67, %v255
    %v257 = vpop.f32.mrf.mxu0
    %v258 = vadd.f32 %v63, %v257
    %v259 = vpop.f32.mrf.mxu0
    %v260 = vadd.f32 %v67, %v259
    %261 = vdwg.mxu0
    %262 = vmatprep.subr.bf16.mxu0 0
    %263 = vmatpush1.bf16.msra.mxu0 0
    %264 = vmatprep.subr.bf16.mxu0 0
    %265 = vmatpush1.bf16.msra.mxu0 0
    %266 = vmatprep.subr.bf16.mxu0 0
    %267 = vmatpush1.bf16.msra.mxu0 0
    %268 = vmatprep.subr.bf16.mxu0 0
    %269 = vmatpush1.bf16.msra.mxu0 0
    %270 = vmatprep.subr.bf16.mxu0 0
    %271 = vmatpush1.bf16.msra.mxu0 0
    %272 = vmatprep.subr.bf16.mxu0 0
    %273 = vmatpush1.bf16.msra.mxu0 0
    %274 = vmatprep.subr.bf16.mxu0 0
    %275 = vmatpush1.bf16.msra.mxu0 0
    %276 = vmatprep.subr.bf16.mxu0 0
    %277 = vmatpush1.bf16.msra.mxu0 %v97
    %278 = vmatprep.subr.bf16.mxu0 0
    %279 = vmatpush2.bf16.msra.mxu0 0
    %280 = vmatprep.subr.bf16.mxu0 0
    %281 = vmatpush2.bf16.msra.mxu0 0
    %282 = vmatprep.subr.bf16.mxu0 0
    %283 = vmatpush2.bf16.msra.mxu0 0
    %284 = vmatprep.subr.bf16.mxu0 0
    %285 = vmatpush2.bf16.msra.mxu0 0
    %286 = vmatprep.subr.bf16.mxu0 0
    %287 = vmatpush2.bf16.msra.mxu0 0
    %288 = vmatprep.subr.bf16.mxu0 0
    %289 = vmatpush2.bf16.msra.mxu0 0
    %290 = vmatprep.subr.bf16.mxu0 0
    %291 = vmatpush2.bf16.msra.mxu0 0
    %292 = vmatprep.subr.bf16.mxu0 0
    %293 = vmatpush2.bf16.msra.mxu0 0
    %294 = vmatprep.mubr.bf16.mxu0 0
    %295 = vmatmul.mubr.bf16.gmra.mxu0 %v105
    %v296 = vpop.f32.mrf.mxu0
    %v297 = vadd.f32 %v71, %v296
    %v298 = vpop.f32.mrf.mxu0
    %v299 = vpop.f32.mrf.mxu0
    %v300 = vadd.f32 %v71, %v299
    %v301 = vpop.f32.mrf.mxu0
    %302 = vmatprep.mubr.bf16.mxu0 0
    %303 = vmatmul.mubr.bf16.gmra.mxu0 %v108
    %v304 = vpop.f32.mrf.mxu0
    %v305 = vadd.f32 %v71, %v304
    %v306 = vpop.f32.mrf.mxu0
    %v307 = vpop.f32.mrf.mxu0
    %v308 = vadd.f32 %v71, %v307
    %v309 = vpop.f32.mrf.mxu0
    %310 = vmatprep.mubr.bf16.mxu0 0
    %311 = vmatmul.mubr.bf16.gmra.mxu0 %v111
    %v312 = vpop.f32.mrf.mxu0
    %v313 = vadd.f32 %v71, %v312
    %v314 = vpop.f32.mrf.mxu0
    %v315 = vpop.f32.mrf.mxu0
    %v316 = vadd.f32 %v71, %v315
    %v317 = vpop.f32.mrf.mxu0
    %318 = vmatprep.mubr.bf16.mxu0 0
    %319 = vmatmul.mubr.bf16.gmra.mxu0 %v114
    %v320 = vpop.f32.mrf.mxu0
    %v321 = vadd.f32 %v71, %v320
    %v322 = vpop.f32.mrf.mxu0
    %v323 = vpop.f32.mrf.mxu0
    %v324 = vadd.f32 %v71, %v323
    %v325 = vpop.f32.mrf.mxu0
    %326 = vdwg.mxu0
    %327 = vst [vmem:[#allocation2] sm:$0xff] %v151
    %328 = vst [vmem:[#allocation2 + $0x8] sm:$0xff] %v153
    %329 = vst [vmem:[#allocation2 + $0x10] sm:$0xff] %v224
    %330 = vst [vmem:[#allocation2 + $0x18] sm:$0xff] %v226
    %331 = vst [vmem:[#allocation2 + $0x20] sm:$0xff] %v155
    %332 = vst [vmem:[#allocation2 + $0x28] sm:$0xff] %v157
    %333 = vst [vmem:[#allocation2 + $0x30] sm:$0xff] %v228
    %334 = vst [vmem:[#allocation2 + $0x38] sm:$0xff] %v230
    %335 = vst [vmem:[#allocation2 + $0x40] sm:$0xff] %v161
    %336 = vst [vmem:[#allocation2 + $0x48] sm:$0xff] %v163
    %337 = vst [vmem:[#allocation2 + $0x50] sm:$0xff] %v234
    %338 = vst [vmem:[#allocation2 + $0x58] sm:$0xff] %v236
    %339 = vst [vmem:[#allocation2 + $0x60] sm:$0xff] %v165
    %340 = vst [vmem:[#allocation2 + $0x68] sm:$0xff] %v167
    %341 = vst [vmem:[#allocation2 + $0x70] sm:$0xff] %v238
    %342 = vst [vmem:[#allocation2 + $0x78] sm:$0xff] %v240
    %343 = vst [vmem:[#allocation2 + $0x80] sm:$0xff] %v171
    %344 = vst [vmem:[#allocation2 + $0x88] sm:$0xff] %v173
    %345 = vst [vmem:[#allocation2 + $0x90] sm:$0xff] %v244
    %346 = vst [vmem:[#allocation2 + $0x98] sm:$0xff] %v246
    %347 = vst [vmem:[#allocation2 + $0xa0] sm:$0xff] %v175
    %348 = vst [vmem:[#allocation2 + $0xa8] sm:$0xff] %v177
    %349 = vst [vmem:[#allocation2 + $0xb0] sm:$0xff] %v248
    %350 = vst [vmem:[#allocation2 + $0xb8] sm:$0xff] %v250
    %351 = vst [vmem:[#allocation2 + $0xc0] sm:$0xff] %v181
    %352 = vst [vmem:[#allocation2 + $0xc8] sm:$0xff] %v183
    %353 = vst [vmem:[#allocation2 + $0xd0] sm:$0xff] %v254
    %354 = vst [vmem:[#allocation2 + $0xd8] sm:$0xff] %v256
    %355 = vst [vmem:[#allocation2 + $0xe0] sm:$0xff] %v185
    %356 = vst [vmem:[#allocation2 + $0xe8] sm:$0xff] %v187
    %357 = vst [vmem:[#allocation2 + $0xf0] sm:$0xff] %v258
    %358 = vst [vmem:[#allocation2 + $0xf8] sm:$0xff] %v260
    %359 = vst [vmem:[#allocation3] sm:$0xff] %v297
    %360 = vst [vmem:[#allocation3 + $0x8] sm:$0xff] %v300
    %361 = vst [vmem:[#allocation3 + $0x10] sm:$0xff] %v305
    %362 = vst [vmem:[#allocation3 + $0x18] sm:$0xff] %v308
    %363 = vst [vmem:[#allocation3 + $0x20] sm:$0xff] %v313
    %364 = vst [vmem:[#allocation3 + $0x28] sm:$0xff] %v316
    %365 = vst [vmem:[#allocation3 + $0x30] sm:$0xff] %v321
    %366 = vst [vmem:[#allocation3 + $0x38] sm:$0xff] %v324
    %p367 = scmp.eq.s32.totalorder 0, 0
    // Predicated region
    $region22: #{lstm_encoder.2} parent=1 // pred_check
      %p368 = pneg %p367
    $region23: #{lstm_encoder.2} parent=1 // pred_check_branch
      %370 = sbr.rel (%p368) target = $region25
    $region24: #{lstm_encoder.2} parent=1 // pred_region
      %371 = vst [vmem:[#allocation4] sm:$0xff] 0.0
      %372 = vst [vmem:[#allocation5] sm:$0xff] 0.0
    $region25: #{lstm_encoder.2} parent=1 // pred_fallthru
      _
    %v373 = vld [vmem:[#allocation4] sm:$0xff]
    %v374 = vld [vmem:[#allocation5] sm:$0xff]
    %s375 = smul.u32 0, 4
    %s376 = smul.addr %s375, 8
    %s377 = scalar_lea.vmem [#allocation2], %s376
    %v378 = vld [vmem:[%s377] sm:$0xff]
    %v379 = vld [vmem:[%s377 + $0x8] sm:$0xff]
    %v380 = vld [vmem:[%s377 + $0x10] sm:$0xff]
    %v381 = vld [vmem:[%s377 + $0x18] sm:$0xff]
    %v382 = vpack.c.bf16 %v373, %v373
    %v383 = vld [vmem:[#allocation6] sm:$0xff]
    %v384 = vld [vmem:[#allocation6 + $0x8] sm:$0xff]
    %v385 = vld [vmem:[#allocation6 + $0x10] sm:$0xff]
    %v386 = vld [vmem:[#allocation6 + $0x18] sm:$0xff]
    %v387 = vld [vmem:[#allocation6 + $0x20] sm:$0xff]
    %v388 = vld [vmem:[#allocation6 + $0x28] sm:$0xff]
    %v389 = vld [vmem:[#allocation6 + $0x30] sm:$0xff]
    %v390 = vld [vmem:[#allocation6 + $0x38] sm:$0xff]
    %v391 = vld [vmem:[#allocation6 + $0x40] sm:$0xff]
    %v392 = vld [vmem:[#allocation6 + $0x48] sm:$0xff]
    %v393 = vld [vmem:[#allocation6 + $0x50] sm:$0xff]
    %v394 = vld [vmem:[#allocation6 + $0x58] sm:$0xff]
    %v395 = vld [vmem:[#allocation6 + $0x60] sm:$0xff]
    %v396 = vld [vmem:[#allocation6 + $0x68] sm:$0xff]
    %v397 = vld [vmem:[#allocation6 + $0x70] sm:$0xff]
    %v398 = vld [vmem:[#allocation6 + $0x78] sm:$0xff]
    %v399 = vld [vmem:[#allocation6 + $0x80] sm:$0xff]
    %v400 = vld [vmem:[#allocation6 + $0x88] sm:$0xff]
    %v401 = vld [vmem:[#allocation6 + $0x90] sm:$0xff]
    %v402 = vld [vmem:[#allocation6 + $0x98] sm:$0xff]
    %v403 = vld [vmem:[#allocation6 + $0xa0] sm:$0xff]
    %v404 = vld [vmem:[#allocation6 + $0xa8] sm:$0xff]
    %v405 = vld [vmem:[#allocation6 + $0xb0] sm:$0xff]
    %v406 = vld [vmem:[#allocation6 + $0xb8] sm:$0xff]
    %v407 = vld [vmem:[#allocation6 + $0xc0] sm:$0xff]
    %v408 = vld [vmem:[#allocation6 + $0xc8] sm:$0xff]
    %v409 = vld [vmem:[#allocation6 + $0xd0] sm:$0xff]
    %v410 = vld [vmem:[#allocation6 + $0xd8] sm:$0xff]
    %v411 = vld [vmem:[#allocation6 + $0xe0] sm:$0xff]
    %v412 = vld [vmem:[#allocation6 + $0xe8] sm:$0xff]
    %v413 = vld [vmem:[#allocation6 + $0xf0] sm:$0xff]
    %v414 = vld [vmem:[#allocation6 + $0xf8] sm:$0xff]
    %v447 = vunpack.c.l.b16 %v383
    %v448 = vunpack.c.h.b16 %v383
    %v449 = vunpack.c.l.b16 %v384
    %v450 = vunpack.c.h.b16 %v384
    %v451 = vunpack.c.l.b16 %v385
    %v452 = vunpack.c.h.b16 %v385
    %v453 = vunpack.c.l.b16 %v386
    %v454 = vunpack.c.h.b16 %v386
    %v455 = vunpack.c.l.b16 %v387
    %v456 = vunpack.c.h.b16 %v387
    %v457 = vunpack.c.l.b16 %v388
    %v458 = vunpack.c.h.b16 %v388
    %v459 = vunpack.c.l.b16 %v389
    %v460 = vunpack.c.h.b16 %v389
    %v461 = vunpack.c.l.b16 %v390
    %v462 = vunpack.c.h.b16 %v390
    %v463 = vunpack.c.l.b16 %v391
    %v464 = vunpack.c.h.b16 %v391
    %v465 = vunpack.c.l.b16 %v392
    %v466 = vunpack.c.h.b16 %v392
    %v467 = vunpack.c.l.b16 %v393
    %v468 = vunpack.c.h.b16 %v393
    %v469 = vunpack.c.l.b16 %v394
    %v470 = vunpack.c.h.b16 %v394
    %v471 = vunpack.c.l.b16 %v395
    %v472 = vunpack.c.h.b16 %v395
    %v473 = vunpack.c.l.b16 %v396
    %v474 = vunpack.c.h.b16 %v396
    %v475 = vunpack.c.l.b16 %v397
    %v476 = vunpack.c.h.b16 %v397
    %v477 = vunpack.c.l.b16 %v398
    %v478 = vunpack.c.h.b16 %v398
    %v479 = vunpack.c.l.b16 %v399
    %v480 = vunpack.c.h.b16 %v399
    %v481 = vunpack.c.l.b16 %v400
    %v482 = vunpack.c.h.b16 %v400
    %v483 = vunpack.c.l.b16 %v401
    %v484 = vunpack.c.h.b16 %v401
    %v485 = vunpack.c.l.b16 %v402
    %v486 = vunpack.c.h.b16 %v402
    %v487 = vunpack.c.l.b16 %v403
    %v488 = vunpack.c.h.b16 %v403
    %v489 = vunpack.c.l.b16 %v404
    %v490 = vunpack.c.h.b16 %v404
    %v491 = vunpack.c.l.b16 %v405
    %v492 = vunpack.c.h.b16 %v405
    %v493 = vunpack.c.l.b16 %v406
    %v494 = vunpack.c.h.b16 %v406
    %v495 = vunpack.c.l.b16 %v407
    %v496 = vunpack.c.h.b16 %v407
    %v497 = vunpack.c.l.b16 %v408
    %v498 = vunpack.c.h.b16 %v408
    %v499 = vunpack.c.l.b16 %v409
    %v500 = vunpack.c.h.b16 %v409
    %v501 = vunpack.c.l.b16 %v410
    %v502 = vunpack.c.h.b16 %v410
    %v503 = vunpack.c.l.b16 %v411
    %v504 = vunpack.c.h.b16 %v411
    %v505 = vunpack.c.l.b16 %v412
    %v506 = vunpack.c.h.b16 %v412
    %v507 = vunpack.c.l.b16 %v413
    %v508 = vunpack.c.h.b16 %v413
    %v509 = vunpack.c.l.b16 %v414
    %v510 = vunpack.c.h.b16 %v414
    %v511 = vpack.c.b16 %v451, %v447
    %v512 = vpack.c.b16 %v452, %v448
    %v513 = vpack.c.b16 %v453, %v449
    %v514 = vpack.c.b16 %v454, %v450
    %v515 = vpack.c.b16 %v459, %v455
    %v516 = vpack.c.b16 %v460, %v456
    %v517 = vpack.c.b16 %v461, %v457
    %v518 = vpack.c.b16 %v462, %v458
    %v519 = vpack.c.b16 %v467, %v463
    %v520 = vpack.c.b16 %v468, %v464
    %v521 = vpack.c.b16 %v469, %v465
    %v522 = vpack.c.b16 %v470, %v466
    %v523 = vpack.c.b16 %v475, %v471
    %v524 = vpack.c.b16 %v476, %v472
    %v525 = vpack.c.b16 %v477, %v473
    %v526 = vpack.c.b16 %v478, %v474
    %v527 = vpack.c.b16 %v483, %v479
    %v528 = vpack.c.b16 %v484, %v480
    %v529 = vpack.c.b16 %v485, %v481
    %v530 = vpack.c.b16 %v486, %v482
    %v531 = vpack.c.b16 %v491, %v487
    %v532 = vpack.c.b16 %v492, %v488
    %v533 = vpack.c.b16 %v493, %v489
    %v534 = vpack.c.b16 %v494, %v490
    %v535 = vpack.c.b16 %v499, %v495
    %v536 = vpack.c.b16 %v500, %v496
    %v537 = vpack.c.b16 %v501, %v497
    %v538 = vpack.c.b16 %v502, %v498
    %v539 = vpack.c.b16 %v507, %v503
    %v540 = vpack.c.b16 %v508, %v504
    %v541 = vpack.c.b16 %v509, %v505
    %v542 = vpack.c.b16 %v510, %v506
    %575 = vmatprep.subr.bf16.mxu0 %v540
    %576 = vmatpush1.bf16.msra.mxu0 %v539
    %577 = vmatprep.subr.bf16.mxu0 %v536
    %578 = vmatpush1.bf16.msra.mxu0 %v535
    %579 = vmatprep.subr.bf16.mxu0 %v532
    %580 = vmatpush1.bf16.msra.mxu0 %v531
    %581 = vmatprep.subr.bf16.mxu0 %v528
    %582 = vmatpush1.bf16.msra.mxu0 %v527
    %583 = vmatprep.subr.bf16.mxu0 %v524
    %584 = vmatpush1.bf16.msra.mxu0 %v523
    %585 = vmatprep.subr.bf16.mxu0 %v520
    %586 = vmatpush1.bf16.msra.mxu0 %v519
    %587 = vmatprep.subr.bf16.mxu0 %v516
    %588 = vmatpush1.bf16.msra.mxu0 %v515
    %589 = vmatprep.subr.bf16.mxu0 %v512
    %590 = vmatpush1.bf16.msra.mxu0 %v511
    %591 = vmatprep.subr.bf16.mxu0 0
    %592 = vmatpush2.bf16.msra.mxu0 0
    %593 = vmatprep.subr.bf16.mxu0 0
    %594 = vmatpush2.bf16.msra.mxu0 0
    %595 = vmatprep.subr.bf16.mxu0 0
    %596 = vmatpush2.bf16.msra.mxu0 0
    %597 = vmatprep.subr.bf16.mxu0 0
    %598 = vmatpush2.bf16.msra.mxu0 0
    %599 = vmatprep.subr.bf16.mxu0 0
    %600 = vmatpush2.bf16.msra.mxu0 0
    %601 = vmatprep.subr.bf16.mxu0 0
    %602 = vmatpush2.bf16.msra.mxu0 0
    %603 = vmatprep.subr.bf16.mxu0 0
    %604 = vmatpush2.bf16.msra.mxu0 0
    %605 = vmatprep.subr.bf16.mxu0 0
    %606 = vmatpush2.bf16.msra.mxu0 0
    %607 = vmatprep.mubr.bf16.mxu0 0
    %608 = vmatmul.mubr.bf16.gmra.mxu0 %v382
    %v609 = vpop.f32.mrf.mxu0
    %v610 = vadd.f32 0.0, %v609
    %v611 = vpop.f32.mrf.mxu0
    %v612 = vadd.f32 0.0, %v611
    %v613 = vpop.f32.mrf.mxu0
    %v614 = vpop.f32.mrf.mxu0
    %615 = vdwg.mxu0
    %616 = vmatprep.subr.bf16.mxu0 %v542
    %617 = vmatpush1.bf16.msra.mxu0 %v541
    %618 = vmatprep.subr.bf16.mxu0 %v538
    %619 = vmatpush1.bf16.msra.mxu0 %v537
    %620 = vmatprep.subr.bf16.mxu0 %v534
    %621 = vmatpush1.bf16.msra.mxu0 %v533
    %622 = vmatprep.subr.bf16.mxu0 %v530
    %623 = vmatpush1.bf16.msra.mxu0 %v529
    %624 = vmatprep.subr.bf16.mxu0 %v526
    %625 = vmatpush1.bf16.msra.mxu0 %v525
    %626 = vmatprep.subr.bf16.mxu0 %v522
    %627 = vmatpush1.bf16.msra.mxu0 %v521
    %628 = vmatprep.subr.bf16.mxu0 %v518
    %629 = vmatpush1.bf16.msra.mxu0 %v517
    %630 = vmatprep.subr.bf16.mxu0 %v514
    %631 = vmatpush1.bf16.msra.mxu0 %v513
    %632 = vmatprep.subr.bf16.mxu0 0
    %633 = vmatpush2.bf16.msra.mxu0 0
    %634 = vmatprep.subr.bf16.mxu0 0
    %635 = vmatpush2.bf16.msra.mxu0 0
    %636 = vmatprep.subr.bf16.mxu0 0
    %637 = vmatpush2.bf16.msra.mxu0 0
    %638 = vmatprep.subr.bf16.mxu0 0
    %639 = vmatpush2.bf16.msra.mxu0 0
    %640 = vmatprep.subr.bf16.mxu0 0
    %641 = vmatpush2.bf16.msra.mxu0 0
    %642 = vmatprep.subr.bf16.mxu0 0
    %643 = vmatpush2.bf16.msra.mxu0 0
    %644 = vmatprep.subr.bf16.mxu0 0
    %645 = vmatpush2.bf16.msra.mxu0 0
    %646 = vmatprep.subr.bf16.mxu0 0
    %647 = vmatpush2.bf16.msra.mxu0 0
    %648 = vmatprep.mubr.bf16.mxu0 0
    %649 = vmatmul.mubr.bf16.gmra.mxu0 %v382
    %v650 = vpop.f32.mrf.mxu0
    %v651 = vadd.f32 0.0, %v650
    %v652 = vpop.f32.mrf.mxu0
    %v653 = vadd.f32 0.0, %v652
    %v654 = vpop.f32.mrf.mxu0
    %v655 = vpop.f32.mrf.mxu0
    %656 = vdwg.mxu0
    %v657 = vadd.f32 %v378, %v610
    %v658 = vadd.f32 %v379, %v612
    %v659 = vadd.f32 %v380, %v651
    %v660 = vadd.f32 %v381, %v653
    %v661 = vxor.u32 %v657, 2147483648
    %v662 = vmul.f32 %v661, 1.442695
    %v663 = vpow.pop %v662
    %v664 = vadd.f32 %v663, 1.0
    %v665 = vrcp.pop %v664
    %v666 = vmul.f32 1.0, %v665
    %v667 = vxor.u32 %v658, 2147483648
    %v668 = vmul.f32 %v667, 1.442695
    %v669 = vpow.pop %v668
    %v670 = vadd.f32 %v669, 1.0
    %v671 = vrcp.pop %v670
    %v672 = vmul.f32 1.0, %v671
    %v673 = vtanh.pop %v659
    %v674 = vxor.u32 %v660, 2147483648
    %v675 = vmul.f32 %v674, 1.442695
    %v676 = vpow.pop %v675
    %v677 = vadd.f32 %v676, 1.0
    %v678 = vrcp.pop %v677
    %v679 = vmul.f32 1.0, %v678
    %v680 = vmul.f32 %v672, %v374
    %v681 = vmul.f32 %v666, %v673
    %v682 = vadd.f32 %v680, %v681
    %v683 = vtanh.pop %v682
    %v684 = vmul.f32 %v679, %v683
    %v685 = vld [vmem:[#allocation3] sm:$0xff]
    %v686 = vadd.f32 %v684, %v685
    %687 = vst [vmem:[%s4] sm:$0xff] %v686
    %s688 = smul.u32 1, 4
    %s689 = smul.addr %s688, 8
    %s690 = scalar_lea.vmem [#allocation2], %s689
    %v691 = vld [vmem:[%s690] sm:$0xff]
    %v692 = vld [vmem:[%s690 + $0x8] sm:$0xff]
    %v693 = vld [vmem:[%s690 + $0x10] sm:$0xff]
    %v694 = vld [vmem:[%s690 + $0x18] sm:$0xff]
    %v695 = vpack.c.bf16 %v684, %v684
    %v696 = vld [vmem:[#allocation6] sm:$0xff]
    %v697 = vld [vmem:[#allocation6 + $0x8] sm:$0xff]
    %v698 = vld [vmem:[#allocation6 + $0x10] sm:$0xff]
    %v699 = vld [vmem:[#allocation6 + $0x18] sm:$0xff]
    %v700 = vld [vmem:[#allocation6 + $0x20] sm:$0xff]
    %v701 = vld [vmem:[#allocation6 + $0x28] sm:$0xff]
    %v702 = vld [vmem:[#allocation6 + $0x30] sm:$0xff]
    %v703 = vld [vmem:[#allocation6 + $0x38] sm:$0xff]
    %v704 = vld [vmem:[#allocation6 + $0x40] sm:$0xff]
    %v705 = vld [vmem:[#allocation6 + $0x48] sm:$0xff]
    %v706 = vld [vmem:[#allocation6 + $0x50] sm:$0xff]
    %v707 = vld [vmem:[#allocation6 + $0x58] sm:$0xff]
    %v708 = vld [vmem:[#allocation6 + $0x60] sm:$0xff]
    %v709 = vld [vmem:[#allocation6 + $0x68] sm:$0xff]
    %v710 = vld [vmem:[#allocation6 + $0x70] sm:$0xff]
    %v711 = vld [vmem:[#allocation6 + $0x78] sm:$0xff]
    %v712 = vld [vmem:[#allocation6 + $0x80] sm:$0xff]
    %v713 = vld [vmem:[#allocation6 + $0x88] sm:$0xff]
    %v714 = vld [vmem:[#allocation6 + $0x90] sm:$0xff]
    %v715 = vld [vmem:[#allocation6 + $0x98] sm:$0xff]
    %v716 = vld [vmem:[#allocation6 + $0xa0] sm:$0xff]
    %v717 = vld [vmem:[#allocation6 + $0xa8] sm:$0xff]
    %v718 = vld [vmem:[#allocation6 + $0xb0] sm:$0xff]
    %v719 = vld [vmem:[#allocation6 + $0xb8] sm:$0xff]
    %v720 = vld [vmem:[#allocation6 + $0xc0] sm:$0xff]
    %v721 = vld [vmem:[#allocation6 + $0xc8] sm:$0xff]
    %v722 = vld [vmem:[#allocation6 + $0xd0] sm:$0xff]
    %v723 = vld [vmem:[#allocation6 + $0xd8] sm:$0xff]
    %v724 = vld [vmem:[#allocation6 + $0xe0] sm:$0xff]
    %v725 = vld [vmem:[#allocation6 + $0xe8] sm:$0xff]
    %v726 = vld [vmem:[#allocation6 + $0xf0] sm:$0xff]
    %v727 = vld [vmem:[#allocation6 + $0xf8] sm:$0xff]
    %v760 = vunpack.c.l.b16 %v696
    %v761 = vunpack.c.h.b16 %v696
    %v762 = vunpack.c.l.b16 %v697
    %v763 = vunpack.c.h.b16 %v697
    %v764 = vunpack.c.l.b16 %v698
    %v765 = vunpack.c.h.b16 %v698
    %v766 = vunpack.c.l.b16 %v699
    %v767 = vunpack.c.h.b16 %v699
    %v768 = vunpack.c.l.b16 %v700
    %v769 = vunpack.c.h.b16 %v700
    %v770 = vunpack.c.l.b16 %v701
    %v771 = vunpack.c.h.b16 %v701
    %v772 = vunpack.c.l.b16 %v702
    %v773 = vunpack.c.h.b16 %v702
    %v774 = vunpack.c.l.b16 %v703
    %v775 = vunpack.c.h.b16 %v703
    %v776 = vunpack.c.l.b16 %v704
    %v777 = vunpack.c.h.b16 %v704
    %v778 = vunpack.c.l.b16 %v705
    %v779 = vunpack.c.h.b16 %v705
    %v780 = vunpack.c.l.b16 %v706
    %v781 = vunpack.c.h.b16 %v706
    %v782 = vunpack.c.l.b16 %v707
    %v783 = vunpack.c.h.b16 %v707
    %v784 = vunpack.c.l.b16 %v708
    %v785 = vunpack.c.h.b16 %v708
    %v786 = vunpack.c.l.b16 %v709
    %v787 = vunpack.c.h.b16 %v709
    %v788 = vunpack.c.l.b16 %v710
    %v789 = vunpack.c.h.b16 %v710
    %v790 = vunpack.c.l.b16 %v711
    %v791 = vunpack.c.h.b16 %v711
    %v792 = vunpack.c.l.b16 %v712
    %v793 = vunpack.c.h.b16 %v712
    %v794 = vunpack.c.l.b16 %v713
    %v795 = vunpack.c.h.b16 %v713
    %v796 = vunpack.c.l.b16 %v714
    %v797 = vunpack.c.h.b16 %v714
    %v798 = vunpack.c.l.b16 %v715
    %v799 = vunpack.c.h.b16 %v715
    %v800 = vunpack.c.l.b16 %v716
    %v801 = vunpack.c.h.b16 %v716
    %v802 = vunpack.c.l.b16 %v717
    %v803 = vunpack.c.h.b16 %v717
    %v804 = vunpack.c.l.b16 %v718
    %v805 = vunpack.c.h.b16 %v718
    %v806 = vunpack.c.l.b16 %v719
    %v807 = vunpack.c.h.b16 %v719
    %v808 = vunpack.c.l.b16 %v720
    %v809 = vunpack.c.h.b16 %v720
    %v810 = vunpack.c.l.b16 %v721
    %v811 = vunpack.c.h.b16 %v721
    %v812 = vunpack.c.l.b16 %v722
    %v813 = vunpack.c.h.b16 %v722
    %v814 = vunpack.c.l.b16 %v723
    %v815 = vunpack.c.h.b16 %v723
    %v816 = vunpack.c.l.b16 %v724
    %v817 = vunpack.c.h.b16 %v724
    %v818 = vunpack.c.l.b16 %v725
    %v819 = vunpack.c.h.b16 %v725
    %v820 = vunpack.c.l.b16 %v726
    %v821 = vunpack.c.h.b16 %v726
    %v822 = vunpack.c.l.b16 %v727
    %v823 = vunpack.c.h.b16 %v727
    %v824 = vpack.c.b16 %v764, %v760
    %v825 = vpack.c.b16 %v765, %v761
    %v826 = vpack.c.b16 %v766, %v762
    %v827 = vpack.c.b16 %v767, %v763
    %v828 = vpack.c.b16 %v772, %v768
    %v829 = vpack.c.b16 %v773, %v769
    %v830 = vpack.c.b16 %v774, %v770
    %v831 = vpack.c.b16 %v775, %v771
    %v832 = vpack.c.b16 %v780, %v776
    %v833 = vpack.c.b16 %v781, %v777
    %v834 = vpack.c.b16 %v782, %v778
    %v835 = vpack.c.b16 %v783, %v779
    %v836 = vpack.c.b16 %v788, %v784
    %v837 = vpack.c.b16 %v789, %v785
    %v838 = vpack.c.b16 %v790, %v786
    %v839 = vpack.c.b16 %v791, %v787
    %v840 = vpack.c.b16 %v796, %v792
    %v841 = vpack.c.b16 %v797, %v793
    %v842 = vpack.c.b16 %v798, %v794
    %v843 = vpack.c.b16 %v799, %v795
    %v844 = vpack.c.b16 %v804, %v800
    %v845 = vpack.c.b16 %v805, %v801
    %v846 = vpack.c.b16 %v806, %v802
    %v847 = vpack.c.b16 %v807, %v803
    %v848 = vpack.c.b16 %v812, %v808
    %v849 = vpack.c.b16 %v813, %v809
    %v850 = vpack.c.b16 %v814, %v810
    %v851 = vpack.c.b16 %v815, %v811
    %v852 = vpack.c.b16 %v820, %v816
    %v853 = vpack.c.b16 %v821, %v817
    %v854 = vpack.c.b16 %v822, %v818
    %v855 = vpack.c.b16 %v823, %v819
    %888 = vmatprep.subr.bf16.mxu0 %v853
    %889 = vmatpush1.bf16.msra.mxu0 %v852
    %890 = vmatprep.subr.bf16.mxu0 %v849
    %891 = vmatpush1.bf16.msra.mxu0 %v848
    %892 = vmatprep.subr.bf16.mxu0 %v845
    %893 = vmatpush1.bf16.msra.mxu0 %v844
    %894 = vmatprep.subr.bf16.mxu0 %v841
    %895 = vmatpush1.bf16.msra.mxu0 %v840
    %896 = vmatprep.subr.bf16.mxu0 %v837
    %897 = vmatpush1.bf16.msra.mxu0 %v836
    %898 = vmatprep.subr.bf16.mxu0 %v833
    %899 = vmatpush1.bf16.msra.mxu0 %v832
    %900 = vmatprep.subr.bf16.mxu0 %v829
    %901 = vmatpush1.bf16.msra.mxu0 %v828
    %902 = vmatprep.subr.bf16.mxu0 %v825
    %903 = vmatpush1.bf16.msra.mxu0 %v824
    %904 = vmatprep.subr.bf16.mxu0 0
    %905 = vmatpush2.bf16.msra.mxu0 0
    %906 = vmatprep.subr.bf16.mxu0 0
    %907 = vmatpush2.bf16.msra.mxu0 0
    %908 = vmatprep.subr.bf16.mxu0 0
    %909 = vmatpush2.bf16.msra.mxu0 0
    %910 = vmatprep.subr.bf16.mxu0 0
    %911 = vmatpush2.bf16.msra.mxu0 0
    %912 = vmatprep.subr.bf16.mxu0 0
    %913 = vmatpush2.bf16.msra.mxu0 0
    %914 = vmatprep.subr.bf16.mxu0 0
    %915 = vmatpush2.bf16.msra.mxu0 0
    %916 = vmatprep.subr.bf16.mxu0 0
    %917 = vmatpush2.bf16.msra.mxu0 0
    %918 = vmatprep.subr.bf16.mxu0 0
    %919 = vmatpush2.bf16.msra.mxu0 0
    %920 = vmatprep.mubr.bf16.mxu0 0
    %921 = vmatmul.mubr.bf16.gmra.mxu0 %v695
    %v922 = vpop.f32.mrf.mxu0
    %v923 = vadd.f32 0.0, %v922
    %v924 = vpop.f32.mrf.mxu0
    %v925 = vadd.f32 0.0, %v924
    %v926 = vpop.f32.mrf.mxu0
    %v927 = vpop.f32.mrf.mxu0
    %928 = vdwg.mxu0
    %929 = vmatprep.subr.bf16.mxu0 %v855
    %930 = vmatpush1.bf16.msra.mxu0 %v854
    %931 = vmatprep.subr.bf16.mxu0 %v851
    %932 = vmatpush1.bf16.msra.mxu0 %v850
    %933 = vmatprep.subr.bf16.mxu0 %v847
    %934 = vmatpush1.bf16.msra.mxu0 %v846
    %935 = vmatprep.subr.bf16.mxu0 %v843
    %936 = vmatpush1.bf16.msra.mxu0 %v842
    %937 = vmatprep.subr.bf16.mxu0 %v839
    %938 = vmatpush1.bf16.msra.mxu0 %v838
    %939 = vmatprep.subr.bf16.mxu0 %v835
    %940 = vmatpush1.bf16.msra.mxu0 %v834
    %941 = vmatprep.subr.bf16.mxu0 %v831
    %942 = vmatpush1.bf16.msra.mxu0 %v830
    %943 = vmatprep.subr.bf16.mxu0 %v827
    %944 = vmatpush1.bf16.msra.mxu0 %v826
    %945 = vmatprep.subr.bf16.mxu0 0
    %946 = vmatpush2.bf16.msra.mxu0 0
    %947 = vmatprep.subr.bf16.mxu0 0
    %948 = vmatpush2.bf16.msra.mxu0 0
    %949 = vmatprep.subr.bf16.mxu0 0
    %950 = vmatpush2.bf16.msra.mxu0 0
    %951 = vmatprep.subr.bf16.mxu0 0
    %952 = vmatpush2.bf16.msra.mxu0 0
    %953 = vmatprep.subr.bf16.mxu0 0
    %954 = vmatpush2.bf16.msra.mxu0 0
    %955 = vmatprep.subr.bf16.mxu0 0
    %956 = vmatpush2.bf16.msra.mxu0 0
    %957 = vmatprep.subr.bf16.mxu0 0
    %958 = vmatpush2.bf16.msra.mxu0 0
    %959 = vmatprep.subr.bf16.mxu0 0
    %960 = vmatpush2.bf16.msra.mxu0 0
    %961 = vmatprep.mubr.bf16.mxu0 0
    %962 = vmatmul.mubr.bf16.gmra.mxu0 %v695
    %v963 = vpop.f32.mrf.mxu0
    %v964 = vadd.f32 0.0, %v963
    %v965 = vpop.f32.mrf.mxu0
    %v966 = vadd.f32 0.0, %v965
    %v967 = vpop.f32.mrf.mxu0
    %v968 = vpop.f32.mrf.mxu0
    %969 = vdwg.mxu0
    %v970 = vadd.f32 %v691, %v923
    %v971 = vadd.f32 %v692, %v925
    %v972 = vadd.f32 %v693, %v964
    %v973 = vadd.f32 %v694, %v966
    %v974 = vxor.u32 %v970, 2147483648
    %v975 = vmul.f32 %v974, 1.442695
    %v976 = vpow.pop %v975
    %v977 = vadd.f32 %v976, 1.0
    %v978 = vrcp.pop %v977
    %v979 = vmul.f32 1.0, %v978
    %v980 = vxor.u32 %v971, 2147483648
    %v981 = vmul.f32 %v980, 1.442695
    %v982 = vpow.pop %v981
    %v983 = vadd.f32 %v982, 1.0
    %v984 = vrcp.pop %v983
    %v985 = vmul.f32 1.0, %v984
    %v986 = vtanh.pop %v972
    %v987 = vxor.u32 %v973, 2147483648
    %v988 = vmul.f32 %v987, 1.442695
    %v989 = vpow.pop %v988
    %v990 = vadd.f32 %v989, 1.0
    %v991 = vrcp.pop %v990
    %v992 = vmul.f32 1.0, %v991
    %v993 = vmul.f32 %v985, %v682
    %v994 = vmul.f32 %v979, %v986
    %v995 = vadd.f32 %v993, %v994
    %v996 = vtanh.pop %v995
    %v997 = vmul.f32 %v992, %v996
    %s998 = scalar_lea.vmem [#allocation3], 8
    %v999 = vld [vmem:[%s998] sm:$0xff]
    %v1000 = vadd.f32 %v997, %v999
    %s1001 = scalar_lea.vmem %s4, 8
    %1002 = vst [vmem:[%s1001] sm:$0xff] %v1000
    %s1003 = smul.u32 2, 4
    %s1004 = smul.addr %s1003, 8
    %s1005 = scalar_lea.vmem [#allocation2], %s1004
    %v1006 = vld [vmem:[%s1005] sm:$0xff]
    %v1007 = vld [vmem:[%s1005 + $0x8] sm:$0xff]
    %v1008 = vld [vmem:[%s1005 + $0x10] sm:$0xff]
    %v1009 = vld [vmem:[%s1005 + $0x18] sm:$0xff]
    %v1010 = vpack.c.bf16 %v997, %v997
    %v1011 = vld [vmem:[#allocation6] sm:$0xff]
    %v1012 = vld [vmem:[#allocation6 + $0x8] sm:$0xff]
    %v1013 = vld [vmem:[#allocation6 + $0x10] sm:$0xff]
    %v1014 = vld [vmem:[#allocation6 + $0x18] sm:$0xff]
    %v1015 = vld [vmem:[#allocation6 + $0x20] sm:$0xff]
    %v1016 = vld [vmem:[#allocation6 + $0x28] sm:$0xff]
    %v1017 = vld [vmem:[#allocation6 + $0x30] sm:$0xff]
    %v1018 = vld [vmem:[#allocation6 + $0x38] sm:$0xff]
    %v1019 = vld [vmem:[#allocation6 + $0x40] sm:$0xff]
    %v1020 = vld [vmem:[#allocation6 + $0x48] sm:$0xff]
    %v1021 = vld [vmem:[#allocation6 + $0x50] sm:$0xff]
    %v1022 = vld [vmem:[#allocation6 + $0x58] sm:$0xff]
    %v1023 = vld [vmem:[#allocation6 + $0x60] sm:$0xff]
    %v1024 = vld [vmem:[#allocation6 + $0x68] sm:$0xff]
    %v1025 = vld [vmem:[#allocation6 + $0x70] sm:$0xff]
    %v1026 = vld [vmem:[#allocation6 + $0x78] sm:$0xff]
    %v1027 = vld [vmem:[#allocation6 + $0x80] sm:$0xff]
    %v1028 = vld [vmem:[#allocation6 + $0x88] sm:$0xff]
    %v1029 = vld [vmem:[#allocation6 + $0x90] sm:$0xff]
    %v1030 = vld [vmem:[#allocation6 + $0x98] sm:$0xff]
    %v1031 = vld [vmem:[#allocation6 + $0xa0] sm:$0xff]
    %v1032 = vld [vmem:[#allocation6 + $0xa8] sm:$0xff]
    %v1033 = vld [vmem:[#allocation6 + $0xb0] sm:$0xff]
    %v1034 = vld [vmem:[#allocation6 + $0xb8] sm:$0xff]
    %v1035 = vld [vmem:[#allocation6 + $0xc0] sm:$0xff]
    %v1036 = vld [vmem:[#allocation6 + $0xc8] sm:$0xff]
    %v1037 = vld [vmem:[#allocation6 + $0xd0] sm:$0xff]
    %v1038 = vld [vmem:[#allocation6 + $0xd8] sm:$0xff]
    %v1039 = vld [vmem:[#allocation6 + $0xe0] sm:$0xff]
    %v1040 = vld [vmem:[#allocation6 + $0xe8] sm:$0xff]
    %v1041 = vld [vmem:[#allocation6 + $0xf0] sm:$0xff]
    %v1042 = vld [vmem:[#allocation6 + $0xf8] sm:$0xff]
    %v1075 = vunpack.c.l.b16 %v1011
    %v1076 = vunpack.c.h.b16 %v1011
    %v1077 = vunpack.c.l.b16 %v1012
    %v1078 = vunpack.c.h.b16 %v1012
    %v1079 = vunpack.c.l.b16 %v1013
    %v1080 = vunpack.c.h.b16 %v1013
    %v1081 = vunpack.c.l.b16 %v1014
    %v1082 = vunpack.c.h.b16 %v1014
    %v1083 = vunpack.c.l.b16 %v1015
    %v1084 = vunpack.c.h.b16 %v1015
    %v1085 = vunpack.c.l.b16 %v1016
    %v1086 = vunpack.c.h.b16 %v1016
    %v1087 = vunpack.c.l.b16 %v1017
    %v1088 = vunpack.c.h.b16 %v1017
    %v1089 = vunpack.c.l.b16 %v1018
    %v1090 = vunpack.c.h.b16 %v1018
    %v1091 = vunpack.c.l.b16 %v1019
    %v1092 = vunpack.c.h.b16 %v1019
    %v1093 = vunpack.c.l.b16 %v1020
    %v1094 = vunpack.c.h.b16 %v1020
    %v1095 = vunpack.c.l.b16 %v1021
    %v1096 = vunpack.c.h.b16 %v1021
    %v1097 = vunpack.c.l.b16 %v1022
    %v1098 = vunpack.c.h.b16 %v1022
    %v1099 = vunpack.c.l.b16 %v1023
    %v1100 = vunpack.c.h.b16 %v1023
    %v1101 = vunpack.c.l.b16 %v1024
    %v1102 = vunpack.c.h.b16 %v1024
    %v1103 = vunpack.c.l.b16 %v1025
    %v1104 = vunpack.c.h.b16 %v1025
    %v1105 = vunpack.c.l.b16 %v1026
    %v1106 = vunpack.c.h.b16 %v1026
    %v1107 = vunpack.c.l.b16 %v1027
    %v1108 = vunpack.c.h.b16 %v1027
    %v1109 = vunpack.c.l.b16 %v1028
    %v1110 = vunpack.c.h.b16 %v1028
    %v1111 = vunpack.c.l.b16 %v1029
    %v1112 = vunpack.c.h.b16 %v1029
    %v1113 = vunpack.c.l.b16 %v1030
    %v1114 = vunpack.c.h.b16 %v1030
    %v1115 = vunpack.c.l.b16 %v1031
    %v1116 = vunpack.c.h.b16 %v1031
    %v1117 = vunpack.c.l.b16 %v1032
    %v1118 = vunpack.c.h.b16 %v1032
    %v1119 = vunpack.c.l.b16 %v1033
    %v1120 = vunpack.c.h.b16 %v1033
    %v1121 = vunpack.c.l.b16 %v1034
    %v1122 = vunpack.c.h.b16 %v1034
    %v1123 = vunpack.c.l.b16 %v1035
    %v1124 = vunpack.c.h.b16 %v1035
    %v1125 = vunpack.c.l.b16 %v1036
    %v1126 = vunpack.c.h.b16 %v1036
    %v1127 = vunpack.c.l.b16 %v1037
    %v1128 = vunpack.c.h.b16 %v1037
    %v1129 = vunpack.c.l.b16 %v1038
    %v1130 = vunpack.c.h.b16 %v1038
    %v1131 = vunpack.c.l.b16 %v1039
    %v1132 = vunpack.c.h.b16 %v1039
    %v1133 = vunpack.c.l.b16 %v1040
    %v1134 = vunpack.c.h.b16 %v1040
    %v1135 = vunpack.c.l.b16 %v1041
    %v1136 = vunpack.c.h.b16 %v1041
    %v1137 = vunpack.c.l.b16 %v1042
    %v1138 = vunpack.c.h.b16 %v1042
    %v1139 = vpack.c.b16 %v1079, %v1075
    %v1140 = vpack.c.b16 %v1080, %v1076
    %v1141 = vpack.c.b16 %v1081, %v1077
    %v1142 = vpack.c.b16 %v1082, %v1078
    %v1143 = vpack.c.b16 %v1087, %v1083
    %v1144 = vpack.c.b16 %v1088, %v1084
    %v1145 = vpack.c.b16 %v1089, %v1085
    %v1146 = vpack.c.b16 %v1090, %v1086
    %v1147 = vpack.c.b16 %v1095, %v1091
    %v1148 = vpack.c.b16 %v1096, %v1092
    %v1149 = vpack.c.b16 %v1097, %v1093
    %v1150 = vpack.c.b16 %v1098, %v1094
    %v1151 = vpack.c.b16 %v1103, %v1099
    %v1152 = vpack.c.b16 %v1104, %v1100
    %v1153 = vpack.c.b16 %v1105, %v1101
    %v1154 = vpack.c.b16 %v1106, %v1102
    %v1155 = vpack.c.b16 %v1111, %v1107
    %v1156 = vpack.c.b16 %v1112, %v1108
    %v1157 = vpack.c.b16 %v1113, %v1109
    %v1158 = vpack.c.b16 %v1114, %v1110
    %v1159 = vpack.c.b16 %v1119, %v1115
    %v1160 = vpack.c.b16 %v1120, %v1116
    %v1161 = vpack.c.b16 %v1121, %v1117
    %v1162 = vpack.c.b16 %v1122, %v1118
    %v1163 = vpack.c.b16 %v1127, %v1123
    %v1164 = vpack.c.b16 %v1128, %v1124
    %v1165 = vpack.c.b16 %v1129, %v1125
    %v1166 = vpack.c.b16 %v1130, %v1126
    %v1167 = vpack.c.b16 %v1135, %v1131
    %v1168 = vpack.c.b16 %v1136, %v1132
    %v1169 = vpack.c.b16 %v1137, %v1133
    %v1170 = vpack.c.b16 %v1138, %v1134
    %1203 = vmatprep.subr.bf16.mxu0 %v1168
    %1204 = vmatpush1.bf16.msra.mxu0 %v1167
    %1205 = vmatprep.subr.bf16.mxu0 %v1164
    %1206 = vmatpush1.bf16.msra.mxu0 %v1163
    %1207 = vmatprep.subr.bf16.mxu0 %v1160
    %1208 = vmatpush1.bf16.msra.mxu0 %v1159
    %1209 = vmatprep.subr.bf16.mxu0 %v1156
    %1210 = vmatpush1.bf16.msra.mxu0 %v1155
    %1211 = vmatprep.subr.bf16.mxu0 %v1152
    %1212 = vmatpush1.bf16.msra.mxu0 %v1151
    %1213 = vmatprep.subr.bf16.mxu0 %v1148
    %1214 = vmatpush1.bf16.msra.mxu0 %v1147
    %1215 = vmatprep.subr.bf16.mxu0 %v1144
    %1216 = vmatpush1.bf16.msra.mxu0 %v1143
    %1217 = vmatprep.subr.bf16.mxu0 %v1140
    %1218 = vmatpush1.bf16.msra.mxu0 %v1139
    %1219 = vmatprep.subr.bf16.mxu0 0
    %1220 = vmatpush2.bf16.msra.mxu0 0
    %1221 = vmatprep.subr.bf16.mxu0 0
    %1222 = vmatpush2.bf16.msra.mxu0 0
    %1223 = vmatprep.subr.bf16.mxu0 0
    %1224 = vmatpush2.bf16.msra.mxu0 0
    %1225 = vmatprep.subr.bf16.mxu0 0
    %1226 = vmatpush2.bf16.msra.mxu0 0
    %1227 = vmatprep.subr.bf16.mxu0 0
    %1228 = vmatpush2.bf16.msra.mxu0 0
    %1229 = vmatprep.subr.bf16.mxu0 0
    %1230 = vmatpush2.bf16.msra.mxu0 0
    %1231 = vmatprep.subr.bf16.mxu0 0
    %1232 = vmatpush2.bf16.msra.mxu0 0
    %1233 = vmatprep.subr.bf16.mxu0 0
    %1234 = vmatpush2.bf16.msra.mxu0 0
    %1235 = vmatprep.mubr.bf16.mxu0 0
    %1236 = vmatmul.mubr.bf16.gmra.mxu0 %v1010
    %v1237 = vpop.f32.mrf.mxu0
    %v1238 = vadd.f32 0.0, %v1237
    %v1239 = vpop.f32.mrf.mxu0
    %v1240 = vadd.f32 0.0, %v1239
    %v1241 = vpop.f32.mrf.mxu0
    %v1242 = vpop.f32.mrf.mxu0
    %1243 = vdwg.mxu0
    %1244 = vmatprep.subr.bf16.mxu0 %v1170
    %1245 = vmatpush1.bf16.msra.mxu0 %v1169
    %1246 = vmatprep.subr.bf16.mxu0 %v1166
    %1247 = vmatpush1.bf16.msra.mxu0 %v1165
    %1248 = vmatprep.subr.bf16.mxu0 %v1162
    %1249 = vmatpush1.bf16.msra.mxu0 %v1161
    %1250 = vmatprep.subr.bf16.mxu0 %v1158
    %1251 = vmatpush1.bf16.msra.mxu0 %v1157
    %1252 = vmatprep.subr.bf16.mxu0 %v1154
    %1253 = vmatpush1.bf16.msra.mxu0 %v1153
    %1254 = vmatprep.subr.bf16.mxu0 %v1150
    %1255 = vmatpush1.bf16.msra.mxu0 %v1149
    %1256 = vmatprep.subr.bf16.mxu0 %v1146
    %1257 = vmatpush1.bf16.msra.mxu0 %v1145
    %1258 = vmatprep.subr.bf16.mxu0 %v1142
    %1259 = vmatpush1.bf16.msra.mxu0 %v1141
    %1260 = vmatprep.subr.bf16.mxu0 0
    %1261 = vmatpush2.bf16.msra.mxu0 0
    %1262 = vmatprep.subr.bf16.mxu0 0
    %1263 = vmatpush2.bf16.msra.mxu0 0
    %1264 = vmatprep.subr.bf16.mxu0 0
    %1265 = vmatpush2.bf16.msra.mxu0 0
    %1266 = vmatprep.subr.bf16.mxu0 0
    %1267 = vmatpush2.bf16.msra.mxu0 0
    %1268 = vmatprep.subr.bf16.mxu0 0
    %1269 = vmatpush2.bf16.msra.mxu0 0
    %1270 = vmatprep.subr.bf16.mxu0 0
    %1271 = vmatpush2.bf16.msra.mxu0 0
    %1272 = vmatprep.subr.bf16.mxu0 0
    %1273 = vmatpush2.bf16.msra.mxu0 0
    %1274 = vmatprep.subr.bf16.mxu0 0
    %1275 = vmatpush2.bf16.msra.mxu0 0
    %1276 = vmatprep.mubr.bf16.mxu0 0
    %1277 = vmatmul.mubr.bf16.gmra.mxu0 %v1010
    %v1278 = vpop.f32.mrf.mxu0
    %v1279 = vadd.f32 0.0, %v1278
    %v1280 = vpop.f32.mrf.mxu0
    %v1281 = vadd.f32 0.0, %v1280
    %v1282 = vpop.f32.mrf.mxu0
    %v1283 = vpop.f32.mrf.mxu0
    %1284 = vdwg.mxu0
    %v1285 = vadd.f32 %v1006, %v1238
    %v1286 = vadd.f32 %v1007, %v1240
    %v1287 = vadd.f32 %v1008, %v1279
    %v1288 = vadd.f32 %v1009, %v1281
    %v1289 = vxor.u32 %v1285, 2147483648
    %v1290 = vmul.f32 %v1289, 1.442695
    %v1291 = vpow.pop %v1290
    %v1292 = vadd.f32 %v1291, 1.0
    %v1293 = vrcp.pop %v1292
    %v1294 = vmul.f32 1.0, %v1293
    %v1295 = vxor.u32 %v1286, 2147483648
    %v1296 = vmul.f32 %v1295, 1.442695
    %v1297 = vpow.pop %v1296
    %v1298 = vadd.f32 %v1297, 1.0
    %v1299 = vrcp.pop %v1298
    %v1300 = vmul.f32 1.0, %v1299
    %v1301 = vtanh.pop %v1287
    %v1302 = vxor.u32 %v1288, 2147483648
    %v1303 = vmul.f32 %v1302, 1.442695
    %v1304 = vpow.pop %v1303
    %v1305 = vadd.f32 %v1304, 1.0
    %v1306 = vrcp.pop %v1305
    %v1307 = vmul.f32 1.0, %v1306
    %v1308 = vmul.f32 %v1300, %v995
    %v1309 = vmul.f32 %v1294, %v1301
    %v1310 = vadd.f32 %v1308, %v1309
    %v1311 = vtanh.pop %v1310
    %v1312 = vmul.f32 %v1307, %v1311
    %s1313 = scalar_lea.vmem [#allocation3], 16
    %v1314 = vld [vmem:[%s1313] sm:$0xff]
    %v1315 = vadd.f32 %v1312, %v1314
    %s1316 = scalar_lea.vmem %s4, 16
    %1317 = vst [vmem:[%s1316] sm:$0xff] %v1315
    %s1318 = smul.u32 3, 4
    %s1319 = smul.addr %s1318, 8
    %s1320 = scalar_lea.vmem [#allocation2], %s1319
    %v1321 = vld [vmem:[%s1320] sm:$0xff]
    %v1322 = vld [vmem:[%s1320 + $0x8] sm:$0xff]
    %v1323 = vld [vmem:[%s1320 + $0x10] sm:$0xff]
    %v1324 = vld [vmem:[%s1320 + $0x18] sm:$0xff]
    %v1325 = vpack.c.bf16 %v1312, %v1312
    %v1326 = vld [vmem:[#allocation6] sm:$0xff]
    %v1327 = vld [vmem:[#allocation6 + $0x8] sm:$0xff]
    %v1328 = vld [vmem:[#allocation6 + $0x10] sm:$0xff]
    %v1329 = vld [vmem:[#allocation6 + $0x18] sm:$0xff]
    %v1330 = vld [vmem:[#allocation6 + $0x20] sm:$0xff]
    %v1331 = vld [vmem:[#allocation6 + $0x28] sm:$0xff]
    %v1332 = vld [vmem:[#allocation6 + $0x30] sm:$0xff]
    %v1333 = vld [vmem:[#allocation6 + $0x38] sm:$0xff]
    %v1334 = vld [vmem:[#allocation6 + $0x40] sm:$0xff]
    %v1335 = vld [vmem:[#allocation6 + $0x48] sm:$0xff]
    %v1336 = vld [vmem:[#allocation6 + $0x50] sm:$0xff]
    %v1337 = vld [vmem:[#allocation6 + $0x58] sm:$0xff]
    %v1338 = vld [vmem:[#allocation6 + $0x60] sm:$0xff]
    %v1339 = vld [vmem:[#allocation6 + $0x68] sm:$0xff]
    %v1340 = vld [vmem:[#allocation6 + $0x70] sm:$0xff]
    %v1341 = vld [vmem:[#allocation6 + $0x78] sm:$0xff]
    %v1342 = vld [vmem:[#allocation6 + $0x80] sm:$0xff]
    %v1343 = vld [vmem:[#allocation6 + $0x88] sm:$0xff]
    %v1344 = vld [vmem:[#allocation6 + $0x90] sm:$0xff]
    %v1345 = vld [vmem:[#allocation6 + $0x98] sm:$0xff]
    %v1346 = vld [vmem:[#allocation6 + $0xa0] sm:$0xff]
    %v1347 = vld [vmem:[#allocation6 + $0xa8] sm:$0xff]
    %v1348 = vld [vmem:[#allocation6 + $0xb0] sm:$0xff]
    %v1349 = vld [vmem:[#allocation6 + $0xb8] sm:$0xff]
    %v1350 = vld [vmem:[#allocation6 + $0xc0] sm:$0xff]
    %v1351 = vld [vmem:[#allocation6 + $0xc8] sm:$0xff]
    %v1352 = vld [vmem:[#allocation6 + $0xd0] sm:$0xff]
    %v1353 = vld [vmem:[#allocation6 + $0xd8] sm:$0xff]
    %v1354 = vld [vmem:[#allocation6 + $0xe0] sm:$0xff]
    %v1355 = vld [vmem:[#allocation6 + $0xe8] sm:$0xff]
    %v1356 = vld [vmem:[#allocation6 + $0xf0] sm:$0xff]
    %v1357 = vld [vmem:[#allocation6 + $0xf8] sm:$0xff]
    %v1390 = vunpack.c.l.b16 %v1326
    %v1391 = vunpack.c.h.b16 %v1326
    %v1392 = vunpack.c.l.b16 %v1327
    %v1393 = vunpack.c.h.b16 %v1327
    %v1394 = vunpack.c.l.b16 %v1328
    %v1395 = vunpack.c.h.b16 %v1328
    %v1396 = vunpack.c.l.b16 %v1329
    %v1397 = vunpack.c.h.b16 %v1329
    %v1398 = vunpack.c.l.b16 %v1330
    %v1399 = vunpack.c.h.b16 %v1330
    %v1400 = vunpack.c.l.b16 %v1331
    %v1401 = vunpack.c.h.b16 %v1331
    %v1402 = vunpack.c.l.b16 %v1332
    %v1403 = vunpack.c.h.b16 %v1332
    %v1404 = vunpack.c.l.b16 %v1333
    %v1405 = vunpack.c.h.b16 %v1333
    %v1406 = vunpack.c.l.b16 %v1334
    %v1407 = vunpack.c.h.b16 %v1334
    %v1408 = vunpack.c.l.b16 %v1335
    %v1409 = vunpack.c.h.b16 %v1335
    %v1410 = vunpack.c.l.b16 %v1336
    %v1411 = vunpack.c.h.b16 %v1336
    %v1412 = vunpack.c.l.b16 %v1337
    %v1413 = vunpack.c.h.b16 %v1337
    %v1414 = vunpack.c.l.b16 %v1338
    %v1415 = vunpack.c.h.b16 %v1338
    %v1416 = vunpack.c.l.b16 %v1339
    %v1417 = vunpack.c.h.b16 %v1339
    %v1418 = vunpack.c.l.b16 %v1340
    %v1419 = vunpack.c.h.b16 %v1340
    %v1420 = vunpack.c.l.b16 %v1341
    %v1421 = vunpack.c.h.b16 %v1341
    %v1422 = vunpack.c.l.b16 %v1342
    %v1423 = vunpack.c.h.b16 %v1342
    %v1424 = vunpack.c.l.b16 %v1343
    %v1425 = vunpack.c.h.b16 %v1343
    %v1426 = vunpack.c.l.b16 %v1344
    %v1427 = vunpack.c.h.b16 %v1344
    %v1428 = vunpack.c.l.b16 %v1345
    %v1429 = vunpack.c.h.b16 %v1345
    %v1430 = vunpack.c.l.b16 %v1346
    %v1431 = vunpack.c.h.b16 %v1346
    %v1432 = vunpack.c.l.b16 %v1347
    %v1433 = vunpack.c.h.b16 %v1347
    %v1434 = vunpack.c.l.b16 %v1348
    %v1435 = vunpack.c.h.b16 %v1348
    %v1436 = vunpack.c.l.b16 %v1349
    %v1437 = vunpack.c.h.b16 %v1349
    %v1438 = vunpack.c.l.b16 %v1350
    %v1439 = vunpack.c.h.b16 %v1350
    %v1440 = vunpack.c.l.b16 %v1351
    %v1441 = vunpack.c.h.b16 %v1351
    %v1442 = vunpack.c.l.b16 %v1352
    %v1443 = vunpack.c.h.b16 %v1352
    %v1444 = vunpack.c.l.b16 %v1353
    %v1445 = vunpack.c.h.b16 %v1353
    %v1446 = vunpack.c.l.b16 %v1354
    %v1447 = vunpack.c.h.b16 %v1354
    %v1448 = vunpack.c.l.b16 %v1355
    %v1449 = vunpack.c.h.b16 %v1355
    %v1450 = vunpack.c.l.b16 %v1356
    %v1451 = vunpack.c.h.b16 %v1356
    %v1452 = vunpack.c.l.b16 %v1357
    %v1453 = vunpack.c.h.b16 %v1357
    %v1454 = vpack.c.b16 %v1394, %v1390
    %v1455 = vpack.c.b16 %v1395, %v1391
    %v1456 = vpack.c.b16 %v1396, %v1392
    %v1457 = vpack.c.b16 %v1397, %v1393
    %v1458 = vpack.c.b16 %v1402, %v1398
    %v1459 = vpack.c.b16 %v1403, %v1399
    %v1460 = vpack.c.b16 %v1404, %v1400
    %v1461 = vpack.c.b16 %v1405, %v1401
    %v1462 = vpack.c.b16 %v1410, %v1406
    %v1463 = vpack.c.b16 %v1411, %v1407
    %v1464 = vpack.c.b16 %v1412, %v1408
    %v1465 = vpack.c.b16 %v1413, %v1409
    %v1466 = vpack.c.b16 %v1418, %v1414
    %v1467 = vpack.c.b16 %v1419, %v1415
    %v1468 = vpack.c.b16 %v1420, %v1416
    %v1469 = vpack.c.b16 %v1421, %v1417
    %v1470 = vpack.c.b16 %v1426, %v1422
    %v1471 = vpack.c.b16 %v1427, %v1423
    %v1472 = vpack.c.b16 %v1428, %v1424
    %v1473 = vpack.c.b16 %v1429, %v1425
    %v1474 = vpack.c.b16 %v1434, %v1430
    %v1475 = vpack.c.b16 %v1435, %v1431
    %v1476 = vpack.c.b16 %v1436, %v1432
    %v1477 = vpack.c.b16 %v1437, %v1433
    %v1478 = vpack.c.b16 %v1442, %v1438
    %v1479 = vpack.c.b16 %v1443, %v1439
    %v1480 = vpack.c.b16 %v1444, %v1440
    %v1481 = vpack.c.b16 %v1445, %v1441
    %v1482 = vpack.c.b16 %v1450, %v1446
    %v1483 = vpack.c.b16 %v1451, %v1447
    %v1484 = vpack.c.b16 %v1452, %v1448
    %v1485 = vpack.c.b16 %v1453, %v1449
    %1518 = vmatprep.subr.bf16.mxu0 %v1483
    %1519 = vmatpush1.bf16.msra.mxu0 %v1482
    %1520 = vmatprep.subr.bf16.mxu0 %v1479
    %1521 = vmatpush1.bf16.msra.mxu0 %v1478
    %1522 = vmatprep.subr.bf16.mxu0 %v1475
    %1523 = vmatpush1.bf16.msra.mxu0 %v1474
    %1524 = vmatprep.subr.bf16.mxu0 %v1471
    %1525 = vmatpush1.bf16.msra.mxu0 %v1470
    %1526 = vmatprep.subr.bf16.mxu0 %v1467
    %1527 = vmatpush1.bf16.msra.mxu0 %v1466
    %1528 = vmatprep.subr.bf16.mxu0 %v1463
    %1529 = vmatpush1.bf16.msra.mxu0 %v1462
    %1530 = vmatprep.subr.bf16.mxu0 %v1459
    %1531 = vmatpush1.bf16.msra.mxu0 %v1458
    %1532 = vmatprep.subr.bf16.mxu0 %v1455
    %1533 = vmatpush1.bf16.msra.mxu0 %v1454
    %1534 = vmatprep.subr.bf16.mxu0 0
    %1535 = vmatpush2.bf16.msra.mxu0 0
    %1536 = vmatprep.subr.bf16.mxu0 0
    %1537 = vmatpush2.bf16.msra.mxu0 0
    %1538 = vmatprep.subr.bf16.mxu0 0
    %1539 = vmatpush2.bf16.msra.mxu0 0
    %1540 = vmatprep.subr.bf16.mxu0 0
    %1541 = vmatpush2.bf16.msra.mxu0 0
    %1542 = vmatprep.subr.bf16.mxu0 0
    %1543 = vmatpush2.bf16.msra.mxu0 0
    %1544 = vmatprep.subr.bf16.mxu0 0
    %1545 = vmatpush2.bf16.msra.mxu0 0
    %1546 = vmatprep.subr.bf16.mxu0 0
    %1547 = vmatpush2.bf16.msra.mxu0 0
    %1548 = vmatprep.subr.bf16.mxu0 0
    %1549 = vmatpush2.bf16.msra.mxu0 0
    %1550 = vmatprep.mubr.bf16.mxu0 0
    %1551 = vmatmul.mubr.bf16.gmra.mxu0 %v1325
    %v1552 = vpop.f32.mrf.mxu0
    %v1553 = vadd.f32 0.0, %v1552
    %v1554 = vpop.f32.mrf.mxu0
    %v1555 = vadd.f32 0.0, %v1554
    %v1556 = vpop.f32.mrf.mxu0
    %v1557 = vpop.f32.mrf.mxu0
    %1558 = vdwg.mxu0
    %1559 = vmatprep.subr.bf16.mxu0 %v1485
    %1560 = vmatpush1.bf16.msra.mxu0 %v1484
    %1561 = vmatprep.subr.bf16.mxu0 %v1481
    %1562 = vmatpush1.bf16.msra.mxu0 %v1480
    %1563 = vmatprep.subr.bf16.mxu0 %v1477
    %1564 = vmatpush1.bf16.msra.mxu0 %v1476
    %1565 = vmatprep.subr.bf16.mxu0 %v1473
    %1566 = vmatpush1.bf16.msra.mxu0 %v1472
    %1567 = vmatprep.subr.bf16.mxu0 %v1469
    %1568 = vmatpush1.bf16.msra.mxu0 %v1468
    %1569 = vmatprep.subr.bf16.mxu0 %v1465
    %1570 = vmatpush1.bf16.msra.mxu0 %v1464
    %1571 = vmatprep.subr.bf16.mxu0 %v1461
    %1572 = vmatpush1.bf16.msra.mxu0 %v1460
    %1573 = vmatprep.subr.bf16.mxu0 %v1457
    %1574 = vmatpush1.bf16.msra.mxu0 %v1456
    %1575 = vmatprep.subr.bf16.mxu0 0
    %1576 = vmatpush2.bf16.msra.mxu0 0
    %1577 = vmatprep.subr.bf16.mxu0 0
    %1578 = vmatpush2.bf16.msra.mxu0 0
    %1579 = vmatprep.subr.bf16.mxu0 0
    %1580 = vmatpush2.bf16.msra.mxu0 0
    %1581 = vmatprep.subr.bf16.mxu0 0
    %1582 = vmatpush2.bf16.msra.mxu0 0
    %1583 = vmatprep.subr.bf16.mxu0 0
    %1584 = vmatpush2.bf16.msra.mxu0 0
    %1585 = vmatprep.subr.bf16.mxu0 0
    %1586 = vmatpush2.bf16.msra.mxu0 0
    %1587 = vmatprep.subr.bf16.mxu0 0
    %1588 = vmatpush2.bf16.msra.mxu0 0
    %1589 = vmatprep.subr.bf16.mxu0 0
    %1590 = vmatpush2.bf16.msra.mxu0 0
    %1591 = vmatprep.mubr.bf16.mxu0 0
    %1592 = vmatmul.mubr.bf16.gmra.mxu0 %v1325
    %v1593 = vpop.f32.mrf.mxu0
    %v1594 = vadd.f32 0.0, %v1593
    %v1595 = vpop.f32.mrf.mxu0
    %v1596 = vadd.f32 0.0, %v1595
    %v1597 = vpop.f32.mrf.mxu0
    %v1598 = vpop.f32.mrf.mxu0
    %1599 = vdwg.mxu0
    %v1600 = vadd.f32 %v1321, %v1553
    %v1601 = vadd.f32 %v1322, %v1555
    %v1602 = vadd.f32 %v1323, %v1594
    %v1603 = vadd.f32 %v1324, %v1596
    %v1604 = vxor.u32 %v1600, 2147483648
    %v1605 = vmul.f32 %v1604, 1.442695
    %v1606 = vpow.pop %v1605
    %v1607 = vadd.f32 %v1606, 1.0
    %v1608 = vrcp.pop %v1607
    %v1609 = vmul.f32 1.0, %v1608
    %v1610 = vxor.u32 %v1601, 2147483648
    %v1611 = vmul.f32 %v1610, 1.442695
    %v1612 = vpow.pop %v1611
    %v1613 = vadd.f32 %v1612, 1.0
    %v1614 = vrcp.pop %v1613
    %v1615 = vmul.f32 1.0, %v1614
    %v1616 = vtanh.pop %v1602
    %v1617 = vxor.u32 %v1603, 2147483648
    %v1618 = vmul.f32 %v1617, 1.442695
    %v1619 = vpow.pop %v1618
    %v1620 = vadd.f32 %v1619, 1.0
    %v1621 = vrcp.pop %v1620
    %v1622 = vmul.f32 1.0, %v1621
    %v1623 = vmul.f32 %v1615, %v1310
    %v1624 = vmul.f32 %v1609, %v1616
    %v1625 = vadd.f32 %v1623, %v1624
    %v1626 = vtanh.pop %v1625
    %v1627 = vmul.f32 %v1622, %v1626
    %s1628 = scalar_lea.vmem [#allocation3], 24
    %v1629 = vld [vmem:[%s1628] sm:$0xff]
    %v1630 = vadd.f32 %v1627, %v1629
    %s1631 = scalar_lea.vmem %s4, 24
    %1632 = vst [vmem:[%s1631] sm:$0xff] %v1630
    %s1633 = smul.u32 4, 4
    %s1634 = smul.addr %s1633, 8
    %s1635 = scalar_lea.vmem [#allocation2], %s1634
    %v1636 = vld [vmem:[%s1635] sm:$0xff]
    %v1637 = vld [vmem:[%s1635 + $0x8] sm:$0xff]
    %v1638 = vld [vmem:[%s1635 + $0x10] sm:$0xff]
    %v1639 = vld [vmem:[%s1635 + $0x18] sm:$0xff]
    %v1640 = vpack.c.bf16 %v1627, %v1627
    %v1641 = vld [vmem:[#allocation6] sm:$0xff]
    %v1642 = vld [vmem:[#allocation6 + $0x8] sm:$0xff]
    %v1643 = vld [vmem:[#allocation6 + $0x10] sm:$0xff]
    %v1644 = vld [vmem:[#allocation6 + $0x18] sm:$0xff]
    %v1645 = vld [vmem:[#allocation6 + $0x20] sm:$0xff]
    %v1646 = vld [vmem:[#allocation6 + $0x28] sm:$0xff]
    %v1647 = vld [vmem:[#allocation6 + $0x30] sm:$0xff]
    %v1648 = vld [vmem:[#allocation6 + $0x38] sm:$0xff]
    %v1649 = vld [vmem:[#allocation6 + $0x40] sm:$0xff]
    %v1650 = vld [vmem:[#allocation6 + $0x48] sm:$0xff]
    %v1651 = vld [vmem:[#allocation6 + $0x50] sm:$0xff]
    %v1652 = vld [vmem:[#allocation6 + $0x58] sm:$0xff]
    %v1653 = vld [vmem:[#allocation6 + $0x60] sm:$0xff]
    %v1654 = vld [vmem:[#allocation6 + $0x68] sm:$0xff]
    %v1655 = vld [vmem:[#allocation6 + $0x70] sm:$0xff]
    %v1656 = vld [vmem:[#allocation6 + $0x78] sm:$0xff]
    %v1657 = vld [vmem:[#allocation6 + $0x80] sm:$0xff]
    %v1658 = vld [vmem:[#allocation6 + $0x88] sm:$0xff]
    %v1659 = vld [vmem:[#allocation6 + $0x90] sm:$0xff]
    %v1660 = vld [vmem:[#allocation6 + $0x98] sm:$0xff]
    %v1661 = vld [vmem:[#allocation6 + $0xa0] sm:$0xff]
    %v1662 = vld [vmem:[#allocation6 + $0xa8] sm:$0xff]
    %v1663 = vld [vmem:[#allocation6 + $0xb0] sm:$0xff]
    %v1664 = vld [vmem:[#allocation6 + $0xb8] sm:$0xff]
    %v1665 = vld [vmem:[#allocation6 + $0xc0] sm:$0xff]
    %v1666 = vld [vmem:[#allocation6 + $0xc8] sm:$0xff]
    %v1667 = vld [vmem:[#allocation6 + $0xd0] sm:$0xff]
    %v1668 = vld [vmem:[#allocation6 + $0xd8] sm:$0xff]
    %v1669 = vld [vmem:[#allocation6 + $0xe0] sm:$0xff]
    %v1670 = vld [vmem:[#allocation6 + $0xe8] sm:$0xff]
    %v1671 = vld [vmem:[#allocation6 + $0xf0] sm:$0xff]
    %v1672 = vld [vmem:[#allocation6 + $0xf8] sm:$0xff]
    %v1705 = vunpack.c.l.b16 %v1641
    %v1706 = vunpack.c.h.b16 %v1641
    %v1707 = vunpack.c.l.b16 %v1642
    %v1708 = vunpack.c.h.b16 %v1642
    %v1709 = vunpack.c.l.b16 %v1643
    %v1710 = vunpack.c.h.b16 %v1643
    %v1711 = vunpack.c.l.b16 %v1644
    %v1712 = vunpack.c.h.b16 %v1644
    %v1713 = vunpack.c.l.b16 %v1645
    %v1714 = vunpack.c.h.b16 %v1645
    %v1715 = vunpack.c.l.b16 %v1646
    %v1716 = vunpack.c.h.b16 %v1646
    %v1717 = vunpack.c.l.b16 %v1647
    %v1718 = vunpack.c.h.b16 %v1647
    %v1719 = vunpack.c.l.b16 %v1648
    %v1720 = vunpack.c.h.b16 %v1648
    %v1721 = vunpack.c.l.b16 %v1649
    %v1722 = vunpack.c.h.b16 %v1649
    %v1723 = vunpack.c.l.b16 %v1650
    %v1724 = vunpack.c.h.b16 %v1650
    %v1725 = vunpack.c.l.b16 %v1651
    %v1726 = vunpack.c.h.b16 %v1651
    %v1727 = vunpack.c.l.b16 %v1652
    %v1728 = vunpack.c.h.b16 %v1652
    %v1729 = vunpack.c.l.b16 %v1653
    %v1730 = vunpack.c.h.b16 %v1653
    %v1731 = vunpack.c.l.b16 %v1654
    %v1732 = vunpack.c.h.b16 %v1654
    %v1733 = vunpack.c.l.b16 %v1655
    %v1734 = vunpack.c.h.b16 %v1655
    %v1735 = vunpack.c.l.b16 %v1656
    %v1736 = vunpack.c.h.b16 %v1656
    %v1737 = vunpack.c.l.b16 %v1657
    %v1738 = vunpack.c.h.b16 %v1657
    %v1739 = vunpack.c.l.b16 %v1658
    %v1740 = vunpack.c.h.b16 %v1658
    %v1741 = vunpack.c.l.b16 %v1659
    %v1742 = vunpack.c.h.b16 %v1659
    %v1743 = vunpack.c.l.b16 %v1660
    %v1744 = vunpack.c.h.b16 %v1660
    %v1745 = vunpack.c.l.b16 %v1661
    %v1746 = vunpack.c.h.b16 %v1661
    %v1747 = vunpack.c.l.b16 %v1662
    %v1748 = vunpack.c.h.b16 %v1662
    %v1749 = vunpack.c.l.b16 %v1663
    %v1750 = vunpack.c.h.b16 %v1663
    %v1751 = vunpack.c.l.b16 %v1664
    %v1752 = vunpack.c.h.b16 %v1664
    %v1753 = vunpack.c.l.b16 %v1665
    %v1754 = vunpack.c.h.b16 %v1665
    %v1755 = vunpack.c.l.b16 %v1666
    %v1756 = vunpack.c.h.b16 %v1666
    %v1757 = vunpack.c.l.b16 %v1667
    %v1758 = vunpack.c.h.b16 %v1667
    %v1759 = vunpack.c.l.b16 %v1668
    %v1760 = vunpack.c.h.b16 %v1668
    %v1761 = vunpack.c.l.b16 %v1669
    %v1762 = vunpack.c.h.b16 %v1669
    %v1763 = vunpack.c.l.b16 %v1670
    %v1764 = vunpack.c.h.b16 %v1670
    %v1765 = vunpack.c.l.b16 %v1671
    %v1766 = vunpack.c.h.b16 %v1671
    %v1767 = vunpack.c.l.b16 %v1672
    %v1768 = vunpack.c.h.b16 %v1672
    %v1769 = vpack.c.b16 %v1709, %v1705
    %v1770 = vpack.c.b16 %v1710, %v1706
    %v1771 = vpack.c.b16 %v1711, %v1707
    %v1772 = vpack.c.b16 %v1712, %v1708
    %v1773 = vpack.c.b16 %v1717, %v1713
    %v1774 = vpack.c.b16 %v1718, %v1714
    %v1775 = vpack.c.b16 %v1719, %v1715
    %v1776 = vpack.c.b16 %v1720, %v1716
    %v1777 = vpack.c.b16 %v1725, %v1721
    %v1778 = vpack.c.b16 %v1726, %v1722
    %v1779 = vpack.c.b16 %v1727, %v1723
    %v1780 = vpack.c.b16 %v1728, %v1724
    %v1781 = vpack.c.b16 %v1733, %v1729
    %v1782 = vpack.c.b16 %v1734, %v1730
    %v1783 = vpack.c.b16 %v1735, %v1731
    %v1784 = vpack.c.b16 %v1736, %v1732
    %v1785 = vpack.c.b16 %v1741, %v1737
    %v1786 = vpack.c.b16 %v1742, %v1738
    %v1787 = vpack.c.b16 %v1743, %v1739
    %v1788 = vpack.c.b16 %v1744, %v1740
    %v1789 = vpack.c.b16 %v1749, %v1745
    %v1790 = vpack.c.b16 %v1750, %v1746
    %v1791 = vpack.c.b16 %v1751, %v1747
    %v1792 = vpack.c.b16 %v1752, %v1748
    %v1793 = vpack.c.b16 %v1757, %v1753
    %v1794 = vpack.c.b16 %v1758, %v1754
    %v1795 = vpack.c.b16 %v1759, %v1755
    %v1796 = vpack.c.b16 %v1760, %v1756
    %v1797 = vpack.c.b16 %v1765, %v1761
    %v1798 = vpack.c.b16 %v1766, %v1762
    %v1799 = vpack.c.b16 %v1767, %v1763
    %v1800 = vpack.c.b16 %v1768, %v1764
    %1833 = vmatprep.subr.bf16.mxu0 %v1798
    %1834 = vmatpush1.bf16.msra.mxu0 %v1797
    %1835 = vmatprep.subr.bf16.mxu0 %v1794
    %1836 = vmatpush1.bf16.msra.mxu0 %v1793
    %1837 = vmatprep.subr.bf16.mxu0 %v1790
    %1838 = vmatpush1.bf16.msra.mxu0 %v1789
    %1839 = vmatprep.subr.bf16.mxu0 %v1786
    %1840 = vmatpush1.bf16.msra.mxu0 %v1785
    %1841 = vmatprep.subr.bf16.mxu0 %v1782
    %1842 = vmatpush1.bf16.msra.mxu0 %v1781
    %1843 = vmatprep.subr.bf16.mxu0 %v1778
    %1844 = vmatpush1.bf16.msra.mxu0 %v1777
    %1845 = vmatprep.subr.bf16.mxu0 %v1774
    %1846 = vmatpush1.bf16.msra.mxu0 %v1773
    %1847 = vmatprep.subr.bf16.mxu0 %v1770
    %1848 = vmatpush1.bf16.msra.mxu0 %v1769
    %1849 = vmatprep.subr.bf16.mxu0 0
    %1850 = vmatpush2.bf16.msra.mxu0 0
    %1851 = vmatprep.subr.bf16.mxu0 0
    %1852 = vmatpush2.bf16.msra.mxu0 0
    %1853 = vmatprep.subr.bf16.mxu0 0
    %1854 = vmatpush2.bf16.msra.mxu0 0
    %1855 = vmatprep.subr.bf16.mxu0 0
    %1856 = vmatpush2.bf16.msra.mxu0 0
    %1857 = vmatprep.subr.bf16.mxu0 0
    %1858 = vmatpush2.bf16.msra.mxu0 0
    %1859 = vmatprep.subr.bf16.mxu0 0
    %1860 = vmatpush2.bf16.msra.mxu0 0
    %1861 = vmatprep.subr.bf16.mxu0 0
    %1862 = vmatpush2.bf16.msra.mxu0 0
    %1863 = vmatprep.subr.bf16.mxu0 0
    %1864 = vmatpush2.bf16.msra.mxu0 0
    %1865 = vmatprep.mubr.bf16.mxu0 0
    %1866 = vmatmul.mubr.bf16.gmra.mxu0 %v1640
    %v1867 = vpop.f32.mrf.mxu0
    %v1868 = vadd.f32 0.0, %v1867
    %v1869 = vpop.f32.mrf.mxu0
    %v1870 = vadd.f32 0.0, %v1869
    %v1871 = vpop.f32.mrf.mxu0
    %v1872 = vpop.f32.mrf.mxu0
    %1873 = vdwg.mxu0
    %1874 = vmatprep.subr.bf16.mxu0 %v1800
    %1875 = vmatpush1.bf16.msra.mxu0 %v1799
    %1876 = vmatprep.subr.bf16.mxu0 %v1796
    %1877 = vmatpush1.bf16.msra.mxu0 %v1795
    %1878 = vmatprep.subr.bf16.mxu0 %v1792
    %1879 = vmatpush1.bf16.msra.mxu0 %v1791
    %1880 = vmatprep.subr.bf16.mxu0 %v1788
    %1881 = vmatpush1.bf16.msra.mxu0 %v1787
    %1882 = vmatprep.subr.bf16.mxu0 %v1784
    %1883 = vmatpush1.bf16.msra.mxu0 %v1783
    %1884 = vmatprep.subr.bf16.mxu0 %v1780
    %1885 = vmatpush1.bf16.msra.mxu0 %v1779
    %1886 = vmatprep.subr.bf16.mxu0 %v1776
    %1887 = vmatpush1.bf16.msra.mxu0 %v1775
    %1888 = vmatprep.subr.bf16.mxu0 %v1772
    %1889 = vmatpush1.bf16.msra.mxu0 %v1771
    %1890 = vmatprep.subr.bf16.mxu0 0
    %1891 = vmatpush2.bf16.msra.mxu0 0
    %1892 = vmatprep.subr.bf16.mxu0 0
    %1893 = vmatpush2.bf16.msra.mxu0 0
    %1894 = vmatprep.subr.bf16.mxu0 0
    %1895 = vmatpush2.bf16.msra.mxu0 0
    %1896 = vmatprep.subr.bf16.mxu0 0
    %1897 = vmatpush2.bf16.msra.mxu0 0
    %1898 = vmatprep.subr.bf16.mxu0 0
    %1899 = vmatpush2.bf16.msra.mxu0 0
    %1900 = vmatprep.subr.bf16.mxu0 0
    %1901 = vmatpush2.bf16.msra.mxu0 0
    %1902 = vmatprep.subr.bf16.mxu0 0
    %1903 = vmatpush2.bf16.msra.mxu0 0
    %1904 = vmatprep.subr.bf16.mxu0 0
    %1905 = vmatpush2.bf16.msra.mxu0 0
    %1906 = vmatprep.mubr.bf16.mxu0 0
    %1907 = vmatmul.mubr.bf16.gmra.mxu0 %v1640
    %v1908 = vpop.f32.mrf.mxu0
    %v1909 = vadd.f32 0.0, %v1908
    %v1910 = vpop.f32.mrf.mxu0
    %v1911 = vadd.f32 0.0, %v1910
    %v1912 = vpop.f32.mrf.mxu0
    %v1913 = vpop.f32.mrf.mxu0
    %1914 = vdwg.mxu0
    %v1915 = vadd.f32 %v1636, %v1868
    %v1916 = vadd.f32 %v1637, %v1870
    %v1917 = vadd.f32 %v1638, %v1909
    %v1918 = vadd.f32 %v1639, %v1911
    %v1919 = vxor.u32 %v1915, 2147483648
    %v1920 = vmul.f32 %v1919, 1.442695
    %v1921 = vpow.pop %v1920
    %v1922 = vadd.f32 %v1921, 1.0
    %v1923 = vrcp.pop %v1922
    %v1924 = vmul.f32 1.0, %v1923
    %v1925 = vxor.u32 %v1916, 2147483648
    %v1926 = vmul.f32 %v1925, 1.442695
    %v1927 = vpow.pop %v1926
    %v1928 = vadd.f32 %v1927, 1.0
    %v1929 = vrcp.pop %v1928
    %v1930 = vmul.f32 1.0, %v1929
    %v1931 = vtanh.pop %v1917
    %v1932 = vxor.u32 %v1918, 2147483648
    %v1933 = vmul.f32 %v1932, 1.442695
    %v1934 = vpow.pop %v1933
    %v1935 = vadd.f32 %v1934, 1.0
    %v1936 = vrcp.pop %v1935
    %v1937 = vmul.f32 1.0, %v1936
    %v1938 = vmul.f32 %v1930, %v1625
    %v1939 = vmul.f32 %v1924, %v1931
    %v1940 = vadd.f32 %v1938, %v1939
    %v1941 = vtanh.pop %v1940
    %v1942 = vmul.f32 %v1937, %v1941
    %s1943 = scalar_lea.vmem [#allocation3], 32
    %v1944 = vld [vmem:[%s1943] sm:$0xff]
    %v1945 = vadd.f32 %v1942, %v1944
    %s1946 = scalar_lea.vmem %s4, 32
    %1947 = vst [vmem:[%s1946] sm:$0xff] %v1945
    %s1948 = smul.u32 5, 4
    %s1949 = smul.addr %s1948, 8
    %s1950 = scalar_lea.vmem [#allocation2], %s1949
    %v1951 = vld [vmem:[%s1950] sm:$0xff]
    %v1952 = vld [vmem:[%s1950 + $0x8] sm:$0xff]
    %v1953 = vld [vmem:[%s1950 + $0x10] sm:$0xff]
    %v1954 = vld [vmem:[%s1950 + $0x18] sm:$0xff]
    %v1955 = vpack.c.bf16 %v1942, %v1942
    %v1956 = vld [vmem:[#allocation6] sm:$0xff]
    %v1957 = vld [vmem:[#allocation6 + $0x8] sm:$0xff]
    %v1958 = vld [vmem:[#allocation6 + $0x10] sm:$0xff]
    %v1959 = vld [vmem:[#allocation6 + $0x18] sm:$0xff]
    %v1960 = vld [vmem:[#allocation6 + $0x20] sm:$0xff]
    %v1961 = vld [vmem:[#allocation6 + $0x28] sm:$0xff]
    %v1962 = vld [vmem:[#allocation6 + $0x30] sm:$0xff]
    %v1963 = vld [vmem:[#allocation6 + $0x38] sm:$0xff]
    %v1964 = vld [vmem:[#allocation6 + $0x40] sm:$0xff]
    %v1965 = vld [vmem:[#allocation6 + $0x48] sm:$0xff]
    %v1966 = vld [vmem:[#allocation6 + $0x50] sm:$0xff]
    %v1967 = vld [vmem:[#allocation6 + $0x58] sm:$0xff]
    %v1968 = vld [vmem:[#allocation6 + $0x60] sm:$0xff]
    %v1969 = vld [vmem:[#allocation6 + $0x68] sm:$0xff]
    %v1970 = vld [vmem:[#allocation6 + $0x70] sm:$0xff]
    %v1971 = vld [vmem:[#allocation6 + $0x78] sm:$0xff]
    %v1972 = vld [vmem:[#allocation6 + $0x80] sm:$0xff]
    %v1973 = vld [vmem:[#allocation6 + $0x88] sm:$0xff]
    %v1974 = vld [vmem:[#allocation6 + $0x90] sm:$0xff]
    %v1975 = vld [vmem:[#allocation6 + $0x98] sm:$0xff]
    %v1976 = vld [vmem:[#allocation6 + $0xa0] sm:$0xff]
    %v1977 = vld [vmem:[#allocation6 + $0xa8] sm:$0xff]
    %v1978 = vld [vmem:[#allocation6 + $0xb0] sm:$0xff]
    %v1979 = vld [vmem:[#allocation6 + $0xb8] sm:$0xff]
    %v1980 = vld [vmem:[#allocation6 + $0xc0] sm:$0xff]
    %v1981 = vld [vmem:[#allocation6 + $0xc8] sm:$0xff]
    %v1982 = vld [vmem:[#allocation6 + $0xd0] sm:$0xff]
    %v1983 = vld [vmem:[#allocation6 + $0xd8] sm:$0xff]
    %v1984 = vld [vmem:[#allocation6 + $0xe0] sm:$0xff]
    %v1985 = vld [vmem:[#allocation6 + $0xe8] sm:$0xff]
    %v1986 = vld [vmem:[#allocation6 + $0xf0] sm:$0xff]
    %v1987 = vld [vmem:[#allocation6 + $0xf8] sm:$0xff]
    %v2020 = vunpack.c.l.b16 %v1956
    %v2021 = vunpack.c.h.b16 %v1956
    %v2022 = vunpack.c.l.b16 %v1957
    %v2023 = vunpack.c.h.b16 %v1957
    %v2024 = vunpack.c.l.b16 %v1958
    %v2025 = vunpack.c.h.b16 %v1958
    %v2026 = vunpack.c.l.b16 %v1959
    %v2027 = vunpack.c.h.b16 %v1959
    %v2028 = vunpack.c.l.b16 %v1960
    %v2029 = vunpack.c.h.b16 %v1960
    %v2030 = vunpack.c.l.b16 %v1961
    %v2031 = vunpack.c.h.b16 %v1961
    %v2032 = vunpack.c.l.b16 %v1962
    %v2033 = vunpack.c.h.b16 %v1962
    %v2034 = vunpack.c.l.b16 %v1963
    %v2035 = vunpack.c.h.b16 %v1963
    %v2036 = vunpack.c.l.b16 %v1964
    %v2037 = vunpack.c.h.b16 %v1964
    %v2038 = vunpack.c.l.b16 %v1965
    %v2039 = vunpack.c.h.b16 %v1965
    %v2040 = vunpack.c.l.b16 %v1966
    %v2041 = vunpack.c.h.b16 %v1966
    %v2042 = vunpack.c.l.b16 %v1967
    %v2043 = vunpack.c.h.b16 %v1967
    %v2044 = vunpack.c.l.b16 %v1968
    %v2045 = vunpack.c.h.b16 %v1968
    %v2046 = vunpack.c.l.b16 %v1969
    %v2047 = vunpack.c.h.b16 %v1969
    %v2048 = vunpack.c.l.b16 %v1970
    %v2049 = vunpack.c.h.b16 %v1970
    %v2050 = vunpack.c.l.b16 %v1971
    %v2051 = vunpack.c.h.b16 %v1971
    %v2052 = vunpack.c.l.b16 %v1972
    %v2053 = vunpack.c.h.b16 %v1972
    %v2054 = vunpack.c.l.b16 %v1973
    %v2055 = vunpack.c.h.b16 %v1973
    %v2056 = vunpack.c.l.b16 %v1974
    %v2057 = vunpack.c.h.b16 %v1974
    %v2058 = vunpack.c.l.b16 %v1975
    %v2059 = vunpack.c.h.b16 %v1975
    %v2060 = vunpack.c.l.b16 %v1976
    %v2061 = vunpack.c.h.b16 %v1976
    %v2062 = vunpack.c.l.b16 %v1977
    %v2063 = vunpack.c.h.b16 %v1977
    %v2064 = vunpack.c.l.b16 %v1978
    %v2065 = vunpack.c.h.b16 %v1978
    %v2066 = vunpack.c.l.b16 %v1979
    %v2067 = vunpack.c.h.b16 %v1979
    %v2068 = vunpack.c.l.b16 %v1980
    %v2069 = vunpack.c.h.b16 %v1980
    %v2070 = vunpack.c.l.b16 %v1981
    %v2071 = vunpack.c.h.b16 %v1981
    %v2072 = vunpack.c.l.b16 %v1982
    %v2073 = vunpack.c.h.b16 %v1982
    %v2074 = vunpack.c.l.b16 %v1983
    %v2075 = vunpack.c.h.b16 %v1983
    %v2076 = vunpack.c.l.b16 %v1984
    %v2077 = vunpack.c.h.b16 %v1984
    %v2078 = vunpack.c.l.b16 %v1985
    %v2079 = vunpack.c.h.b16 %v1985
    %v2080 = vunpack.c.l.b16 %v1986
    %v2081 = vunpack.c.h.b16 %v1986
    %v2082 = vunpack.c.l.b16 %v1987
    %v2083 = vunpack.c.h.b16 %v1987
    %v2084 = vpack.c.b16 %v2024, %v2020
    %v2085 = vpack.c.b16 %v2025, %v2021
    %v2086 = vpack.c.b16 %v2026, %v2022
    %v2087 = vpack.c.b16 %v2027, %v2023
    %v2088 = vpack.c.b16 %v2032, %v2028
    %v2089 = vpack.c.b16 %v2033, %v2029
    %v2090 = vpack.c.b16 %v2034, %v2030
    %v2091 = vpack.c.b16 %v2035, %v2031
    %v2092 = vpack.c.b16 %v2040, %v2036
    %v2093 = vpack.c.b16 %v2041, %v2037
    %v2094 = vpack.c.b16 %v2042, %v2038
    %v2095 = vpack.c.b16 %v2043, %v2039
    %v2096 = vpack.c.b16 %v2048, %v2044
    %v2097 = vpack.c.b16 %v2049, %v2045
    %v2098 = vpack.c.b16 %v2050, %v2046
    %v2099 = vpack.c.b16 %v2051, %v2047
    %v2100 = vpack.c.b16 %v2056, %v2052
    %v2101 = vpack.c.b16 %v2057, %v2053
    %v2102 = vpack.c.b16 %v2058, %v2054
    %v2103 = vpack.c.b16 %v2059, %v2055
    %v2104 = vpack.c.b16 %v2064, %v2060
    %v2105 = vpack.c.b16 %v2065, %v2061
    %v2106 = vpack.c.b16 %v2066, %v2062
    %v2107 = vpack.c.b16 %v2067, %v2063
    %v2108 = vpack.c.b16 %v2072, %v2068
    %v2109 = vpack.c.b16 %v2073, %v2069
    %v2110 = vpack.c.b16 %v2074, %v2070
    %v2111 = vpack.c.b16 %v2075, %v2071
    %v2112 = vpack.c.b16 %v2080, %v2076
    %v2113 = vpack.c.b16 %v2081, %v2077
    %v2114 = vpack.c.b16 %v2082, %v2078
    %v2115 = vpack.c.b16 %v2083, %v2079
    %2148 = vmatprep.subr.bf16.mxu0 %v2113
    %2149 = vmatpush1.bf16.msra.mxu0 %v2112
    %2150 = vmatprep.subr.bf16.mxu0 %v2109
    %2151 = vmatpush1.bf16.msra.mxu0 %v2108
    %2152 = vmatprep.subr.bf16.mxu0 %v2105
    %2153 = vmatpush1.bf16.msra.mxu0 %v2104
    %2154 = vmatprep.subr.bf16.mxu0 %v2101
    %2155 = vmatpush1.bf16.msra.mxu0 %v2100
    %2156 = vmatprep.subr.bf16.mxu0 %v2097
    %2157 = vmatpush1.bf16.msra.mxu0 %v2096
    %2158 = vmatprep.subr.bf16.mxu0 %v2093
    %2159 = vmatpush1.bf16.msra.mxu0 %v2092
    %2160 = vmatprep.subr.bf16.mxu0 %v2089
    %2161 = vmatpush1.bf16.msra.mxu0 %v2088
    %2162 = vmatprep.subr.bf16.mxu0 %v2085
    %2163 = vmatpush1.bf16.msra.mxu0 %v2084
    %2164 = vmatprep.subr.bf16.mxu0 0
    %2165 = vmatpush2.bf16.msra.mxu0 0
    %2166 = vmatprep.subr.bf16.mxu0 0
    %2167 = vmatpush2.bf16.msra.mxu0 0
    %2168 = vmatprep.subr.bf16.mxu0 0
    %2169 = vmatpush2.bf16.msra.mxu0 0
    %2170 = vmatprep.subr.bf16.mxu0 0
    %2171 = vmatpush2.bf16.msra.mxu0 0
    %2172 = vmatprep.subr.bf16.mxu0 0
    %2173 = vmatpush2.bf16.msra.mxu0 0
    %2174 = vmatprep.subr.bf16.mxu0 0
    %2175 = vmatpush2.bf16.msra.mxu0 0
    %2176 = vmatprep.subr.bf16.mxu0 0
    %2177 = vmatpush2.bf16.msra.mxu0 0
    %2178 = vmatprep.subr.bf16.mxu0 0
    %2179 = vmatpush2.bf16.msra.mxu0 0
    %2180 = vmatprep.mubr.bf16.mxu0 0
    %2181 = vmatmul.mubr.bf16.gmra.mxu0 %v1955
    %v2182 = vpop.f32.mrf.mxu0
    %v2183 = vadd.f32 0.0, %v2182
    %v2184 = vpop.f32.mrf.mxu0
    %v2185 = vadd.f32 0.0, %v2184
    %v2186 = vpop.f32.mrf.mxu0
    %v2187 = vpop.f32.mrf.mxu0
    %2188 = vdwg.mxu0
    %2189 = vmatprep.subr.bf16.mxu0 %v2115
    %2190 = vmatpush1.bf16.msra.mxu0 %v2114
    %2191 = vmatprep.subr.bf16.mxu0 %v2111
    %2192 = vmatpush1.bf16.msra.mxu0 %v2110
    %2193 = vmatprep.subr.bf16.mxu0 %v2107
    %2194 = vmatpush1.bf16.msra.mxu0 %v2106
    %2195 = vmatprep.subr.bf16.mxu0 %v2103
    %2196 = vmatpush1.bf16.msra.mxu0 %v2102
    %2197 = vmatprep.subr.bf16.mxu0 %v2099
    %2198 = vmatpush1.bf16.msra.mxu0 %v2098
    %2199 = vmatprep.subr.bf16.mxu0 %v2095
    %2200 = vmatpush1.bf16.msra.mxu0 %v2094
    %2201 = vmatprep.subr.bf16.mxu0 %v2091
    %2202 = vmatpush1.bf16.msra.mxu0 %v2090
    %2203 = vmatprep.subr.bf16.mxu0 %v2087
    %2204 = vmatpush1.bf16.msra.mxu0 %v2086
    %2205 = vmatprep.subr.bf16.mxu0 0
    %2206 = vmatpush2.bf16.msra.mxu0 0
    %2207 = vmatprep.subr.bf16.mxu0 0
    %2208 = vmatpush2.bf16.msra.mxu0 0
    %2209 = vmatprep.subr.bf16.mxu0 0
    %2210 = vmatpush2.bf16.msra.mxu0 0
    %2211 = vmatprep.subr.bf16.mxu0 0
    %2212 = vmatpush2.bf16.msra.mxu0 0
    %2213 = vmatprep.subr.bf16.mxu0 0
    %2214 = vmatpush2.bf16.msra.mxu0 0
    %2215 = vmatprep.subr.bf16.mxu0 0
    %2216 = vmatpush2.bf16.msra.mxu0 0
    %2217 = vmatprep.subr.bf16.mxu0 0
    %2218 = vmatpush2.bf16.msra.mxu0 0
    %2219 = vmatprep.subr.bf16.mxu0 0
    %2220 = vmatpush2.bf16.msra.mxu0 0
    %2221 = vmatprep.mubr.bf16.mxu0 0
    %2222 = vmatmul.mubr.bf16.gmra.mxu0 %v1955
    %v2223 = vpop.f32.mrf.mxu0
    %v2224 = vadd.f32 0.0, %v2223
    %v2225 = vpop.f32.mrf.mxu0
    %v2226 = vadd.f32 0.0, %v2225
    %v2227 = vpop.f32.mrf.mxu0
    %v2228 = vpop.f32.mrf.mxu0
    %2229 = vdwg.mxu0
    %v2230 = vadd.f32 %v1951, %v2183
    %v2231 = vadd.f32 %v1952, %v2185
    %v2232 = vadd.f32 %v1953, %v2224
    %v2233 = vadd.f32 %v1954, %v2226
    %v2234 = vxor.u32 %v2230, 2147483648
    %v2235 = vmul.f32 %v2234, 1.442695
    %v2236 = vpow.pop %v2235
    %v2237 = vadd.f32 %v2236, 1.0
    %v2238 = vrcp.pop %v2237
    %v2239 = vmul.f32 1.0, %v2238
    %v2240 = vxor.u32 %v2231, 2147483648
    %v2241 = vmul.f32 %v2240, 1.442695
    %v2242 = vpow.pop %v2241
    %v2243 = vadd.f32 %v2242, 1.0
    %v2244 = vrcp.pop %v2243
    %v2245 = vmul.f32 1.0, %v2244
    %v2246 = vtanh.pop %v2232
    %v2247 = vxor.u32 %v2233, 2147483648
    %v2248 = vmul.f32 %v2247, 1.442695
    %v2249 = vpow.pop %v2248
    %v2250 = vadd.f32 %v2249, 1.0
    %v2251 = vrcp.pop %v2250
    %v2252 = vmul.f32 1.0, %v2251
    %v2253 = vmul.f32 %v2245, %v1940
    %v2254 = vmul.f32 %v2239, %v2246
    %v2255 = vadd.f32 %v2253, %v2254
    %v2256 = vtanh.pop %v2255
    %v2257 = vmul.f32 %v2252, %v2256
    %s2258 = scalar_lea.vmem [#allocation3], 40
    %v2259 = vld [vmem:[%s2258] sm:$0xff]
    %v2260 = vadd.f32 %v2257, %v2259
    %s2261 = scalar_lea.vmem %s4, 40
    %2262 = vst [vmem:[%s2261] sm:$0xff] %v2260
    %s2263 = smul.u32 6, 4
    %s2264 = smul.addr %s2263, 8
    %s2265 = scalar_lea.vmem [#allocation2], %s2264
    %v2266 = vld [vmem:[%s2265] sm:$0xff]
    %v2267 = vld [vmem:[%s2265 + $0x8] sm:$0xff]
    %v2268 = vld [vmem:[%s2265 + $0x10] sm:$0xff]
    %v2269 = vld [vmem:[%s2265 + $0x18] sm:$0xff]
    %v2270 = vpack.c.bf16 %v2257, %v2257
    %v2271 = vld [vmem:[#allocation6] sm:$0xff]
    %v2272 = vld [vmem:[#allocation6 + $0x8] sm:$0xff]
    %v2273 = vld [vmem:[#allocation6 + $0x10] sm:$0xff]
    %v2274 = vld [vmem:[#allocation6 + $0x18] sm:$0xff]
    %v2275 = vld [vmem:[#allocation6 + $0x20] sm:$0xff]
    %v2276 = vld [vmem:[#allocation6 + $0x28] sm:$0xff]
    %v2277 = vld [vmem:[#allocation6 + $0x30] sm:$0xff]
    %v2278 = vld [vmem:[#allocation6 + $0x38] sm:$0xff]
    %v2279 = vld [vmem:[#allocation6 + $0x40] sm:$0xff]
    %v2280 = vld [vmem:[#allocation6 + $0x48] sm:$0xff]
    %v2281 = vld [vmem:[#allocation6 + $0x50] sm:$0xff]
    %v2282 = vld [vmem:[#allocation6 + $0x58] sm:$0xff]
    %v2283 = vld [vmem:[#allocation6 + $0x60] sm:$0xff]
    %v2284 = vld [vmem:[#allocation6 + $0x68] sm:$0xff]
    %v2285 = vld [vmem:[#allocation6 + $0x70] sm:$0xff]
    %v2286 = vld [vmem:[#allocation6 + $0x78] sm:$0xff]
    %v2287 = vld [vmem:[#allocation6 + $0x80] sm:$0xff]
    %v2288 = vld [vmem:[#allocation6 + $0x88] sm:$0xff]
    %v2289 = vld [vmem:[#allocation6 + $0x90] sm:$0xff]
    %v2290 = vld [vmem:[#allocation6 + $0x98] sm:$0xff]
    %v2291 = vld [vmem:[#allocation6 + $0xa0] sm:$0xff]
    %v2292 = vld [vmem:[#allocation6 + $0xa8] sm:$0xff]
    %v2293 = vld [vmem:[#allocation6 + $0xb0] sm:$0xff]
    %v2294 = vld [vmem:[#allocation6 + $0xb8] sm:$0xff]
    %v2295 = vld [vmem:[#allocation6 + $0xc0] sm:$0xff]
    %v2296 = vld [vmem:[#allocation6 + $0xc8] sm:$0xff]
    %v2297 = vld [vmem:[#allocation6 + $0xd0] sm:$0xff]
    %v2298 = vld [vmem:[#allocation6 + $0xd8] sm:$0xff]
    %v2299 = vld [vmem:[#allocation6 + $0xe0] sm:$0xff]
    %v2300 = vld [vmem:[#allocation6 + $0xe8] sm:$0xff]
    %v2301 = vld [vmem:[#allocation6 + $0xf0] sm:$0xff]
    %v2302 = vld [vmem:[#allocation6 + $0xf8] sm:$0xff]
    %v2335 = vunpack.c.l.b16 %v2271
    %v2336 = vunpack.c.h.b16 %v2271
    %v2337 = vunpack.c.l.b16 %v2272
    %v2338 = vunpack.c.h.b16 %v2272
    %v2339 = vunpack.c.l.b16 %v2273
    %v2340 = vunpack.c.h.b16 %v2273
    %v2341 = vunpack.c.l.b16 %v2274
    %v2342 = vunpack.c.h.b16 %v2274
    %v2343 = vunpack.c.l.b16 %v2275
    %v2344 = vunpack.c.h.b16 %v2275
    %v2345 = vunpack.c.l.b16 %v2276
    %v2346 = vunpack.c.h.b16 %v2276
    %v2347 = vunpack.c.l.b16 %v2277
    %v2348 = vunpack.c.h.b16 %v2277
    %v2349 = vunpack.c.l.b16 %v2278
    %v2350 = vunpack.c.h.b16 %v2278
    %v2351 = vunpack.c.l.b16 %v2279
    %v2352 = vunpack.c.h.b16 %v2279
    %v2353 = vunpack.c.l.b16 %v2280
    %v2354 = vunpack.c.h.b16 %v2280
    %v2355 = vunpack.c.l.b16 %v2281
    %v2356 = vunpack.c.h.b16 %v2281
    %v2357 = vunpack.c.l.b16 %v2282
    %v2358 = vunpack.c.h.b16 %v2282
    %v2359 = vunpack.c.l.b16 %v2283
    %v2360 = vunpack.c.h.b16 %v2283
    %v2361 = vunpack.c.l.b16 %v2284
    %v2362 = vunpack.c.h.b16 %v2284
    %v2363 = vunpack.c.l.b16 %v2285
    %v2364 = vunpack.c.h.b16 %v2285
    %v2365 = vunpack.c.l.b16 %v2286
    %v2366 = vunpack.c.h.b16 %v2286
    %v2367 = vunpack.c.l.b16 %v2287
    %v2368 = vunpack.c.h.b16 %v2287
    %v2369 = vunpack.c.l.b16 %v2288
    %v2370 = vunpack.c.h.b16 %v2288
    %v2371 = vunpack.c.l.b16 %v2289
    %v2372 = vunpack.c.h.b16 %v2289
    %v2373 = vunpack.c.l.b16 %v2290
    %v2374 = vunpack.c.h.b16 %v2290
    %v2375 = vunpack.c.l.b16 %v2291
    %v2376 = vunpack.c.h.b16 %v2291
    %v2377 = vunpack.c.l.b16 %v2292
    %v2378 = vunpack.c.h.b16 %v2292
    %v2379 = vunpack.c.l.b16 %v2293
    %v2380 = vunpack.c.h.b16 %v2293
    %v2381 = vunpack.c.l.b16 %v2294
    %v2382 = vunpack.c.h.b16 %v2294
    %v2383 = vunpack.c.l.b16 %v2295
    %v2384 = vunpack.c.h.b16 %v2295
    %v2385 = vunpack.c.l.b16 %v2296
    %v2386 = vunpack.c.h.b16 %v2296
    %v2387 = vunpack.c.l.b16 %v2297
    %v2388 = vunpack.c.h.b16 %v2297
    %v2389 = vunpack.c.l.b16 %v2298
    %v2390 = vunpack.c.h.b16 %v2298
    %v2391 = vunpack.c.l.b16 %v2299
    %v2392 = vunpack.c.h.b16 %v2299
    %v2393 = vunpack.c.l.b16 %v2300
    %v2394 = vunpack.c.h.b16 %v2300
    %v2395 = vunpack.c.l.b16 %v2301
    %v2396 = vunpack.c.h.b16 %v2301
    %v2397 = vunpack.c.l.b16 %v2302
    %v2398 = vunpack.c.h.b16 %v2302
    %v2399 = vpack.c.b16 %v2339, %v2335
    %v2400 = vpack.c.b16 %v2340, %v2336
    %v2401 = vpack.c.b16 %v2341, %v2337
    %v2402 = vpack.c.b16 %v2342, %v2338
    %v2403 = vpack.c.b16 %v2347, %v2343
    %v2404 = vpack.c.b16 %v2348, %v2344
    %v2405 = vpack.c.b16 %v2349, %v2345
    %v2406 = vpack.c.b16 %v2350, %v2346
    %v2407 = vpack.c.b16 %v2355, %v2351
    %v2408 = vpack.c.b16 %v2356, %v2352
    %v2409 = vpack.c.b16 %v2357, %v2353
    %v2410 = vpack.c.b16 %v2358, %v2354
    %v2411 = vpack.c.b16 %v2363, %v2359
    %v2412 = vpack.c.b16 %v2364, %v2360
    %v2413 = vpack.c.b16 %v2365, %v2361
    %v2414 = vpack.c.b16 %v2366, %v2362
    %v2415 = vpack.c.b16 %v2371, %v2367
    %v2416 = vpack.c.b16 %v2372, %v2368
    %v2417 = vpack.c.b16 %v2373, %v2369
    %v2418 = vpack.c.b16 %v2374, %v2370
    %v2419 = vpack.c.b16 %v2379, %v2375
    %v2420 = vpack.c.b16 %v2380, %v2376
    %v2421 = vpack.c.b16 %v2381, %v2377
    %v2422 = vpack.c.b16 %v2382, %v2378
    %v2423 = vpack.c.b16 %v2387, %v2383
    %v2424 = vpack.c.b16 %v2388, %v2384
    %v2425 = vpack.c.b16 %v2389, %v2385
    %v2426 = vpack.c.b16 %v2390, %v2386
    %v2427 = vpack.c.b16 %v2395, %v2391
    %v2428 = vpack.c.b16 %v2396, %v2392
    %v2429 = vpack.c.b16 %v2397, %v2393
    %v2430 = vpack.c.b16 %v2398, %v2394
    %2463 = vmatprep.subr.bf16.mxu0 %v2428
    %2464 = vmatpush1.bf16.msra.mxu0 %v2427
    %2465 = vmatprep.subr.bf16.mxu0 %v2424
    %2466 = vmatpush1.bf16.msra.mxu0 %v2423
    %2467 = vmatprep.subr.bf16.mxu0 %v2420
    %2468 = vmatpush1.bf16.msra.mxu0 %v2419
    %2469 = vmatprep.subr.bf16.mxu0 %v2416
    %2470 = vmatpush1.bf16.msra.mxu0 %v2415
    %2471 = vmatprep.subr.bf16.mxu0 %v2412
    %2472 = vmatpush1.bf16.msra.mxu0 %v2411
    %2473 = vmatprep.subr.bf16.mxu0 %v2408
    %2474 = vmatpush1.bf16.msra.mxu0 %v2407
    %2475 = vmatprep.subr.bf16.mxu0 %v2404
    %2476 = vmatpush1.bf16.msra.mxu0 %v2403
    %2477 = vmatprep.subr.bf16.mxu0 %v2400
    %2478 = vmatpush1.bf16.msra.mxu0 %v2399
    %2479 = vmatprep.subr.bf16.mxu0 0
    %2480 = vmatpush2.bf16.msra.mxu0 0
    %2481 = vmatprep.subr.bf16.mxu0 0
    %2482 = vmatpush2.bf16.msra.mxu0 0
    %2483 = vmatprep.subr.bf16.mxu0 0
    %2484 = vmatpush2.bf16.msra.mxu0 0
    %2485 = vmatprep.subr.bf16.mxu0 0
    %2486 = vmatpush2.bf16.msra.mxu0 0
    %2487 = vmatprep.subr.bf16.mxu0 0
    %2488 = vmatpush2.bf16.msra.mxu0 0
    %2489 = vmatprep.subr.bf16.mxu0 0
    %2490 = vmatpush2.bf16.msra.mxu0 0
    %2491 = vmatprep.subr.bf16.mxu0 0
    %2492 = vmatpush2.bf16.msra.mxu0 0
    %2493 = vmatprep.subr.bf16.mxu0 0
    %2494 = vmatpush2.bf16.msra.mxu0 0
    %2495 = vmatprep.mubr.bf16.mxu0 0
    %2496 = vmatmul.mubr.bf16.gmra.mxu0 %v2270
    %v2497 = vpop.f32.mrf.mxu0
    %v2498 = vadd.f32 0.0, %v2497
    %v2499 = vpop.f32.mrf.mxu0
    %v2500 = vadd.f32 0.0, %v2499
    %v2501 = vpop.f32.mrf.mxu0
    %v2502 = vpop.f32.mrf.mxu0
    %2503 = vdwg.mxu0
    %2504 = vmatprep.subr.bf16.mxu0 %v2430
    %2505 = vmatpush1.bf16.msra.mxu0 %v2429
    %2506 = vmatprep.subr.bf16.mxu0 %v2426
    %2507 = vmatpush1.bf16.msra.mxu0 %v2425
    %2508 = vmatprep.subr.bf16.mxu0 %v2422
    %2509 = vmatpush1.bf16.msra.mxu0 %v2421
    %2510 = vmatprep.subr.bf16.mxu0 %v2418
    %2511 = vmatpush1.bf16.msra.mxu0 %v2417
    %2512 = vmatprep.subr.bf16.mxu0 %v2414
    %2513 = vmatpush1.bf16.msra.mxu0 %v2413
    %2514 = vmatprep.subr.bf16.mxu0 %v2410
    %2515 = vmatpush1.bf16.msra.mxu0 %v2409
    %2516 = vmatprep.subr.bf16.mxu0 %v2406
    %2517 = vmatpush1.bf16.msra.mxu0 %v2405
    %2518 = vmatprep.subr.bf16.mxu0 %v2402
    %2519 = vmatpush1.bf16.msra.mxu0 %v2401
    %2520 = vmatprep.subr.bf16.mxu0 0
    %2521 = vmatpush2.bf16.msra.mxu0 0
    %2522 = vmatprep.subr.bf16.mxu0 0
    %2523 = vmatpush2.bf16.msra.mxu0 0
    %2524 = vmatprep.subr.bf16.mxu0 0
    %2525 = vmatpush2.bf16.msra.mxu0 0
    %2526 = vmatprep.subr.bf16.mxu0 0
    %2527 = vmatpush2.bf16.msra.mxu0 0
    %2528 = vmatprep.subr.bf16.mxu0 0
    %2529 = vmatpush2.bf16.msra.mxu0 0
    %2530 = vmatprep.subr.bf16.mxu0 0
    %2531 = vmatpush2.bf16.msra.mxu0 0
    %2532 = vmatprep.subr.bf16.mxu0 0
    %2533 = vmatpush2.bf16.msra.mxu0 0
    %2534 = vmatprep.subr.bf16.mxu0 0
    %2535 = vmatpush2.bf16.msra.mxu0 0
    %2536 = vmatprep.mubr.bf16.mxu0 0
    %2537 = vmatmul.mubr.bf16.gmra.mxu0 %v2270
    %v2538 = vpop.f32.mrf.mxu0
    %v2539 = vadd.f32 0.0, %v2538
    %v2540 = vpop.f32.mrf.mxu0
    %v2541 = vadd.f32 0.0, %v2540
    %v2542 = vpop.f32.mrf.mxu0
    %v2543 = vpop.f32.mrf.mxu0
    %2544 = vdwg.mxu0
    %v2545 = vadd.f32 %v2266, %v2498
    %v2546 = vadd.f32 %v2267, %v2500
    %v2547 = vadd.f32 %v2268, %v2539
    %v2548 = vadd.f32 %v2269, %v2541
    %v2549 = vxor.u32 %v2545, 2147483648
    %v2550 = vmul.f32 %v2549, 1.442695
    %v2551 = vpow.pop %v2550
    %v2552 = vadd.f32 %v2551, 1.0
    %v2553 = vrcp.pop %v2552
    %v2554 = vmul.f32 1.0, %v2553
    %v2555 = vxor.u32 %v2546, 2147483648
    %v2556 = vmul.f32 %v2555, 1.442695
    %v2557 = vpow.pop %v2556
    %v2558 = vadd.f32 %v2557, 1.0
    %v2559 = vrcp.pop %v2558
    %v2560 = vmul.f32 1.0, %v2559
    %v2561 = vtanh.pop %v2547
    %v2562 = vxor.u32 %v2548, 2147483648
    %v2563 = vmul.f32 %v2562, 1.442695
    %v2564 = vpow.pop %v2563
    %v2565 = vadd.f32 %v2564, 1.0
    %v2566 = vrcp.pop %v2565
    %v2567 = vmul.f32 1.0, %v2566
    %v2568 = vmul.f32 %v2560, %v2255
    %v2569 = vmul.f32 %v2554, %v2561
    %v2570 = vadd.f32 %v2568, %v2569
    %v2571 = vtanh.pop %v2570
    %v2572 = vmul.f32 %v2567, %v2571
    %s2573 = scalar_lea.vmem [#allocation3], 48
    %v2574 = vld [vmem:[%s2573] sm:$0xff]
    %v2575 = vadd.f32 %v2572, %v2574
    %s2576 = scalar_lea.vmem %s4, 48
    %2577 = vst [vmem:[%s2576] sm:$0xff] %v2575
    %s2578 = smul.u32 7, 4
    %s2579 = smul.addr %s2578, 8
    %s2580 = scalar_lea.vmem [#allocation2], %s2579
    %v2581 = vld [vmem:[%s2580] sm:$0xff]
    %v2582 = vld [vmem:[%s2580 + $0x8] sm:$0xff]
    %v2583 = vld [vmem:[%s2580 + $0x10] sm:$0xff]
    %v2584 = vld [vmem:[%s2580 + $0x18] sm:$0xff]
    %v2585 = vpack.c.bf16 %v2572, %v2572
    %v2586 = vld [vmem:[#allocation6] sm:$0xff]
    %v2587 = vld [vmem:[#allocation6 + $0x8] sm:$0xff]
    %v2588 = vld [vmem:[#allocation6 + $0x10] sm:$0xff]
    %v2589 = vld [vmem:[#allocation6 + $0x18] sm:$0xff]
    %v2590 = vld [vmem:[#allocation6 + $0x20] sm:$0xff]
    %v2591 = vld [vmem:[#allocation6 + $0x28] sm:$0xff]
    %v2592 = vld [vmem:[#allocation6 + $0x30] sm:$0xff]
    %v2593 = vld [vmem:[#allocation6 + $0x38] sm:$0xff]
    %v2594 = vld [vmem:[#allocation6 + $0x40] sm:$0xff]
    %v2595 = vld [vmem:[#allocation6 + $0x48] sm:$0xff]
    %v2596 = vld [vmem:[#allocation6 + $0x50] sm:$0xff]
    %v2597 = vld [vmem:[#allocation6 + $0x58] sm:$0xff]
    %v2598 = vld [vmem:[#allocation6 + $0x60] sm:$0xff]
    %v2599 = vld [vmem:[#allocation6 + $0x68] sm:$0xff]
    %v2600 = vld [vmem:[#allocation6 + $0x70] sm:$0xff]
    %v2601 = vld [vmem:[#allocation6 + $0x78] sm:$0xff]
    %v2602 = vld [vmem:[#allocation6 + $0x80] sm:$0xff]
    %v2603 = vld [vmem:[#allocation6 + $0x88] sm:$0xff]
    %v2604 = vld [vmem:[#allocation6 + $0x90] sm:$0xff]
    %v2605 = vld [vmem:[#allocation6 + $0x98] sm:$0xff]
    %v2606 = vld [vmem:[#allocation6 + $0xa0] sm:$0xff]
    %v2607 = vld [vmem:[#allocation6 + $0xa8] sm:$0xff]
    %v2608 = vld [vmem:[#allocation6 + $0xb0] sm:$0xff]
    %v2609 = vld [vmem:[#allocation6 + $0xb8] sm:$0xff]
    %v2610 = vld [vmem:[#allocation6 + $0xc0] sm:$0xff]
    %v2611 = vld [vmem:[#allocation6 + $0xc8] sm:$0xff]
    %v2612 = vld [vmem:[#allocation6 + $0xd0] sm:$0xff]
    %v2613 = vld [vmem:[#allocation6 + $0xd8] sm:$0xff]
    %v2614 = vld [vmem:[#allocation6 + $0xe0] sm:$0xff]
    %v2615 = vld [vmem:[#allocation6 + $0xe8] sm:$0xff]
    %v2616 = vld [vmem:[#allocation6 + $0xf0] sm:$0xff]
    %v2617 = vld [vmem:[#allocation6 + $0xf8] sm:$0xff]
    %v2650 = vunpack.c.l.b16 %v2586
    %v2651 = vunpack.c.h.b16 %v2586
    %v2652 = vunpack.c.l.b16 %v2587
    %v2653 = vunpack.c.h.b16 %v2587
    %v2654 = vunpack.c.l.b16 %v2588
    %v2655 = vunpack.c.h.b16 %v2588
    %v2656 = vunpack.c.l.b16 %v2589
    %v2657 = vunpack.c.h.b16 %v2589
    %v2658 = vunpack.c.l.b16 %v2590
    %v2659 = vunpack.c.h.b16 %v2590
    %v2660 = vunpack.c.l.b16 %v2591
    %v2661 = vunpack.c.h.b16 %v2591
    %v2662 = vunpack.c.l.b16 %v2592
    %v2663 = vunpack.c.h.b16 %v2592
    %v2664 = vunpack.c.l.b16 %v2593
    %v2665 = vunpack.c.h.b16 %v2593
    %v2666 = vunpack.c.l.b16 %v2594
    %v2667 = vunpack.c.h.b16 %v2594
    %v2668 = vunpack.c.l.b16 %v2595
    %v2669 = vunpack.c.h.b16 %v2595
    %v2670 = vunpack.c.l.b16 %v2596
    %v2671 = vunpack.c.h.b16 %v2596
    %v2672 = vunpack.c.l.b16 %v2597
    %v2673 = vunpack.c.h.b16 %v2597
    %v2674 = vunpack.c.l.b16 %v2598
    %v2675 = vunpack.c.h.b16 %v2598
    %v2676 = vunpack.c.l.b16 %v2599
    %v2677 = vunpack.c.h.b16 %v2599
    %v2678 = vunpack.c.l.b16 %v2600
    %v2679 = vunpack.c.h.b16 %v2600
    %v2680 = vunpack.c.l.b16 %v2601
    %v2681 = vunpack.c.h.b16 %v2601
    %v2682 = vunpack.c.l.b16 %v2602
    %v2683 = vunpack.c.h.b16 %v2602
    %v2684 = vunpack.c.l.b16 %v2603
    %v2685 = vunpack.c.h.b16 %v2603
    %v2686 = vunpack.c.l.b16 %v2604
    %v2687 = vunpack.c.h.b16 %v2604
    %v2688 = vunpack.c.l.b16 %v2605
    %v2689 = vunpack.c.h.b16 %v2605
    %v2690 = vunpack.c.l.b16 %v2606
    %v2691 = vunpack.c.h.b16 %v2606
    %v2692 = vunpack.c.l.b16 %v2607
    %v2693 = vunpack.c.h.b16 %v2607
    %v2694 = vunpack.c.l.b16 %v2608
    %v2695 = vunpack.c.h.b16 %v2608
    %v2696 = vunpack.c.l.b16 %v2609
    %v2697 = vunpack.c.h.b16 %v2609
    %v2698 = vunpack.c.l.b16 %v2610
    %v2699 = vunpack.c.h.b16 %v2610
    %v2700 = vunpack.c.l.b16 %v2611
    %v2701 = vunpack.c.h.b16 %v2611
    %v2702 = vunpack.c.l.b16 %v2612
    %v2703 = vunpack.c.h.b16 %v2612
    %v2704 = vunpack.c.l.b16 %v2613
    %v2705 = vunpack.c.h.b16 %v2613
    %v2706 = vunpack.c.l.b16 %v2614
    %v2707 = vunpack.c.h.b16 %v2614
    %v2708 = vunpack.c.l.b16 %v2615
    %v2709 = vunpack.c.h.b16 %v2615
    %v2710 = vunpack.c.l.b16 %v2616
    %v2711 = vunpack.c.h.b16 %v2616
    %v2712 = vunpack.c.l.b16 %v2617
    %v2713 = vunpack.c.h.b16 %v2617
    %v2714 = vpack.c.b16 %v2654, %v2650
    %v2715 = vpack.c.b16 %v2655, %v2651
    %v2716 = vpack.c.b16 %v2656, %v2652
    %v2717 = vpack.c.b16 %v2657, %v2653
    %v2718 = vpack.c.b16 %v2662, %v2658
    %v2719 = vpack.c.b16 %v2663, %v2659
    %v2720 = vpack.c.b16 %v2664, %v2660
    %v2721 = vpack.c.b16 %v2665, %v2661
    %v2722 = vpack.c.b16 %v2670, %v2666
    %v2723 = vpack.c.b16 %v2671, %v2667
    %v2724 = vpack.c.b16 %v2672, %v2668
    %v2725 = vpack.c.b16 %v2673, %v2669
    %v2726 = vpack.c.b16 %v2678, %v2674
    %v2727 = vpack.c.b16 %v2679, %v2675
    %v2728 = vpack.c.b16 %v2680, %v2676
    %v2729 = vpack.c.b16 %v2681, %v2677
    %v2730 = vpack.c.b16 %v2686, %v2682
    %v2731 = vpack.c.b16 %v2687, %v2683
    %v2732 = vpack.c.b16 %v2688, %v2684
    %v2733 = vpack.c.b16 %v2689, %v2685
    %v2734 = vpack.c.b16 %v2694, %v2690
    %v2735 = vpack.c.b16 %v2695, %v2691
    %v2736 = vpack.c.b16 %v2696, %v2692
    %v2737 = vpack.c.b16 %v2697, %v2693
    %v2738 = vpack.c.b16 %v2702, %v2698
    %v2739 = vpack.c.b16 %v2703, %v2699
    %v2740 = vpack.c.b16 %v2704, %v2700
    %v2741 = vpack.c.b16 %v2705, %v2701
    %v2742 = vpack.c.b16 %v2710, %v2706
    %v2743 = vpack.c.b16 %v2711, %v2707
    %v2744 = vpack.c.b16 %v2712, %v2708
    %v2745 = vpack.c.b16 %v2713, %v2709
    %2778 = vmatprep.subr.bf16.mxu0 %v2743
    %2779 = vmatpush1.bf16.msra.mxu0 %v2742
    %2780 = vmatprep.subr.bf16.mxu0 %v2739
    %2781 = vmatpush1.bf16.msra.mxu0 %v2738
    %2782 = vmatprep.subr.bf16.mxu0 %v2735
    %2783 = vmatpush1.bf16.msra.mxu0 %v2734
    %2784 = vmatprep.subr.bf16.mxu0 %v2731
    %2785 = vmatpush1.bf16.msra.mxu0 %v2730
    %2786 = vmatprep.subr.bf16.mxu0 %v2727
    %2787 = vmatpush1.bf16.msra.mxu0 %v2726
    %2788 = vmatprep.subr.bf16.mxu0 %v2723
    %2789 = vmatpush1.bf16.msra.mxu0 %v2722
    %2790 = vmatprep.subr.bf16.mxu0 %v2719
    %2791 = vmatpush1.bf16.msra.mxu0 %v2718
    %2792 = vmatprep.subr.bf16.mxu0 %v2715
    %2793 = vmatpush1.bf16.msra.mxu0 %v2714
    %2794 = vmatprep.subr.bf16.mxu0 0
    %2795 = vmatpush2.bf16.msra.mxu0 0
    %2796 = vmatprep.subr.bf16.mxu0 0
    %2797 = vmatpush2.bf16.msra.mxu0 0
    %2798 = vmatprep.subr.bf16.mxu0 0
    %2799 = vmatpush2.bf16.msra.mxu0 0
    %2800 = vmatprep.subr.bf16.mxu0 0
    %2801 = vmatpush2.bf16.msra.mxu0 0
    %2802 = vmatprep.subr.bf16.mxu0 0
    %2803 = vmatpush2.bf16.msra.mxu0 0
    %2804 = vmatprep.subr.bf16.mxu0 0
    %2805 = vmatpush2.bf16.msra.mxu0 0
    %2806 = vmatprep.subr.bf16.mxu0 0
    %2807 = vmatpush2.bf16.msra.mxu0 0
    %2808 = vmatprep.subr.bf16.mxu0 0
    %2809 = vmatpush2.bf16.msra.mxu0 0
    %2810 = vmatprep.mubr.bf16.mxu0 0
    %2811 = vmatmul.mubr.bf16.gmra.mxu0 %v2585
    %v2812 = vpop.f32.mrf.mxu0
    %v2813 = vadd.f32 0.0, %v2812
    %v2814 = vpop.f32.mrf.mxu0
    %v2815 = vadd.f32 0.0, %v2814
    %v2816 = vpop.f32.mrf.mxu0
    %v2817 = vpop.f32.mrf.mxu0
    %2818 = vdwg.mxu0
    %2819 = vmatprep.subr.bf16.mxu0 %v2745
    %2820 = vmatpush1.bf16.msra.mxu0 %v2744
    %2821 = vmatprep.subr.bf16.mxu0 %v2741
    %2822 = vmatpush1.bf16.msra.mxu0 %v2740
    %2823 = vmatprep.subr.bf16.mxu0 %v2737
    %2824 = vmatpush1.bf16.msra.mxu0 %v2736
    %2825 = vmatprep.subr.bf16.mxu0 %v2733
    %2826 = vmatpush1.bf16.msra.mxu0 %v2732
    %2827 = vmatprep.subr.bf16.mxu0 %v2729
    %2828 = vmatpush1.bf16.msra.mxu0 %v2728
    %2829 = vmatprep.subr.bf16.mxu0 %v2725
    %2830 = vmatpush1.bf16.msra.mxu0 %v2724
    %2831 = vmatprep.subr.bf16.mxu0 %v2721
    %2832 = vmatpush1.bf16.msra.mxu0 %v2720
    %2833 = vmatprep.subr.bf16.mxu0 %v2717
    %2834 = vmatpush1.bf16.msra.mxu0 %v2716
    %2835 = vmatprep.subr.bf16.mxu0 0
    %2836 = vmatpush2.bf16.msra.mxu0 0
    %2837 = vmatprep.subr.bf16.mxu0 0
    %2838 = vmatpush2.bf16.msra.mxu0 0
    %2839 = vmatprep.subr.bf16.mxu0 0
    %2840 = vmatpush2.bf16.msra.mxu0 0
    %2841 = vmatprep.subr.bf16.mxu0 0
    %2842 = vmatpush2.bf16.msra.mxu0 0
    %2843 = vmatprep.subr.bf16.mxu0 0
    %2844 = vmatpush2.bf16.msra.mxu0 0
    %2845 = vmatprep.subr.bf16.mxu0 0
    %2846 = vmatpush2.bf16.msra.mxu0 0
    %2847 = vmatprep.subr.bf16.mxu0 0
    %2848 = vmatpush2.bf16.msra.mxu0 0
    %2849 = vmatprep.subr.bf16.mxu0 0
    %2850 = vmatpush2.bf16.msra.mxu0 0
    %2851 = vmatprep.mubr.bf16.mxu0 0
    %2852 = vmatmul.mubr.bf16.gmra.mxu0 %v2585
    %v2853 = vpop.f32.mrf.mxu0
    %v2854 = vadd.f32 0.0, %v2853
    %v2855 = vpop.f32.mrf.mxu0
    %v2856 = vadd.f32 0.0, %v2855
    %v2857 = vpop.f32.mrf.mxu0
    %v2858 = vpop.f32.mrf.mxu0
    %2859 = vdwg.mxu0
    %v2860 = vadd.f32 %v2581, %v2813
    %v2861 = vadd.f32 %v2582, %v2815
    %v2862 = vadd.f32 %v2583, %v2854
    %v2863 = vadd.f32 %v2584, %v2856
    %v2864 = vxor.u32 %v2860, 2147483648
    %v2865 = vmul.f32 %v2864, 1.442695
    %v2866 = vpow.pop %v2865
    %v2867 = vadd.f32 %v2866, 1.0
    %v2868 = vrcp.pop %v2867
    %v2869 = vmul.f32 1.0, %v2868
    %v2870 = vxor.u32 %v2861, 2147483648
    %v2871 = vmul.f32 %v2870, 1.442695
    %v2872 = vpow.pop %v2871
    %v2873 = vadd.f32 %v2872, 1.0
    %v2874 = vrcp.pop %v2873
    %v2875 = vmul.f32 1.0, %v2874
    %v2876 = vtanh.pop %v2862
    %v2877 = vxor.u32 %v2863, 2147483648
    %v2878 = vmul.f32 %v2877, 1.442695
    %v2879 = vpow.pop %v2878
    %v2880 = vadd.f32 %v2879, 1.0
    %v2881 = vrcp.pop %v2880
    %v2882 = vmul.f32 1.0, %v2881
    %v2883 = vmul.f32 %v2875, %v2570
    %v2884 = vmul.f32 %v2869, %v2876
    %v2885 = vadd.f32 %v2883, %v2884
    %v2886 = vtanh.pop %v2885
    %v2887 = vmul.f32 %v2882, %v2886
    %s2888 = scalar_lea.vmem [#allocation3], 56
    %v2889 = vld [vmem:[%s2888] sm:$0xff]
    %v2890 = vadd.f32 %v2887, %v2889
    %s2891 = scalar_lea.vmem %s4, 56
    %2892 = vst [vmem:[%s2891] sm:$0xff] %v2890
    %2893 = vst [vmem:[#allocation4] sm:$0xff] %v2887
    %2894 = vst [vmem:[#allocation5] sm:$0xff] %v2885
    // Predicated region
    $region26: #{lstm_encoder.2} parent=1 // pred_check
      _
    $region27: #{lstm_encoder.2} parent=1 // pred_check_branch
      %2896 = sbr.rel (0) target = $region29
    $region28: #{lstm_encoder.2} parent=1 // pred_region
      _
    $region29: #{lstm_encoder.2} parent=1 // pred_fallthru
      _
    // Predicated region
    $region30: #{lstm_encoder.2} parent=1 // pred_check
      _
    $region31: #{lstm_encoder.2} parent=1 // pred_check_branch
      %2898 = sbr.rel (0) target = $region33
    $region32: #{lstm_encoder.2} parent=1 // pred_region
      _
    $region33: #{lstm_encoder.2} parent=1 // pred_fallthru
      _
    %2899 = vsyncpa [#allocation7], 1

// kernel: lstm_encoder.3
$region0: #{lstm_encoder.3}
  #allocation0 [shape = 'u32[]', space=smem, size = 0x4, offset = 0x4, fixed_abs, tag = 'smem constant byte address 0x4 - core index']
  #allocation1 [shape = 'u32[144,128]{1,0:T(1,128)}', space=vmem, size = 0x12000, scoped, tag = 'internal scratch']
  #allocation2 [shape = 'f32[64,512]{1,0:T(8,128)}', space=vmem, size = 0x20000, scoped, tag = 'scratch operand']
  #allocation3 [shape = 'f32[64,128]{1,0:T(8,128)}', space=vmem, size = 0x8000, scoped, tag = 'scratch operand']
  #allocation4 [shape = 'f32[8,128]{1,0:T(8,128)}', space=vmem, size = 0x1000, scoped, tag = 'scratch operand']
  #allocation5 [shape = 'f32[8,128]{1,0:T(8,128)}', space=vmem, size = 0x1000, scoped, tag = 'scratch operand']
  %s0 = inlined_call_operand.vmem [shape: f32[64,128], index: 0, kind: input, shape index: {}]
  %s1 = inlined_call_operand.vmem [shape: bf16[128,640], index: 1, kind: input, shape index: {}]
  %s2 = inlined_call_operand.vmem [shape: f32[1,640], index: 2, kind: input, shape index: {}]
  %s3 = inlined_call_operand.hbm [shape: bf16[128,512], index: 3, kind: input, shape index: {}]
  %s4 = inlined_call_operand.vmem [shape: f32[64,128], index: 4, kind: output, shape index: {}]
  %s5 = sld [smem:[#allocation0]]
  $region34: #{lstm_encoder.3} parent=0
    _
  %s7 = ssub.s32 1, %s5
  %s8 = scalar_select 0, %s7, %s5
  $region1: #{lstm_encoder.3} parent=0
    #allocation6 [shape = 'u8[131072]{0}', space=vmem, size = 0x20000, scoped, tag = 'input window, operand 3, single buffered']
    #allocation7 [shape = 's32[1]{0}', space=sflag, size = 0x4, scoped, tag = 'scoped memory for lstm_encoder.3']
    %9 = vsyncpa [#allocation7], 0
    // Predicated region
    $region2: #{lstm_encoder.3} parent=1 // pred_check
      _
    $region3: #{lstm_encoder.3} parent=1 // pred_check_branch
      %11 = sbr.rel (0) target = $region5
    $region4: #{lstm_encoder.3} parent=1 // pred_region
      _
    $region5: #{lstm_encoder.3} parent=1 // pred_fallthru
      _
    // Predicated region
    $region6: #{lstm_encoder.3} parent=1 // pred_check
      _
    $region7: #{lstm_encoder.3} parent=1 // pred_check_branch
      %13 = sbr.rel (0) target = $region9
    $region8: #{lstm_encoder.3} parent=1 // pred_region
      _
    $region9: #{lstm_encoder.3} parent=1 // pred_fallthru
      _
    // Predicated region
    $region10: #{lstm_encoder.3} parent=1 // pred_check
      _
    $region11: #{lstm_encoder.3} parent=1 // pred_check_branch
      %15 = sbr.rel (0) target = $region13
    $region12: #{lstm_encoder.3} parent=1 // pred_region
      _
    $region13: #{lstm_encoder.3} parent=1 // pred_fallthru
      _
    // Predicated region
    $region14: #{lstm_encoder.3} parent=1 // pred_check
      _
    $region15: #{lstm_encoder.3} parent=1 // pred_check_branch
      %17 = sbr.rel (0) target = $region17
    $region16: #{lstm_encoder.3} parent=1 // pred_region
      %s19 = ssub.s32 4096, 4096
      %20 = vsyncadd [#allocation7], %s19
      %s21 = sshll.u32 [#allocation6], 4
      %s22 = int_to_ptr.vmem [resolvable:$true] %s21
      %27 = dma.hbm_to_vmem [thread:$0]  %s3, 4096, %s22, [#allocation7], 256, 256, 16
    $region17: #{lstm_encoder.3} parent=1 // pred_fallthru
      _
    // Predicated region
    $region18: #{lstm_encoder.3} parent=1 // pred_check
      _
    $region19: #{lstm_encoder.3} parent=1 // pred_check_branch
      %29 = sbr.rel (0) target = $region21
    $region20: #{lstm_encoder.3} parent=1 // pred_region
      %30 = dma.done [#allocation7], 4096
    $region21: #{lstm_encoder.3} parent=1 // pred_fallthru
      _
    %v32 = vld [vmem:[%s0] sm:$0xff]
    %v33 = vld [vmem:[%s0 + $0x8] sm:$0xff]
    %v34 = vld [vmem:[%s0 + $0x10] sm:$0xff]
    %v35 = vld [vmem:[%s0 + $0x18] sm:$0xff]
    %v36 = vld [vmem:[%s0 + $0x20] sm:$0xff]
    %v37 = vld [vmem:[%s0 + $0x28] sm:$0xff]
    %v38 = vld [vmem:[%s0 + $0x30] sm:$0xff]
    %v39 = vld [vmem:[%s0 + $0x38] sm:$0xff]
    %v40 = vpack.c.bf16 %v33, %v32
    %v41 = vpack.c.bf16 %v35, %v34
    %v42 = vpack.c.bf16 %v37, %v36
    %v43 = vpack.c.bf16 %v39, %v38
    %v44 = vld [vmem:[%s1] sm:$0xff]
    %v45 = vld [vmem:[%s1 + $0x8] sm:$0xff]
    %v46 = vld [vmem:[%s1 + $0x10] sm:$0xf]
    %v47 = vld [vmem:[%s1 + $0x14] sm:$0xff]
    %v48 = vld [vmem:[%s1 + $0x1c] sm:$0xff]
    %v49 = vld [vmem:[%s1 + $0x24] sm:$0xf]
    %v50 = vld [vmem:[%s1 + $0x28] sm:$0xff]
    %v51 = vld [vmem:[%s1 + $0x30] sm:$0xff]
    %v52 = vld [vmem:[%s1 + $0x38] sm:$0xf]
    %v53 = vld [vmem:[%s1 + $0x3c] sm:$0xff]
    %v54 = vld [vmem:[%s1 + $0x44] sm:$0xff]
    %v55 = vld [vmem:[%s1 + $0x4c] sm:$0xf]
    %v56 = vld [vmem:[%s1 + $0x50] sm:$0xff]
    %v57 = vld [vmem:[%s1 + $0x58] sm:$0xff]
    %v58 = vld [vmem:[%s1 + $0x60] sm:$0xf]
    %v59 = vld [vmem:[%s1 + $0x64] sm:$0xff]
    %v60 = vld [vmem:[%s1 + $0x6c] sm:$0xff]
    %v61 = vld [vmem:[%s1 + $0x74] sm:$0xf]
    %v62 = vld [vmem:[%s1 + $0x78] sm:$0xff]
    %v63 = vld [vmem:[%s1 + $0x80] sm:$0xff]
    %v64 = vld [vmem:[%s1 + $0x88] sm:$0xf]
    %v65 = vld [vmem:[%s1 + $0x8c] sm:$0xff]
    %v66 = vld [vmem:[%s1 + $0x94] sm:$0xff]
    %v67 = vld [vmem:[%s1 + $0x9c] sm:$0xf]
    %v68 = vld [vmem:[%s1 + $0xa0] sm:$0xff]
    %v69 = vld [vmem:[%s1 + $0xa8] sm:$0xff]
    %v70 = vld [vmem:[%s1 + $0xb0] sm:$0xf]
    %v71 = vld [vmem:[%s1 + $0xb4] sm:$0xff]
    %v72 = vld [vmem:[%s1 + $0xbc] sm:$0xff]
    %v73 = vld [vmem:[%s1 + $0xc4] sm:$0xf]
    %v74 = vld [vmem:[%s1 + $0xc8] sm:$0xff]
    %v75 = vld [vmem:[%s1 + $0xd0] sm:$0xff]
    %v76 = vld [vmem:[%s1 + $0xd8] sm:$0xf]
    %v77 = vld [vmem:[%s1 + $0xdc] sm:$0xff]
    %v78 = vld [vmem:[%s1 + $0xe4] sm:$0xff]
    %v79 = vld [vmem:[%s1 + $0xec] sm:$0xf]
    %v80 = vld [vmem:[%s1 + $0xf0] sm:$0xff]
    %v81 = vld [vmem:[%s1 + $0xf8] sm:$0xff]
    %v82 = vld [vmem:[%s1 + $0x100] sm:$0xf]
    %v83 = vld [vmem:[%s1 + $0x104] sm:$0xff]
    %v84 = vld [vmem:[%s1 + $0x10c] sm:$0xff]
    %v85 = vld [vmem:[%s1 + $0x114] sm:$0xf]
    %v86 = vld [vmem:[%s1 + $0x118] sm:$0xff]
    %v87 = vld [vmem:[%s1 + $0x120] sm:$0xff]
    %v88 = vld [vmem:[%s1 + $0x128] sm:$0xf]
    %v89 = vld [vmem:[%s1 + $0x12c] sm:$0xff]
    %v90 = vld [vmem:[%s1 + $0x134] sm:$0xff]
    %v91 = vld [vmem:[%s1 + $0x13c] sm:$0xf]
    %v92 = vld [vmem:[%s2] sm:$0x1f]
    %v94 = vlaneseq
    %v95 = vshrl.u32 %v94, 7
    %v96 = vsub.s32 0, %v95
    %v97 = vrot.slane %v92, %v96
    %v98 = vlaneseq
    %v99 = vshrl.u32 %v98, 7
    %v100 = vsub.s32 1, %v99
    %v101 = vrot.slane %v92, %v100
    %v102 = vlaneseq
    %v103 = vshrl.u32 %v102, 7
    %v104 = vsub.s32 2, %v103
    %v105 = vrot.slane %v92, %v104
    %v106 = vlaneseq
    %v107 = vshrl.u32 %v106, 7
    %v108 = vsub.s32 3, %v107
    %v109 = vrot.slane %v92, %v108
    %v110 = vlaneseq
    %v111 = vshrl.u32 %v110, 7
    %v112 = vsub.s32 4, %v111
    %v113 = vrot.slane %v92, %v112
    %v167 = vunpack.c.l.b16 %v44
    %v168 = vunpack.c.h.b16 %v44
    %v169 = vunpack.c.l.b16 %v45
    %v170 = vunpack.c.h.b16 %v45
    %v171 = vunpack.c.l.b16 %v46
    %v172 = vunpack.c.l.b16 %v47
    %v173 = vunpack.c.h.b16 %v47
    %v174 = vunpack.c.l.b16 %v48
    %v175 = vunpack.c.h.b16 %v48
    %v176 = vunpack.c.l.b16 %v49
    %v177 = vunpack.c.l.b16 %v50
    %v178 = vunpack.c.h.b16 %v50
    %v179 = vunpack.c.l.b16 %v51
    %v180 = vunpack.c.h.b16 %v51
    %v181 = vunpack.c.l.b16 %v52
    %v182 = vunpack.c.l.b16 %v53
    %v183 = vunpack.c.h.b16 %v53
    %v184 = vunpack.c.l.b16 %v54
    %v185 = vunpack.c.h.b16 %v54
    %v186 = vunpack.c.l.b16 %v55
    %v187 = vunpack.c.l.b16 %v56
    %v188 = vunpack.c.h.b16 %v56
    %v189 = vunpack.c.l.b16 %v57
    %v190 = vunpack.c.h.b16 %v57
    %v191 = vunpack.c.l.b16 %v58
    %v192 = vunpack.c.l.b16 %v59
    %v193 = vunpack.c.h.b16 %v59
    %v194 = vunpack.c.l.b16 %v60
    %v195 = vunpack.c.h.b16 %v60
    %v196 = vunpack.c.l.b16 %v61
    %v197 = vunpack.c.l.b16 %v62
    %v198 = vunpack.c.h.b16 %v62
    %v199 = vunpack.c.l.b16 %v63
    %v200 = vunpack.c.h.b16 %v63
    %v201 = vunpack.c.l.b16 %v64
    %v202 = vunpack.c.l.b16 %v65
    %v203 = vunpack.c.h.b16 %v65
    %v204 = vunpack.c.l.b16 %v66
    %v205 = vunpack.c.h.b16 %v66
    %v206 = vunpack.c.l.b16 %v67
    %v207 = vunpack.c.l.b16 %v68
    %v208 = vunpack.c.h.b16 %v68
    %v209 = vunpack.c.l.b16 %v69
    %v210 = vunpack.c.h.b16 %v69
    %v211 = vunpack.c.l.b16 %v70
    %v212 = vunpack.c.l.b16 %v71
    %v213 = vunpack.c.h.b16 %v71
    %v214 = vunpack.c.l.b16 %v72
    %v215 = vunpack.c.h.b16 %v72
    %v216 = vunpack.c.l.b16 %v73
    %v217 = vunpack.c.l.b16 %v74
    %v218 = vunpack.c.h.b16 %v74
    %v219 = vunpack.c.l.b16 %v75
    %v220 = vunpack.c.h.b16 %v75
    %v221 = vunpack.c.l.b16 %v76
    %v222 = vunpack.c.l.b16 %v77
    %v223 = vunpack.c.h.b16 %v77
    %v224 = vunpack.c.l.b16 %v78
    %v225 = vunpack.c.h.b16 %v78
    %v226 = vunpack.c.l.b16 %v79
    %v227 = vunpack.c.l.b16 %v80
    %v228 = vunpack.c.h.b16 %v80
    %v229 = vunpack.c.l.b16 %v81
    %v230 = vunpack.c.h.b16 %v81
    %v231 = vunpack.c.l.b16 %v82
    %v232 = vunpack.c.l.b16 %v83
    %v233 = vunpack.c.h.b16 %v83
    %v234 = vunpack.c.l.b16 %v84
    %v235 = vunpack.c.h.b16 %v84
    %v236 = vunpack.c.l.b16 %v85
    %v237 = vunpack.c.l.b16 %v86
    %v238 = vunpack.c.h.b16 %v86
    %v239 = vunpack.c.l.b16 %v87
    %v240 = vunpack.c.h.b16 %v87
    %v241 = vunpack.c.l.b16 %v88
    %v242 = vunpack.c.l.b16 %v89
    %v243 = vunpack.c.h.b16 %v89
    %v244 = vunpack.c.l.b16 %v90
    %v245 = vunpack.c.h.b16 %v90
    %v246 = vunpack.c.l.b16 %v91
    %v247 = vpack.c.b16 %v172, %v167
    %v248 = vpack.c.b16 %v173, %v168
    %v249 = vpack.c.b16 %v174, %v169
    %v250 = vpack.c.b16 %v175, %v170
    %v251 = vpack.c.b16 %v176, %v171
    %v252 = vpack.c.b16 %v182, %v177
    %v253 = vpack.c.b16 %v183, %v178
    %v254 = vpack.c.b16 %v184, %v179
    %v255 = vpack.c.b16 %v185, %v180
    %v256 = vpack.c.b16 %v186, %v181
    %v257 = vpack.c.b16 %v192, %v187
    %v258 = vpack.c.b16 %v193, %v188
    %v259 = vpack.c.b16 %v194, %v189
    %v260 = vpack.c.b16 %v195, %v190
    %v261 = vpack.c.b16 %v196, %v191
    %v262 = vpack.c.b16 %v202, %v197
    %v263 = vpack.c.b16 %v203, %v198
    %v264 = vpack.c.b16 %v204, %v199
    %v265 = vpack.c.b16 %v205, %v200
    %v266 = vpack.c.b16 %v206, %v201
    %v267 = vpack.c.b16 %v212, %v207
    %v268 = vpack.c.b16 %v213, %v208
    %v269 = vpack.c.b16 %v214, %v209
    %v270 = vpack.c.b16 %v215, %v210
    %v271 = vpack.c.b16 %v216, %v211
    %v272 = vpack.c.b16 %v222, %v217
    %v273 = vpack.c.b16 %v223, %v218
    %v274 = vpack.c.b16 %v224, %v219
    %v275 = vpack.c.b16 %v225, %v220
    %v276 = vpack.c.b16 %v226, %v221
    %v277 = vpack.c.b16 %v232, %v227
    %v278 = vpack.c.b16 %v233, %v228
    %v279 = vpack.c.b16 %v234, %v229
    %v280 = vpack.c.b16 %v235, %v230
    %v281 = vpack.c.b16 %v236, %v231
    %v282 = vpack.c.b16 %v242, %v237
    %v283 = vpack.c.b16 %v243, %v238
    %v284 = vpack.c.b16 %v244, %v239
    %v285 = vpack.c.b16 %v245, %v240
    %v286 = vpack.c.b16 %v246, %v241
    %327 = vmatprep.subr.bf16.mxu0 %v283
    %328 = vmatpush1.bf16.msra.mxu0 %v282
    %329 = vmatprep.subr.bf16.mxu0 %v278
    %330 = vmatpush1.bf16.msra.mxu0 %v277
    %331 = vmatprep.subr.bf16.mxu0 %v273
    %332 = vmatpush1.bf16.msra.mxu0 %v272
    %333 = vmatprep.subr.bf16.mxu0 %v268
    %334 = vmatpush1.bf16.msra.mxu0 %v267
    %335 = vmatprep.subr.bf16.mxu0 %v263
    %336 = vmatpush1.bf16.msra.mxu0 %v262
    %337 = vmatprep.subr.bf16.mxu0 %v258
    %338 = vmatpush1.bf16.msra.mxu0 %v257
    %339 = vmatprep.subr.bf16.mxu0 %v253
    %340 = vmatpush1.bf16.msra.mxu0 %v252
    %341 = vmatprep.subr.bf16.mxu0 %v248
    %342 = vmatpush1.bf16.msra.mxu0 %v247
    %343 = vmatprep.subr.bf16.mxu0 0
    %344 = vmatpush2.bf16.msra.mxu0 0
    %345 = vmatprep.subr.bf16.mxu0 0
    %346 = vmatpush2.bf16.msra.mxu0 0
    %347 = vmatprep.subr.bf16.mxu0 0
    %348 = vmatpush2.bf16.msra.mxu0 0
    %349 = vmatprep.subr.bf16.mxu0 0
    %350 = vmatpush2.bf16.msra.mxu0 0
    %351 = vmatprep.subr.bf16.mxu0 0
    %352 = vmatpush2.bf16.msra.mxu0 0
    %353 = vmatprep.subr.bf16.mxu0 0
    %354 = vmatpush2.bf16.msra.mxu0 0
    %355 = vmatprep.subr.bf16.mxu0 0
    %356 = vmatpush2.bf16.msra.mxu0 0
    %357 = vmatprep.subr.bf16.mxu0 0
    %358 = vmatpush2.bf16.msra.mxu0 0
    %359 = vmatprep.mubr.bf16.mxu0 0
    %360 = vmatmul.mubr.bf16.gmra.mxu0 %v40
    %v361 = vpop.f32.mrf.mxu0
    %v362 = vadd.f32 %v97, %v361
    %v363 = vpop.f32.mrf.mxu0
    %v364 = vadd.f32 %v101, %v363
    %v365 = vpop.f32.mrf.mxu0
    %v366 = vadd.f32 %v97, %v365
    %v367 = vpop.f32.mrf.mxu0
    %v368 = vadd.f32 %v101, %v367
    %369 = vmatprep.mubr.bf16.mxu0 0
    %370 = vmatmul.mubr.bf16.gmra.mxu0 %v41
    %v371 = vpop.f32.mrf.mxu0
    %v372 = vadd.f32 %v97, %v371
    %v373 = vpop.f32.mrf.mxu0
    %v374 = vadd.f32 %v101, %v373
    %v375 = vpop.f32.mrf.mxu0
    %v376 = vadd.f32 %v97, %v375
    %v377 = vpop.f32.mrf.mxu0
    %v378 = vadd.f32 %v101, %v377
    %379 = vmatprep.mubr.bf16.mxu0 0
    %380 = vmatmul.mubr.bf16.gmra.mxu0 %v42
    %v381 = vpop.f32.mrf.mxu0
    %v382 = vadd.f32 %v97, %v381
    %v383 = vpop.f32.mrf.mxu0
    %v384 = vadd.f32 %v101, %v383
    %v385 = vpop.f32.mrf.mxu0
    %v386 = vadd.f32 %v97, %v385
    %v387 = vpop.f32.mrf.mxu0
    %v388 = vadd.f32 %v101, %v387
    %389 = vmatprep.mubr.bf16.mxu0 0
    %390 = vmatmul.mubr.bf16.gmra.mxu0 %v43
    %v391 = vpop.f32.mrf.mxu0
    %v392 = vadd.f32 %v97, %v391
    %v393 = vpop.f32.mrf.mxu0
    %v394 = vadd.f32 %v101, %v393
    %v395 = vpop.f32.mrf.mxu0
    %v396 = vadd.f32 %v97, %v395
    %v397 = vpop.f32.mrf.mxu0
    %v398 = vadd.f32 %v101, %v397
    %399 = vdwg.mxu0
    %400 = vmatprep.subr.bf16.mxu0 %v285
    %401 = vmatpush1.bf16.msra.mxu0 %v284
    %402 = vmatprep.subr.bf16.mxu0 %v280
    %403 = vmatpush1.bf16.msra.mxu0 %v279
    %404 = vmatprep.subr.bf16.mxu0 %v275
    %405 = vmatpush1.bf16.msra.mxu0 %v274
    %406 = vmatprep.subr.bf16.mxu0 %v270
    %407 = vmatpush1.bf16.msra.mxu0 %v269
    %408 = vmatprep.subr.bf16.mxu0 %v265
    %409 = vmatpush1.bf16.msra.mxu0 %v264
    %410 = vmatprep.subr.bf16.mxu0 %v260
    %411 = vmatpush1.bf16.msra.mxu0 %v259
    %412 = vmatprep.subr.bf16.mxu0 %v255
    %413 = vmatpush1.bf16.msra.mxu0 %v254
    %414 = vmatprep.subr.bf16.mxu0 %v250
    %415 = vmatpush1.bf16.msra.mxu0 %v249
    %416 = vmatprep.subr.bf16.mxu0 0
    %417 = vmatpush2.bf16.msra.mxu0 0
    %418 = vmatprep.subr.bf16.mxu0 0
    %419 = vmatpush2.bf16.msra.mxu0 0
    %420 = vmatprep.subr.bf16.mxu0 0
    %421 = vmatpush2.bf16.msra.mxu0 0
    %422 = vmatprep.subr.bf16.mxu0 0
    %423 = vmatpush2.bf16.msra.mxu0 0
    %424 = vmatprep.subr.bf16.mxu0 0
    %425 = vmatpush2.bf16.msra.mxu0 0
    %426 = vmatprep.subr.bf16.mxu0 0
    %427 = vmatpush2.bf16.msra.mxu0 0
    %428 = vmatprep.subr.bf16.mxu0 0
    %429 = vmatpush2.bf16.msra.mxu0 0
    %430 = vmatprep.subr.bf16.mxu0 0
    %431 = vmatpush2.bf16.msra.mxu0 0
    %432 = vmatprep.mubr.bf16.mxu0 0
    %433 = vmatmul.mubr.bf16.gmra.mxu0 %v40
    %v434 = vpop.f32.mrf.mxu0
    %v435 = vadd.f32 %v105, %v434
    %v436 = vpop.f32.mrf.mxu0
    %v437 = vadd.f32 %v109, %v436
    %v438 = vpop.f32.mrf.mxu0
    %v439 = vadd.f32 %v105, %v438
    %v440 = vpop.f32.mrf.mxu0
    %v441 = vadd.f32 %v109, %v440
    %442 = vmatprep.mubr.bf16.mxu0 0
    %443 = vmatmul.mubr.bf16.gmra.mxu0 %v41
    %v444 = vpop.f32.mrf.mxu0
    %v445 = vadd.f32 %v105, %v444
    %v446 = vpop.f32.mrf.mxu0
    %v447 = vadd.f32 %v109, %v446
    %v448 = vpop.f32.mrf.mxu0
    %v449 = vadd.f32 %v105, %v448
    %v450 = vpop.f32.mrf.mxu0
    %v451 = vadd.f32 %v109, %v450
    %452 = vmatprep.mubr.bf16.mxu0 0
    %453 = vmatmul.mubr.bf16.gmra.mxu0 %v42
    %v454 = vpop.f32.mrf.mxu0
    %v455 = vadd.f32 %v105, %v454
    %v456 = vpop.f32.mrf.mxu0
    %v457 = vadd.f32 %v109, %v456
    %v458 = vpop.f32.mrf.mxu0
    %v459 = vadd.f32 %v105, %v458
    %v460 = vpop.f32.mrf.mxu0
    %v461 = vadd.f32 %v109, %v460
    %462 = vmatprep.mubr.bf16.mxu0 0
    %463 = vmatmul.mubr.bf16.gmra.mxu0 %v43
    %v464 = vpop.f32.mrf.mxu0
    %v465 = vadd.f32 %v105, %v464
    %v466 = vpop.f32.mrf.mxu0
    %v467 = vadd.f32 %v109, %v466
    %v468 = vpop.f32.mrf.mxu0
    %v469 = vadd.f32 %v105, %v468
    %v470 = vpop.f32.mrf.mxu0
    %v471 = vadd.f32 %v109, %v470
    %472 = vdwg.mxu0
    %473 = vmatprep.subr.bf16.mxu0 0
    %474 = vmatpush1.bf16.msra.mxu0 %v286
    %475 = vmatprep.subr.bf16.mxu0 0
    %476 = vmatpush1.bf16.msra.mxu0 %v281
    %477 = vmatprep.subr.bf16.mxu0 0
    %478 = vmatpush1.bf16.msra.mxu0 %v276
    %479 = vmatprep.subr.bf16.mxu0 0
    %480 = vmatpush1.bf16.msra.mxu0 %v271
    %481 = vmatprep.subr.bf16.mxu0 0
    %482 = vmatpush1.bf16.msra.mxu0 %v266
    %483 = vmatprep.subr.bf16.mxu0 0
    %484 = vmatpush1.bf16.msra.mxu0 %v261
    %485 = vmatprep.subr.bf16.mxu0 0
    %486 = vmatpush1.bf16.msra.mxu0 %v256
    %487 = vmatprep.subr.bf16.mxu0 0
    %488 = vmatpush1.bf16.msra.mxu0 %v251
    %489 = vmatprep.subr.bf16.mxu0 0
    %490 = vmatpush2.bf16.msra.mxu0 0
    %491 = vmatprep.subr.bf16.mxu0 0
    %492 = vmatpush2.bf16.msra.mxu0 0
    %493 = vmatprep.subr.bf16.mxu0 0
    %494 = vmatpush2.bf16.msra.mxu0 0
    %495 = vmatprep.subr.bf16.mxu0 0
    %496 = vmatpush2.bf16.msra.mxu0 0
    %497 = vmatprep.subr.bf16.mxu0 0
    %498 = vmatpush2.bf16.msra.mxu0 0
    %499 = vmatprep.subr.bf16.mxu0 0
    %500 = vmatpush2.bf16.msra.mxu0 0
    %501 = vmatprep.subr.bf16.mxu0 0
    %502 = vmatpush2.bf16.msra.mxu0 0
    %503 = vmatprep.subr.bf16.mxu0 0
    %504 = vmatpush2.bf16.msra.mxu0 0
    %505 = vmatprep.mubr.bf16.mxu0 0
    %506 = vmatmul.mubr.bf16.gmra.mxu0 %v40
    %v507 = vpop.f32.mrf.mxu0
    %v508 = vadd.f32 %v113, %v507
    %v509 = vpop.f32.mrf.mxu0
    %v510 = vpop.f32.mrf.mxu0
    %v511 = vadd.f32 %v113, %v510
    %v512 = vpop.f32.mrf.mxu0
    %513 = vmatprep.mubr.bf16.mxu0 0
    %514 = vmatmul.mubr.bf16.gmra.mxu0 %v41
    %v515 = vpop.f32.mrf.mxu0
    %v516 = vadd.f32 %v113, %v515
    %v517 = vpop.f32.mrf.mxu0
    %v518 = vpop.f32.mrf.mxu0
    %v519 = vadd.f32 %v113, %v518
    %v520 = vpop.f32.mrf.mxu0
    %521 = vmatprep.mubr.bf16.mxu0 0
    %522 = vmatmul.mubr.bf16.gmra.mxu0 %v42
    %v523 = vpop.f32.mrf.mxu0
    %v524 = vadd.f32 %v113, %v523
    %v525 = vpop.f32.mrf.mxu0
    %v526 = vpop.f32.mrf.mxu0
    %v527 = vadd.f32 %v113, %v526
    %v528 = vpop.f32.mrf.mxu0
    %529 = vmatprep.mubr.bf16.mxu0 0
    %530 = vmatmul.mubr.bf16.gmra.mxu0 %v43
    %v531 = vpop.f32.mrf.mxu0
    %v532 = vadd.f32 %v113, %v531
    %v533 = vpop.f32.mrf.mxu0
    %v534 = vpop.f32.mrf.mxu0
    %v535 = vadd.f32 %v113, %v534
    %v536 = vpop.f32.mrf.mxu0
    %537 = vdwg.mxu0
    %538 = vst [vmem:[#allocation2] sm:$0xff] %v362
    %539 = vst [vmem:[#allocation2 + $0x8] sm:$0xff] %v364
    %540 = vst [vmem:[#allocation2 + $0x10] sm:$0xff] %v435
    %541 = vst [vmem:[#allocation2 + $0x18] sm:$0xff] %v437
    %542 = vst [vmem:[#allocation2 + $0x20] sm:$0xff] %v366
    %543 = vst [vmem:[#allocation2 + $0x28] sm:$0xff] %v368
    %544 = vst [vmem:[#allocation2 + $0x30] sm:$0xff] %v439
    %545 = vst [vmem:[#allocation2 + $0x38] sm:$0xff] %v441
    %546 = vst [vmem:[#allocation2 + $0x40] sm:$0xff] %v372
    %547 = vst [vmem:[#allocation2 + $0x48] sm:$0xff] %v374
    %548 = vst [vmem:[#allocation2 + $0x50] sm:$0xff] %v445
    %549 = vst [vmem:[#allocation2 + $0x58] sm:$0xff] %v447
    %550 = vst [vmem:[#allocation2 + $0x60] sm:$0xff] %v376
    %551 = vst [vmem:[#allocation2 + $0x68] sm:$0xff] %v378
    %552 = vst [vmem:[#allocation2 + $0x70] sm:$0xff] %v449
    %553 = vst [vmem:[#allocation2 + $0x78] sm:$0xff] %v451
    %554 = vst [vmem:[#allocation2 + $0x80] sm:$0xff] %v382
    %555 = vst [vmem:[#allocation2 + $0x88] sm:$0xff] %v384
    %556 = vst [vmem:[#allocation2 + $0x90] sm:$0xff] %v455
    %557 = vst [vmem:[#allocation2 + $0x98] sm:$0xff] %v457
    %558 = vst [vmem:[#allocation2 + $0xa0] sm:$0xff] %v386
    %559 = vst [vmem:[#allocation2 + $0xa8] sm:$0xff] %v388
    %560 = vst [vmem:[#allocation2 + $0xb0] sm:$0xff] %v459
    %561 = vst [vmem:[#allocation2 + $0xb8] sm:$0xff] %v461
    %562 = vst [vmem:[#allocation2 + $0xc0] sm:$0xff] %v392
    %563 = vst [vmem:[#allocation2 + $0xc8] sm:$0xff] %v394
    %564 = vst [vmem:[#allocation2 + $0xd0] sm:$0xff] %v465
    %565 = vst [vmem:[#allocation2 + $0xd8] sm:$0xff] %v467
    %566 = vst [vmem:[#allocation2 + $0xe0] sm:$0xff] %v396
    %567 = vst [vmem:[#allocation2 + $0xe8] sm:$0xff] %v398
    %568 = vst [vmem:[#allocation2 + $0xf0] sm:$0xff] %v469
    %569 = vst [vmem:[#allocation2 + $0xf8] sm:$0xff] %v471
    %570 = vst [vmem:[#allocation3] sm:$0xff] %v508
    %571 = vst [vmem:[#allocation3 + $0x8] sm:$0xff] %v511
    %572 = vst [vmem:[#allocation3 + $0x10] sm:$0xff] %v516
    %573 = vst [vmem:[#allocation3 + $0x18] sm:$0xff] %v519
    %574 = vst [vmem:[#allocation3 + $0x20] sm:$0xff] %v524
    %575 = vst [vmem:[#allocation3 + $0x28] sm:$0xff] %v527
    %576 = vst [vmem:[#allocation3 + $0x30] sm:$0xff] %v532
    %577 = vst [vmem:[#allocation3 + $0x38] sm:$0xff] %v535
    %p578 = scmp.eq.s32.totalorder 0, 0
    // Predicated region
    $region22: #{lstm_encoder.3} parent=1 // pred_check
      %p579 = pneg %p578
    $region23: #{lstm_encoder.3} parent=1 // pred_check_branch
      %581 = sbr.rel (%p579) target = $region25
    $region24: #{lstm_encoder.3} parent=1 // pred_region
      %582 = vst [vmem:[#allocation4] sm:$0xff] 0.0
      %583 = vst [vmem:[#allocation5] sm:$0xff] 0.0
    $region25: #{lstm_encoder.3} parent=1 // pred_fallthru
      _
    %v584 = vld [vmem:[#allocation4] sm:$0xff]
    %v585 = vld [vmem:[#allocation5] sm:$0xff]
    %s586 = smul.u32 0, 4
    %s587 = smul.addr %s586, 8
    %s588 = scalar_lea.vmem [#allocation2], %s587
    %v589 = vld [vmem:[%s588] sm:$0xff]
    %v590 = vld [vmem:[%s588 + $0x8] sm:$0xff]
    %v591 = vld [vmem:[%s588 + $0x10] sm:$0xff]
    %v592 = vld [vmem:[%s588 + $0x18] sm:$0xff]
    %v593 = vpack.c.bf16 %v584, %v584
    %v594 = vld [vmem:[#allocation6] sm:$0xff]
    %v595 = vld [vmem:[#allocation6 + $0x8] sm:$0xff]
    %v596 = vld [vmem:[#allocation6 + $0x10] sm:$0xff]
    %v597 = vld [vmem:[#allocation6 + $0x18] sm:$0xff]
    %v598 = vld [vmem:[#allocation6 + $0x20] sm:$0xff]
    %v599 = vld [vmem:[#allocation6 + $0x28] sm:$0xff]
    %v600 = vld [vmem:[#allocation6 + $0x30] sm:$0xff]
    %v601 = vld [vmem:[#allocation6 + $0x38] sm:$0xff]
    %v602 = vld [vmem:[#allocation6 + $0x40] sm:$0xff]
    %v603 = vld [vmem:[#allocation6 + $0x48] sm:$0xff]
    %v604 = vld [vmem:[#allocation6 + $0x50] sm:$0xff]
    %v605 = vld [vmem:[#allocation6 + $0x58] sm:$0xff]
    %v606 = vld [vmem:[#allocation6 + $0x60] sm:$0xff]
    %v607 = vld [vmem:[#allocation6 + $0x68] sm:$0xff]
    %v608 = vld [vmem:[#allocation6 + $0x70] sm:$0xff]
    %v609 = vld [vmem:[#allocation6 + $0x78] sm:$0xff]
    %v610 = vld [vmem:[#allocation6 + $0x80] sm:$0xff]
    %v611 = vld [vmem:[#allocation6 + $0x88] sm:$0xff]
    %v612 = vld [vmem:[#allocation6 + $0x90] sm:$0xff]
    %v613 = vld [vmem:[#allocation6 + $0x98] sm:$0xff]
    %v614 = vld [vmem:[#allocation6 + $0xa0] sm:$0xff]
    %v615 = vld [vmem:[#allocation6 + $0xa8] sm:$0xff]
    %v616 = vld [vmem:[#allocation6 + $0xb0] sm:$0xff]
    %v617 = vld [vmem:[#allocation6 + $0xb8] sm:$0xff]
    %v618 = vld [vmem:[#allocation6 + $0xc0] sm:$0xff]
    %v619 = vld [vmem:[#allocation6 + $0xc8] sm:$0xff]
    %v620 = vld [vmem:[#allocation6 + $0xd0] sm:$0xff]
    %v621 = vld [vmem:[#allocation6 + $0xd8] sm:$0xff]
    %v622 = vld [vmem:[#allocation6 + $0xe0] sm:$0xff]
    %v623 = vld [vmem:[#allocation6 + $0xe8] sm:$0xff]
    %v624 = vld [vmem:[#allocation6 + $0xf0] sm:$0xff]
    %v625 = vld [vmem:[#allocation6 + $0xf8] sm:$0xff]
    %v658 = vunpack.c.l.b16 %v594
    %v659 = vunpack.c.h.b16 %v594
    %v660 = vunpack.c.l.b16 %v595
    %v661 = vunpack.c.h.b16 %v595
    %v662 = vunpack.c.l.b16 %v596
    %v663 = vunpack.c.h.b16 %v596
    %v664 = vunpack.c.l.b16 %v597
    %v665 = vunpack.c.h.b16 %v597
    %v666 = vunpack.c.l.b16 %v598
    %v667 = vunpack.c.h.b16 %v598
    %v668 = vunpack.c.l.b16 %v599
    %v669 = vunpack.c.h.b16 %v599
    %v670 = vunpack.c.l.b16 %v600
    %v671 = vunpack.c.h.b16 %v600
    %v672 = vunpack.c.l.b16 %v601
    %v673 = vunpack.c.h.b16 %v601
    %v674 = vunpack.c.l.b16 %v602
    %v675 = vunpack.c.h.b16 %v602
    %v676 = vunpack.c.l.b16 %v603
    %v677 = vunpack.c.h.b16 %v603
    %v678 = vunpack.c.l.b16 %v604
    %v679 = vunpack.c.h.b16 %v604
    %v680 = vunpack.c.l.b16 %v605
    %v681 = vunpack.c.h.b16 %v605
    %v682 = vunpack.c.l.b16 %v606
    %v683 = vunpack.c.h.b16 %v606
    %v684 = vunpack.c.l.b16 %v607
    %v685 = vunpack.c.h.b16 %v607
    %v686 = vunpack.c.l.b16 %v608
    %v687 = vunpack.c.h.b16 %v608
    %v688 = vunpack.c.l.b16 %v609
    %v689 = vunpack.c.h.b16 %v609
    %v690 = vunpack.c.l.b16 %v610
    %v691 = vunpack.c.h.b16 %v610
    %v692 = vunpack.c.l.b16 %v611
    %v693 = vunpack.c.h.b16 %v611
    %v694 = vunpack.c.l.b16 %v612
    %v695 = vunpack.c.h.b16 %v612
    %v696 = vunpack.c.l.b16 %v613
    %v697 = vunpack.c.h.b16 %v613
    %v698 = vunpack.c.l.b16 %v614
    %v699 = vunpack.c.h.b16 %v614
    %v700 = vunpack.c.l.b16 %v615
    %v701 = vunpack.c.h.b16 %v615
    %v702 = vunpack.c.l.b16 %v616
    %v703 = vunpack.c.h.b16 %v616
    %v704 = vunpack.c.l.b16 %v617
    %v705 = vunpack.c.h.b16 %v617
    %v706 = vunpack.c.l.b16 %v618
    %v707 = vunpack.c.h.b16 %v618
    %v708 = vunpack.c.l.b16 %v619
    %v709 = vunpack.c.h.b16 %v619
    %v710 = vunpack.c.l.b16 %v620
    %v711 = vunpack.c.h.b16 %v620
    %v712 = vunpack.c.l.b16 %v621
    %v713 = vunpack.c.h.b16 %v621
    %v714 = vunpack.c.l.b16 %v622
    %v715 = vunpack.c.h.b16 %v622
    %v716 = vunpack.c.l.b16 %v623
    %v717 = vunpack.c.h.b16 %v623
    %v718 = vunpack.c.l.b16 %v624
    %v719 = vunpack.c.h.b16 %v624
    %v720 = vunpack.c.l.b16 %v625
    %v721 = vunpack.c.h.b16 %v625
    %v722 = vpack.c.b16 %v662, %v658
    %v723 = vpack.c.b16 %v663, %v659
    %v724 = vpack.c.b16 %v664, %v660
    %v725 = vpack.c.b16 %v665, %v661
    %v726 = vpack.c.b16 %v670, %v666
    %v727 = vpack.c.b16 %v671, %v667
    %v728 = vpack.c.b16 %v672, %v668
    %v729 = vpack.c.b16 %v673, %v669
    %v730 = vpack.c.b16 %v678, %v674
    %v731 = vpack.c.b16 %v679, %v675
    %v732 = vpack.c.b16 %v680, %v676
    %v733 = vpack.c.b16 %v681, %v677
    %v734 = vpack.c.b16 %v686, %v682
    %v735 = vpack.c.b16 %v687, %v683
    %v736 = vpack.c.b16 %v688, %v684
    %v737 = vpack.c.b16 %v689, %v685
    %v738 = vpack.c.b16 %v694, %v690
    %v739 = vpack.c.b16 %v695, %v691
    %v740 = vpack.c.b16 %v696, %v692
    %v741 = vpack.c.b16 %v697, %v693
    %v742 = vpack.c.b16 %v702, %v698
    %v743 = vpack.c.b16 %v703, %v699
    %v744 = vpack.c.b16 %v704, %v700
    %v745 = vpack.c.b16 %v705, %v701
    %v746 = vpack.c.b16 %v710, %v706
    %v747 = vpack.c.b16 %v711, %v707
    %v748 = vpack.c.b16 %v712, %v708
    %v749 = vpack.c.b16 %v713, %v709
    %v750 = vpack.c.b16 %v718, %v714
    %v751 = vpack.c.b16 %v719, %v715
    %v752 = vpack.c.b16 %v720, %v716
    %v753 = vpack.c.b16 %v721, %v717
    %786 = vmatprep.subr.bf16.mxu0 %v751
    %787 = vmatpush1.bf16.msra.mxu0 %v750
    %788 = vmatprep.subr.bf16.mxu0 %v747
    %789 = vmatpush1.bf16.msra.mxu0 %v746
    %790 = vmatprep.subr.bf16.mxu0 %v743
    %791 = vmatpush1.bf16.msra.mxu0 %v742
    %792 = vmatprep.subr.bf16.mxu0 %v739
    %793 = vmatpush1.bf16.msra.mxu0 %v738
    %794 = vmatprep.subr.bf16.mxu0 %v735
    %795 = vmatpush1.bf16.msra.mxu0 %v734
    %796 = vmatprep.subr.bf16.mxu0 %v731
    %797 = vmatpush1.bf16.msra.mxu0 %v730
    %798 = vmatprep.subr.bf16.mxu0 %v727
    %799 = vmatpush1.bf16.msra.mxu0 %v726
    %800 = vmatprep.subr.bf16.mxu0 %v723
    %801 = vmatpush1.bf16.msra.mxu0 %v722
    %802 = vmatprep.subr.bf16.mxu0 0
    %803 = vmatpush2.bf16.msra.mxu0 0
    %804 = vmatprep.subr.bf16.mxu0 0
    %805 = vmatpush2.bf16.msra.mxu0 0
    %806 = vmatprep.subr.bf16.mxu0 0
    %807 = vmatpush2.bf16.msra.mxu0 0
    %808 = vmatprep.subr.bf16.mxu0 0
    %809 = vmatpush2.bf16.msra.mxu0 0
    %810 = vmatprep.subr.bf16.mxu0 0
    %811 = vmatpush2.bf16.msra.mxu0 0
    %812 = vmatprep.subr.bf16.mxu0 0
    %813 = vmatpush2.bf16.msra.mxu0 0
    %814 = vmatprep.subr.bf16.mxu0 0
    %815 = vmatpush2.bf16.msra.mxu0 0
    %816 = vmatprep.subr.bf16.mxu0 0
    %817 = vmatpush2.bf16.msra.mxu0 0
    %818 = vmatprep.mubr.bf16.mxu0 0
    %819 = vmatmul.mubr.bf16.gmra.mxu0 %v593
    %v820 = vpop.f32.mrf.mxu0
    %v821 = vadd.f32 0.0, %v820
    %v822 = vpop.f32.mrf.mxu0
    %v823 = vadd.f32 0.0, %v822
    %v824 = vpop.f32.mrf.mxu0
    %v825 = vpop.f32.mrf.mxu0
    %826 = vdwg.mxu0
    %827 = vmatprep.subr.bf16.mxu0 %v753
    %828 = vmatpush1.bf16.msra.mxu0 %v752
    %829 = vmatprep.subr.bf16.mxu0 %v749
    %830 = vmatpush1.bf16.msra.mxu0 %v748
    %831 = vmatprep.subr.bf16.mxu0 %v745
    %832 = vmatpush1.bf16.msra.mxu0 %v744
    %833 = vmatprep.subr.bf16.mxu0 %v741
    %834 = vmatpush1.bf16.msra.mxu0 %v740
    %835 = vmatprep.subr.bf16.mxu0 %v737
    %836 = vmatpush1.bf16.msra.mxu0 %v736
    %837 = vmatprep.subr.bf16.mxu0 %v733
    %838 = vmatpush1.bf16.msra.mxu0 %v732
    %839 = vmatprep.subr.bf16.mxu0 %v729
    %840 = vmatpush1.bf16.msra.mxu0 %v728
    %841 = vmatprep.subr.bf16.mxu0 %v725
    %842 = vmatpush1.bf16.msra.mxu0 %v724
    %843 = vmatprep.subr.bf16.mxu0 0
    %844 = vmatpush2.bf16.msra.mxu0 0
    %845 = vmatprep.subr.bf16.mxu0 0
    %846 = vmatpush2.bf16.msra.mxu0 0
    %847 = vmatprep.subr.bf16.mxu0 0
    %848 = vmatpush2.bf16.msra.mxu0 0
    %849 = vmatprep.subr.bf16.mxu0 0
    %850 = vmatpush2.bf16.msra.mxu0 0
    %851 = vmatprep.subr.bf16.mxu0 0
    %852 = vmatpush2.bf16.msra.mxu0 0
    %853 = vmatprep.subr.bf16.mxu0 0
    %854 = vmatpush2.bf16.msra.mxu0 0
    %855 = vmatprep.subr.bf16.mxu0 0
    %856 = vmatpush2.bf16.msra.mxu0 0
    %857 = vmatprep.subr.bf16.mxu0 0
    %858 = vmatpush2.bf16.msra.mxu0 0
    %859 = vmatprep.mubr.bf16.mxu0 0
    %860 = vmatmul.mubr.bf16.gmra.mxu0 %v593
    %v861 = vpop.f32.mrf.mxu0
    %v862 = vadd.f32 0.0, %v861
    %v863 = vpop.f32.mrf.mxu0
    %v864 = vadd.f32 0.0, %v863
    %v865 = vpop.f32.mrf.mxu0
    %v866 = vpop.f32.mrf.mxu0
    %867 = vdwg.mxu0
    %v868 = vadd.f32 %v589, %v821
    %v869 = vadd.f32 %v590, %v823
    %v870 = vadd.f32 %v591, %v862
    %v871 = vadd.f32 %v592, %v864
    %v872 = vxor.u32 %v868, 2147483648
    %v873 = vmul.f32 %v872, 1.442695
    %v874 = vpow.pop %v873
    %v875 = vadd.f32 %v874, 1.0
    %v876 = vrcp.pop %v875
    %v877 = vmul.f32 1.0, %v876
    %v878 = vxor.u32 %v869, 2147483648
    %v879 = vmul.f32 %v878, 1.442695
    %v880 = vpow.pop %v879
    %v881 = vadd.f32 %v880, 1.0
    %v882 = vrcp.pop %v881
    %v883 = vmul.f32 1.0, %v882
    %v884 = vtanh.pop %v870
    %v885 = vxor.u32 %v871, 2147483648
    %v886 = vmul.f32 %v885, 1.442695
    %v887 = vpow.pop %v886
    %v888 = vadd.f32 %v887, 1.0
    %v889 = vrcp.pop %v888
    %v890 = vmul.f32 1.0, %v889
    %v891 = vmul.f32 %v883, %v585
    %v892 = vmul.f32 %v877, %v884
    %v893 = vadd.f32 %v891, %v892
    %v894 = vtanh.pop %v893
    %v895 = vmul.f32 %v890, %v894
    %v896 = vld [vmem:[#allocation3] sm:$0xff]
    %v897 = vadd.f32 %v895, %v896
    %898 = vst [vmem:[%s4] sm:$0xff] %v897
    %s899 = smul.u32 1, 4
    %s900 = smul.addr %s899, 8
    %s901 = scalar_lea.vmem [#allocation2], %s900
    %v902 = vld [vmem:[%s901] sm:$0xff]
    %v903 = vld [vmem:[%s901 + $0x8] sm:$0xff]
    %v904 = vld [vmem:[%s901 + $0x10] sm:$0xff]
    %v905 = vld [vmem:[%s901 + $0x18] sm:$0xff]
    %v906 = vpack.c.bf16 %v895, %v895
    %v907 = vld [vmem:[#allocation6] sm:$0xff]
    %v908 = vld [vmem:[#allocation6 + $0x8] sm:$0xff]
    %v909 = vld [vmem:[#allocation6 + $0x10] sm:$0xff]
    %v910 = vld [vmem:[#allocation6 + $0x18] sm:$0xff]
    %v911 = vld [vmem:[#allocation6 + $0x20] sm:$0xff]
    %v912 = vld [vmem:[#allocation6 + $0x28] sm:$0xff]
    %v913 = vld [vmem:[#allocation6 + $0x30] sm:$0xff]
    %v914 = vld [vmem:[#allocation6 + $0x38] sm:$0xff]
    %v915 = vld [vmem:[#allocation6 + $0x40] sm:$0xff]
    %v916 = vld [vmem:[#allocation6 + $0x48] sm:$0xff]
    %v917 = vld [vmem:[#allocation6 + $0x50] sm:$0xff]
    %v918 = vld [vmem:[#allocation6 + $0x58] sm:$0xff]
    %v919 = vld [vmem:[#allocation6 + $0x60] sm:$0xff]
    %v920 = vld [vmem:[#allocation6 + $0x68] sm:$0xff]
    %v921 = vld [vmem:[#allocation6 + $0x70] sm:$0xff]
    %v922 = vld [vmem:[#allocation6 + $0x78] sm:$0xff]
    %v923 = vld [vmem:[#allocation6 + $0x80] sm:$0xff]
    %v924 = vld [vmem:[#allocation6 + $0x88] sm:$0xff]
    %v925 = vld [vmem:[#allocation6 + $0x90] sm:$0xff]
    %v926 = vld [vmem:[#allocation6 + $0x98] sm:$0xff]
    %v927 = vld [vmem:[#allocation6 + $0xa0] sm:$0xff]
    %v928 = vld [vmem:[#allocation6 + $0xa8] sm:$0xff]
    %v929 = vld [vmem:[#allocation6 + $0xb0] sm:$0xff]
    %v930 = vld [vmem:[#allocation6 + $0xb8] sm:$0xff]
    %v931 = vld [vmem:[#allocation6 + $0xc0] sm:$0xff]
    %v932 = vld [vmem:[#allocation6 + $0xc8] sm:$0xff]
    %v933 = vld [vmem:[#allocation6 + $0xd0] sm:$0xff]
    %v934 = vld [vmem:[#allocation6 + $0xd8] sm:$0xff]
    %v935 = vld [vmem:[#allocation6 + $0xe0] sm:$0xff]
    %v936 = vld [vmem:[#allocation6 + $0xe8] sm:$0xff]
    %v937 = vld [vmem:[#allocation6 + $0xf0] sm:$0xff]
    %v938 = vld [vmem:[#allocation6 + $0xf8] sm:$0xff]
    %v971 = vunpack.c.l.b16 %v907
    %v972 = vunpack.c.h.b16 %v907
    %v973 = vunpack.c.l.b16 %v908
    %v974 = vunpack.c.h.b16 %v908
    %v975 = vunpack.c.l.b16 %v909
    %v976 = vunpack.c.h.b16 %v909
    %v977 = vunpack.c.l.b16 %v910
    %v978 = vunpack.c.h.b16 %v910
    %v979 = vunpack.c.l.b16 %v911
    %v980 = vunpack.c.h.b16 %v911
    %v981 = vunpack.c.l.b16 %v912
    %v982 = vunpack.c.h.b16 %v912
    %v983 = vunpack.c.l.b16 %v913
    %v984 = vunpack.c.h.b16 %v913
    %v985 = vunpack.c.l.b16 %v914
    %v986 = vunpack.c.h.b16 %v914
    %v987 = vunpack.c.l.b16 %v915
    %v988 = vunpack.c.h.b16 %v915
    %v989 = vunpack.c.l.b16 %v916
    %v990 = vunpack.c.h.b16 %v916
    %v991 = vunpack.c.l.b16 %v917
    %v992 = vunpack.c.h.b16 %v917
    %v993 = vunpack.c.l.b16 %v918
    %v994 = vunpack.c.h.b16 %v918
    %v995 = vunpack.c.l.b16 %v919
    %v996 = vunpack.c.h.b16 %v919
    %v997 = vunpack.c.l.b16 %v920
    %v998 = vunpack.c.h.b16 %v920
    %v999 = vunpack.c.l.b16 %v921
    %v1000 = vunpack.c.h.b16 %v921
    %v1001 = vunpack.c.l.b16 %v922
    %v1002 = vunpack.c.h.b16 %v922
    %v1003 = vunpack.c.l.b16 %v923
    %v1004 = vunpack.c.h.b16 %v923
    %v1005 = vunpack.c.l.b16 %v924
    %v1006 = vunpack.c.h.b16 %v924
    %v1007 = vunpack.c.l.b16 %v925
    %v1008 = vunpack.c.h.b16 %v925
    %v1009 = vunpack.c.l.b16 %v926
    %v1010 = vunpack.c.h.b16 %v926
    %v1011 = vunpack.c.l.b16 %v927
    %v1012 = vunpack.c.h.b16 %v927
    %v1013 = vunpack.c.l.b16 %v928
    %v1014 = vunpack.c.h.b16 %v928
    %v1015 = vunpack.c.l.b16 %v929
    %v1016 = vunpack.c.h.b16 %v929
    %v1017 = vunpack.c.l.b16 %v930
    %v1018 = vunpack.c.h.b16 %v930
    %v1019 = vunpack.c.l.b16 %v931
    %v1020 = vunpack.c.h.b16 %v931
    %v1021 = vunpack.c.l.b16 %v932
    %v1022 = vunpack.c.h.b16 %v932
    %v1023 = vunpack.c.l.b16 %v933
    %v1024 = vunpack.c.h.b16 %v933
    %v1025 = vunpack.c.l.b16 %v934
    %v1026 = vunpack.c.h.b16 %v934
    %v1027 = vunpack.c.l.b16 %v935
    %v1028 = vunpack.c.h.b16 %v935
    %v1029 = vunpack.c.l.b16 %v936
    %v1030 = vunpack.c.h.b16 %v936
    %v1031 = vunpack.c.l.b16 %v937
    %v1032 = vunpack.c.h.b16 %v937
    %v1033 = vunpack.c.l.b16 %v938
    %v1034 = vunpack.c.h.b16 %v938
    %v1035 = vpack.c.b16 %v975, %v971
    %v1036 = vpack.c.b16 %v976, %v972
    %v1037 = vpack.c.b16 %v977, %v973
    %v1038 = vpack.c.b16 %v978, %v974
    %v1039 = vpack.c.b16 %v983, %v979
    %v1040 = vpack.c.b16 %v984, %v980
    %v1041 = vpack.c.b16 %v985, %v981
    %v1042 = vpack.c.b16 %v986, %v982
    %v1043 = vpack.c.b16 %v991, %v987
    %v1044 = vpack.c.b16 %v992, %v988
    %v1045 = vpack.c.b16 %v993, %v989
    %v1046 = vpack.c.b16 %v994, %v990
    %v1047 = vpack.c.b16 %v999, %v995
    %v1048 = vpack.c.b16 %v1000, %v996
    %v1049 = vpack.c.b16 %v1001, %v997
    %v1050 = vpack.c.b16 %v1002, %v998
    %v1051 = vpack.c.b16 %v1007, %v1003
    %v1052 = vpack.c.b16 %v1008, %v1004
    %v1053 = vpack.c.b16 %v1009, %v1005
    %v1054 = vpack.c.b16 %v1010, %v1006
    %v1055 = vpack.c.b16 %v1015, %v1011
    %v1056 = vpack.c.b16 %v1016, %v1012
    %v1057 = vpack.c.b16 %v1017, %v1013
    %v1058 = vpack.c.b16 %v1018, %v1014
    %v1059 = vpack.c.b16 %v1023, %v1019
    %v1060 = vpack.c.b16 %v1024, %v1020
    %v1061 = vpack.c.b16 %v1025, %v1021
    %v1062 = vpack.c.b16 %v1026, %v1022
    %v1063 = vpack.c.b16 %v1031, %v1027
    %v1064 = vpack.c.b16 %v1032, %v1028
    %v1065 = vpack.c.b16 %v1033, %v1029
    %v1066 = vpack.c.b16 %v1034, %v1030
    %1099 = vmatprep.subr.bf16.mxu0 %v1064
    %1100 = vmatpush1.bf16.msra.mxu0 %v1063
    %1101 = vmatprep.subr.bf16.mxu0 %v1060
    %1102 = vmatpush1.bf16.msra.mxu0 %v1059
    %1103 = vmatprep.subr.bf16.mxu0 %v1056
    %1104 = vmatpush1.bf16.msra.mxu0 %v1055
    %1105 = vmatprep.subr.bf16.mxu0 %v1052
    %1106 = vmatpush1.bf16.msra.mxu0 %v1051
    %1107 = vmatprep.subr.bf16.mxu0 %v1048
    %1108 = vmatpush1.bf16.msra.mxu0 %v1047
    %1109 = vmatprep.subr.bf16.mxu0 %v1044
    %1110 = vmatpush1.bf16.msra.mxu0 %v1043
    %1111 = vmatprep.subr.bf16.mxu0 %v1040
    %1112 = vmatpush1.bf16.msra.mxu0 %v1039
    %1113 = vmatprep.subr.bf16.mxu0 %v1036
    %1114 = vmatpush1.bf16.msra.mxu0 %v1035
    %1115 = vmatprep.subr.bf16.mxu0 0
    %1116 = vmatpush2.bf16.msra.mxu0 0
    %1117 = vmatprep.subr.bf16.mxu0 0
    %1118 = vmatpush2.bf16.msra.mxu0 0
    %1119 = vmatprep.subr.bf16.mxu0 0
    %1120 = vmatpush2.bf16.msra.mxu0 0
    %1121 = vmatprep.subr.bf16.mxu0 0
    %1122 = vmatpush2.bf16.msra.mxu0 0
    %1123 = vmatprep.subr.bf16.mxu0 0
    %1124 = vmatpush2.bf16.msra.mxu0 0
    %1125 = vmatprep.subr.bf16.mxu0 0
    %1126 = vmatpush2.bf16.msra.mxu0 0
    %1127 = vmatprep.subr.bf16.mxu0 0
    %1128 = vmatpush2.bf16.msra.mxu0 0
    %1129 = vmatprep.subr.bf16.mxu0 0
    %1130 = vmatpush2.bf16.msra.mxu0 0
    %1131 = vmatprep.mubr.bf16.mxu0 0
    %1132 = vmatmul.mubr.bf16.gmra.mxu0 %v906
    %v1133 = vpop.f32.mrf.mxu0
    %v1134 = vadd.f32 0.0, %v1133
    %v1135 = vpop.f32.mrf.mxu0
    %v1136 = vadd.f32 0.0, %v1135
    %v1137 = vpop.f32.mrf.mxu0
    %v1138 = vpop.f32.mrf.mxu0
    %1139 = vdwg.mxu0
    %1140 = vmatprep.subr.bf16.mxu0 %v1066
    %1141 = vmatpush1.bf16.msra.mxu0 %v1065
    %1142 = vmatprep.subr.bf16.mxu0 %v1062
    %1143 = vmatpush1.bf16.msra.mxu0 %v1061
    %1144 = vmatprep.subr.bf16.mxu0 %v1058
    %1145 = vmatpush1.bf16.msra.mxu0 %v1057
    %1146 = vmatprep.subr.bf16.mxu0 %v1054
    %1147 = vmatpush1.bf16.msra.mxu0 %v1053
    %1148 = vmatprep.subr.bf16.mxu0 %v1050
    %1149 = vmatpush1.bf16.msra.mxu0 %v1049
    %1150 = vmatprep.subr.bf16.mxu0 %v1046
    %1151 = vmatpush1.bf16.msra.mxu0 %v1045
    %1152 = vmatprep.subr.bf16.mxu0 %v1042
    %1153 = vmatpush1.bf16.msra.mxu0 %v1041
    %1154 = vmatprep.subr.bf16.mxu0 %v1038
    %1155 = vmatpush1.bf16.msra.mxu0 %v1037
    %1156 = vmatprep.subr.bf16.mxu0 0
    %1157 = vmatpush2.bf16.msra.mxu0 0
    %1158 = vmatprep.subr.bf16.mxu0 0
    %1159 = vmatpush2.bf16.msra.mxu0 0
    %1160 = vmatprep.subr.bf16.mxu0 0
    %1161 = vmatpush2.bf16.msra.mxu0 0
    %1162 = vmatprep.subr.bf16.mxu0 0
    %1163 = vmatpush2.bf16.msra.mxu0 0
    %1164 = vmatprep.subr.bf16.mxu0 0
    %1165 = vmatpush2.bf16.msra.mxu0 0
    %1166 = vmatprep.subr.bf16.mxu0 0
    %1167 = vmatpush2.bf16.msra.mxu0 0
    %1168 = vmatprep.subr.bf16.mxu0 0
    %1169 = vmatpush2.bf16.msra.mxu0 0
    %1170 = vmatprep.subr.bf16.mxu0 0
    %1171 = vmatpush2.bf16.msra.mxu0 0
    %1172 = vmatprep.mubr.bf16.mxu0 0
    %1173 = vmatmul.mubr.bf16.gmra.mxu0 %v906
    %v1174 = vpop.f32.mrf.mxu0
    %v1175 = vadd.f32 0.0, %v1174
    %v1176 = vpop.f32.mrf.mxu0
    %v1177 = vadd.f32 0.0, %v1176
    %v1178 = vpop.f32.mrf.mxu0
    %v1179 = vpop.f32.mrf.mxu0
    %1180 = vdwg.mxu0
    %v1181 = vadd.f32 %v902, %v1134
    %v1182 = vadd.f32 %v903, %v1136
    %v1183 = vadd.f32 %v904, %v1175
    %v1184 = vadd.f32 %v905, %v1177
    %v1185 = vxor.u32 %v1181, 2147483648
    %v1186 = vmul.f32 %v1185, 1.442695
    %v1187 = vpow.pop %v1186
    %v1188 = vadd.f32 %v1187, 1.0
    %v1189 = vrcp.pop %v1188
    %v1190 = vmul.f32 1.0, %v1189
    %v1191 = vxor.u32 %v1182, 2147483648
    %v1192 = vmul.f32 %v1191, 1.442695
    %v1193 = vpow.pop %v1192
    %v1194 = vadd.f32 %v1193, 1.0
    %v1195 = vrcp.pop %v1194
    %v1196 = vmul.f32 1.0, %v1195
    %v1197 = vtanh.pop %v1183
    %v1198 = vxor.u32 %v1184, 2147483648
    %v1199 = vmul.f32 %v1198, 1.442695
    %v1200 = vpow.pop %v1199
    %v1201 = vadd.f32 %v1200, 1.0
    %v1202 = vrcp.pop %v1201
    %v1203 = vmul.f32 1.0, %v1202
    %v1204 = vmul.f32 %v1196, %v893
    %v1205 = vmul.f32 %v1190, %v1197
    %v1206 = vadd.f32 %v1204, %v1205
    %v1207 = vtanh.pop %v1206
    %v1208 = vmul.f32 %v1203, %v1207
    %s1209 = scalar_lea.vmem [#allocation3], 8
    %v1210 = vld [vmem:[%s1209] sm:$0xff]
    %v1211 = vadd.f32 %v1208, %v1210
    %s1212 = scalar_lea.vmem %s4, 8
    %1213 = vst [vmem:[%s1212] sm:$0xff] %v1211
    %s1214 = smul.u32 2, 4
    %s1215 = smul.addr %s1214, 8
    %s1216 = scalar_lea.vmem [#allocation2], %s1215
    %v1217 = vld [vmem:[%s1216] sm:$0xff]
    %v1218 = vld [vmem:[%s1216 + $0x8] sm:$0xff]
    %v1219 = vld [vmem:[%s1216 + $0x10] sm:$0xff]
    %v1220 = vld [vmem:[%s1216 + $0x18] sm:$0xff]
    %v1221 = vpack.c.bf16 %v1208, %v1208
    %v1222 = vld [vmem:[#allocation6] sm:$0xff]
    %v1223 = vld [vmem:[#allocation6 + $0x8] sm:$0xff]
    %v1224 = vld [vmem:[#allocation6 + $0x10] sm:$0xff]
    %v1225 = vld [vmem:[#allocation6 + $0x18] sm:$0xff]
    %v1226 = vld [vmem:[#allocation6 + $0x20] sm:$0xff]
    %v1227 = vld [vmem:[#allocation6 + $0x28] sm:$0xff]
    %v1228 = vld [vmem:[#allocation6 + $0x30] sm:$0xff]
    %v1229 = vld [vmem:[#allocation6 + $0x38] sm:$0xff]
    %v1230 = vld [vmem:[#allocation6 + $0x40] sm:$0xff]
    %v1231 = vld [vmem:[#allocation6 + $0x48] sm:$0xff]
    %v1232 = vld [vmem:[#allocation6 + $0x50] sm:$0xff]
    %v1233 = vld [vmem:[#allocation6 + $0x58] sm:$0xff]
    %v1234 = vld [vmem:[#allocation6 + $0x60] sm:$0xff]
    %v1235 = vld [vmem:[#allocation6 + $0x68] sm:$0xff]
    %v1236 = vld [vmem:[#allocation6 + $0x70] sm:$0xff]
    %v1237 = vld [vmem:[#allocation6 + $0x78] sm:$0xff]
    %v1238 = vld [vmem:[#allocation6 + $0x80] sm:$0xff]
    %v1239 = vld [vmem:[#allocation6 + $0x88] sm:$0xff]
    %v1240 = vld [vmem:[#allocation6 + $0x90] sm:$0xff]
    %v1241 = vld [vmem:[#allocation6 + $0x98] sm:$0xff]
    %v1242 = vld [vmem:[#allocation6 + $0xa0] sm:$0xff]
    %v1243 = vld [vmem:[#allocation6 + $0xa8] sm:$0xff]
    %v1244 = vld [vmem:[#allocation6 + $0xb0] sm:$0xff]
    %v1245 = vld [vmem:[#allocation6 + $0xb8] sm:$0xff]
    %v1246 = vld [vmem:[#allocation6 + $0xc0] sm:$0xff]
    %v1247 = vld [vmem:[#allocation6 + $0xc8] sm:$0xff]
    %v1248 = vld [vmem:[#allocation6 + $0xd0] sm:$0xff]
    %v1249 = vld [vmem:[#allocation6 + $0xd8] sm:$0xff]
    %v1250 = vld [vmem:[#allocation6 + $0xe0] sm:$0xff]
    %v1251 = vld [vmem:[#allocation6 + $0xe8] sm:$0xff]
    %v1252 = vld [vmem:[#allocation6 + $0xf0] sm:$0xff]
    %v1253 = vld [vmem:[#allocation6 + $0xf8] sm:$0xff]
    %v1286 = vunpack.c.l.b16 %v1222
    %v1287 = vunpack.c.h.b16 %v1222
    %v1288 = vunpack.c.l.b16 %v1223
    %v1289 = vunpack.c.h.b16 %v1223
    %v1290 = vunpack.c.l.b16 %v1224
    %v1291 = vunpack.c.h.b16 %v1224
    %v1292 = vunpack.c.l.b16 %v1225
    %v1293 = vunpack.c.h.b16 %v1225
    %v1294 = vunpack.c.l.b16 %v1226
    %v1295 = vunpack.c.h.b16 %v1226
    %v1296 = vunpack.c.l.b16 %v1227
    %v1297 = vunpack.c.h.b16 %v1227
    %v1298 = vunpack.c.l.b16 %v1228
    %v1299 = vunpack.c.h.b16 %v1228
    %v1300 = vunpack.c.l.b16 %v1229
    %v1301 = vunpack.c.h.b16 %v1229
    %v1302 = vunpack.c.l.b16 %v1230
    %v1303 = vunpack.c.h.b16 %v1230
    %v1304 = vunpack.c.l.b16 %v1231
    %v1305 = vunpack.c.h.b16 %v1231
    %v1306 = vunpack.c.l.b16 %v1232
    %v1307 = vunpack.c.h.b16 %v1232
    %v1308 = vunpack.c.l.b16 %v1233
    %v1309 = vunpack.c.h.b16 %v1233
    %v1310 = vunpack.c.l.b16 %v1234
    %v1311 = vunpack.c.h.b16 %v1234
    %v1312 = vunpack.c.l.b16 %v1235
    %v1313 = vunpack.c.h.b16 %v1235
    %v1314 = vunpack.c.l.b16 %v1236
    %v1315 = vunpack.c.h.b16 %v1236
    %v1316 = vunpack.c.l.b16 %v1237
    %v1317 = vunpack.c.h.b16 %v1237
    %v1318 = vunpack.c.l.b16 %v1238
    %v1319 = vunpack.c.h.b16 %v1238
    %v1320 = vunpack.c.l.b16 %v1239
    %v1321 = vunpack.c.h.b16 %v1239
    %v1322 = vunpack.c.l.b16 %v1240
    %v1323 = vunpack.c.h.b16 %v1240
    %v1324 = vunpack.c.l.b16 %v1241
    %v1325 = vunpack.c.h.b16 %v1241
    %v1326 = vunpack.c.l.b16 %v1242
    %v1327 = vunpack.c.h.b16 %v1242
    %v1328 = vunpack.c.l.b16 %v1243
    %v1329 = vunpack.c.h.b16 %v1243
    %v1330 = vunpack.c.l.b16 %v1244
    %v1331 = vunpack.c.h.b16 %v1244
    %v1332 = vunpack.c.l.b16 %v1245
    %v1333 = vunpack.c.h.b16 %v1245
    %v1334 = vunpack.c.l.b16 %v1246
    %v1335 = vunpack.c.h.b16 %v1246
    %v1336 = vunpack.c.l.b16 %v1247
    %v1337 = vunpack.c.h.b16 %v1247
    %v1338 = vunpack.c.l.b16 %v1248
    %v1339 = vunpack.c.h.b16 %v1248
    %v1340 = vunpack.c.l.b16 %v1249
    %v1341 = vunpack.c.h.b16 %v1249
    %v1342 = vunpack.c.l.b16 %v1250
    %v1343 = vunpack.c.h.b16 %v1250
    %v1344 = vunpack.c.l.b16 %v1251
    %v1345 = vunpack.c.h.b16 %v1251
    %v1346 = vunpack.c.l.b16 %v1252
    %v1347 = vunpack.c.h.b16 %v1252
    %v1348 = vunpack.c.l.b16 %v1253
    %v1349 = vunpack.c.h.b16 %v1253
    %v1350 = vpack.c.b16 %v1290, %v1286
    %v1351 = vpack.c.b16 %v1291, %v1287
    %v1352 = vpack.c.b16 %v1292, %v1288
    %v1353 = vpack.c.b16 %v1293, %v1289
    %v1354 = vpack.c.b16 %v1298, %v1294
    %v1355 = vpack.c.b16 %v1299, %v1295
    %v1356 = vpack.c.b16 %v1300, %v1296
    %v1357 = vpack.c.b16 %v1301, %v1297
    %v1358 = vpack.c.b16 %v1306, %v1302
    %v1359 = vpack.c.b16 %v1307, %v1303
    %v1360 = vpack.c.b16 %v1308, %v1304
    %v1361 = vpack.c.b16 %v1309, %v1305
    %v1362 = vpack.c.b16 %v1314, %v1310
    %v1363 = vpack.c.b16 %v1315, %v1311
    %v1364 = vpack.c.b16 %v1316, %v1312
    %v1365 = vpack.c.b16 %v1317, %v1313
    %v1366 = vpack.c.b16 %v1322, %v1318
    %v1367 = vpack.c.b16 %v1323, %v1319
    %v1368 = vpack.c.b16 %v1324, %v1320
    %v1369 = vpack.c.b16 %v1325, %v1321
    %v1370 = vpack.c.b16 %v1330, %v1326
    %v1371 = vpack.c.b16 %v1331, %v1327
    %v1372 = vpack.c.b16 %v1332, %v1328
    %v1373 = vpack.c.b16 %v1333, %v1329
    %v1374 = vpack.c.b16 %v1338, %v1334
    %v1375 = vpack.c.b16 %v1339, %v1335
    %v1376 = vpack.c.b16 %v1340, %v1336
    %v1377 = vpack.c.b16 %v1341, %v1337
    %v1378 = vpack.c.b16 %v1346, %v1342
    %v1379 = vpack.c.b16 %v1347, %v1343
    %v1380 = vpack.c.b16 %v1348, %v1344
    %v1381 = vpack.c.b16 %v1349, %v1345
    %1414 = vmatprep.subr.bf16.mxu0 %v1379
    %1415 = vmatpush1.bf16.msra.mxu0 %v1378
    %1416 = vmatprep.subr.bf16.mxu0 %v1375
    %1417 = vmatpush1.bf16.msra.mxu0 %v1374
    %1418 = vmatprep.subr.bf16.mxu0 %v1371
    %1419 = vmatpush1.bf16.msra.mxu0 %v1370
    %1420 = vmatprep.subr.bf16.mxu0 %v1367
    %1421 = vmatpush1.bf16.msra.mxu0 %v1366
    %1422 = vmatprep.subr.bf16.mxu0 %v1363
    %1423 = vmatpush1.bf16.msra.mxu0 %v1362
    %1424 = vmatprep.subr.bf16.mxu0 %v1359
    %1425 = vmatpush1.bf16.msra.mxu0 %v1358
    %1426 = vmatprep.subr.bf16.mxu0 %v1355
    %1427 = vmatpush1.bf16.msra.mxu0 %v1354
    %1428 = vmatprep.subr.bf16.mxu0 %v1351
    %1429 = vmatpush1.bf16.msra.mxu0 %v1350
    %1430 = vmatprep.subr.bf16.mxu0 0
    %1431 = vmatpush2.bf16.msra.mxu0 0
    %1432 = vmatprep.subr.bf16.mxu0 0
    %1433 = vmatpush2.bf16.msra.mxu0 0
    %1434 = vmatprep.subr.bf16.mxu0 0
    %1435 = vmatpush2.bf16.msra.mxu0 0
    %1436 = vmatprep.subr.bf16.mxu0 0
    %1437 = vmatpush2.bf16.msra.mxu0 0
    %1438 = vmatprep.subr.bf16.mxu0 0
    %1439 = vmatpush2.bf16.msra.mxu0 0
    %1440 = vmatprep.subr.bf16.mxu0 0
    %1441 = vmatpush2.bf16.msra.mxu0 0
    %1442 = vmatprep.subr.bf16.mxu0 0
    %1443 = vmatpush2.bf16.msra.mxu0 0
    %1444 = vmatprep.subr.bf16.mxu0 0
    %1445 = vmatpush2.bf16.msra.mxu0 0
    %1446 = vmatprep.mubr.bf16.mxu0 0
    %1447 = vmatmul.mubr.bf16.gmra.mxu0 %v1221
    %v1448 = vpop.f32.mrf.mxu0
    %v1449 = vadd.f32 0.0, %v1448
    %v1450 = vpop.f32.mrf.mxu0
    %v1451 = vadd.f32 0.0, %v1450
    %v1452 = vpop.f32.mrf.mxu0
    %v1453 = vpop.f32.mrf.mxu0
    %1454 = vdwg.mxu0
    %1455 = vmatprep.subr.bf16.mxu0 %v1381
    %1456 = vmatpush1.bf16.msra.mxu0 %v1380
    %1457 = vmatprep.subr.bf16.mxu0 %v1377
    %1458 = vmatpush1.bf16.msra.mxu0 %v1376
    %1459 = vmatprep.subr.bf16.mxu0 %v1373
    %1460 = vmatpush1.bf16.msra.mxu0 %v1372
    %1461 = vmatprep.subr.bf16.mxu0 %v1369
    %1462 = vmatpush1.bf16.msra.mxu0 %v1368
    %1463 = vmatprep.subr.bf16.mxu0 %v1365
    %1464 = vmatpush1.bf16.msra.mxu0 %v1364
    %1465 = vmatprep.subr.bf16.mxu0 %v1361
    %1466 = vmatpush1.bf16.msra.mxu0 %v1360
    %1467 = vmatprep.subr.bf16.mxu0 %v1357
    %1468 = vmatpush1.bf16.msra.mxu0 %v1356
    %1469 = vmatprep.subr.bf16.mxu0 %v1353
    %1470 = vmatpush1.bf16.msra.mxu0 %v1352
    %1471 = vmatprep.subr.bf16.mxu0 0
    %1472 = vmatpush2.bf16.msra.mxu0 0
    %1473 = vmatprep.subr.bf16.mxu0 0
    %1474 = vmatpush2.bf16.msra.mxu0 0
    %1475 = vmatprep.subr.bf16.mxu0 0
    %1476 = vmatpush2.bf16.msra.mxu0 0
    %1477 = vmatprep.subr.bf16.mxu0 0
    %1478 = vmatpush2.bf16.msra.mxu0 0
    %1479 = vmatprep.subr.bf16.mxu0 0
    %1480 = vmatpush2.bf16.msra.mxu0 0
    %1481 = vmatprep.subr.bf16.mxu0 0
    %1482 = vmatpush2.bf16.msra.mxu0 0
    %1483 = vmatprep.subr.bf16.mxu0 0
    %1484 = vmatpush2.bf16.msra.mxu0 0
    %1485 = vmatprep.subr.bf16.mxu0 0
    %1486 = vmatpush2.bf16.msra.mxu0 0
    %1487 = vmatprep.mubr.bf16.mxu0 0
    %1488 = vmatmul.mubr.bf16.gmra.mxu0 %v1221
    %v1489 = vpop.f32.mrf.mxu0
    %v1490 = vadd.f32 0.0, %v1489
    %v1491 = vpop.f32.mrf.mxu0
    %v1492 = vadd.f32 0.0, %v1491
    %v1493 = vpop.f32.mrf.mxu0
    %v1494 = vpop.f32.mrf.mxu0
    %1495 = vdwg.mxu0
    %v1496 = vadd.f32 %v1217, %v1449
    %v1497 = vadd.f32 %v1218, %v1451
    %v1498 = vadd.f32 %v1219, %v1490
    %v1499 = vadd.f32 %v1220, %v1492
    %v1500 = vxor.u32 %v1496, 2147483648
    %v1501 = vmul.f32 %v1500, 1.442695
    %v1502 = vpow.pop %v1501
    %v1503 = vadd.f32 %v1502, 1.0
    %v1504 = vrcp.pop %v1503
    %v1505 = vmul.f32 1.0, %v1504
    %v1506 = vxor.u32 %v1497, 2147483648
    %v1507 = vmul.f32 %v1506, 1.442695
    %v1508 = vpow.pop %v1507
    %v1509 = vadd.f32 %v1508, 1.0
    %v1510 = vrcp.pop %v1509
    %v1511 = vmul.f32 1.0, %v1510
    %v1512 = vtanh.pop %v1498
    %v1513 = vxor.u32 %v1499, 2147483648
    %v1514 = vmul.f32 %v1513, 1.442695
    %v1515 = vpow.pop %v1514
    %v1516 = vadd.f32 %v1515, 1.0
    %v1517 = vrcp.pop %v1516
    %v1518 = vmul.f32 1.0, %v1517
    %v1519 = vmul.f32 %v1511, %v1206
    %v1520 = vmul.f32 %v1505, %v1512
    %v1521 = vadd.f32 %v1519, %v1520
    %v1522 = vtanh.pop %v1521
    %v1523 = vmul.f32 %v1518, %v1522
    %s1524 = scalar_lea.vmem [#allocation3], 16
    %v1525 = vld [vmem:[%s1524] sm:$0xff]
    %v1526 = vadd.f32 %v1523, %v1525
    %s1527 = scalar_lea.vmem %s4, 16
    %1528 = vst [vmem:[%s1527] sm:$0xff] %v1526
    %s1529 = smul.u32 3, 4
    %s1530 = smul.addr %s1529, 8
    %s1531 = scalar_lea.vmem [#allocation2], %s1530
    %v1532 = vld [vmem:[%s1531] sm:$0xff]
    %v1533 = vld [vmem:[%s1531 + $0x8] sm:$0xff]
    %v1534 = vld [vmem:[%s1531 + $0x10] sm:$0xff]
    %v1535 = vld [vmem:[%s1531 + $0x18] sm:$0xff]
    %v1536 = vpack.c.bf16 %v1523, %v1523
    %v1537 = vld [vmem:[#allocation6] sm:$0xff]
    %v1538 = vld [vmem:[#allocation6 + $0x8] sm:$0xff]
    %v1539 = vld [vmem:[#allocation6 + $0x10] sm:$0xff]
    %v1540 = vld [vmem:[#allocation6 + $0x18] sm:$0xff]
    %v1541 = vld [vmem:[#allocation6 + $0x20] sm:$0xff]
    %v1542 = vld [vmem:[#allocation6 + $0x28] sm:$0xff]
    %v1543 = vld [vmem:[#allocation6 + $0x30] sm:$0xff]
    %v1544 = vld [vmem:[#allocation6 + $0x38] sm:$0xff]
    %v1545 = vld [vmem:[#allocation6 + $0x40] sm:$0xff]
    %v1546 = vld [vmem:[#allocation6 + $0x48] sm:$0xff]
    %v1547 = vld [vmem:[#allocation6 + $0x50] sm:$0xff]
    %v1548 = vld [vmem:[#allocation6 + $0x58] sm:$0xff]
    %v1549 = vld [vmem:[#allocation6 + $0x60] sm:$0xff]
    %v1550 = vld [vmem:[#allocation6 + $0x68] sm:$0xff]
    %v1551 = vld [vmem:[#allocation6 + $0x70] sm:$0xff]
    %v1552 = vld [vmem:[#allocation6 + $0x78] sm:$0xff]
    %v1553 = vld [vmem:[#allocation6 + $0x80] sm:$0xff]
    %v1554 = vld [vmem:[#allocation6 + $0x88] sm:$0xff]
    %v1555 = vld [vmem:[#allocation6 + $0x90] sm:$0xff]
    %v1556 = vld [vmem:[#allocation6 + $0x98] sm:$0xff]
    %v1557 = vld [vmem:[#allocation6 + $0xa0] sm:$0xff]
    %v1558 = vld [vmem:[#allocation6 + $0xa8] sm:$0xff]
    %v1559 = vld [vmem:[#allocation6 + $0xb0] sm:$0xff]
    %v1560 = vld [vmem:[#allocation6 + $0xb8] sm:$0xff]
    %v1561 = vld [vmem:[#allocation6 + $0xc0] sm:$0xff]
    %v1562 = vld [vmem:[#allocation6 + $0xc8] sm:$0xff]
    %v1563 = vld [vmem:[#allocation6 + $0xd0] sm:$0xff]
    %v1564 = vld [vmem:[#allocation6 + $0xd8] sm:$0xff]
    %v1565 = vld [vmem:[#allocation6 + $0xe0] sm:$0xff]
    %v1566 = vld [vmem:[#allocation6 + $0xe8] sm:$0xff]
    %v1567 = vld [vmem:[#allocation6 + $0xf0] sm:$0xff]
    %v1568 = vld [vmem:[#allocation6 + $0xf8] sm:$0xff]
    %v1601 = vunpack.c.l.b16 %v1537
    %v1602 = vunpack.c.h.b16 %v1537
    %v1603 = vunpack.c.l.b16 %v1538
    %v1604 = vunpack.c.h.b16 %v1538
    %v1605 = vunpack.c.l.b16 %v1539
    %v1606 = vunpack.c.h.b16 %v1539
    %v1607 = vunpack.c.l.b16 %v1540
    %v1608 = vunpack.c.h.b16 %v1540
    %v1609 = vunpack.c.l.b16 %v1541
    %v1610 = vunpack.c.h.b16 %v1541
    %v1611 = vunpack.c.l.b16 %v1542
    %v1612 = vunpack.c.h.b16 %v1542
    %v1613 = vunpack.c.l.b16 %v1543
    %v1614 = vunpack.c.h.b16 %v1543
    %v1615 = vunpack.c.l.b16 %v1544
    %v1616 = vunpack.c.h.b16 %v1544
    %v1617 = vunpack.c.l.b16 %v1545
    %v1618 = vunpack.c.h.b16 %v1545
    %v1619 = vunpack.c.l.b16 %v1546
    %v1620 = vunpack.c.h.b16 %v1546
    %v1621 = vunpack.c.l.b16 %v1547
    %v1622 = vunpack.c.h.b16 %v1547
    %v1623 = vunpack.c.l.b16 %v1548
    %v1624 = vunpack.c.h.b16 %v1548
    %v1625 = vunpack.c.l.b16 %v1549
    %v1626 = vunpack.c.h.b16 %v1549
    %v1627 = vunpack.c.l.b16 %v1550
    %v1628 = vunpack.c.h.b16 %v1550
    %v1629 = vunpack.c.l.b16 %v1551
    %v1630 = vunpack.c.h.b16 %v1551
    %v1631 = vunpack.c.l.b16 %v1552
    %v1632 = vunpack.c.h.b16 %v1552
    %v1633 = vunpack.c.l.b16 %v1553
    %v1634 = vunpack.c.h.b16 %v1553
    %v1635 = vunpack.c.l.b16 %v1554
    %v1636 = vunpack.c.h.b16 %v1554
    %v1637 = vunpack.c.l.b16 %v1555
    %v1638 = vunpack.c.h.b16 %v1555
    %v1639 = vunpack.c.l.b16 %v1556
    %v1640 = vunpack.c.h.b16 %v1556
    %v1641 = vunpack.c.l.b16 %v1557
    %v1642 = vunpack.c.h.b16 %v1557
    %v1643 = vunpack.c.l.b16 %v1558
    %v1644 = vunpack.c.h.b16 %v1558
    %v1645 = vunpack.c.l.b16 %v1559
    %v1646 = vunpack.c.h.b16 %v1559
    %v1647 = vunpack.c.l.b16 %v1560
    %v1648 = vunpack.c.h.b16 %v1560
    %v1649 = vunpack.c.l.b16 %v1561
    %v1650 = vunpack.c.h.b16 %v1561
    %v1651 = vunpack.c.l.b16 %v1562
    %v1652 = vunpack.c.h.b16 %v1562
    %v1653 = vunpack.c.l.b16 %v1563
    %v1654 = vunpack.c.h.b16 %v1563
    %v1655 = vunpack.c.l.b16 %v1564
    %v1656 = vunpack.c.h.b16 %v1564
    %v1657 = vunpack.c.l.b16 %v1565
    %v1658 = vunpack.c.h.b16 %v1565
    %v1659 = vunpack.c.l.b16 %v1566
    %v1660 = vunpack.c.h.b16 %v1566
    %v1661 = vunpack.c.l.b16 %v1567
    %v1662 = vunpack.c.h.b16 %v1567
    %v1663 = vunpack.c.l.b16 %v1568
    %v1664 = vunpack.c.h.b16 %v1568
    %v1665 = vpack.c.b16 %v1605, %v1601
    %v1666 = vpack.c.b16 %v1606, %v1602
    %v1667 = vpack.c.b16 %v1607, %v1603
    %v1668 = vpack.c.b16 %v1608, %v1604
    %v1669 = vpack.c.b16 %v1613, %v1609
    %v1670 = vpack.c.b16 %v1614, %v1610
    %v1671 = vpack.c.b16 %v1615, %v1611
    %v1672 = vpack.c.b16 %v1616, %v1612
    %v1673 = vpack.c.b16 %v1621, %v1617
    %v1674 = vpack.c.b16 %v1622, %v1618
    %v1675 = vpack.c.b16 %v1623, %v1619
    %v1676 = vpack.c.b16 %v1624, %v1620
    %v1677 = vpack.c.b16 %v1629, %v1625
    %v1678 = vpack.c.b16 %v1630, %v1626
    %v1679 = vpack.c.b16 %v1631, %v1627
    %v1680 = vpack.c.b16 %v1632, %v1628
    %v1681 = vpack.c.b16 %v1637, %v1633
    %v1682 = vpack.c.b16 %v1638, %v1634
    %v1683 = vpack.c.b16 %v1639, %v1635
    %v1684 = vpack.c.b16 %v1640, %v1636
    %v1685 = vpack.c.b16 %v1645, %v1641
    %v1686 = vpack.c.b16 %v1646, %v1642
    %v1687 = vpack.c.b16 %v1647, %v1643
    %v1688 = vpack.c.b16 %v1648, %v1644
    %v1689 = vpack.c.b16 %v1653, %v1649
    %v1690 = vpack.c.b16 %v1654, %v1650
    %v1691 = vpack.c.b16 %v1655, %v1651
    %v1692 = vpack.c.b16 %v1656, %v1652
    %v1693 = vpack.c.b16 %v1661, %v1657
    %v1694 = vpack.c.b16 %v1662, %v1658
    %v1695 = vpack.c.b16 %v1663, %v1659
    %v1696 = vpack.c.b16 %v1664, %v1660
    %1729 = vmatprep.subr.bf16.mxu0 %v1694
    %1730 = vmatpush1.bf16.msra.mxu0 %v1693
    %1731 = vmatprep.subr.bf16.mxu0 %v1690
    %1732 = vmatpush1.bf16.msra.mxu0 %v1689
    %1733 = vmatprep.subr.bf16.mxu0 %v1686
    %1734 = vmatpush1.bf16.msra.mxu0 %v1685
    %1735 = vmatprep.subr.bf16.mxu0 %v1682
    %1736 = vmatpush1.bf16.msra.mxu0 %v1681
    %1737 = vmatprep.subr.bf16.mxu0 %v1678
    %1738 = vmatpush1.bf16.msra.mxu0 %v1677
    %1739 = vmatprep.subr.bf16.mxu0 %v1674
    %1740 = vmatpush1.bf16.msra.mxu0 %v1673
    %1741 = vmatprep.subr.bf16.mxu0 %v1670
    %1742 = vmatpush1.bf16.msra.mxu0 %v1669
    %1743 = vmatprep.subr.bf16.mxu0 %v1666
    %1744 = vmatpush1.bf16.msra.mxu0 %v1665
    %1745 = vmatprep.subr.bf16.mxu0 0
    %1746 = vmatpush2.bf16.msra.mxu0 0
    %1747 = vmatprep.subr.bf16.mxu0 0
    %1748 = vmatpush2.bf16.msra.mxu0 0
    %1749 = vmatprep.subr.bf16.mxu0 0
    %1750 = vmatpush2.bf16.msra.mxu0 0
    %1751 = vmatprep.subr.bf16.mxu0 0
    %1752 = vmatpush2.bf16.msra.mxu0 0
    %1753 = vmatprep.subr.bf16.mxu0 0
    %1754 = vmatpush2.bf16.msra.mxu0 0
    %1755 = vmatprep.subr.bf16.mxu0 0
    %1756 = vmatpush2.bf16.msra.mxu0 0
    %1757 = vmatprep.subr.bf16.mxu0 0
    %1758 = vmatpush2.bf16.msra.mxu0 0
    %1759 = vmatprep.subr.bf16.mxu0 0
    %1760 = vmatpush2.bf16.msra.mxu0 0
    %1761 = vmatprep.mubr.bf16.mxu0 0
    %1762 = vmatmul.mubr.bf16.gmra.mxu0 %v1536
    %v1763 = vpop.f32.mrf.mxu0
    %v1764 = vadd.f32 0.0, %v1763
    %v1765 = vpop.f32.mrf.mxu0
    %v1766 = vadd.f32 0.0, %v1765
    %v1767 = vpop.f32.mrf.mxu0
    %v1768 = vpop.f32.mrf.mxu0
    %1769 = vdwg.mxu0
    %1770 = vmatprep.subr.bf16.mxu0 %v1696
    %1771 = vmatpush1.bf16.msra.mxu0 %v1695
    %1772 = vmatprep.subr.bf16.mxu0 %v1692
    %1773 = vmatpush1.bf16.msra.mxu0 %v1691
    %1774 = vmatprep.subr.bf16.mxu0 %v1688
    %1775 = vmatpush1.bf16.msra.mxu0 %v1687
    %1776 = vmatprep.subr.bf16.mxu0 %v1684
    %1777 = vmatpush1.bf16.msra.mxu0 %v1683
    %1778 = vmatprep.subr.bf16.mxu0 %v1680
    %1779 = vmatpush1.bf16.msra.mxu0 %v1679
    %1780 = vmatprep.subr.bf16.mxu0 %v1676
    %1781 = vmatpush1.bf16.msra.mxu0 %v1675
    %1782 = vmatprep.subr.bf16.mxu0 %v1672
    %1783 = vmatpush1.bf16.msra.mxu0 %v1671
    %1784 = vmatprep.subr.bf16.mxu0 %v1668
    %1785 = vmatpush1.bf16.msra.mxu0 %v1667
    %1786 = vmatprep.subr.bf16.mxu0 0
    %1787 = vmatpush2.bf16.msra.mxu0 0
    %1788 = vmatprep.subr.bf16.mxu0 0
    %1789 = vmatpush2.bf16.msra.mxu0 0
    %1790 = vmatprep.subr.bf16.mxu0 0
    %1791 = vmatpush2.bf16.msra.mxu0 0
    %1792 = vmatprep.subr.bf16.mxu0 0
    %1793 = vmatpush2.bf16.msra.mxu0 0
    %1794 = vmatprep.subr.bf16.mxu0 0
    %1795 = vmatpush2.bf16.msra.mxu0 0
    %1796 = vmatprep.subr.bf16.mxu0 0
    %1797 = vmatpush2.bf16.msra.mxu0 0
    %1798 = vmatprep.subr.bf16.mxu0 0
    %1799 = vmatpush2.bf16.msra.mxu0 0
    %1800 = vmatprep.subr.bf16.mxu0 0
    %1801 = vmatpush2.bf16.msra.mxu0 0
    %1802 = vmatprep.mubr.bf16.mxu0 0
    %1803 = vmatmul.mubr.bf16.gmra.mxu0 %v1536
    %v1804 = vpop.f32.mrf.mxu0
    %v1805 = vadd.f32 0.0, %v1804
    %v1806 = vpop.f32.mrf.mxu0
    %v1807 = vadd.f32 0.0, %v1806
    %v1808 = vpop.f32.mrf.mxu0
    %v1809 = vpop.f32.mrf.mxu0
    %1810 = vdwg.mxu0
    %v1811 = vadd.f32 %v1532, %v1764
    %v1812 = vadd.f32 %v1533, %v1766
    %v1813 = vadd.f32 %v1534, %v1805
    %v1814 = vadd.f32 %v1535, %v1807
    %v1815 = vxor.u32 %v1811, 2147483648
    %v1816 = vmul.f32 %v1815, 1.442695
    %v1817 = vpow.pop %v1816
    %v1818 = vadd.f32 %v1817, 1.0
    %v1819 = vrcp.pop %v1818
    %v1820 = vmul.f32 1.0, %v1819
    %v1821 = vxor.u32 %v1812, 2147483648
    %v1822 = vmul.f32 %v1821, 1.442695
    %v1823 = vpow.pop %v1822
    %v1824 = vadd.f32 %v1823, 1.0
    %v1825 = vrcp.pop %v1824
    %v1826 = vmul.f32 1.0, %v1825
    %v1827 = vtanh.pop %v1813
    %v1828 = vxor.u32 %v1814, 2147483648
    %v1829 = vmul.f32 %v1828, 1.442695
    %v1830 = vpow.pop %v1829
    %v1831 = vadd.f32 %v1830, 1.0
    %v1832 = vrcp.pop %v1831
    %v1833 = vmul.f32 1.0, %v1832
    %v1834 = vmul.f32 %v1826, %v1521
    %v1835 = vmul.f32 %v1820, %v1827
    %v1836 = vadd.f32 %v1834, %v1835
    %v1837 = vtanh.pop %v1836
    %v1838 = vmul.f32 %v1833, %v1837
    %s1839 = scalar_lea.vmem [#allocation3], 24
    %v1840 = vld [vmem:[%s1839] sm:$0xff]
    %v1841 = vadd.f32 %v1838, %v1840
    %s1842 = scalar_lea.vmem %s4, 24
    %1843 = vst [vmem:[%s1842] sm:$0xff] %v1841
    %s1844 = smul.u32 4, 4
    %s1845 = smul.addr %s1844, 8
    %s1846 = scalar_lea.vmem [#allocation2], %s1845
    %v1847 = vld [vmem:[%s1846] sm:$0xff]
    %v1848 = vld [vmem:[%s1846 + $0x8] sm:$0xff]
    %v1849 = vld [vmem:[%s1846 + $0x10] sm:$0xff]
    %v1850 = vld [vmem:[%s1846 + $0x18] sm:$0xff]
    %v1851 = vpack.c.bf16 %v1838, %v1838
    %v1852 = vld [vmem:[#allocation6] sm:$0xff]
    %v1853 = vld [vmem:[#allocation6 + $0x8] sm:$0xff]
    %v1854 = vld [vmem:[#allocation6 + $0x10] sm:$0xff]
    %v1855 = vld [vmem:[#allocation6 + $0x18] sm:$0xff]
    %v1856 = vld [vmem:[#allocation6 + $0x20] sm:$0xff]
    %v1857 = vld [vmem:[#allocation6 + $0x28] sm:$0xff]
    %v1858 = vld [vmem:[#allocation6 + $0x30] sm:$0xff]
    %v1859 = vld [vmem:[#allocation6 + $0x38] sm:$0xff]
    %v1860 = vld [vmem:[#allocation6 + $0x40] sm:$0xff]
    %v1861 = vld [vmem:[#allocation6 + $0x48] sm:$0xff]
    %v1862 = vld [vmem:[#allocation6 + $0x50] sm:$0xff]
    %v1863 = vld [vmem:[#allocation6 + $0x58] sm:$0xff]
    %v1864 = vld [vmem:[#allocation6 + $0x60] sm:$0xff]
    %v1865 = vld [vmem:[#allocation6 + $0x68] sm:$0xff]
    %v1866 = vld [vmem:[#allocation6 + $0x70] sm:$0xff]
    %v1867 = vld [vmem:[#allocation6 + $0x78] sm:$0xff]
    %v1868 = vld [vmem:[#allocation6 + $0x80] sm:$0xff]
    %v1869 = vld [vmem:[#allocation6 + $0x88] sm:$0xff]
    %v1870 = vld [vmem:[#allocation6 + $0x90] sm:$0xff]
    %v1871 = vld [vmem:[#allocation6 + $0x98] sm:$0xff]
    %v1872 = vld [vmem:[#allocation6 + $0xa0] sm:$0xff]
    %v1873 = vld [vmem:[#allocation6 + $0xa8] sm:$0xff]
    %v1874 = vld [vmem:[#allocation6 + $0xb0] sm:$0xff]
    %v1875 = vld [vmem:[#allocation6 + $0xb8] sm:$0xff]
    %v1876 = vld [vmem:[#allocation6 + $0xc0] sm:$0xff]
    %v1877 = vld [vmem:[#allocation6 + $0xc8] sm:$0xff]
    %v1878 = vld [vmem:[#allocation6 + $0xd0] sm:$0xff]
    %v1879 = vld [vmem:[#allocation6 + $0xd8] sm:$0xff]
    %v1880 = vld [vmem:[#allocation6 + $0xe0] sm:$0xff]
    %v1881 = vld [vmem:[#allocation6 + $0xe8] sm:$0xff]
    %v1882 = vld [vmem:[#allocation6 + $0xf0] sm:$0xff]
    %v1883 = vld [vmem:[#allocation6 + $0xf8] sm:$0xff]
    %v1916 = vunpack.c.l.b16 %v1852
    %v1917 = vunpack.c.h.b16 %v1852
    %v1918 = vunpack.c.l.b16 %v1853
    %v1919 = vunpack.c.h.b16 %v1853
    %v1920 = vunpack.c.l.b16 %v1854
    %v1921 = vunpack.c.h.b16 %v1854
    %v1922 = vunpack.c.l.b16 %v1855
    %v1923 = vunpack.c.h.b16 %v1855
    %v1924 = vunpack.c.l.b16 %v1856
    %v1925 = vunpack.c.h.b16 %v1856
    %v1926 = vunpack.c.l.b16 %v1857
    %v1927 = vunpack.c.h.b16 %v1857
    %v1928 = vunpack.c.l.b16 %v1858
    %v1929 = vunpack.c.h.b16 %v1858
    %v1930 = vunpack.c.l.b16 %v1859
    %v1931 = vunpack.c.h.b16 %v1859
    %v1932 = vunpack.c.l.b16 %v1860
    %v1933 = vunpack.c.h.b16 %v1860
    %v1934 = vunpack.c.l.b16 %v1861
    %v1935 = vunpack.c.h.b16 %v1861
    %v1936 = vunpack.c.l.b16 %v1862
    %v1937 = vunpack.c.h.b16 %v1862
    %v1938 = vunpack.c.l.b16 %v1863
    %v1939 = vunpack.c.h.b16 %v1863
    %v1940 = vunpack.c.l.b16 %v1864
    %v1941 = vunpack.c.h.b16 %v1864
    %v1942 = vunpack.c.l.b16 %v1865
    %v1943 = vunpack.c.h.b16 %v1865
    %v1944 = vunpack.c.l.b16 %v1866
    %v1945 = vunpack.c.h.b16 %v1866
    %v1946 = vunpack.c.l.b16 %v1867
    %v1947 = vunpack.c.h.b16 %v1867
    %v1948 = vunpack.c.l.b16 %v1868
    %v1949 = vunpack.c.h.b16 %v1868
    %v1950 = vunpack.c.l.b16 %v1869
    %v1951 = vunpack.c.h.b16 %v1869
    %v1952 = vunpack.c.l.b16 %v1870
    %v1953 = vunpack.c.h.b16 %v1870
    %v1954 = vunpack.c.l.b16 %v1871
    %v1955 = vunpack.c.h.b16 %v1871
    %v1956 = vunpack.c.l.b16 %v1872
    %v1957 = vunpack.c.h.b16 %v1872
    %v1958 = vunpack.c.l.b16 %v1873
    %v1959 = vunpack.c.h.b16 %v1873
    %v1960 = vunpack.c.l.b16 %v1874
    %v1961 = vunpack.c.h.b16 %v1874
    %v1962 = vunpack.c.l.b16 %v1875
    %v1963 = vunpack.c.h.b16 %v1875
    %v1964 = vunpack.c.l.b16 %v1876
    %v1965 = vunpack.c.h.b16 %v1876
    %v1966 = vunpack.c.l.b16 %v1877
    %v1967 = vunpack.c.h.b16 %v1877
    %v1968 = vunpack.c.l.b16 %v1878
    %v1969 = vunpack.c.h.b16 %v1878
    %v1970 = vunpack.c.l.b16 %v1879
    %v1971 = vunpack.c.h.b16 %v1879
    %v1972 = vunpack.c.l.b16 %v1880
    %v1973 = vunpack.c.h.b16 %v1880
    %v1974 = vunpack.c.l.b16 %v1881
    %v1975 = vunpack.c.h.b16 %v1881
    %v1976 = vunpack.c.l.b16 %v1882
    %v1977 = vunpack.c.h.b16 %v1882
    %v1978 = vunpack.c.l.b16 %v1883
    %v1979 = vunpack.c.h.b16 %v1883
    %v1980 = vpack.c.b16 %v1920, %v1916
    %v1981 = vpack.c.b16 %v1921, %v1917
    %v1982 = vpack.c.b16 %v1922, %v1918
    %v1983 = vpack.c.b16 %v1923, %v1919
    %v1984 = vpack.c.b16 %v1928, %v1924
    %v1985 = vpack.c.b16 %v1929, %v1925
    %v1986 = vpack.c.b16 %v1930, %v1926
    %v1987 = vpack.c.b16 %v1931, %v1927
    %v1988 = vpack.c.b16 %v1936, %v1932
    %v1989 = vpack.c.b16 %v1937, %v1933
    %v1990 = vpack.c.b16 %v1938, %v1934
    %v1991 = vpack.c.b16 %v1939, %v1935
    %v1992 = vpack.c.b16 %v1944, %v1940
    %v1993 = vpack.c.b16 %v1945, %v1941
    %v1994 = vpack.c.b16 %v1946, %v1942
    %v1995 = vpack.c.b16 %v1947, %v1943
    %v1996 = vpack.c.b16 %v1952, %v1948
    %v1997 = vpack.c.b16 %v1953, %v1949
    %v1998 = vpack.c.b16 %v1954, %v1950
    %v1999 = vpack.c.b16 %v1955, %v1951
    %v2000 = vpack.c.b16 %v1960, %v1956
    %v2001 = vpack.c.b16 %v1961, %v1957
    %v2002 = vpack.c.b16 %v1962, %v1958
    %v2003 = vpack.c.b16 %v1963, %v1959
    %v2004 = vpack.c.b16 %v1968, %v1964
    %v2005 = vpack.c.b16 %v1969, %v1965
    %v2006 = vpack.c.b16 %v1970, %v1966
    %v2007 = vpack.c.b16 %v1971, %v1967
    %v2008 = vpack.c.b16 %v1976, %v1972
    %v2009 = vpack.c.b16 %v1977, %v1973
    %v2010 = vpack.c.b16 %v1978, %v1974
    %v2011 = vpack.c.b16 %v1979, %v1975
    %2044 = vmatprep.subr.bf16.mxu0 %v2009
    %2045 = vmatpush1.bf16.msra.mxu0 %v2008
    %2046 = vmatprep.subr.bf16.mxu0 %v2005
    %2047 = vmatpush1.bf16.msra.mxu0 %v2004
    %2048 = vmatprep.subr.bf16.mxu0 %v2001
    %2049 = vmatpush1.bf16.msra.mxu0 %v2000
    %2050 = vmatprep.subr.bf16.mxu0 %v1997
    %2051 = vmatpush1.bf16.msra.mxu0 %v1996
    %2052 = vmatprep.subr.bf16.mxu0 %v1993
    %2053 = vmatpush1.bf16.msra.mxu0 %v1992
    %2054 = vmatprep.subr.bf16.mxu0 %v1989
    %2055 = vmatpush1.bf16.msra.mxu0 %v1988
    %2056 = vmatprep.subr.bf16.mxu0 %v1985
    %2057 = vmatpush1.bf16.msra.mxu0 %v1984
    %2058 = vmatprep.subr.bf16.mxu0 %v1981
    %2059 = vmatpush1.bf16.msra.mxu0 %v1980
    %2060 = vmatprep.subr.bf16.mxu0 0
    %2061 = vmatpush2.bf16.msra.mxu0 0
    %2062 = vmatprep.subr.bf16.mxu0 0
    %2063 = vmatpush2.bf16.msra.mxu0 0
    %2064 = vmatprep.subr.bf16.mxu0 0
    %2065 = vmatpush2.bf16.msra.mxu0 0
    %2066 = vmatprep.subr.bf16.mxu0 0
    %2067 = vmatpush2.bf16.msra.mxu0 0
    %2068 = vmatprep.subr.bf16.mxu0 0
    %2069 = vmatpush2.bf16.msra.mxu0 0
    %2070 = vmatprep.subr.bf16.mxu0 0
    %2071 = vmatpush2.bf16.msra.mxu0 0
    %2072 = vmatprep.subr.bf16.mxu0 0
    %2073 = vmatpush2.bf16.msra.mxu0 0
    %2074 = vmatprep.subr.bf16.mxu0 0
    %2075 = vmatpush2.bf16.msra.mxu0 0
    %2076 = vmatprep.mubr.bf16.mxu0 0
    %2077 = vmatmul.mubr.bf16.gmra.mxu0 %v1851
    %v2078 = vpop.f32.mrf.mxu0
    %v2079 = vadd.f32 0.0, %v2078
    %v2080 = vpop.f32.mrf.mxu0
    %v2081 = vadd.f32 0.0, %v2080
    %v2082 = vpop.f32.mrf.mxu0
    %v2083 = vpop.f32.mrf.mxu0
    %2084 = vdwg.mxu0
    %2085 = vmatprep.subr.bf16.mxu0 %v2011
    %2086 = vmatpush1.bf16.msra.mxu0 %v2010
    %2087 = vmatprep.subr.bf16.mxu0 %v2007
    %2088 = vmatpush1.bf16.msra.mxu0 %v2006
    %2089 = vmatprep.subr.bf16.mxu0 %v2003
    %2090 = vmatpush1.bf16.msra.mxu0 %v2002
    %2091 = vmatprep.subr.bf16.mxu0 %v1999
    %2092 = vmatpush1.bf16.msra.mxu0 %v1998
    %2093 = vmatprep.subr.bf16.mxu0 %v1995
    %2094 = vmatpush1.bf16.msra.mxu0 %v1994
    %2095 = vmatprep.subr.bf16.mxu0 %v1991
    %2096 = vmatpush1.bf16.msra.mxu0 %v1990
    %2097 = vmatprep.subr.bf16.mxu0 %v1987
    %2098 = vmatpush1.bf16.msra.mxu0 %v1986
    %2099 = vmatprep.subr.bf16.mxu0 %v1983
    %2100 = vmatpush1.bf16.msra.mxu0 %v1982
    %2101 = vmatprep.subr.bf16.mxu0 0
    %2102 = vmatpush2.bf16.msra.mxu0 0
    %2103 = vmatprep.subr.bf16.mxu0 0
    %2104 = vmatpush2.bf16.msra.mxu0 0
    %2105 = vmatprep.subr.bf16.mxu0 0
    %2106 = vmatpush2.bf16.msra.mxu0 0
    %2107 = vmatprep.subr.bf16.mxu0 0
    %2108 = vmatpush2.bf16.msra.mxu0 0
    %2109 = vmatprep.subr.bf16.mxu0 0
    %2110 = vmatpush2.bf16.msra.mxu0 0
    %2111 = vmatprep.subr.bf16.mxu0 0
    %2112 = vmatpush2.bf16.msra.mxu0 0
    %2113 = vmatprep.subr.bf16.mxu0 0
    %2114 = vmatpush2.bf16.msra.mxu0 0
    %2115 = vmatprep.subr.bf16.mxu0 0
    %2116 = vmatpush2.bf16.msra.mxu0 0
    %2117 = vmatprep.mubr.bf16.mxu0 0
    %2118 = vmatmul.mubr.bf16.gmra.mxu0 %v1851
    %v2119 = vpop.f32.mrf.mxu0
    %v2120 = vadd.f32 0.0, %v2119
    %v2121 = vpop.f32.mrf.mxu0
    %v2122 = vadd.f32 0.0, %v2121
    %v2123 = vpop.f32.mrf.mxu0
    %v2124 = vpop.f32.mrf.mxu0
    %2125 = vdwg.mxu0
    %v2126 = vadd.f32 %v1847, %v2079
    %v2127 = vadd.f32 %v1848, %v2081
    %v2128 = vadd.f32 %v1849, %v2120
    %v2129 = vadd.f32 %v1850, %v2122
    %v2130 = vxor.u32 %v2126, 2147483648
    %v2131 = vmul.f32 %v2130, 1.442695
    %v2132 = vpow.pop %v2131
    %v2133 = vadd.f32 %v2132, 1.0
    %v2134 = vrcp.pop %v2133
    %v2135 = vmul.f32 1.0, %v2134
    %v2136 = vxor.u32 %v2127, 2147483648
    %v2137 = vmul.f32 %v2136, 1.442695
    %v2138 = vpow.pop %v2137
    %v2139 = vadd.f32 %v2138, 1.0
    %v2140 = vrcp.pop %v2139
    %v2141 = vmul.f32 1.0, %v2140
    %v2142 = vtanh.pop %v2128
    %v2143 = vxor.u32 %v2129, 2147483648
    %v2144 = vmul.f32 %v2143, 1.442695
    %v2145 = vpow.pop %v2144
    %v2146 = vadd.f32 %v2145, 1.0
    %v2147 = vrcp.pop %v2146
    %v2148 = vmul.f32 1.0, %v2147
    %v2149 = vmul.f32 %v2141, %v1836
    %v2150 = vmul.f32 %v2135, %v2142
    %v2151 = vadd.f32 %v2149, %v2150
    %v2152 = vtanh.pop %v2151
    %v2153 = vmul.f32 %v2148, %v2152
    %s2154 = scalar_lea.vmem [#allocation3], 32
    %v2155 = vld [vmem:[%s2154] sm:$0xff]
    %v2156 = vadd.f32 %v2153, %v2155
    %s2157 = scalar_lea.vmem %s4, 32
    %2158 = vst [vmem:[%s2157] sm:$0xff] %v2156
    %s2159 = smul.u32 5, 4
    %s2160 = smul.addr %s2159, 8
    %s2161 = scalar_lea.vmem [#allocation2], %s2160
    %v2162 = vld [vmem:[%s2161] sm:$0xff]
    %v2163 = vld [vmem:[%s2161 + $0x8] sm:$0xff]
    %v2164 = vld [vmem:[%s2161 + $0x10] sm:$0xff]
    %v2165 = vld [vmem:[%s2161 + $0x18] sm:$0xff]
    %v2166 = vpack.c.bf16 %v2153, %v2153
    %v2167 = vld [vmem:[#allocation6] sm:$0xff]
    %v2168 = vld [vmem:[#allocation6 + $0x8] sm:$0xff]
    %v2169 = vld [vmem:[#allocation6 + $0x10] sm:$0xff]
    %v2170 = vld [vmem:[#allocation6 + $0x18] sm:$0xff]
    %v2171 = vld [vmem:[#allocation6 + $0x20] sm:$0xff]
    %v2172 = vld [vmem:[#allocation6 + $0x28] sm:$0xff]
    %v2173 = vld [vmem:[#allocation6 + $0x30] sm:$0xff]
    %v2174 = vld [vmem:[#allocation6 + $0x38] sm:$0xff]
    %v2175 = vld [vmem:[#allocation6 + $0x40] sm:$0xff]
    %v2176 = vld [vmem:[#allocation6 + $0x48] sm:$0xff]
    %v2177 = vld [vmem:[#allocation6 + $0x50] sm:$0xff]
    %v2178 = vld [vmem:[#allocation6 + $0x58] sm:$0xff]
    %v2179 = vld [vmem:[#allocation6 + $0x60] sm:$0xff]
    %v2180 = vld [vmem:[#allocation6 + $0x68] sm:$0xff]
    %v2181 = vld [vmem:[#allocation6 + $0x70] sm:$0xff]
    %v2182 = vld [vmem:[#allocation6 + $0x78] sm:$0xff]
    %v2183 = vld [vmem:[#allocation6 + $0x80] sm:$0xff]
    %v2184 = vld [vmem:[#allocation6 + $0x88] sm:$0xff]
    %v2185 = vld [vmem:[#allocation6 + $0x90] sm:$0xff]
    %v2186 = vld [vmem:[#allocation6 + $0x98] sm:$0xff]
    %v2187 = vld [vmem:[#allocation6 + $0xa0] sm:$0xff]
    %v2188 = vld [vmem:[#allocation6 + $0xa8] sm:$0xff]
    %v2189 = vld [vmem:[#allocation6 + $0xb0] sm:$0xff]
    %v2190 = vld [vmem:[#allocation6 + $0xb8] sm:$0xff]
    %v2191 = vld [vmem:[#allocation6 + $0xc0] sm:$0xff]
    %v2192 = vld [vmem:[#allocation6 + $0xc8] sm:$0xff]
    %v2193 = vld [vmem:[#allocation6 + $0xd0] sm:$0xff]
    %v2194 = vld [vmem:[#allocation6 + $0xd8] sm:$0xff]
    %v2195 = vld [vmem:[#allocation6 + $0xe0] sm:$0xff]
    %v2196 = vld [vmem:[#allocation6 + $0xe8] sm:$0xff]
    %v2197 = vld [vmem:[#allocation6 + $0xf0] sm:$0xff]
    %v2198 = vld [vmem:[#allocation6 + $0xf8] sm:$0xff]
    %v2231 = vunpack.c.l.b16 %v2167
    %v2232 = vunpack.c.h.b16 %v2167
    %v2233 = vunpack.c.l.b16 %v2168
    %v2234 = vunpack.c.h.b16 %v2168
    %v2235 = vunpack.c.l.b16 %v2169
    %v2236 = vunpack.c.h.b16 %v2169
    %v2237 = vunpack.c.l.b16 %v2170
    %v2238 = vunpack.c.h.b16 %v2170
    %v2239 = vunpack.c.l.b16 %v2171
    %v2240 = vunpack.c.h.b16 %v2171
    %v2241 = vunpack.c.l.b16 %v2172
    %v2242 = vunpack.c.h.b16 %v2172
    %v2243 = vunpack.c.l.b16 %v2173
    %v2244 = vunpack.c.h.b16 %v2173
    %v2245 = vunpack.c.l.b16 %v2174
    %v2246 = vunpack.c.h.b16 %v2174
    %v2247 = vunpack.c.l.b16 %v2175
    %v2248 = vunpack.c.h.b16 %v2175
    %v2249 = vunpack.c.l.b16 %v2176
    %v2250 = vunpack.c.h.b16 %v2176
    %v2251 = vunpack.c.l.b16 %v2177
    %v2252 = vunpack.c.h.b16 %v2177
    %v2253 = vunpack.c.l.b16 %v2178
    %v2254 = vunpack.c.h.b16 %v2178
    %v2255 = vunpack.c.l.b16 %v2179
    %v2256 = vunpack.c.h.b16 %v2179
    %v2257 = vunpack.c.l.b16 %v2180
    %v2258 = vunpack.c.h.b16 %v2180
    %v2259 = vunpack.c.l.b16 %v2181
    %v2260 = vunpack.c.h.b16 %v2181
    %v2261 = vunpack.c.l.b16 %v2182
    %v2262 = vunpack.c.h.b16 %v2182
    %v2263 = vunpack.c.l.b16 %v2183
    %v2264 = vunpack.c.h.b16 %v2183
    %v2265 = vunpack.c.l.b16 %v2184
    %v2266 = vunpack.c.h.b16 %v2184
    %v2267 = vunpack.c.l.b16 %v2185
    %v2268 = vunpack.c.h.b16 %v2185
    %v2269 = vunpack.c.l.b16 %v2186
    %v2270 = vunpack.c.h.b16 %v2186
    %v2271 = vunpack.c.l.b16 %v2187
    %v2272 = vunpack.c.h.b16 %v2187
    %v2273 = vunpack.c.l.b16 %v2188
    %v2274 = vunpack.c.h.b16 %v2188
    %v2275 = vunpack.c.l.b16 %v2189
    %v2276 = vunpack.c.h.b16 %v2189
    %v2277 = vunpack.c.l.b16 %v2190
    %v2278 = vunpack.c.h.b16 %v2190
    %v2279 = vunpack.c.l.b16 %v2191
    %v2280 = vunpack.c.h.b16 %v2191
    %v2281 = vunpack.c.l.b16 %v2192
    %v2282 = vunpack.c.h.b16 %v2192
    %v2283 = vunpack.c.l.b16 %v2193
    %v2284 = vunpack.c.h.b16 %v2193
    %v2285 = vunpack.c.l.b16 %v2194
    %v2286 = vunpack.c.h.b16 %v2194
    %v2287 = vunpack.c.l.b16 %v2195
    %v2288 = vunpack.c.h.b16 %v2195
    %v2289 = vunpack.c.l.b16 %v2196
    %v2290 = vunpack.c.h.b16 %v2196
    %v2291 = vunpack.c.l.b16 %v2197
    %v2292 = vunpack.c.h.b16 %v2197
    %v2293 = vunpack.c.l.b16 %v2198
    %v2294 = vunpack.c.h.b16 %v2198
    %v2295 = vpack.c.b16 %v2235, %v2231
    %v2296 = vpack.c.b16 %v2236, %v2232
    %v2297 = vpack.c.b16 %v2237, %v2233
    %v2298 = vpack.c.b16 %v2238, %v2234
    %v2299 = vpack.c.b16 %v2243, %v2239
    %v2300 = vpack.c.b16 %v2244, %v2240
    %v2301 = vpack.c.b16 %v2245, %v2241
    %v2302 = vpack.c.b16 %v2246, %v2242
    %v2303 = vpack.c.b16 %v2251, %v2247
    %v2304 = vpack.c.b16 %v2252, %v2248
    %v2305 = vpack.c.b16 %v2253, %v2249
    %v2306 = vpack.c.b16 %v2254, %v2250
    %v2307 = vpack.c.b16 %v2259, %v2255
    %v2308 = vpack.c.b16 %v2260, %v2256
    %v2309 = vpack.c.b16 %v2261, %v2257
    %v2310 = vpack.c.b16 %v2262, %v2258
    %v2311 = vpack.c.b16 %v2267, %v2263
    %v2312 = vpack.c.b16 %v2268, %v2264
    %v2313 = vpack.c.b16 %v2269, %v2265
    %v2314 = vpack.c.b16 %v2270, %v2266
    %v2315 = vpack.c.b16 %v2275, %v2271
    %v2316 = vpack.c.b16 %v2276, %v2272
    %v2317 = vpack.c.b16 %v2277, %v2273
    %v2318 = vpack.c.b16 %v2278, %v2274
    %v2319 = vpack.c.b16 %v2283, %v2279
    %v2320 = vpack.c.b16 %v2284, %v2280
    %v2321 = vpack.c.b16 %v2285, %v2281
    %v2322 = vpack.c.b16 %v2286, %v2282
    %v2323 = vpack.c.b16 %v2291, %v2287
    %v2324 = vpack.c.b16 %v2292, %v2288
    %v2325 = vpack.c.b16 %v2293, %v2289
    %v2326 = vpack.c.b16 %v2294, %v2290
    %2359 = vmatprep.subr.bf16.mxu0 %v2324
    %2360 = vmatpush1.bf16.msra.mxu0 %v2323
    %2361 = vmatprep.subr.bf16.mxu0 %v2320
    %2362 = vmatpush1.bf16.msra.mxu0 %v2319
    %2363 = vmatprep.subr.bf16.mxu0 %v2316
    %2364 = vmatpush1.bf16.msra.mxu0 %v2315
    %2365 = vmatprep.subr.bf16.mxu0 %v2312
    %2366 = vmatpush1.bf16.msra.mxu0 %v2311
    %2367 = vmatprep.subr.bf16.mxu0 %v2308
    %2368 = vmatpush1.bf16.msra.mxu0 %v2307
    %2369 = vmatprep.subr.bf16.mxu0 %v2304
    %2370 = vmatpush1.bf16.msra.mxu0 %v2303
    %2371 = vmatprep.subr.bf16.mxu0 %v2300
    %2372 = vmatpush1.bf16.msra.mxu0 %v2299
    %2373 = vmatprep.subr.bf16.mxu0 %v2296
    %2374 = vmatpush1.bf16.msra.mxu0 %v2295
    %2375 = vmatprep.subr.bf16.mxu0 0
    %2376 = vmatpush2.bf16.msra.mxu0 0
    %2377 = vmatprep.subr.bf16.mxu0 0
    %2378 = vmatpush2.bf16.msra.mxu0 0
    %2379 = vmatprep.subr.bf16.mxu0 0
    %2380 = vmatpush2.bf16.msra.mxu0 0
    %2381 = vmatprep.subr.bf16.mxu0 0
    %2382 = vmatpush2.bf16.msra.mxu0 0
    %2383 = vmatprep.subr.bf16.mxu0 0
    %2384 = vmatpush2.bf16.msra.mxu0 0
    %2385 = vmatprep.subr.bf16.mxu0 0
    %2386 = vmatpush2.bf16.msra.mxu0 0
    %2387 = vmatprep.subr.bf16.mxu0 0
    %2388 = vmatpush2.bf16.msra.mxu0 0
    %2389 = vmatprep.subr.bf16.mxu0 0
    %2390 = vmatpush2.bf16.msra.mxu0 0
    %2391 = vmatprep.mubr.bf16.mxu0 0
    %2392 = vmatmul.mubr.bf16.gmra.mxu0 %v2166
    %v2393 = vpop.f32.mrf.mxu0
    %v2394 = vadd.f32 0.0, %v2393
    %v2395 = vpop.f32.mrf.mxu0
    %v2396 = vadd.f32 0.0, %v2395
    %v2397 = vpop.f32.mrf.mxu0
    %v2398 = vpop.f32.mrf.mxu0
    %2399 = vdwg.mxu0
    %2400 = vmatprep.subr.bf16.mxu0 %v2326
    %2401 = vmatpush1.bf16.msra.mxu0 %v2325
    %2402 = vmatprep.subr.bf16.mxu0 %v2322
    %2403 = vmatpush1.bf16.msra.mxu0 %v2321
    %2404 = vmatprep.subr.bf16.mxu0 %v2318
    %2405 = vmatpush1.bf16.msra.mxu0 %v2317
    %2406 = vmatprep.subr.bf16.mxu0 %v2314
    %2407 = vmatpush1.bf16.msra.mxu0 %v2313
    %2408 = vmatprep.subr.bf16.mxu0 %v2310
    %2409 = vmatpush1.bf16.msra.mxu0 %v2309
    %2410 = vmatprep.subr.bf16.mxu0 %v2306
    %2411 = vmatpush1.bf16.msra.mxu0 %v2305
    %2412 = vmatprep.subr.bf16.mxu0 %v2302
    %2413 = vmatpush1.bf16.msra.mxu0 %v2301
    %2414 = vmatprep.subr.bf16.mxu0 %v2298
    %2415 = vmatpush1.bf16.msra.mxu0 %v2297
    %2416 = vmatprep.subr.bf16.mxu0 0
    %2417 = vmatpush2.bf16.msra.mxu0 0
    %2418 = vmatprep.subr.bf16.mxu0 0
    %2419 = vmatpush2.bf16.msra.mxu0 0
    %2420 = vmatprep.subr.bf16.mxu0 0
    %2421 = vmatpush2.bf16.msra.mxu0 0
    %2422 = vmatprep.subr.bf16.mxu0 0
    %2423 = vmatpush2.bf16.msra.mxu0 0
    %2424 = vmatprep.subr.bf16.mxu0 0
    %2425 = vmatpush2.bf16.msra.mxu0 0
    %2426 = vmatprep.subr.bf16.mxu0 0
    %2427 = vmatpush2.bf16.msra.mxu0 0
    %2428 = vmatprep.subr.bf16.mxu0 0
    %2429 = vmatpush2.bf16.msra.mxu0 0
    %2430 = vmatprep.subr.bf16.mxu0 0
    %2431 = vmatpush2.bf16.msra.mxu0 0
    %2432 = vmatprep.mubr.bf16.mxu0 0
    %2433 = vmatmul.mubr.bf16.gmra.mxu0 %v2166
    %v2434 = vpop.f32.mrf.mxu0
    %v2435 = vadd.f32 0.0, %v2434
    %v2436 = vpop.f32.mrf.mxu0
    %v2437 = vadd.f32 0.0, %v2436
    %v2438 = vpop.f32.mrf.mxu0
    %v2439 = vpop.f32.mrf.mxu0
    %2440 = vdwg.mxu0
    %v2441 = vadd.f32 %v2162, %v2394
    %v2442 = vadd.f32 %v2163, %v2396
    %v2443 = vadd.f32 %v2164, %v2435
    %v2444 = vadd.f32 %v2165, %v2437
    %v2445 = vxor.u32 %v2441, 2147483648
    %v2446 = vmul.f32 %v2445, 1.442695
    %v2447 = vpow.pop %v2446
    %v2448 = vadd.f32 %v2447, 1.0
    %v2449 = vrcp.pop %v2448
    %v2450 = vmul.f32 1.0, %v2449
    %v2451 = vxor.u32 %v2442, 2147483648
    %v2452 = vmul.f32 %v2451, 1.442695
    %v2453 = vpow.pop %v2452
    %v2454 = vadd.f32 %v2453, 1.0
    %v2455 = vrcp.pop %v2454
    %v2456 = vmul.f32 1.0, %v2455
    %v2457 = vtanh.pop %v2443
    %v2458 = vxor.u32 %v2444, 2147483648
    %v2459 = vmul.f32 %v2458, 1.442695
    %v2460 = vpow.pop %v2459
    %v2461 = vadd.f32 %v2460, 1.0
    %v2462 = vrcp.pop %v2461
    %v2463 = vmul.f32 1.0, %v2462
    %v2464 = vmul.f32 %v2456, %v2151
    %v2465 = vmul.f32 %v2450, %v2457
    %v2466 = vadd.f32 %v2464, %v2465
    %v2467 = vtanh.pop %v2466
    %v2468 = vmul.f32 %v2463, %v2467
    %s2469 = scalar_lea.vmem [#allocation3], 40
    %v2470 = vld [vmem:[%s2469] sm:$0xff]
    %v2471 = vadd.f32 %v2468, %v2470
    %s2472 = scalar_lea.vmem %s4, 40
    %2473 = vst [vmem:[%s2472] sm:$0xff] %v2471
    %s2474 = smul.u32 6, 4
    %s2475 = smul.addr %s2474, 8
    %s2476 = scalar_lea.vmem [#allocation2], %s2475
    %v2477 = vld [vmem:[%s2476] sm:$0xff]
    %v2478 = vld [vmem:[%s2476 + $0x8] sm:$0xff]
    %v2479 = vld [vmem:[%s2476 + $0x10] sm:$0xff]
    %v2480 = vld [vmem:[%s2476 + $0x18] sm:$0xff]
    %v2481 = vpack.c.bf16 %v2468, %v2468
    %v2482 = vld [vmem:[#allocation6] sm:$0xff]
    %v2483 = vld [vmem:[#allocation6 + $0x8] sm:$0xff]
    %v2484 = vld [vmem:[#allocation6 + $0x10] sm:$0xff]
    %v2485 = vld [vmem:[#allocation6 + $0x18] sm:$0xff]
    %v2486 = vld [vmem:[#allocation6 + $0x20] sm:$0xff]
    %v2487 = vld [vmem:[#allocation6 + $0x28] sm:$0xff]
    %v2488 = vld [vmem:[#allocation6 + $0x30] sm:$0xff]
    %v2489 = vld [vmem:[#allocation6 + $0x38] sm:$0xff]
    %v2490 = vld [vmem:[#allocation6 + $0x40] sm:$0xff]
    %v2491 = vld [vmem:[#allocation6 + $0x48] sm:$0xff]
    %v2492 = vld [vmem:[#allocation6 + $0x50] sm:$0xff]
    %v2493 = vld [vmem:[#allocation6 + $0x58] sm:$0xff]
    %v2494 = vld [vmem:[#allocation6 + $0x60] sm:$0xff]
    %v2495 = vld [vmem:[#allocation6 + $0x68] sm:$0xff]
    %v2496 = vld [vmem:[#allocation6 + $0x70] sm:$0xff]
    %v2497 = vld [vmem:[#allocation6 + $0x78] sm:$0xff]
    %v2498 = vld [vmem:[#allocation6 + $0x80] sm:$0xff]
    %v2499 = vld [vmem:[#allocation6 + $0x88] sm:$0xff]
    %v2500 = vld [vmem:[#allocation6 + $0x90] sm:$0xff]
    %v2501 = vld [vmem:[#allocation6 + $0x98] sm:$0xff]
    %v2502 = vld [vmem:[#allocation6 + $0xa0] sm:$0xff]
    %v2503 = vld [vmem:[#allocation6 + $0xa8] sm:$0xff]
    %v2504 = vld [vmem:[#allocation6 + $0xb0] sm:$0xff]
    %v2505 = vld [vmem:[#allocation6 + $0xb8] sm:$0xff]
    %v2506 = vld [vmem:[#allocation6 + $0xc0] sm:$0xff]
    %v2507 = vld [vmem:[#allocation6 + $0xc8] sm:$0xff]
    %v2508 = vld [vmem:[#allocation6 + $0xd0] sm:$0xff]
    %v2509 = vld [vmem:[#allocation6 + $0xd8] sm:$0xff]
    %v2510 = vld [vmem:[#allocation6 + $0xe0] sm:$0xff]
    %v2511 = vld [vmem:[#allocation6 + $0xe8] sm:$0xff]
    %v2512 = vld [vmem:[#allocation6 + $0xf0] sm:$0xff]
    %v2513 = vld [vmem:[#allocation6 + $0xf8] sm:$0xff]
    %v2546 = vunpack.c.l.b16 %v2482
    %v2547 = vunpack.c.h.b16 %v2482
    %v2548 = vunpack.c.l.b16 %v2483
    %v2549 = vunpack.c.h.b16 %v2483
    %v2550 = vunpack.c.l.b16 %v2484
    %v2551 = vunpack.c.h.b16 %v2484
    %v2552 = vunpack.c.l.b16 %v2485
    %v2553 = vunpack.c.h.b16 %v2485
    %v2554 = vunpack.c.l.b16 %v2486
    %v2555 = vunpack.c.h.b16 %v2486
    %v2556 = vunpack.c.l.b16 %v2487
    %v2557 = vunpack.c.h.b16 %v2487
    %v2558 = vunpack.c.l.b16 %v2488
    %v2559 = vunpack.c.h.b16 %v2488
    %v2560 = vunpack.c.l.b16 %v2489
    %v2561 = vunpack.c.h.b16 %v2489
    %v2562 = vunpack.c.l.b16 %v2490
    %v2563 = vunpack.c.h.b16 %v2490
    %v2564 = vunpack.c.l.b16 %v2491
    %v2565 = vunpack.c.h.b16 %v2491
    %v2566 = vunpack.c.l.b16 %v2492
    %v2567 = vunpack.c.h.b16 %v2492
    %v2568 = vunpack.c.l.b16 %v2493
    %v2569 = vunpack.c.h.b16 %v2493
    %v2570 = vunpack.c.l.b16 %v2494
    %v2571 = vunpack.c.h.b16 %v2494
    %v2572 = vunpack.c.l.b16 %v2495
    %v2573 = vunpack.c.h.b16 %v2495
    %v2574 = vunpack.c.l.b16 %v2496
    %v2575 = vunpack.c.h.b16 %v2496
    %v2576 = vunpack.c.l.b16 %v2497
    %v2577 = vunpack.c.h.b16 %v2497
    %v2578 = vunpack.c.l.b16 %v2498
    %v2579 = vunpack.c.h.b16 %v2498
    %v2580 = vunpack.c.l.b16 %v2499
    %v2581 = vunpack.c.h.b16 %v2499
    %v2582 = vunpack.c.l.b16 %v2500
    %v2583 = vunpack.c.h.b16 %v2500
    %v2584 = vunpack.c.l.b16 %v2501
    %v2585 = vunpack.c.h.b16 %v2501
    %v2586 = vunpack.c.l.b16 %v2502
    %v2587 = vunpack.c.h.b16 %v2502
    %v2588 = vunpack.c.l.b16 %v2503
    %v2589 = vunpack.c.h.b16 %v2503
    %v2590 = vunpack.c.l.b16 %v2504
    %v2591 = vunpack.c.h.b16 %v2504
    %v2592 = vunpack.c.l.b16 %v2505
    %v2593 = vunpack.c.h.b16 %v2505
    %v2594 = vunpack.c.l.b16 %v2506
    %v2595 = vunpack.c.h.b16 %v2506
    %v2596 = vunpack.c.l.b16 %v2507
    %v2597 = vunpack.c.h.b16 %v2507
    %v2598 = vunpack.c.l.b16 %v2508
    %v2599 = vunpack.c.h.b16 %v2508
    %v2600 = vunpack.c.l.b16 %v2509
    %v2601 = vunpack.c.h.b16 %v2509
    %v2602 = vunpack.c.l.b16 %v2510
    %v2603 = vunpack.c.h.b16 %v2510
    %v2604 = vunpack.c.l.b16 %v2511
    %v2605 = vunpack.c.h.b16 %v2511
    %v2606 = vunpack.c.l.b16 %v2512
    %v2607 = vunpack.c.h.b16 %v2512
    %v2608 = vunpack.c.l.b16 %v2513
    %v2609 = vunpack.c.h.b16 %v2513
    %v2610 = vpack.c.b16 %v2550, %v2546
    %v2611 = vpack.c.b16 %v2551, %v2547
    %v2612 = vpack.c.b16 %v2552, %v2548
    %v2613 = vpack.c.b16 %v2553, %v2549
    %v2614 = vpack.c.b16 %v2558, %v2554
    %v2615 = vpack.c.b16 %v2559, %v2555
    %v2616 = vpack.c.b16 %v2560, %v2556
    %v2617 = vpack.c.b16 %v2561, %v2557
    %v2618 = vpack.c.b16 %v2566, %v2562
    %v2619 = vpack.c.b16 %v2567, %v2563
    %v2620 = vpack.c.b16 %v2568, %v2564
    %v2621 = vpack.c.b16 %v2569, %v2565
    %v2622 = vpack.c.b16 %v2574, %v2570
    %v2623 = vpack.c.b16 %v2575, %v2571
    %v2624 = vpack.c.b16 %v2576, %v2572
    %v2625 = vpack.c.b16 %v2577, %v2573
    %v2626 = vpack.c.b16 %v2582, %v2578
    %v2627 = vpack.c.b16 %v2583, %v2579
    %v2628 = vpack.c.b16 %v2584, %v2580
    %v2629 = vpack.c.b16 %v2585, %v2581
    %v2630 = vpack.c.b16 %v2590, %v2586
    %v2631 = vpack.c.b16 %v2591, %v2587
    %v2632 = vpack.c.b16 %v2592, %v2588
    %v2633 = vpack.c.b16 %v2593, %v2589
    %v2634 = vpack.c.b16 %v2598, %v2594
    %v2635 = vpack.c.b16 %v2599, %v2595
    %v2636 = vpack.c.b16 %v2600, %v2596
    %v2637 = vpack.c.b16 %v2601, %v2597
    %v2638 = vpack.c.b16 %v2606, %v2602
    %v2639 = vpack.c.b16 %v2607, %v2603
    %v2640 = vpack.c.b16 %v2608, %v2604
    %v2641 = vpack.c.b16 %v2609, %v2605
    %2674 = vmatprep.subr.bf16.mxu0 %v2639
    %2675 = vmatpush1.bf16.msra.mxu0 %v2638
    %2676 = vmatprep.subr.bf16.mxu0 %v2635
    %2677 = vmatpush1.bf16.msra.mxu0 %v2634
    %2678 = vmatprep.subr.bf16.mxu0 %v2631
    %2679 = vmatpush1.bf16.msra.mxu0 %v2630
    %2680 = vmatprep.subr.bf16.mxu0 %v2627
    %2681 = vmatpush1.bf16.msra.mxu0 %v2626
    %2682 = vmatprep.subr.bf16.mxu0 %v2623
    %2683 = vmatpush1.bf16.msra.mxu0 %v2622
    %2684 = vmatprep.subr.bf16.mxu0 %v2619
    %2685 = vmatpush1.bf16.msra.mxu0 %v2618
    %2686 = vmatprep.subr.bf16.mxu0 %v2615
    %2687 = vmatpush1.bf16.msra.mxu0 %v2614
    %2688 = vmatprep.subr.bf16.mxu0 %v2611
    %2689 = vmatpush1.bf16.msra.mxu0 %v2610
    %2690 = vmatprep.subr.bf16.mxu0 0
    %2691 = vmatpush2.bf16.msra.mxu0 0
    %2692 = vmatprep.subr.bf16.mxu0 0
    %2693 = vmatpush2.bf16.msra.mxu0 0
    %2694 = vmatprep.subr.bf16.mxu0 0
    %2695 = vmatpush2.bf16.msra.mxu0 0
    %2696 = vmatprep.subr.bf16.mxu0 0
    %2697 = vmatpush2.bf16.msra.mxu0 0
    %2698 = vmatprep.subr.bf16.mxu0 0
    %2699 = vmatpush2.bf16.msra.mxu0 0
    %2700 = vmatprep.subr.bf16.mxu0 0
    %2701 = vmatpush2.bf16.msra.mxu0 0
    %2702 = vmatprep.subr.bf16.mxu0 0
    %2703 = vmatpush2.bf16.msra.mxu0 0
    %2704 = vmatprep.subr.bf16.mxu0 0
    %2705 = vmatpush2.bf16.msra.mxu0 0
    %2706 = vmatprep.mubr.bf16.mxu0 0
    %2707 = vmatmul.mubr.bf16.gmra.mxu0 %v2481
    %v2708 = vpop.f32.mrf.mxu0
    %v2709 = vadd.f32 0.0, %v2708
    %v2710 = vpop.f32.mrf.mxu0
    %v2711 = vadd.f32 0.0, %v2710
    %v2712 = vpop.f32.mrf.mxu0
    %v2713 = vpop.f32.mrf.mxu0
    %2714 = vdwg.mxu0
    %2715 = vmatprep.subr.bf16.mxu0 %v2641
    %2716 = vmatpush1.bf16.msra.mxu0 %v2640
    %2717 = vmatprep.subr.bf16.mxu0 %v2637
    %2718 = vmatpush1.bf16.msra.mxu0 %v2636
    %2719 = vmatprep.subr.bf16.mxu0 %v2633
    %2720 = vmatpush1.bf16.msra.mxu0 %v2632
    %2721 = vmatprep.subr.bf16.mxu0 %v2629
    %2722 = vmatpush1.bf16.msra.mxu0 %v2628
    %2723 = vmatprep.subr.bf16.mxu0 %v2625
    %2724 = vmatpush1.bf16.msra.mxu0 %v2624
    %2725 = vmatprep.subr.bf16.mxu0 %v2621
    %2726 = vmatpush1.bf16.msra.mxu0 %v2620
    %2727 = vmatprep.subr.bf16.mxu0 %v2617
    %2728 = vmatpush1.bf16.msra.mxu0 %v2616
    %2729 = vmatprep.subr.bf16.mxu0 %v2613
    %2730 = vmatpush1.bf16.msra.mxu0 %v2612
    %2731 = vmatprep.subr.bf16.mxu0 0
    %2732 = vmatpush2.bf16.msra.mxu0 0
    %2733 = vmatprep.subr.bf16.mxu0 0
    %2734 = vmatpush2.bf16.msra.mxu0 0
    %2735 = vmatprep.subr.bf16.mxu0 0
    %2736 = vmatpush2.bf16.msra.mxu0 0
    %2737 = vmatprep.subr.bf16.mxu0 0
    %2738 = vmatpush2.bf16.msra.mxu0 0
    %2739 = vmatprep.subr.bf16.mxu0 0
    %2740 = vmatpush2.bf16.msra.mxu0 0
    %2741 = vmatprep.subr.bf16.mxu0 0
    %2742 = vmatpush2.bf16.msra.mxu0 0
    %2743 = vmatprep.subr.bf16.mxu0 0
    %2744 = vmatpush2.bf16.msra.mxu0 0
    %2745 = vmatprep.subr.bf16.mxu0 0
    %2746 = vmatpush2.bf16.msra.mxu0 0
    %2747 = vmatprep.mubr.bf16.mxu0 0
    %2748 = vmatmul.mubr.bf16.gmra.mxu0 %v2481
    %v2749 = vpop.f32.mrf.mxu0
    %v2750 = vadd.f32 0.0, %v2749
    %v2751 = vpop.f32.mrf.mxu0
    %v2752 = vadd.f32 0.0, %v2751
    %v2753 = vpop.f32.mrf.mxu0
    %v2754 = vpop.f32.mrf.mxu0
    %2755 = vdwg.mxu0
    %v2756 = vadd.f32 %v2477, %v2709
    %v2757 = vadd.f32 %v2478, %v2711
    %v2758 = vadd.f32 %v2479, %v2750
    %v2759 = vadd.f32 %v2480, %v2752
    %v2760 = vxor.u32 %v2756, 2147483648
    %v2761 = vmul.f32 %v2760, 1.442695
    %v2762 = vpow.pop %v2761
    %v2763 = vadd.f32 %v2762, 1.0
    %v2764 = vrcp.pop %v2763
    %v2765 = vmul.f32 1.0, %v2764
    %v2766 = vxor.u32 %v2757, 2147483648
    %v2767 = vmul.f32 %v2766, 1.442695
    %v2768 = vpow.pop %v2767
    %v2769 = vadd.f32 %v2768, 1.0
    %v2770 = vrcp.pop %v2769
    %v2771 = vmul.f32 1.0, %v2770
    %v2772 = vtanh.pop %v2758
    %v2773 = vxor.u32 %v2759, 2147483648
    %v2774 = vmul.f32 %v2773, 1.442695
    %v2775 = vpow.pop %v2774
    %v2776 = vadd.f32 %v2775, 1.0
    %v2777 = vrcp.pop %v2776
    %v2778 = vmul.f32 1.0, %v2777
    %v2779 = vmul.f32 %v2771, %v2466
    %v2780 = vmul.f32 %v2765, %v2772
    %v2781 = vadd.f32 %v2779, %v2780
    %v2782 = vtanh.pop %v2781
    %v2783 = vmul.f32 %v2778, %v2782
    %s2784 = scalar_lea.vmem [#allocation3], 48
    %v2785 = vld [vmem:[%s2784] sm:$0xff]
    %v2786 = vadd.f32 %v2783, %v2785
    %s2787 = scalar_lea.vmem %s4, 48
    %2788 = vst [vmem:[%s2787] sm:$0xff] %v2786
    %s2789 = smul.u32 7, 4
    %s2790 = smul.addr %s2789, 8
    %s2791 = scalar_lea.vmem [#allocation2], %s2790
    %v2792 = vld [vmem:[%s2791] sm:$0xff]
    %v2793 = vld [vmem:[%s2791 + $0x8] sm:$0xff]
    %v2794 = vld [vmem:[%s2791 + $0x10] sm:$0xff]
    %v2795 = vld [vmem:[%s2791 + $0x18] sm:$0xff]
    %v2796 = vpack.c.bf16 %v2783, %v2783
    %v2797 = vld [vmem:[#allocation6] sm:$0xff]
    %v2798 = vld [vmem:[#allocation6 + $0x8] sm:$0xff]
    %v2799 = vld [vmem:[#allocation6 + $0x10] sm:$0xff]
    %v2800 = vld [vmem:[#allocation6 + $0x18] sm:$0xff]
    %v2801 = vld [vmem:[#allocation6 + $0x20] sm:$0xff]
    %v2802 = vld [vmem:[#allocation6 + $0x28] sm:$0xff]
    %v2803 = vld [vmem:[#allocation6 + $0x30] sm:$0xff]
    %v2804 = vld [vmem:[#allocation6 + $0x38] sm:$0xff]
    %v2805 = vld [vmem:[#allocation6 + $0x40] sm:$0xff]
    %v2806 = vld [vmem:[#allocation6 + $0x48] sm:$0xff]
    %v2807 = vld [vmem:[#allocation6 + $0x50] sm:$0xff]
    %v2808 = vld [vmem:[#allocation6 + $0x58] sm:$0xff]
    %v2809 = vld [vmem:[#allocation6 + $0x60] sm:$0xff]
    %v2810 = vld [vmem:[#allocation6 + $0x68] sm:$0xff]
    %v2811 = vld [vmem:[#allocation6 + $0x70] sm:$0xff]
    %v2812 = vld [vmem:[#allocation6 + $0x78] sm:$0xff]
    %v2813 = vld [vmem:[#allocation6 + $0x80] sm:$0xff]
    %v2814 = vld [vmem:[#allocation6 + $0x88] sm:$0xff]
    %v2815 = vld [vmem:[#allocation6 + $0x90] sm:$0xff]
    %v2816 = vld [vmem:[#allocation6 + $0x98] sm:$0xff]
    %v2817 = vld [vmem:[#allocation6 + $0xa0] sm:$0xff]
    %v2818 = vld [vmem:[#allocation6 + $0xa8] sm:$0xff]
    %v2819 = vld [vmem:[#allocation6 + $0xb0] sm:$0xff]
    %v2820 = vld [vmem:[#allocation6 + $0xb8] sm:$0xff]
    %v2821 = vld [vmem:[#allocation6 + $0xc0] sm:$0xff]
    %v2822 = vld [vmem:[#allocation6 + $0xc8] sm:$0xff]
    %v2823 = vld [vmem:[#allocation6 + $0xd0] sm:$0xff]
    %v2824 = vld [vmem:[#allocation6 + $0xd8] sm:$0xff]
    %v2825 = vld [vmem:[#allocation6 + $0xe0] sm:$0xff]
    %v2826 = vld [vmem:[#allocation6 + $0xe8] sm:$0xff]
    %v2827 = vld [vmem:[#allocation6 + $0xf0] sm:$0xff]
    %v2828 = vld [vmem:[#allocation6 + $0xf8] sm:$0xff]
    %v2861 = vunpack.c.l.b16 %v2797
    %v2862 = vunpack.c.h.b16 %v2797
    %v2863 = vunpack.c.l.b16 %v2798
    %v2864 = vunpack.c.h.b16 %v2798
    %v2865 = vunpack.c.l.b16 %v2799
    %v2866 = vunpack.c.h.b16 %v2799
    %v2867 = vunpack.c.l.b16 %v2800
    %v2868 = vunpack.c.h.b16 %v2800
    %v2869 = vunpack.c.l.b16 %v2801
    %v2870 = vunpack.c.h.b16 %v2801
    %v2871 = vunpack.c.l.b16 %v2802
    %v2872 = vunpack.c.h.b16 %v2802
    %v2873 = vunpack.c.l.b16 %v2803
    %v2874 = vunpack.c.h.b16 %v2803
    %v2875 = vunpack.c.l.b16 %v2804
    %v2876 = vunpack.c.h.b16 %v2804
    %v2877 = vunpack.c.l.b16 %v2805
    %v2878 = vunpack.c.h.b16 %v2805
    %v2879 = vunpack.c.l.b16 %v2806
    %v2880 = vunpack.c.h.b16 %v2806
    %v2881 = vunpack.c.l.b16 %v2807
    %v2882 = vunpack.c.h.b16 %v2807
    %v2883 = vunpack.c.l.b16 %v2808
    %v2884 = vunpack.c.h.b16 %v2808
    %v2885 = vunpack.c.l.b16 %v2809
    %v2886 = vunpack.c.h.b16 %v2809
    %v2887 = vunpack.c.l.b16 %v2810
    %v2888 = vunpack.c.h.b16 %v2810
    %v2889 = vunpack.c.l.b16 %v2811
    %v2890 = vunpack.c.h.b16 %v2811
    %v2891 = vunpack.c.l.b16 %v2812
    %v2892 = vunpack.c.h.b16 %v2812
    %v2893 = vunpack.c.l.b16 %v2813
    %v2894 = vunpack.c.h.b16 %v2813
    %v2895 = vunpack.c.l.b16 %v2814
    %v2896 = vunpack.c.h.b16 %v2814
    %v2897 = vunpack.c.l.b16 %v2815
    %v2898 = vunpack.c.h.b16 %v2815
    %v2899 = vunpack.c.l.b16 %v2816
    %v2900 = vunpack.c.h.b16 %v2816
    %v2901 = vunpack.c.l.b16 %v2817
    %v2902 = vunpack.c.h.b16 %v2817
    %v2903 = vunpack.c.l.b16 %v2818
    %v2904 = vunpack.c.h.b16 %v2818
    %v2905 = vunpack.c.l.b16 %v2819
    %v2906 = vunpack.c.h.b16 %v2819
    %v2907 = vunpack.c.l.b16 %v2820
    %v2908 = vunpack.c.h.b16 %v2820
    %v2909 = vunpack.c.l.b16 %v2821
    %v2910 = vunpack.c.h.b16 %v2821
    %v2911 = vunpack.c.l.b16 %v2822
    %v2912 = vunpack.c.h.b16 %v2822
    %v2913 = vunpack.c.l.b16 %v2823
    %v2914 = vunpack.c.h.b16 %v2823
    %v2915 = vunpack.c.l.b16 %v2824
    %v2916 = vunpack.c.h.b16 %v2824
    %v2917 = vunpack.c.l.b16 %v2825
    %v2918 = vunpack.c.h.b16 %v2825
    %v2919 = vunpack.c.l.b16 %v2826
    %v2920 = vunpack.c.h.b16 %v2826
    %v2921 = vunpack.c.l.b16 %v2827
    %v2922 = vunpack.c.h.b16 %v2827
    %v2923 = vunpack.c.l.b16 %v2828
    %v2924 = vunpack.c.h.b16 %v2828
    %v2925 = vpack.c.b16 %v2865, %v2861
    %v2926 = vpack.c.b16 %v2866, %v2862
    %v2927 = vpack.c.b16 %v2867, %v2863
    %v2928 = vpack.c.b16 %v2868, %v2864
    %v2929 = vpack.c.b16 %v2873, %v2869
    %v2930 = vpack.c.b16 %v2874, %v2870
    %v2931 = vpack.c.b16 %v2875, %v2871
    %v2932 = vpack.c.b16 %v2876, %v2872
    %v2933 = vpack.c.b16 %v2881, %v2877
    %v2934 = vpack.c.b16 %v2882, %v2878
    %v2935 = vpack.c.b16 %v2883, %v2879
    %v2936 = vpack.c.b16 %v2884, %v2880
    %v2937 = vpack.c.b16 %v2889, %v2885
    %v2938 = vpack.c.b16 %v2890, %v2886
    %v2939 = vpack.c.b16 %v2891, %v2887
    %v2940 = vpack.c.b16 %v2892, %v2888
    %v2941 = vpack.c.b16 %v2897, %v2893
    %v2942 = vpack.c.b16 %v2898, %v2894
    %v2943 = vpack.c.b16 %v2899, %v2895
    %v2944 = vpack.c.b16 %v2900, %v2896
    %v2945 = vpack.c.b16 %v2905, %v2901
    %v2946 = vpack.c.b16 %v2906, %v2902
    %v2947 = vpack.c.b16 %v2907, %v2903
    %v2948 = vpack.c.b16 %v2908, %v2904
    %v2949 = vpack.c.b16 %v2913, %v2909
    %v2950 = vpack.c.b16 %v2914, %v2910
    %v2951 = vpack.c.b16 %v2915, %v2911
    %v2952 = vpack.c.b16 %v2916, %v2912
    %v2953 = vpack.c.b16 %v2921, %v2917
    %v2954 = vpack.c.b16 %v2922, %v2918
    %v2955 = vpack.c.b16 %v2923, %v2919
    %v2956 = vpack.c.b16 %v2924, %v2920
    %2989 = vmatprep.subr.bf16.mxu0 %v2954
    %2990 = vmatpush1.bf16.msra.mxu0 %v2953
    %2991 = vmatprep.subr.bf16.mxu0 %v2950
    %2992 = vmatpush1.bf16.msra.mxu0 %v2949
    %2993 = vmatprep.subr.bf16.mxu0 %v2946
    %2994 = vmatpush1.bf16.msra.mxu0 %v2945
    %2995 = vmatprep.subr.bf16.mxu0 %v2942
    %2996 = vmatpush1.bf16.msra.mxu0 %v2941
    %2997 = vmatprep.subr.bf16.mxu0 %v2938
    %2998 = vmatpush1.bf16.msra.mxu0 %v2937
    %2999 = vmatprep.subr.bf16.mxu0 %v2934
    %3000 = vmatpush1.bf16.msra.mxu0 %v2933
    %3001 = vmatprep.subr.bf16.mxu0 %v2930
    %3002 = vmatpush1.bf16.msra.mxu0 %v2929
    %3003 = vmatprep.subr.bf16.mxu0 %v2926
    %3004 = vmatpush1.bf16.msra.mxu0 %v2925
    %3005 = vmatprep.subr.bf16.mxu0 0
    %3006 = vmatpush2.bf16.msra.mxu0 0
    %3007 = vmatprep.subr.bf16.mxu0 0
    %3008 = vmatpush2.bf16.msra.mxu0 0
    %3009 = vmatprep.subr.bf16.mxu0 0
    %3010 = vmatpush2.bf16.msra.mxu0 0
    %3011 = vmatprep.subr.bf16.mxu0 0
    %3012 = vmatpush2.bf16.msra.mxu0 0
    %3013 = vmatprep.subr.bf16.mxu0 0
    %3014 = vmatpush2.bf16.msra.mxu0 0
    %3015 = vmatprep.subr.bf16.mxu0 0
    %3016 = vmatpush2.bf16.msra.mxu0 0
    %3017 = vmatprep.subr.bf16.mxu0 0
    %3018 = vmatpush2.bf16.msra.mxu0 0
    %3019 = vmatprep.subr.bf16.mxu0 0
    %3020 = vmatpush2.bf16.msra.mxu0 0
    %3021 = vmatprep.mubr.bf16.mxu0 0
    %3022 = vmatmul.mubr.bf16.gmra.mxu0 %v2796
    %v3023 = vpop.f32.mrf.mxu0
    %v3024 = vadd.f32 0.0, %v3023
    %v3025 = vpop.f32.mrf.mxu0
    %v3026 = vadd.f32 0.0, %v3025
    %v3027 = vpop.f32.mrf.mxu0
    %v3028 = vpop.f32.mrf.mxu0
    %3029 = vdwg.mxu0
    %3030 = vmatprep.subr.bf16.mxu0 %v2956
    %3031 = vmatpush1.bf16.msra.mxu0 %v2955
    %3032 = vmatprep.subr.bf16.mxu0 %v2952
    %3033 = vmatpush1.bf16.msra.mxu0 %v2951
    %3034 = vmatprep.subr.bf16.mxu0 %v2948
    %3035 = vmatpush1.bf16.msra.mxu0 %v2947
    %3036 = vmatprep.subr.bf16.mxu0 %v2944
    %3037 = vmatpush1.bf16.msra.mxu0 %v2943
    %3038 = vmatprep.subr.bf16.mxu0 %v2940
    %3039 = vmatpush1.bf16.msra.mxu0 %v2939
    %3040 = vmatprep.subr.bf16.mxu0 %v2936
    %3041 = vmatpush1.bf16.msra.mxu0 %v2935
    %3042 = vmatprep.subr.bf16.mxu0 %v2932
    %3043 = vmatpush1.bf16.msra.mxu0 %v2931
    %3044 = vmatprep.subr.bf16.mxu0 %v2928
    %3045 = vmatpush1.bf16.msra.mxu0 %v2927
    %3046 = vmatprep.subr.bf16.mxu0 0
    %3047 = vmatpush2.bf16.msra.mxu0 0
    %3048 = vmatprep.subr.bf16.mxu0 0
    %3049 = vmatpush2.bf16.msra.mxu0 0
    %3050 = vmatprep.subr.bf16.mxu0 0
    %3051 = vmatpush2.bf16.msra.mxu0 0
    %3052 = vmatprep.subr.bf16.mxu0 0
    %3053 = vmatpush2.bf16.msra.mxu0 0
    %3054 = vmatprep.subr.bf16.mxu0 0
    %3055 = vmatpush2.bf16.msra.mxu0 0
    %3056 = vmatprep.subr.bf16.mxu0 0
    %3057 = vmatpush2.bf16.msra.mxu0 0
    %3058 = vmatprep.subr.bf16.mxu0 0
    %3059 = vmatpush2.bf16.msra.mxu0 0
    %3060 = vmatprep.subr.bf16.mxu0 0
    %3061 = vmatpush2.bf16.msra.mxu0 0
    %3062 = vmatprep.mubr.bf16.mxu0 0
    %3063 = vmatmul.mubr.bf16.gmra.mxu0 %v2796
    %v3064 = vpop.f32.mrf.mxu0
    %v3065 = vadd.f32 0.0, %v3064
    %v3066 = vpop.f32.mrf.mxu0
    %v3067 = vadd.f32 0.0, %v3066
    %v3068 = vpop.f32.mrf.mxu0
    %v3069 = vpop.f32.mrf.mxu0
    %3070 = vdwg.mxu0
    %v3071 = vadd.f32 %v2792, %v3024
    %v3072 = vadd.f32 %v2793, %v3026
    %v3073 = vadd.f32 %v2794, %v3065
    %v3074 = vadd.f32 %v2795, %v3067
    %v3075 = vxor.u32 %v3071, 2147483648
    %v3076 = vmul.f32 %v3075, 1.442695
    %v3077 = vpow.pop %v3076
    %v3078 = vadd.f32 %v3077, 1.0
    %v3079 = vrcp.pop %v3078
    %v3080 = vmul.f32 1.0, %v3079
    %v3081 = vxor.u32 %v3072, 2147483648
    %v3082 = vmul.f32 %v3081, 1.442695
    %v3083 = vpow.pop %v3082
    %v3084 = vadd.f32 %v3083, 1.0
    %v3085 = vrcp.pop %v3084
    %v3086 = vmul.f32 1.0, %v3085
    %v3087 = vtanh.pop %v3073
    %v3088 = vxor.u32 %v3074, 2147483648
    %v3089 = vmul.f32 %v3088, 1.442695
    %v3090 = vpow.pop %v3089
    %v3091 = vadd.f32 %v3090, 1.0
    %v3092 = vrcp.pop %v3091
    %v3093 = vmul.f32 1.0, %v3092
    %v3094 = vmul.f32 %v3086, %v2781
    %v3095 = vmul.f32 %v3080, %v3087
    %v3096 = vadd.f32 %v3094, %v3095
    %v3097 = vtanh.pop %v3096
    %v3098 = vmul.f32 %v3093, %v3097
    %s3099 = scalar_lea.vmem [#allocation3], 56
    %v3100 = vld [vmem:[%s3099] sm:$0xff]
    %v3101 = vadd.f32 %v3098, %v3100
    %s3102 = scalar_lea.vmem %s4, 56
    %3103 = vst [vmem:[%s3102] sm:$0xff] %v3101
    %3104 = vst [vmem:[#allocation4] sm:$0xff] %v3098
    %3105 = vst [vmem:[#allocation5] sm:$0xff] %v3096
    // Predicated region
    $region26: #{lstm_encoder.3} parent=1 // pred_check
      _
    $region27: #{lstm_encoder.3} parent=1 // pred_check_branch
      %3107 = sbr.rel (0) target = $region29
    $region28: #{lstm_encoder.3} parent=1 // pred_region
      _
    $region29: #{lstm_encoder.3} parent=1 // pred_fallthru
      _
    // Predicated region
    $region30: #{lstm_encoder.3} parent=1 // pred_check
      _
    $region31: #{lstm_encoder.3} parent=1 // pred_check_branch
      %3109 = sbr.rel (0) target = $region33
    $region32: #{lstm_encoder.3} parent=1 // pred_region
      _
    $region33: #{lstm_encoder.3} parent=1 // pred_fallthru
      _
    %3110 = vsyncpa [#allocation7], 1

</llo_original>
